<compile_context>
chip_gen: v7x
topology: tpu7x:2x2x1
jax: 0.10.0
libtpu: 0.0.40
codegen_flags: <defaults>
</compile_context>

<pallas_src>
import functools
import math

import jax
import jax.numpy as jnp
from jax.experimental import pallas as pl
from jax.experimental.pallas import tpu as pltpu


CARDINALITY = 64
BASE_WIDTH = 4
EXPANSION = 4
STAGE_BLOCKS = (3, 4, 23, 3)
STAGE_PLANES = (64, 128, 256, 512)
STAGE_STRIDES = (1, 2, 2, 2)

_VMEM_LIMIT = 48 * 1024 * 1024


# ----------------------------- small helpers -------------------------------

def _round_up(x, m):
    return (x + m - 1) // m * m


def _largest_div8(dim, cap):
    """Largest multiple-of-8 divisor of `dim` that is <= cap; falls back to `dim`
    (a full-extent block is always legal and needs no padding)."""
    if dim <= cap:
        return dim
    t = (cap // 8) * 8
    while t >= 8:
        if dim % t == 0:
            return t
        t -= 8
    return dim


def _choose_m_tile(m, k, n_tiles):
    cap = (2 * 1024 * 1024) // (2 * max(k, 1))      # ~2 MiB bf16 A tiles
    cap = max(512, min(4096, cap))
    tm = _largest_div8(m, cap)
    if m // tm == 1 and n_tiles == 1:
        # give the pipeline (and v7x's second core) at least two grid steps if we can
        tm = _largest_div8(m, max(m // 2, 8))
    return tm


def _choose_n_tile(n):
    if n <= 256:
        return n
    tn = 512 if n % 512 == 0 else 256
    if n % tn != 0:
        tn = n
    return tn


def _choose_cps(nchunk):
    """Channel chunks (of 128) handled per grid step for the grouped conv."""
    for c in (4, 2, 1):
        if nchunk % c == 0 and nchunk // c >= min(4, nchunk):
            return c
    return 1


# ----------------------------- Pallas kernels ------------------------------

def _make_matmul_kernel(relu, has_residual):
    """Single full-K MXU matmul tile with the folded-BatchNorm affine (+ optional
    residual add and ReLU) fused into the epilogue."""

    def kernel(*refs):
        if has_residual:
            a_ref, b_ref, s_ref, t_ref, r_ref, o_ref = refs
        else:
            a_ref, b_ref, s_ref, t_ref, o_ref = refs
        y = jnp.dot(a_ref[...], b_ref[...], preferred_element_type=jnp.float32)
        y = y * s_ref[...] + t_ref[...]
        if has_residual:
            y = y + r_ref[...].astype(jnp.float32)
        if relu:
            y = jnp.maximum(y, 0.0)
        o_ref[...] = y.astype(o_ref.dtype)

    return kernel


def _make_gconv_halo_kernel(cps):
    """Stride-1 grouped 3x3 conv over one (image-slab, channel-chunk-group) block.
    x_ref: (nb, H+2, Wop+2, 128*cps) zero-padded NHWC halo block (bf16)
    w_ref: (cps, 3, 384, 128) per-row-tap block-diagonal packed group weights (bf16)
    o_ref: (nb, H, W, 128*cps)
    The 9 taps are formed in VMEM and accumulated as three K=384 dots per chunk."""

    def kernel(x_ref, w_ref, s_ref, t_ref, o_ref):
        nb, _, wp, _ = x_ref.shape
        _, ho, wo, _ = o_ref.shape
        wop = wp - 2                      # 8-aligned padded output width
        m = nb * ho * wop
        for c in range(cps):
            cs = slice(c * 128, (c + 1) * 128)
            acc = None
            for di in range(3):
                taps = [x_ref[:, di:di + ho, dj:dj + wop, cs].reshape(m, 128)
                        for dj in range(3)]
                d = jnp.dot(jnp.concatenate(taps, axis=1), w_ref[c, di],
                            preferred_element_type=jnp.float32)
                acc = d if acc is None else acc + d
            y = jnp.maximum(acc * s_ref[:, cs] + t_ref[:, cs], 0.0)
            y = y.astype(o_ref.dtype).reshape(nb, ho, wop, 128)
            o_ref[:, :, :, cs] = y[:, :, :wo, :]

    return kernel


def _make_gconv_taps_kernel(cps):
    """Grouped 3x3 conv from pre-gathered taps (used for the three stride-2 blocks
    and as a lowering fallback).  x_ref: (9, tr, 128*cps), o_ref: (tr, 128*cps)."""

    def kernel(x_ref, w_ref, s_ref, t_ref, o_ref):
        for c in range(cps):
            cs = slice(c * 128, (c + 1) * 128)
            acc = None
            for di in range(3):
                taps = [x_ref[di * 3 + dj, :, cs] for dj in range(3)]
                d = jnp.dot(jnp.concatenate(taps, axis=1), w_ref[c, di],
                            preferred_element_type=jnp.float32)
                acc = d if acc is None else acc + d
            y = jnp.maximum(acc * s_ref[:, cs] + t_ref[:, cs], 0.0)
            o_ref[:, cs] = y.astype(o_ref.dtype)

    return kernel


def _avgpool_kernel(x_ref, o_ref):
    o_ref[...] = jnp.mean(x_ref[...].astype(jnp.float32), axis=1)


def _linear_kernel(x_ref, w_ref, b_ref, o_ref):
    o_ref[...] = jnp.dot(x_ref[...], w_ref[...],
                         preferred_element_type=jnp.float32) + b_ref[...]


# ----------------------------- Pallas wrappers ------------------------------

@functools.partial(jax.jit, static_argnames=("relu",))
def matmul_bn_act(a, w, scale, shift, residual=None, relu=True):
    """(M, K) @ (K, N) in bf16 with fused per-column affine (folded BN), optional
    residual add and ReLU.  Exact-divisor tiles, full-K blocks, no padding copies."""
    m, k = a.shape
    _, n = w.shape
    tn = _choose_n_tile(n)
    tm = _choose_m_tile(m, k, n // tn)

    a = a.astype(jnp.bfloat16)
    w = w.astype(jnp.bfloat16)
    s = scale.astype(jnp.float32).reshape(1, n)
    t = shift.astype(jnp.float32).reshape(1, n)

    inputs = [a, w, s, t]
    in_specs = [
        pl.BlockSpec((tm, k), lambda i, j: (i, 0)),
        pl.BlockSpec((k, tn), lambda i, j: (0, j)),
        pl.BlockSpec((1, tn), lambda i, j: (0, j)),
        pl.BlockSpec((1, tn), lambda i, j: (0, j)),
    ]
    if residual is not None:
        inputs.append(residual.astype(jnp.bfloat16))
        in_specs.append(pl.BlockSpec((tm, tn), lambda i, j: (i, j)))

    kernel = _make_matmul_kernel(relu, residual is not None)
    out = pl.pallas_call(
        kernel,
        out_shape=jax.ShapeDtypeStruct((m, n), jnp.bfloat16),
        grid_spec=pltpu.PrefetchScalarGridSpec(
            num_scalar_prefetch=0,
            grid=(m // tm, n // tn),
            in_specs=in_specs,
            out_specs=pl.BlockSpec((tm, tn), lambda i, j: (i, j)),
        ),
        compiler_params=pltpu.CompilerParams(
            dimension_semantics=("parallel", "parallel"),
            vmem_limit_bytes=_VMEM_LIMIT),
        cost_estimate=pl.CostEstimate(flops=2 * m * n * k, transcendentals=0,
                                      bytes_accessed=2 * (m * k + k * n + 2 * m * n)),
    )(*inputs)
    return out


@jax.jit
def _gconv_halo(x, wpk, scale, shift):
    """Stride-1 grouped 3x3 conv + fused BN + ReLU from a padded NHWC halo block."""
    n, h, w, c = x.shape
    nchunk = c // 128
    cps = _choose_cps(nchunk)
    ho, wo = h, w
    wop = _round_up(wo, 8)                 # 8-aligned compute width (extra cols discarded)
    hp, wp = h + 2, wop + 2
    xp = jnp.pad(x.astype(jnp.bfloat16), ((0, 0), (1, 1), (1, wp - 1 - w), (0, 0)))
    s = scale.astype(jnp.float32).reshape(1, c)
    t = shift.astype(jnp.float32).reshape(1, c)

    split_n = n > 1 and n * ho * wop > 4096
    gn, nb = (n, 1) if split_n else (1, n)

    kernel = _make_gconv_halo_kernel(cps)
    return pl.pallas_call(
        kernel,
        out_shape=jax.ShapeDtypeStruct((n, ho, wo, c), jnp.bfloat16),
        grid_spec=pltpu.PrefetchScalarGridSpec(
            num_scalar_prefetch=0,
            grid=(gn, nchunk // cps),
            in_specs=[
                pl.BlockSpec((nb, hp, wp, 128 * cps), lambda i, j: (i, 0, 0, j)),
                pl.BlockSpec((cps, 3, 384, 128), lambda i, j: (j, 0, 0, 0)),
                pl.BlockSpec((1, 128 * cps), lambda i, j: (0, j)),
                pl.BlockSpec((1, 128 * cps), lambda i, j: (0, j)),
            ],
            out_specs=pl.BlockSpec((nb, ho, wo, 128 * cps), lambda i, j: (i, 0, 0, j)),
        ),
        compiler_params=pltpu.CompilerParams(
            dimension_semantics=("parallel", "parallel"),
            vmem_limit_bytes=_VMEM_LIMIT),
    )(xp, wpk, s, t)


@functools.partial(jax.jit, static_argnames=("stride",))
def _gconv_taps(x, wpk, scale, shift, stride):
    """Grouped 3x3 conv via wrapper-side tap gathering (stride-2 blocks / fallback)."""
    n, h, w, c = x.shape
    nchunk = c // 128
    cps = _choose_cps(nchunk)
    ho = (h + 2 - 3) // stride + 1
    wo = (w + 2 - 3) // stride + 1
    rows = n * ho * wo
    xp = jnp.pad(x.astype(jnp.bfloat16), ((0, 0), (1, 1), (1, 1), (0, 0)))
    taps = jnp.stack(
        [xp[:, i:i + stride * (ho - 1) + 1:stride,
            j:j + stride * (wo - 1) + 1:stride, :].reshape(rows, c)
         for i in range(3) for j in range(3)], axis=0)              # (9, rows, C)
    s = scale.astype(jnp.float32).reshape(1, c)
    t = shift.astype(jnp.float32).reshape(1, c)
    tr = _largest_div8(rows, 1024)

    kernel = _make_gconv_taps_kernel(cps)
    out = pl.pallas_call(
        kernel,
        out_shape=jax.ShapeDtypeStruct((rows, c), jnp.bfloat16),
        grid_spec=pltpu.PrefetchScalarGridSpec(
            num_scalar_prefetch=0,
            grid=(rows // tr, nchunk // cps),
            in_specs=[
                pl.BlockSpec((9, tr, 128 * cps), lambda i, j: (0, i, j)),
                pl.BlockSpec((cps, 3, 384, 128), lambda i, j: (j, 0, 0, 0)),
                pl.BlockSpec((1, 128 * cps), lambda i, j: (0, j)),
                pl.BlockSpec((1, 128 * cps), lambda i, j: (0, j)),
            ],
            out_specs=pl.BlockSpec((tr, 128 * cps), lambda i, j: (i, j)),
        ),
        compiler_params=pltpu.CompilerParams(
            dimension_semantics=("parallel", "parallel"),
            vmem_limit_bytes=_VMEM_LIMIT),
    )(taps, wpk, s, t)
    return out.reshape(n, ho, wo, c)


_HALO_OK = [True]


def grouped_conv_bn_relu(x, wpk, scale, shift, stride):
    """3x3 grouped conv (cardinality 64) + fused BN + ReLU, NHWC bf16 in/out."""
    if stride == 1 and _HALO_OK[0]:
        try:
            return _gconv_halo(x, wpk, scale, shift)
        except Exception:
            # Lowering fallback: keep correctness via the tap-gather path.
            _HALO_OK[0] = False
    if stride == 1:
        return _gconv_taps(x, wpk, scale, shift, stride=1)
    # TODO(synk): a halo-DMA kernel with strided in-kernel loads would avoid the
    # (small, ~2.25x-input) tap materialization for the three stride-2 blocks.
    return _gconv_taps(x, wpk, scale, shift, stride=2)


@jax.jit
def maxpool_3x3_s2_p1(x):
    # 3x3 / stride-2 / pad-1 max pool as a single fused XLA max-chain.
    # TODO(synk): overlapping pooling windows are not expressible with plain BlockSpec
    # tiling; a dedicated Pallas kernel would need manual halo DMA.
    n, h, w, c = x.shape
    ho = (h + 2 - 3) // 2 + 1
    wo = (w + 2 - 3) // 2 + 1
    xp = jnp.pad(x, ((0, 0), (1, 1), (1, 1), (0, 0)), constant_values=-jnp.inf)
    out = None
    for i in range(3):
        for j in range(3):
            win = xp[:, i:i + 2 * (ho - 1) + 1:2, j:j + 2 * (wo - 1) + 1:2, :]
            out = win if out is None else jnp.maximum(out, win)
    return out


@jax.jit
def avgpool_7x7(x):
    # AvgPool2d((7,7),(1,1)) on the final 7x7 map == global mean over H, W.
    n, h, w, c = x.shape
    xr = x.reshape(n, h * w, c)
    return pl.pallas_call(
        _avgpool_kernel,
        out_shape=jax.ShapeDtypeStruct((n, c), jnp.float32),
    )(xr)


@jax.jit
def linear(feat, w_t, b):
    # feat: (N, 2048) f32, w_t: (2048, ncls_padded) bf16, b: (ncls_padded,) f32.
    x = feat.astype(jnp.bfloat16)
    return pl.pallas_call(
        _linear_kernel,
        out_shape=jax.ShapeDtypeStruct((x.shape[0], w_t.shape[1]), jnp.float32),
    )(x, w_t, b.reshape(1, -1))


def _extract_patches(x, kh, kw, stride, padding):
    """NHWC -> (N*Ho*Wo, C*kh*kw) im2col patches, per-patch order (c, kh, kw) matching
    the PyTorch weight flattening (Cout, Cin, KH, KW) -> (Cout, Cin*KH*KW)."""
    n, h, w, c = x.shape
    if padding:
        x = jnp.pad(x, ((0, 0), (padding, padding), (padding, padding), (0, 0)))
    ho = (h + 2 * padding - kh) // stride + 1
    wo = (w + 2 * padding - kw) // stride + 1
    cols = []
    for i in range(kh):
        for j in range(kw):
            cols.append(x[:, i:i + stride * (ho - 1) + 1:stride,
                          j:j + stride * (wo - 1) + 1:stride, :])
    p = jnp.stack(cols, axis=-1)                     # (N, Ho, Wo, C, kh*kw)
    return p.reshape(n * ho * wo, c * kh * kw), ho, wo


@jax.jit
def stem_conv_bn_relu(x, w, scale, shift):
    """7x7 / stride-2 / pad-3 stem conv as im2col + fused matmul+BN+ReLU (K=147 kept
    as a full-extent block; no pad copies)."""
    n = x.shape[0]
    patches, ho, wo = _extract_patches(x, 7, 7, 2, 3)
    out = matmul_bn_act(patches, w, scale, shift, relu=True)
    return out.reshape(n, ho, wo, w.shape[1])


# ----------------------------- ResNeXt-101 64x4d ----------------------------

def bottleneck_forward(x, p, stride):
    n, h, w, c = x.shape
    x2d = x.reshape(n * h * w, c)
    width = p["w1"].shape[1]
    out_ch = p["w3"].shape[1]
    # conv1 1x1 + BN + ReLU
    h1 = matmul_bn_act(x2d, p["w1"], p["s1"], p["b1"], relu=True)
    h1 = h1.reshape(n, h, w, width)
    # conv2 3x3 grouped (cardinality 64), stride s, + BN + ReLU
    h2 = grouped_conv_bn_relu(h1, p["w2blk"], p["s2"], p["b2"], stride=stride)
    ho, wo = h2.shape[1], h2.shape[2]
    h2 = h2.reshape(n * ho * wo, width)
    # shortcut branch
    if "wd" in p:
        xs = x2d if stride == 1 else x[:, ::stride, ::stride, :].reshape(n * ho * wo, c)
        sc = matmul_bn_act(xs, p["wd"], p["sd"], p["bd"], relu=False)
    else:
        sc = x2d
    # conv3 1x1 + BN + residual add + ReLU (fused epilogue)
    out = matmul_bn_act(h2, p["w3"], p["s3"], p["b3"], residual=sc, relu=True)
    return out.reshape(n, ho, wo, out_ch)


def resnext101_64x4d_forward(params, x_nchw):
    """Returns (logits, pooled_features) exactly like the PyTorch module's forward."""
    x = jnp.transpose(x_nchw, (0, 2, 3, 1)).astype(jnp.bfloat16)   # NCHW -> NHWC, bf16
    x = stem_conv_bn_relu(x, params["wstem"], params["s_stem"], params["b_stem"])
    x = maxpool_3x3_s2_p1(x)
    for stage_idx, stage in enumerate(params["stages"]):
        for b_idx, blk in enumerate(stage):
            stride = STAGE_STRIDES[stage_idx] if b_idx == 0 else 1
            x = bottleneck_forward(x, blk, stride)
    feat = avgpool_7x7(x)                            # (N, 2048) == x.view(N, -1)
    y = linear(feat, params["fc_w_t"], params["fc_b"])[:, :params["num_classes"]]
    return y, feat


# ----------------------------- parameter handling ---------------------------

def _pack_grouped_weight(w):
    """Pack a grouped 3x3 weight (C, C//64, 3, 3) into (C//128, 3, 384, 128) bf16:
    per 128-channel chunk and per row tap ki, a (3*128, 128) block (kj-major, input
    channel minor) that is block-diagonal over the groups inside the chunk."""
    c, cg = w.shape[0], w.shape[1]
    nchunk = c // 128
    gpc = 128 // cg                                   # groups per 128-channel chunk
    wr = w.reshape(nchunk, gpc, cg, cg, 3, 3)         # [j, lg, a(out), b(in), ki, kj]
    eye = jnp.eye(gpc, dtype=w.dtype)
    dense = jnp.einsum("pq,jqabxy->jxypbqa", eye, wr)  # [j, ki, kj, lg_in, b, lg_out, a]
    dense = dense.reshape(nchunk, 3, 3, 128, 128)      # [j, ki, kj, cin, cout]
    return dense.reshape(nchunk, 3, 384, 128).astype(jnp.bfloat16)


def prepare_params(raw):
    """One-time conversion of PyTorch-layout parameters into the inference layout used
    by the Pallas kernels."""
    ncls = raw["fc_w"].shape[0]
    ncls_p = _round_up(ncls, 128)
    prep = {
        "wstem": raw["stem_w"].reshape(64, -1).T.astype(jnp.bfloat16),   # (147, 64)
        "s_stem": raw["stem_bn_s"], "b_stem": raw["stem_bn_b"],
        "fc_w_t": jnp.pad(raw["fc_w"].T, ((0, 0), (0, ncls_p - ncls))).astype(jnp.bfloat16),
        "fc_b": jnp.pad(raw["fc_b"], (0, ncls_p - ncls)).astype(jnp.float32),
        "num_classes": int(ncls),
    }
    stages = []
    for stage in raw["stages"]:
        blocks = []
        for p in stage:
            q = {
                "w1": p["conv1_w"][:, :, 0, 0].T.astype(jnp.bfloat16),
                "s1": p["bn1_s"], "b1": p["bn1_b"],
                "w2blk": _pack_grouped_weight(p["conv2_w"]),
                "s2": p["bn2_s"], "b2": p["bn2_b"],
                "w3": p["conv3_w"][:, :, 0, 0].T.astype(jnp.bfloat16),
                "s3": p["bn3_s"], "b3": p["bn3_b"],
            }
            if "down_w" in p:
                q["wd"] = p["down_w"][:, :, 0, 0].T.astype(jnp.bfloat16)
                q["sd"] = p["down_s"]
                q["bd"] = p["down_b"]
            blocks.append(q)
        stages.append(blocks)
    prep["stages"] = stages
    return prep


def init_params(key, num_classes=1000):
    """Random PyTorch-layout parameters: conv weights (Cout, Cin/groups, KH, KW) and
    inference BatchNorm folded into per-channel scale/shift."""
    counter = [0]

    def next_key():
        counter[0] += 1
        return jax.random.fold_in(key, counter[0])

    def conv_w(cout, cin_g, kh, kw):
        fan_in = cin_g * kh * kw
        std = math.sqrt(2.0 / fan_in)
        return std * jax.random.normal(next_key(), (cout, cin_g, kh, kw), jnp.float32)

    def bn(c, gamma=1.0):
        eps = 1e-5
        g = gamma + 0.05 * jax.random.normal(next_key(), (c,), jnp.float32)
        b = 0.05 * jax.random.normal(next_key(), (c,), jnp.float32)
        running_mean = jnp.zeros((c,), jnp.float32)
        running_var = jnp.ones((c,), jnp.float32)
        scale = g / jnp.sqrt(running_var + eps)
        shift = b - running_mean * scale
        return scale, shift

    params = {"stem_w": conv_w(64, 3, 7, 7)}
    params["stem_bn_s"], params["stem_bn_b"] = bn(64)

    stages = []
    in_ch = 64
    for planes, n_blocks in zip(STAGE_PLANES, STAGE_BLOCKS):
        width = planes * BASE_WIDTH * CARDINALITY // 64     # == planes * 4
        out_ch = planes * EXPANSION
        blocks = []
        for b in range(n_blocks):
            p = {"conv1_w": conv_w(width, in_ch, 1, 1)}
            p["bn1_s"], p["bn1_b"] = bn(width)
            p["conv2_w"] = conv_w(width, width // CARDINALITY, 3, 3)
            p["bn2_s"], p["bn2_b"] = bn(width)
            p["conv3_w"] = conv_w(out_ch, width, 1, 1)
            p["bn3_s"], p["bn3_b"] = bn(out_ch, gamma=0.5)
            if b == 0:
                p["down_w"] = conv_w(out_ch, in_ch, 1, 1)
                p["down_s"], p["down_b"] = bn(out_ch)
            blocks.append(p)
            in_ch = out_ch
        stages.append(blocks)
    params["stages"] = stages

    bound = 1.0 / math.sqrt(2048)
    params["fc_w"] = jax.random.uniform(next_key(), (num_classes, 2048),
                                        jnp.float32, -bound, bound)
    params["fc_b"] = jax.random.uniform(next_key(), (num_classes,),
                                        jnp.float32, -bound, bound)
    return params


# ----------------------------- reference checks -----------------------------

def _ref_gconv_bn_relu(x_bf16, w_f32, scale, shift, stride):
    xf = x_bf16.astype(jnp.float32)
    wf = w_f32.astype(jnp.bfloat16).astype(jnp.float32)
    y = jax.lax.conv_general_dilated(
        xf, jnp.transpose(wf, (2, 3, 1, 0)), window_strides=(stride, stride),
        padding=((1, 1), (1, 1)), dimension_numbers=("NHWC", "HWIO", "NHWC"),
        feature_group_count=CARDINALITY, precision=jax.lax.Precision.HIGHEST)
    return jnp.maximum(y * scale + shift, 0.0)


def _max_rel_err(got, want):
    got = got.astype(jnp.float32)
    want = want.astype(jnp.float32)
    return float(jnp.max(jnp.abs(got - want)) / (jnp.max(jnp.abs(want)) + 1e-6))


if __name__ == "__main__":
    root = jax.random.PRNGKey(0)
    raw_params = init_params(jax.random.fold_in(root, 0), num_classes=1000)
    params = prepare_params(raw_params)

    # Input must be 224x224 so the backbone produces a 7x7 map for AvgPool2d((7,7),(1,1)).
    x = jax.random.normal(jax.random.fold_in(root, 1), (2, 3, 224, 224), jnp.float32)
    y, feat = resnext101_64x4d_forward(params, x)
    y, feat = jax.block_until_ready((y, feat))
    assert y.shape == (2, 1000), y.shape
    assert feat.shape == (2, 2048), feat.shape
    assert bool(jnp.isfinite(y).all()) and bool(jnp.isfinite(feat).all())

    # Spot-check the grouped-conv packing / kernels against XLA's grouped convolution
    # (shapes match the network, so the Pallas compiles are shared with the run above).
    checks = [
        ((2, 56, 56, 256), 1, raw_params["stages"][0][1], params["stages"][0][1]),
        ((2, 14, 14, 1024), 1, raw_params["stages"][2][1], params["stages"][2][1]),
        ((2, 14, 14, 2048), 2, raw_params["stages"][3][0], params["stages"][3][0]),
    ]
    for ci, (shape, stride, rb, pb) in enumerate(checks):
        xc = jax.random.normal(jax.random.fold_in(root, 10 + ci), shape,
                               jnp.float32).astype(jnp.bfloat16)
        got = grouped_conv_bn_relu(xc, pb["w2blk"], rb["bn2_s"], rb["bn2_b"], stride=stride)
        want = _ref_gconv_bn_relu(xc, rb["conv2_w"], rb["bn2_s"], rb["bn2_b"], stride)
        err = _max_rel_err(got, want)
        assert err < 5e-2, f"grouped conv check {ci} failed: rel err {err}"

    # Spot-check the fused matmul + BN + residual + ReLU epilogue.
    rb = raw_params["stages"][2][1]
    pb = params["stages"][2][1]
    a = jax.random.normal(jax.random.fold_in(root, 20), (392, 1024),
                          jnp.float32).astype(jnp.bfloat16)
    r = jax.random.normal(jax.random.fold_in(root, 21), (392, 1024),
                          jnp.float32).astype(jnp.bfloat16)
    got = matmul_bn_act(a, pb["w3"], rb["bn3_s"], rb["bn3_b"], residual=r, relu=True)
    want = jnp.maximum(
        jnp.dot(a.astype(jnp.float32), pb["w3"].astype(jnp.float32),
                precision=jax.lax.Precision.HIGHEST) * rb["bn3_s"] + rb["bn3_b"]
        + r.astype(jnp.float32), 0.0)
    err = _max_rel_err(got, want)
    assert err < 5e-2, f"fused matmul check failed: rel err {err}"

    print("KERNEL_OK")
</pallas_src>

<mosaic_0001>
module attributes {stable_mosaic.version = 11 : i64} {
  func.func @kernel(%arg0: i32, %arg1: i32, %arg2: memref<3584x147xbf16, #tpu.memory_space<vmem>>, %arg3: memref<147x64xbf16, #tpu.memory_space<vmem>>, %arg4: memref<1x64xf32, #tpu.memory_space<vmem>>, %arg5: memref<1x64xf32, #tpu.memory_space<vmem>>, %arg6: memref<3584x64xbf16, #tpu.memory_space<vmem>>) attributes {dimension_semantics = [#tpu.dimension_semantics<parallel>, #tpu.dimension_semantics<parallel>], iteration_bounds = array<i64: 7, 1>, scalar_prefetch = 0 : i64, scratch_operands = 0 : i64, tpu.core_type = #tpu.core_type<tc>, window_params = [{transform_indices = @transform_0, window_bounds = array<i64: 3584, 147>}, {transform_indices = @transform_1, window_bounds = array<i64: 147, 64>}, {transform_indices = @transform_2, window_bounds = array<i64: 1, 64>}, {transform_indices = @transform_3, window_bounds = array<i64: 1, 64>}, {transform_indices = @transform_4, window_bounds = array<i64: 3584, 64>}]} {
    %c0 = arith.constant 0 : index
    %c0_0 = arith.constant 0 : index
    %0 = vector.load %arg2[%c0, %c0_0] : memref<3584x147xbf16, #tpu.memory_space<vmem>>, vector<3584x147xbf16>
    %c0_1 = arith.constant 0 : index
    %c0_2 = arith.constant 0 : index
    %1 = vector.load %arg3[%c0_1, %c0_2] : memref<147x64xbf16, #tpu.memory_space<vmem>>, vector<147x64xbf16>
    %cst = arith.constant dense<0.000000e+00> : vector<3584x64xf32>
    %2 = tpu.matmul %0, %1, %cst {dimension_numbers = #tpu.dot_dimension_numbers<[1], [0], [0], [1], [0, 0, 1, 1], [], []>} : vector<3584x147xbf16>, vector<147x64xbf16>, vector<3584x64xf32> -> vector<3584x64xf32>
    %c0_3 = arith.constant 0 : index
    %c0_4 = arith.constant 0 : index
    %3 = vector.load %arg4[%c0_3, %c0_4] : memref<1x64xf32, #tpu.memory_space<vmem>>, vector<1x64xf32>
    %4 = vector.broadcast %3 : vector<1x64xf32> to vector<3584x64xf32>
    %5 = arith.mulf %2, %4 : vector<3584x64xf32>
    %c0_5 = arith.constant 0 : index
    %c0_6 = arith.constant 0 : index
    %6 = vector.load %arg5[%c0_5, %c0_6] : memref<1x64xf32, #tpu.memory_space<vmem>>, vector<1x64xf32>
    %7 = vector.broadcast %6 : vector<1x64xf32> to vector<3584x64xf32>
    %8 = arith.addf %5, %7 : vector<3584x64xf32>
    %cst_7 = arith.constant 0.000000e+00 : f32
    %9 = vector.broadcast %cst_7 : f32 to vector<3584x64xf32>
    %10 = arith.maximumf %8, %9 : vector<3584x64xf32>
    %11 = arith.truncf %10 : vector<3584x64xf32> to vector<3584x64xbf16>
    %c0_8 = arith.constant 0 : index
    %c0_9 = arith.constant 0 : index
    %12 = vector.load %arg6[%c0_8, %c0_9] : memref<3584x64xbf16, #tpu.memory_space<vmem>>, vector<3584x64xbf16>
    tpu.vector_store %arg6[%c0_8, %c0_9], %11 {strides = array<i32>} : memref<3584x64xbf16, #tpu.memory_space<vmem>>, vector<3584x64xbf16>,
    return
  }
  func.func @transform_0(%arg0: i32, %arg1: i32) -> (i32, i32) {
    %c0_i32 = arith.constant 0 : i32
    %c0_i32_0 = arith.constant 0 : i32
    return %arg0, %c0_i32 : i32, i32
  }
  func.func @transform_1(%arg0: i32, %arg1: i32) -> (i32, i32) {
    %c0_i32 = arith.constant 0 : i32
    %c0_i32_0 = arith.constant 0 : i32
    return %c0_i32, %arg1 : i32, i32
  }
  func.func @transform_2(%arg0: i32, %arg1: i32) -> (i32, i32) {
    %c0_i32 = arith.constant 0 : i32
    %c0_i32_0 = arith.constant 0 : i32
    return %c0_i32, %arg1 : i32, i32
  }
  func.func @transform_3(%arg0: i32, %arg1: i32) -> (i32, i32) {
    %c0_i32 = arith.constant 0 : i32
    %c0_i32_0 = arith.constant 0 : i32
    return %c0_i32, %arg1 : i32, i32
  }
  func.func @transform_4(%arg0: i32, %arg1: i32) -> (i32, i32) {
    %c0_i32 = arith.constant 0 : i32
    return %arg0, %arg1 : i32, i32
  }
}

</mosaic_0001>

<llo_original>
// kernel: matmul_bn_act.1
$region0: #{matmul_bn_act.1}
  #allocation0 [shape = 'u32[]', space=smem, size = 0x4, offset = 0x4, fixed_abs, tag = 'smem constant byte address 0x4 - core index']
  #allocation1 [shape = 'u32[144,128]{1,0:T(1,128)}', space=vmem, size = 0x12000, scoped, tag = 'internal scratch']
  %s0 = inlined_call_operand.vmem [shape: bf16[25088,147], index: 0, kind: input, shape index: {}]
  %s1 = inlined_call_operand.vmem [shape: bf16[147,64], index: 1, kind: input, shape index: {}]
  %s2 = inlined_call_operand.vmem [shape: f32[1,64], index: 2, kind: input, shape index: {}]
  %s3 = inlined_call_operand.vmem [shape: f32[1,64], index: 3, kind: input, shape index: {}]
  %s4 = inlined_call_operand.hbm [shape: bf16[25088,64], index: 4, kind: output, shape index: {}]
  %s5 = sld [smem:[#allocation0]]
  $region49: #{matmul_bn_act.1} parent=0
    _
  %s7 = ssub.s32 1, %s5
  %s8 = scalar_select 0, %s7, %s5
  $region1: #{matmul_bn_act.1} parent=0
    #allocation2 [shape = 'u8[1835008]{0}', space=vmem, size = 0x1c0000, scoped, tag = 'output window, operand 0']
    #allocation3 [shape = 's32[2]{0}', space=sflag, size = 0x8, scoped, tag = 'scoped memory for matmul_bn_act.1']
    %9 = vsyncpa [#allocation3], 0
    %s10 = scalar_lea.sflag [#allocation3], 1
    %11 = vsyncpa %s10, 0
    loop: start=0, step=1, limit=9
    $region2: #{matmul_bn_act.1} parent=1 // loop_pre_header
      _
    $region3: #{matmul_bn_act.1} parent=1 // loop_header
      %s13 = sphi 0, %s17
      %p14 = scmp.ge.s32.totalorder %s13, 9
      %s20 = sphi 0, %s32
      %s21 = sphi 0, %s28
      %s22 = sphi 0, %s20
      %s23 = sphi 0, %s21
      %s24 = sphi 0, %s22
      %s25 = sphi 0, %s23
      %s35 = sphi 0, %s37
      %s38 = sphi 0, %s35
      %s39 = sphi 0, %s38
      %s55 = sphi 0, %s39
      %s61 = sphi 0, %s63
      %s64 = sphi 0, %s61
      %s65 = sphi 0, %s64
      %s81 = sphi 0, %s65
      %s87 = sphi 0, %s89
      %s90 = sphi 0, %s87
      %s91 = sphi 0, %s90
      %s107 = sphi 0, %s91
      %s113 = sphi 0, %s115
      %s116 = sphi 0, %s113
      %s117 = sphi 0, %s116
      %s133 = sphi 0, %s117
      %s141 = sphi 0, %s143
      %s144 = sphi 0, %s141
      %s145 = sphi 0, %s144
      %s161 = sphi 0, %s145
    $region4: #{matmul_bn_act.1} parent=1 // loop_header_branch
      %16 = sbr.rel (%p14) target = $region8
    $region5: #{matmul_bn_act.1} parent=1 // loop_body
      %s18 = ssub.s32 %s13, 1
      %s19 = ssub.s32 %s13, 2
      %s26 = sadd.s32 1, %s21
      %p27 = scmp.ge.s32.totalorder %s26, 1
      %s28 = scalar_select %p27, 0, %s26
      %s29 = sadd.s32 1, %s20
      %s30 = scalar_select %p27, %s29, %s20
      %p31 = scmp.ge.s32.totalorder %s30, 7
      %s32 = scalar_select %p31, 0, %s30
      %s33 = ssub.s32 %s20, %s32
      %p34 = scmp.eq.s32.totalorder %s33, 0
      %s36 = sadd.s32 %s35, 1
      %s37 = scalar_select %p34, %s35, %s36
      %p40 = pneg %p34
      %p41 = scmp.eq.s32.totalorder %s13, 6
      %p42 = por %p40, %p41
      %p43 = scmp.ne.s32.totalorder %s35, %s38
      %p44 = scmp.eq.s32.totalorder %s13, 0
      %p45 = por %p43, %p44
      %p46 = scmp.ne.s32.totalorder %s35, %s38
      %p47 = scmp.eq.s32.totalorder %s18, 6
      %p48 = por %p46, %p47
      %p49 = scmp.ne.s32.totalorder %s38, %s39
      %p50 = scmp.eq.s32.totalorder %s18, 0
      %p51 = por %p49, %p50
      %p52 = scmp.ne.s32.totalorder %s38, %s39
      %p53 = scmp.eq.s32.totalorder %s19, 6
      %p54 = por %p52, %p53
      %p56 = scmp.ne.s32.totalorder %s39, %s55
      %p57 = scmp.eq.s32.totalorder %s19, 0
      %p58 = por %p56, %p57
      %s59 = ssub.s32 %s21, %s28
      %p60 = scmp.eq.s32.totalorder %s59, 0
      %s62 = sadd.s32 %s61, 1
      %s63 = scalar_select %p60, %s61, %s62
      %p66 = pneg %p60
      %p67 = scmp.eq.s32.totalorder %s13, 6
      %p68 = por %p66, %p67
      %p69 = scmp.ne.s32.totalorder %s61, %s64
      %p70 = scmp.eq.s32.totalorder %s13, 0
      %p71 = por %p69, %p70
      %p72 = scmp.ne.s32.totalorder %s61, %s64
      %p73 = scmp.eq.s32.totalorder %s18, 6
      %p74 = por %p72, %p73
      %p75 = scmp.ne.s32.totalorder %s64, %s65
      %p76 = scmp.eq.s32.totalorder %s18, 0
      %p77 = por %p75, %p76
      %p78 = scmp.ne.s32.totalorder %s64, %s65
      %p79 = scmp.eq.s32.totalorder %s19, 6
      %p80 = por %p78, %p79
      %p82 = scmp.ne.s32.totalorder %s65, %s81
      %p83 = scmp.eq.s32.totalorder %s19, 0
      %p84 = por %p82, %p83
      %s85 = ssub.s32 %s21, %s28
      %p86 = scmp.eq.s32.totalorder %s85, 0
      %s88 = sadd.s32 %s87, 1
      %s89 = scalar_select %p86, %s87, %s88
      %p92 = pneg %p86
      %p93 = scmp.eq.s32.totalorder %s13, 6
      %p94 = por %p92, %p93
      %p95 = scmp.ne.s32.totalorder %s87, %s90
      %p96 = scmp.eq.s32.totalorder %s13, 0
      %p97 = por %p95, %p96
      %p98 = scmp.ne.s32.totalorder %s87, %s90
      %p99 = scmp.eq.s32.totalorder %s18, 6
      %p100 = por %p98, %p99
      %p101 = scmp.ne.s32.totalorder %s90, %s91
      %p102 = scmp.eq.s32.totalorder %s18, 0
      %p103 = por %p101, %p102
      %p104 = scmp.ne.s32.totalorder %s90, %s91
      %p105 = scmp.eq.s32.totalorder %s19, 6
      %p106 = por %p104, %p105
      %p108 = scmp.ne.s32.totalorder %s91, %s107
      %p109 = scmp.eq.s32.totalorder %s19, 0
      %p110 = por %p108, %p109
      %s111 = ssub.s32 %s21, %s28
      %p112 = scmp.eq.s32.totalorder %s111, 0
      %s114 = sadd.s32 %s113, 1
      %s115 = scalar_select %p112, %s113, %s114
      %p118 = pneg %p112
      %p119 = scmp.eq.s32.totalorder %s13, 6
      %p120 = por %p118, %p119
      %p121 = scmp.ne.s32.totalorder %s113, %s116
      %p122 = scmp.eq.s32.totalorder %s13, 0
      %p123 = por %p121, %p122
      %p124 = scmp.ne.s32.totalorder %s113, %s116
      %p125 = scmp.eq.s32.totalorder %s18, 6
      %p126 = por %p124, %p125
      %p127 = scmp.ne.s32.totalorder %s116, %s117
      %p128 = scmp.eq.s32.totalorder %s18, 0
      %p129 = por %p127, %p128
      %p130 = scmp.ne.s32.totalorder %s116, %s117
      %p131 = scmp.eq.s32.totalorder %s19, 6
      %p132 = por %p130, %p131
      %p134 = scmp.ne.s32.totalorder %s117, %s133
      %p135 = scmp.eq.s32.totalorder %s19, 0
      %p136 = por %p134, %p135
      %s137 = ssub.s32 %s20, %s32
      %s138 = ssub.s32 %s21, %s28
      %s139 = sor.u32 %s137, %s138
      %p140 = scmp.eq.s32.totalorder %s139, 0
      %s142 = sadd.s32 %s141, 1
      %s143 = scalar_select %p140, %s141, %s142
      %p146 = pneg %p140
      %p147 = scmp.eq.s32.totalorder %s13, 6
      %p148 = por %p146, %p147
      %p149 = scmp.ne.s32.totalorder %s141, %s144
      %p150 = scmp.eq.s32.totalorder %s13, 0
      %p151 = por %p149, %p150
      %p152 = scmp.ne.s32.totalorder %s141, %s144
      %p153 = scmp.eq.s32.totalorder %s18, 6
      %p154 = por %p152, %p153
      %p155 = scmp.ne.s32.totalorder %s144, %s145
      %p156 = scmp.eq.s32.totalorder %s18, 0
      %p157 = por %p155, %p156
      %p158 = scmp.ne.s32.totalorder %s144, %s145
      %p159 = scmp.eq.s32.totalorder %s19, 6
      %p160 = por %p158, %p159
      %p162 = scmp.ne.s32.totalorder %s145, %s161
      %p163 = scmp.eq.s32.totalorder %s19, 0
      %p164 = por %p162, %p163
      %p165 = scmp.le.s32.totalorder 1, %s13
      %p166 = scmp.lt.s32.totalorder %s13, 8
      %p167 = pnand %p165, %p166
      %p168 = pneg %p167
      // Predicated region
      $region9: #{matmul_bn_act.1} parent=5 // pred_check
        _
      $region10: #{matmul_bn_act.1} parent=5 // pred_check_branch
        %170 = sbr.rel (%p167) target = $region12
      $region11: #{matmul_bn_act.1} parent=5 // pred_region
        %s171 = ssub.s32 %s13, 1
        // Predicated region
        $region13: #{matmul_bn_act.1} parent=11 // pred_check
          %p172 = pneg %p77
        $region14: #{matmul_bn_act.1} parent=11 // pred_check_branch
          %174 = sbr.rel (%p172) target = $region16
        $region15: #{matmul_bn_act.1} parent=11 // pred_region
          %p175 = scmp.lt.s32.totalorder %s23, 0
          %s176 = scalar_select %p175, %s23, 0
          %s177 = smul.addr %s176, 4
          %s178 = scalar_lea.vmem %s1, %s177
        $region16: #{matmul_bn_act.1} parent=11 // pred_fallthru
          _
        // Predicated region
        $region17: #{matmul_bn_act.1} parent=11 // pred_check
          %p179 = pneg %p103
        $region18: #{matmul_bn_act.1} parent=11 // pred_check_branch
          %181 = sbr.rel (%p179) target = $region20
        $region19: #{matmul_bn_act.1} parent=11 // pred_region
          %p182 = scmp.lt.s32.totalorder %s23, 0
          %s183 = scalar_select %p182, %s23, 0
          %s184 = scalar_lea.vmem %s2, %s183
        $region20: #{matmul_bn_act.1} parent=11 // pred_fallthru
          _
        // Predicated region
        $region21: #{matmul_bn_act.1} parent=11 // pred_check
          %p185 = pneg %p129
        $region22: #{matmul_bn_act.1} parent=11 // pred_check_branch
          %187 = sbr.rel (%p185) target = $region24
        $region23: #{matmul_bn_act.1} parent=11 // pred_region
          %p188 = scmp.lt.s32.totalorder %s23, 0
          %s189 = scalar_select %p188, %s23, 0
          %s190 = scalar_lea.vmem %s3, %s189
        $region24: #{matmul_bn_act.1} parent=11 // pred_fallthru
          _
      $region12: #{matmul_bn_act.1} parent=5 // pred_fallthru
        _
      %p191 = scmp.lt.s32.totalorder %s13, 7
      // Predicated region
      $region25: #{matmul_bn_act.1} parent=5 // pred_check
        %p192 = pneg %p191
      $region26: #{matmul_bn_act.1} parent=5 // pred_check_branch
        %194 = sbr.rel (%p192) target = $region28
      $region27: #{matmul_bn_act.1} parent=5 // pred_region
        // Predicated region
        $region29: #{matmul_bn_act.1} parent=27 // pred_check
          %p195 = pneg %p45
        $region30: #{matmul_bn_act.1} parent=27 // pred_check_branch
          %197 = sbr.rel (%p195) target = $region32
        $region31: #{matmul_bn_act.1} parent=27 // pred_region
          %s198 = smul.u32 448, %s20
          %p199 = scmp.lt.s32.totalorder %s198, 3135
          %s200 = scalar_select %p199, %s198, 3135
          %s201 = smul.addr %s200, 2
          %s202 = smul.addr %s201, 4
          %s203 = scalar_lea.vmem %s0, %s202
          %s204 = smul.u32 448, %s20
        $region32: #{matmul_bn_act.1} parent=27 // pred_fallthru
          _
      $region28: #{matmul_bn_act.1} parent=5 // pred_fallthru
        _
      %p205 = scmp.le.s32.totalorder 1, %s13
      %p206 = scmp.lt.s32.totalorder %s13, 8
      %p207 = pnand %p205, %p206
      %p208 = pneg %p207
      // Predicated region
      $region33: #{matmul_bn_act.1} parent=5 // pred_check
        _
      $region34: #{matmul_bn_act.1} parent=5 // pred_check_branch
        %210 = sbr.rel (%p207) target = $region36
      $region35: #{matmul_bn_act.1} parent=5 // pred_region
        %s211 = ssub.s32 %s13, 1
        %s212 = smul.u32 448, %s22
        %p213 = scmp.lt.s32.totalorder %s212, 3135
        %s214 = scalar_select %p213, %s212, 3135
        %s215 = smul.addr %s214, 2
        %s216 = smul.addr %s215, 4
        %s217 = scalar_lea.vmem %s0, %s216
        %p218 = pneg %p51
        %p219 = pneg %p48
        %p220 = scmp.lt.s32.totalorder %s23, 0
        %s221 = scalar_select %p220, %s23, 0
        %s222 = smul.addr %s221, 4
        %s223 = scalar_lea.vmem %s1, %s222
        %p224 = pneg %p77
        %p225 = pneg %p74
        %p226 = scmp.lt.s32.totalorder %s23, 0
        %s227 = scalar_select %p226, %s23, 0
        %s228 = scalar_lea.vmem %s2, %s227
        %p229 = pneg %p103
        %p230 = pneg %p100
        %p231 = scmp.lt.s32.totalorder %s23, 0
        %s232 = scalar_select %p231, %s23, 0
        %s233 = scalar_lea.vmem %s3, %s232
        %p234 = pneg %p129
        %p235 = pneg %p126
        %p236 = pneg %p157
        %p237 = pneg %p154
        %s238 = sand.u32 %s144, 1
        %s239 = scalar_lea.sflag [#allocation3], %s238
        %s240 = sand.u32 %s144, 1
        %s241 = smul.addr %s240, 1792
        %s242 = scalar_lea.vmem [#allocation2], %s241
        %s243 = smul.u32 448, %s22
        %p244 = scmp.lt.s32.totalorder %s243, 3135
        %s245 = scalar_select %p244, %s243, 3135
        %s246 = smul.addr %s245, 2
        %s247 = smul.addr %s246, 4
        %s248 = scalar_lea.vmem %s0, %s247
        %s249 = smul.u32 448, %s22
        %p250 = scmp.lt.s32.totalorder %s23, 0
        %s251 = scalar_select %p250, %s23, 0
        %s252 = smul.addr %s251, 4
        %s253 = scalar_lea.vmem %s1, %s252
        %p254 = scmp.lt.s32.totalorder %s23, 0
        %s255 = scalar_select %p254, %s23, 0
        %s256 = scalar_lea.vmem %s2, %s255
        %p257 = scmp.lt.s32.totalorder %s23, 0
        %s258 = scalar_select %p257, %s23, 0
        %s259 = scalar_lea.vmem %s3, %s258
        %s260 = smul.u32 448, %s22
        %v262 = vld [vmem:[%s248] sm:$0xff]
        %v263 = vld [vmem:[%s248 + $0x8] sm:$0xff]
        %v264 = vld [vmem:[%s248 + $0x10] sm:$0xff]
        %v265 = vld [vmem:[%s248 + $0x18] sm:$0xff]
        %v266 = vld [vmem:[%s248 + $0x20] sm:$0xff]
        %v267 = vld [vmem:[%s248 + $0x28] sm:$0xff]
        %v268 = vld [vmem:[%s248 + $0x30] sm:$0xff]
        %v269 = vld [vmem:[%s248 + $0x38] sm:$0xff]
        %v270 = vld [vmem:[%s248 + $0x40] sm:$0xff]
        %v271 = vld [vmem:[%s248 + $0x48] sm:$0xff]
        %v272 = vld [vmem:[%s248 + $0x50] sm:$0xff]
        %v273 = vld [vmem:[%s248 + $0x58] sm:$0xff]
        %v274 = vld [vmem:[%s248 + $0x60] sm:$0xff]
        %v275 = vld [vmem:[%s248 + $0x68] sm:$0xff]
        %v276 = vld [vmem:[%s248 + $0x70] sm:$0xff]
        %v277 = vld [vmem:[%s248 + $0x78] sm:$0xff]
        %v278 = vld [vmem:[%s248 + $0x80] sm:$0xff]
        %v279 = vld [vmem:[%s248 + $0x88] sm:$0xff]
        %v280 = vld [vmem:[%s248 + $0x90] sm:$0xff]
        %v281 = vld [vmem:[%s248 + $0x98] sm:$0xff]
        %v282 = vld [vmem:[%s248 + $0xa0] sm:$0xff]
        %v283 = vld [vmem:[%s248 + $0xa8] sm:$0xff]
        %v284 = vld [vmem:[%s248 + $0xb0] sm:$0xff]
        %v285 = vld [vmem:[%s248 + $0xb8] sm:$0xff]
        %v286 = vld [vmem:[%s248 + $0xc0] sm:$0xff]
        %v287 = vld [vmem:[%s248 + $0xc8] sm:$0xff]
        %v288 = vld [vmem:[%s248 + $0xd0] sm:$0xff]
        %v289 = vld [vmem:[%s248 + $0xd8] sm:$0xff]
        %v290 = vld [vmem:[%s248 + $0xe0] sm:$0xff]
        %v291 = vld [vmem:[%s248 + $0xe8] sm:$0xff]
        %v292 = vld [vmem:[%s248 + $0xf0] sm:$0xff]
        %v293 = vld [vmem:[%s248 + $0xf8] sm:$0xff]
        %v294 = vld [vmem:[%s248 + $0x100] sm:$0xff]
        %v295 = vld [vmem:[%s248 + $0x108] sm:$0xff]
        %v296 = vld [vmem:[%s248 + $0x110] sm:$0xff]
        %v297 = vld [vmem:[%s248 + $0x118] sm:$0xff]
        %v298 = vld [vmem:[%s248 + $0x120] sm:$0xff]
        %v299 = vld [vmem:[%s248 + $0x128] sm:$0xff]
        %v300 = vld [vmem:[%s248 + $0x130] sm:$0xff]
        %v301 = vld [vmem:[%s248 + $0x138] sm:$0xff]
        %v302 = vld [vmem:[%s248 + $0x140] sm:$0xff]
        %v303 = vld [vmem:[%s248 + $0x148] sm:$0xff]
        %v304 = vld [vmem:[%s248 + $0x150] sm:$0xff]
        %v305 = vld [vmem:[%s248 + $0x158] sm:$0xff]
        %v306 = vld [vmem:[%s248 + $0x160] sm:$0xff]
        %v307 = vld [vmem:[%s248 + $0x168] sm:$0xff]
        %v308 = vld [vmem:[%s248 + $0x170] sm:$0xff]
        %v309 = vld [vmem:[%s248 + $0x178] sm:$0xff]
        %v310 = vld [vmem:[%s248 + $0x180] sm:$0xff]
        %v311 = vld [vmem:[%s248 + $0x188] sm:$0xff]
        %v312 = vld [vmem:[%s248 + $0x190] sm:$0xff]
        %v313 = vld [vmem:[%s248 + $0x198] sm:$0xff]
        %v314 = vld [vmem:[%s248 + $0x1a0] sm:$0xff]
        %v315 = vld [vmem:[%s248 + $0x1a8] sm:$0xff]
        %v316 = vld [vmem:[%s248 + $0x1b0] sm:$0xff]
        %v317 = vld [vmem:[%s248 + $0x1b8] sm:$0xff]
        %v318 = vld [vmem:[%s248 + $0x1c0] sm:$0xff]
        %v319 = vld [vmem:[%s248 + $0x1c8] sm:$0xff]
        %v320 = vld [vmem:[%s248 + $0x1d0] sm:$0xff]
        %v321 = vld [vmem:[%s248 + $0x1d8] sm:$0xff]
        %v322 = vld [vmem:[%s248 + $0x1e0] sm:$0xff]
        %v323 = vld [vmem:[%s248 + $0x1e8] sm:$0xff]
        %v324 = vld [vmem:[%s248 + $0x1f0] sm:$0xff]
        %v325 = vld [vmem:[%s248 + $0x1f8] sm:$0xff]
        %v326 = vld [vmem:[%s248 + $0x200] sm:$0xff]
        %v327 = vld [vmem:[%s248 + $0x208] sm:$0xff]
        %v328 = vld [vmem:[%s248 + $0x210] sm:$0xff]
        %v329 = vld [vmem:[%s248 + $0x218] sm:$0xff]
        %v330 = vld [vmem:[%s248 + $0x220] sm:$0xff]
        %v331 = vld [vmem:[%s248 + $0x228] sm:$0xff]
        %v332 = vld [vmem:[%s248 + $0x230] sm:$0xff]
        %v333 = vld [vmem:[%s248 + $0x238] sm:$0xff]
        %v334 = vld [vmem:[%s248 + $0x240] sm:$0xff]
        %v335 = vld [vmem:[%s248 + $0x248] sm:$0xff]
        %v336 = vld [vmem:[%s248 + $0x250] sm:$0xff]
        %v337 = vld [vmem:[%s248 + $0x258] sm:$0xff]
        %v338 = vld [vmem:[%s248 + $0x260] sm:$0xff]
        %v339 = vld [vmem:[%s248 + $0x268] sm:$0xff]
        %v340 = vld [vmem:[%s248 + $0x270] sm:$0xff]
        %v341 = vld [vmem:[%s248 + $0x278] sm:$0xff]
        %v342 = vld [vmem:[%s248 + $0x280] sm:$0xff]
        %v343 = vld [vmem:[%s248 + $0x288] sm:$0xff]
        %v344 = vld [vmem:[%s248 + $0x290] sm:$0xff]
        %v345 = vld [vmem:[%s248 + $0x298] sm:$0xff]
        %v346 = vld [vmem:[%s248 + $0x2a0] sm:$0xff]
        %v347 = vld [vmem:[%s248 + $0x2a8] sm:$0xff]
        %v348 = vld [vmem:[%s248 + $0x2b0] sm:$0xff]
        %v349 = vld [vmem:[%s248 + $0x2b8] sm:$0xff]
        %v350 = vld [vmem:[%s248 + $0x2c0] sm:$0xff]
        %v351 = vld [vmem:[%s248 + $0x2c8] sm:$0xff]
        %v352 = vld [vmem:[%s248 + $0x2d0] sm:$0xff]
        %v353 = vld [vmem:[%s248 + $0x2d8] sm:$0xff]
        %v354 = vld [vmem:[%s248 + $0x2e0] sm:$0xff]
        %v355 = vld [vmem:[%s248 + $0x2e8] sm:$0xff]
        %v356 = vld [vmem:[%s248 + $0x2f0] sm:$0xff]
        %v357 = vld [vmem:[%s248 + $0x2f8] sm:$0xff]
        %v358 = vld [vmem:[%s248 + $0x300] sm:$0xff]
        %v359 = vld [vmem:[%s248 + $0x308] sm:$0xff]
        %v360 = vld [vmem:[%s248 + $0x310] sm:$0xff]
        %v361 = vld [vmem:[%s248 + $0x318] sm:$0xff]
        %v362 = vld [vmem:[%s248 + $0x320] sm:$0xff]
        %v363 = vld [vmem:[%s248 + $0x328] sm:$0xff]
        %v364 = vld [vmem:[%s248 + $0x330] sm:$0xff]
        %v365 = vld [vmem:[%s248 + $0x338] sm:$0xff]
        %v366 = vld [vmem:[%s248 + $0x340] sm:$0xff]
        %v367 = vld [vmem:[%s248 + $0x348] sm:$0xff]
        %v368 = vld [vmem:[%s248 + $0x350] sm:$0xff]
        %v369 = vld [vmem:[%s248 + $0x358] sm:$0xff]
        %v370 = vld [vmem:[%s248 + $0x360] sm:$0xff]
        %v371 = vld [vmem:[%s248 + $0x368] sm:$0xff]
        %v372 = vld [vmem:[%s248 + $0x370] sm:$0xff]
        %v373 = vld [vmem:[%s248 + $0x378] sm:$0xff]
        %v374 = vld [vmem:[%s248 + $0x380] sm:$0xff]
        %v375 = vld [vmem:[%s248 + $0x388] sm:$0xff]
        %v376 = vld [vmem:[%s248 + $0x390] sm:$0xff]
        %v377 = vld [vmem:[%s248 + $0x398] sm:$0xff]
        %v378 = vld [vmem:[%s248 + $0x3a0] sm:$0xff]
        %v379 = vld [vmem:[%s248 + $0x3a8] sm:$0xff]
        %v380 = vld [vmem:[%s248 + $0x3b0] sm:$0xff]
        %v381 = vld [vmem:[%s248 + $0x3b8] sm:$0xff]
        %v382 = vld [vmem:[%s248 + $0x3c0] sm:$0xff]
        %v383 = vld [vmem:[%s248 + $0x3c8] sm:$0xff]
        %v384 = vld [vmem:[%s248 + $0x3d0] sm:$0xff]
        %v385 = vld [vmem:[%s248 + $0x3d8] sm:$0xff]
        %v386 = vld [vmem:[%s248 + $0x3e0] sm:$0xff]
        %v387 = vld [vmem:[%s248 + $0x3e8] sm:$0xff]
        %v388 = vld [vmem:[%s248 + $0x3f0] sm:$0xff]
        %v389 = vld [vmem:[%s248 + $0x3f8] sm:$0xff]
        %v390 = vld [vmem:[%s248 + $0x400] sm:$0xff]
        %v391 = vld [vmem:[%s248 + $0x408] sm:$0xff]
        %v392 = vld [vmem:[%s248 + $0x410] sm:$0xff]
        %v393 = vld [vmem:[%s248 + $0x418] sm:$0xff]
        %v394 = vld [vmem:[%s248 + $0x420] sm:$0xff]
        %v395 = vld [vmem:[%s248 + $0x428] sm:$0xff]
        %v396 = vld [vmem:[%s248 + $0x430] sm:$0xff]
        %v397 = vld [vmem:[%s248 + $0x438] sm:$0xff]
        %v398 = vld [vmem:[%s248 + $0x440] sm:$0xff]
        %v399 = vld [vmem:[%s248 + $0x448] sm:$0xff]
        %v400 = vld [vmem:[%s248 + $0x450] sm:$0xff]
        %v401 = vld [vmem:[%s248 + $0x458] sm:$0xff]
        %v402 = vld [vmem:[%s248 + $0x460] sm:$0xff]
        %v403 = vld [vmem:[%s248 + $0x468] sm:$0xff]
        %v404 = vld [vmem:[%s248 + $0x470] sm:$0xff]
        %v405 = vld [vmem:[%s248 + $0x478] sm:$0xff]
        %v406 = vld [vmem:[%s248 + $0x480] sm:$0xff]
        %v407 = vld [vmem:[%s248 + $0x488] sm:$0xff]
        %v408 = vld [vmem:[%s248 + $0x490] sm:$0xff]
        %v409 = vld [vmem:[%s248 + $0x498] sm:$0xff]
        %v410 = vld [vmem:[%s248 + $0x4a0] sm:$0xff]
        %v411 = vld [vmem:[%s248 + $0x4a8] sm:$0xff]
        %v412 = vld [vmem:[%s248 + $0x4b0] sm:$0xff]
        %v413 = vld [vmem:[%s248 + $0x4b8] sm:$0xff]
        %v414 = vld [vmem:[%s248 + $0x4c0] sm:$0xff]
        %v415 = vld [vmem:[%s248 + $0x4c8] sm:$0xff]
        %v416 = vld [vmem:[%s248 + $0x4d0] sm:$0xff]
        %v417 = vld [vmem:[%s248 + $0x4d8] sm:$0xff]
        %v418 = vld [vmem:[%s248 + $0x4e0] sm:$0xff]
        %v419 = vld [vmem:[%s248 + $0x4e8] sm:$0xff]
        %v420 = vld [vmem:[%s248 + $0x4f0] sm:$0xff]
        %v421 = vld [vmem:[%s248 + $0x4f8] sm:$0xff]
        %v422 = vld [vmem:[%s248 + $0x500] sm:$0xff]
        %v423 = vld [vmem:[%s248 + $0x508] sm:$0xff]
        %v424 = vld [vmem:[%s248 + $0x510] sm:$0xff]
        %v425 = vld [vmem:[%s248 + $0x518] sm:$0xff]
        %v426 = vld [vmem:[%s248 + $0x520] sm:$0xff]
        %v427 = vld [vmem:[%s248 + $0x528] sm:$0xff]
        %v428 = vld [vmem:[%s248 + $0x530] sm:$0xff]
        %v429 = vld [vmem:[%s248 + $0x538] sm:$0xff]
        %v430 = vld [vmem:[%s248 + $0x540] sm:$0xff]
        %v431 = vld [vmem:[%s248 + $0x548] sm:$0xff]
        %v432 = vld [vmem:[%s248 + $0x550] sm:$0xff]
        %v433 = vld [vmem:[%s248 + $0x558] sm:$0xff]
        %v434 = vld [vmem:[%s248 + $0x560] sm:$0xff]
        %v435 = vld [vmem:[%s248 + $0x568] sm:$0xff]
        %v436 = vld [vmem:[%s248 + $0x570] sm:$0xff]
        %v437 = vld [vmem:[%s248 + $0x578] sm:$0xff]
        %v438 = vld [vmem:[%s248 + $0x580] sm:$0xff]
        %v439 = vld [vmem:[%s248 + $0x588] sm:$0xff]
        %v440 = vld [vmem:[%s248 + $0x590] sm:$0xff]
        %v441 = vld [vmem:[%s248 + $0x598] sm:$0xff]
        %v442 = vld [vmem:[%s248 + $0x5a0] sm:$0xff]
        %v443 = vld [vmem:[%s248 + $0x5a8] sm:$0xff]
        %v444 = vld [vmem:[%s248 + $0x5b0] sm:$0xff]
        %v445 = vld [vmem:[%s248 + $0x5b8] sm:$0xff]
        %v446 = vld [vmem:[%s248 + $0x5c0] sm:$0xff]
        %v447 = vld [vmem:[%s248 + $0x5c8] sm:$0xff]
        %v448 = vld [vmem:[%s248 + $0x5d0] sm:$0xff]
        %v449 = vld [vmem:[%s248 + $0x5d8] sm:$0xff]
        %v450 = vld [vmem:[%s248 + $0x5e0] sm:$0xff]
        %v451 = vld [vmem:[%s248 + $0x5e8] sm:$0xff]
        %v452 = vld [vmem:[%s248 + $0x5f0] sm:$0xff]
        %v453 = vld [vmem:[%s248 + $0x5f8] sm:$0xff]
        %v454 = vld [vmem:[%s248 + $0x600] sm:$0xff]
        %v455 = vld [vmem:[%s248 + $0x608] sm:$0xff]
        %v456 = vld [vmem:[%s248 + $0x610] sm:$0xff]
        %v457 = vld [vmem:[%s248 + $0x618] sm:$0xff]
        %v458 = vld [vmem:[%s248 + $0x620] sm:$0xff]
        %v459 = vld [vmem:[%s248 + $0x628] sm:$0xff]
        %v460 = vld [vmem:[%s248 + $0x630] sm:$0xff]
        %v461 = vld [vmem:[%s248 + $0x638] sm:$0xff]
        %v462 = vld [vmem:[%s248 + $0x640] sm:$0xff]
        %v463 = vld [vmem:[%s248 + $0x648] sm:$0xff]
        %v464 = vld [vmem:[%s248 + $0x650] sm:$0xff]
        %v465 = vld [vmem:[%s248 + $0x658] sm:$0xff]
        %v466 = vld [vmem:[%s248 + $0x660] sm:$0xff]
        %v467 = vld [vmem:[%s248 + $0x668] sm:$0xff]
        %v468 = vld [vmem:[%s248 + $0x670] sm:$0xff]
        %v469 = vld [vmem:[%s248 + $0x678] sm:$0xff]
        %v470 = vld [vmem:[%s248 + $0x680] sm:$0xff]
        %v471 = vld [vmem:[%s248 + $0x688] sm:$0xff]
        %v472 = vld [vmem:[%s248 + $0x690] sm:$0xff]
        %v473 = vld [vmem:[%s248 + $0x698] sm:$0xff]
        %v474 = vld [vmem:[%s248 + $0x6a0] sm:$0xff]
        %v475 = vld [vmem:[%s248 + $0x6a8] sm:$0xff]
        %v476 = vld [vmem:[%s248 + $0x6b0] sm:$0xff]
        %v477 = vld [vmem:[%s248 + $0x6b8] sm:$0xff]
        %v478 = vld [vmem:[%s248 + $0x6c0] sm:$0xff]
        %v479 = vld [vmem:[%s248 + $0x6c8] sm:$0xff]
        %v480 = vld [vmem:[%s248 + $0x6d0] sm:$0xff]
        %v481 = vld [vmem:[%s248 + $0x6d8] sm:$0xff]
        %v482 = vld [vmem:[%s248 + $0x6e0] sm:$0xff]
        %v483 = vld [vmem:[%s248 + $0x6e8] sm:$0xff]
        %v484 = vld [vmem:[%s248 + $0x6f0] sm:$0xff]
        %v485 = vld [vmem:[%s248 + $0x6f8] sm:$0xff]
        %v486 = vld [vmem:[%s248 + $0x700] sm:$0xff]
        %v487 = vld [vmem:[%s248 + $0x708] sm:$0xff]
        %v488 = vld [vmem:[%s248 + $0x710] sm:$0xff]
        %v489 = vld [vmem:[%s248 + $0x718] sm:$0xff]
        %v490 = vld [vmem:[%s248 + $0x720] sm:$0xff]
        %v491 = vld [vmem:[%s248 + $0x728] sm:$0xff]
        %v492 = vld [vmem:[%s248 + $0x730] sm:$0xff]
        %v493 = vld [vmem:[%s248 + $0x738] sm:$0xff]
        %v494 = vld [vmem:[%s248 + $0x740] sm:$0xff]
        %v495 = vld [vmem:[%s248 + $0x748] sm:$0xff]
        %v496 = vld [vmem:[%s248 + $0x750] sm:$0xff]
        %v497 = vld [vmem:[%s248 + $0x758] sm:$0xff]
        %v498 = vld [vmem:[%s248 + $0x760] sm:$0xff]
        %v499 = vld [vmem:[%s248 + $0x768] sm:$0xff]
        %v500 = vld [vmem:[%s248 + $0x770] sm:$0xff]
        %v501 = vld [vmem:[%s248 + $0x778] sm:$0xff]
        %v502 = vld [vmem:[%s248 + $0x780] sm:$0xff]
        %v503 = vld [vmem:[%s248 + $0x788] sm:$0xff]
        %v504 = vld [vmem:[%s248 + $0x790] sm:$0xff]
        %v505 = vld [vmem:[%s248 + $0x798] sm:$0xff]
        %v506 = vld [vmem:[%s248 + $0x7a0] sm:$0xff]
        %v507 = vld [vmem:[%s248 + $0x7a8] sm:$0xff]
        %v508 = vld [vmem:[%s248 + $0x7b0] sm:$0xff]
        %v509 = vld [vmem:[%s248 + $0x7b8] sm:$0xff]
        %v510 = vld [vmem:[%s248 + $0x7c0] sm:$0xff]
        %v511 = vld [vmem:[%s248 + $0x7c8] sm:$0xff]
        %v512 = vld [vmem:[%s248 + $0x7d0] sm:$0xff]
        %v513 = vld [vmem:[%s248 + $0x7d8] sm:$0xff]
        %v514 = vld [vmem:[%s248 + $0x7e0] sm:$0xff]
        %v515 = vld [vmem:[%s248 + $0x7e8] sm:$0xff]
        %v516 = vld [vmem:[%s248 + $0x7f0] sm:$0xff]
        %v517 = vld [vmem:[%s248 + $0x7f8] sm:$0xff]
        %v518 = vld [vmem:[%s248 + $0x800] sm:$0xff]
        %v519 = vld [vmem:[%s248 + $0x808] sm:$0xff]
        %v520 = vld [vmem:[%s248 + $0x810] sm:$0xff]
        %v521 = vld [vmem:[%s248 + $0x818] sm:$0xff]
        %v522 = vld [vmem:[%s248 + $0x820] sm:$0xff]
        %v523 = vld [vmem:[%s248 + $0x828] sm:$0xff]
        %v524 = vld [vmem:[%s248 + $0x830] sm:$0xff]
        %v525 = vld [vmem:[%s248 + $0x838] sm:$0xff]
        %v526 = vld [vmem:[%s248 + $0x840] sm:$0xff]
        %v527 = vld [vmem:[%s248 + $0x848] sm:$0xff]
        %v528 = vld [vmem:[%s248 + $0x850] sm:$0xff]
        %v529 = vld [vmem:[%s248 + $0x858] sm:$0xff]
        %v530 = vld [vmem:[%s248 + $0x860] sm:$0xff]
        %v531 = vld [vmem:[%s248 + $0x868] sm:$0xff]
        %v532 = vld [vmem:[%s248 + $0x870] sm:$0xff]
        %v533 = vld [vmem:[%s248 + $0x878] sm:$0xff]
        %v534 = vld [vmem:[%s248 + $0x880] sm:$0xff]
        %v535 = vld [vmem:[%s248 + $0x888] sm:$0xff]
        %v536 = vld [vmem:[%s248 + $0x890] sm:$0xff]
        %v537 = vld [vmem:[%s248 + $0x898] sm:$0xff]
        %v538 = vld [vmem:[%s248 + $0x8a0] sm:$0xff]
        %v539 = vld [vmem:[%s248 + $0x8a8] sm:$0xff]
        %v540 = vld [vmem:[%s248 + $0x8b0] sm:$0xff]
        %v541 = vld [vmem:[%s248 + $0x8b8] sm:$0xff]
        %v542 = vld [vmem:[%s248 + $0x8c0] sm:$0xff]
        %v543 = vld [vmem:[%s248 + $0x8c8] sm:$0xff]
        %v544 = vld [vmem:[%s248 + $0x8d0] sm:$0xff]
        %v545 = vld [vmem:[%s248 + $0x8d8] sm:$0xff]
        %v546 = vld [vmem:[%s248 + $0x8e0] sm:$0xff]
        %v547 = vld [vmem:[%s248 + $0x8e8] sm:$0xff]
        %v548 = vld [vmem:[%s248 + $0x8f0] sm:$0xff]
        %v549 = vld [vmem:[%s248 + $0x8f8] sm:$0xff]
        %v550 = vld [vmem:[%s248 + $0x900] sm:$0xff]
        %v551 = vld [vmem:[%s248 + $0x908] sm:$0xff]
        %v552 = vld [vmem:[%s248 + $0x910] sm:$0xff]
        %v553 = vld [vmem:[%s248 + $0x918] sm:$0xff]
        %v554 = vld [vmem:[%s248 + $0x920] sm:$0xff]
        %v555 = vld [vmem:[%s248 + $0x928] sm:$0xff]
        %v556 = vld [vmem:[%s248 + $0x930] sm:$0xff]
        %v557 = vld [vmem:[%s248 + $0x938] sm:$0xff]
        %v558 = vld [vmem:[%s248 + $0x940] sm:$0xff]
        %v559 = vld [vmem:[%s248 + $0x948] sm:$0xff]
        %v560 = vld [vmem:[%s248 + $0x950] sm:$0xff]
        %v561 = vld [vmem:[%s248 + $0x958] sm:$0xff]
        %v562 = vld [vmem:[%s248 + $0x960] sm:$0xff]
        %v563 = vld [vmem:[%s248 + $0x968] sm:$0xff]
        %v564 = vld [vmem:[%s248 + $0x970] sm:$0xff]
        %v565 = vld [vmem:[%s248 + $0x978] sm:$0xff]
        %v566 = vld [vmem:[%s248 + $0x980] sm:$0xff]
        %v567 = vld [vmem:[%s248 + $0x988] sm:$0xff]
        %v568 = vld [vmem:[%s248 + $0x990] sm:$0xff]
        %v569 = vld [vmem:[%s248 + $0x998] sm:$0xff]
        %v570 = vld [vmem:[%s248 + $0x9a0] sm:$0xff]
        %v571 = vld [vmem:[%s248 + $0x9a8] sm:$0xff]
        %v572 = vld [vmem:[%s248 + $0x9b0] sm:$0xff]
        %v573 = vld [vmem:[%s248 + $0x9b8] sm:$0xff]
        %v574 = vld [vmem:[%s248 + $0x9c0] sm:$0xff]
        %v575 = vld [vmem:[%s248 + $0x9c8] sm:$0xff]
        %v576 = vld [vmem:[%s248 + $0x9d0] sm:$0xff]
        %v577 = vld [vmem:[%s248 + $0x9d8] sm:$0xff]
        %v578 = vld [vmem:[%s248 + $0x9e0] sm:$0xff]
        %v579 = vld [vmem:[%s248 + $0x9e8] sm:$0xff]
        %v580 = vld [vmem:[%s248 + $0x9f0] sm:$0xff]
        %v581 = vld [vmem:[%s248 + $0x9f8] sm:$0xff]
        %v582 = vld [vmem:[%s248 + $0xa00] sm:$0xff]
        %v583 = vld [vmem:[%s248 + $0xa08] sm:$0xff]
        %v584 = vld [vmem:[%s248 + $0xa10] sm:$0xff]
        %v585 = vld [vmem:[%s248 + $0xa18] sm:$0xff]
        %v586 = vld [vmem:[%s248 + $0xa20] sm:$0xff]
        %v587 = vld [vmem:[%s248 + $0xa28] sm:$0xff]
        %v588 = vld [vmem:[%s248 + $0xa30] sm:$0xff]
        %v589 = vld [vmem:[%s248 + $0xa38] sm:$0xff]
        %v590 = vld [vmem:[%s248 + $0xa40] sm:$0xff]
        %v591 = vld [vmem:[%s248 + $0xa48] sm:$0xff]
        %v592 = vld [vmem:[%s248 + $0xa50] sm:$0xff]
        %v593 = vld [vmem:[%s248 + $0xa58] sm:$0xff]
        %v594 = vld [vmem:[%s248 + $0xa60] sm:$0xff]
        %v595 = vld [vmem:[%s248 + $0xa68] sm:$0xff]
        %v596 = vld [vmem:[%s248 + $0xa70] sm:$0xff]
        %v597 = vld [vmem:[%s248 + $0xa78] sm:$0xff]
        %v598 = vld [vmem:[%s248 + $0xa80] sm:$0xff]
        %v599 = vld [vmem:[%s248 + $0xa88] sm:$0xff]
        %v600 = vld [vmem:[%s248 + $0xa90] sm:$0xff]
        %v601 = vld [vmem:[%s248 + $0xa98] sm:$0xff]
        %v602 = vld [vmem:[%s248 + $0xaa0] sm:$0xff]
        %v603 = vld [vmem:[%s248 + $0xaa8] sm:$0xff]
        %v604 = vld [vmem:[%s248 + $0xab0] sm:$0xff]
        %v605 = vld [vmem:[%s248 + $0xab8] sm:$0xff]
        %v606 = vld [vmem:[%s248 + $0xac0] sm:$0xff]
        %v607 = vld [vmem:[%s248 + $0xac8] sm:$0xff]
        %v608 = vld [vmem:[%s248 + $0xad0] sm:$0xff]
        %v609 = vld [vmem:[%s248 + $0xad8] sm:$0xff]
        %v610 = vld [vmem:[%s248 + $0xae0] sm:$0xff]
        %v611 = vld [vmem:[%s248 + $0xae8] sm:$0xff]
        %v612 = vld [vmem:[%s248 + $0xaf0] sm:$0xff]
        %v613 = vld [vmem:[%s248 + $0xaf8] sm:$0xff]
        %v614 = vld [vmem:[%s248 + $0xb00] sm:$0xff]
        %v615 = vld [vmem:[%s248 + $0xb08] sm:$0xff]
        %v616 = vld [vmem:[%s248 + $0xb10] sm:$0xff]
        %v617 = vld [vmem:[%s248 + $0xb18] sm:$0xff]
        %v618 = vld [vmem:[%s248 + $0xb20] sm:$0xff]
        %v619 = vld [vmem:[%s248 + $0xb28] sm:$0xff]
        %v620 = vld [vmem:[%s248 + $0xb30] sm:$0xff]
        %v621 = vld [vmem:[%s248 + $0xb38] sm:$0xff]
        %v622 = vld [vmem:[%s248 + $0xb40] sm:$0xff]
        %v623 = vld [vmem:[%s248 + $0xb48] sm:$0xff]
        %v624 = vld [vmem:[%s248 + $0xb50] sm:$0xff]
        %v625 = vld [vmem:[%s248 + $0xb58] sm:$0xff]
        %v626 = vld [vmem:[%s248 + $0xb60] sm:$0xff]
        %v627 = vld [vmem:[%s248 + $0xb68] sm:$0xff]
        %v628 = vld [vmem:[%s248 + $0xb70] sm:$0xff]
        %v629 = vld [vmem:[%s248 + $0xb78] sm:$0xff]
        %v630 = vld [vmem:[%s248 + $0xb80] sm:$0xff]
        %v631 = vld [vmem:[%s248 + $0xb88] sm:$0xff]
        %v632 = vld [vmem:[%s248 + $0xb90] sm:$0xff]
        %v633 = vld [vmem:[%s248 + $0xb98] sm:$0xff]
        %v634 = vld [vmem:[%s248 + $0xba0] sm:$0xff]
        %v635 = vld [vmem:[%s248 + $0xba8] sm:$0xff]
        %v636 = vld [vmem:[%s248 + $0xbb0] sm:$0xff]
        %v637 = vld [vmem:[%s248 + $0xbb8] sm:$0xff]
        %v638 = vld [vmem:[%s248 + $0xbc0] sm:$0xff]
        %v639 = vld [vmem:[%s248 + $0xbc8] sm:$0xff]
        %v640 = vld [vmem:[%s248 + $0xbd0] sm:$0xff]
        %v641 = vld [vmem:[%s248 + $0xbd8] sm:$0xff]
        %v642 = vld [vmem:[%s248 + $0xbe0] sm:$0xff]
        %v643 = vld [vmem:[%s248 + $0xbe8] sm:$0xff]
        %v644 = vld [vmem:[%s248 + $0xbf0] sm:$0xff]
        %v645 = vld [vmem:[%s248 + $0xbf8] sm:$0xff]
        %v646 = vld [vmem:[%s248 + $0xc00] sm:$0xff]
        %v647 = vld [vmem:[%s248 + $0xc08] sm:$0xff]
        %v648 = vld [vmem:[%s248 + $0xc10] sm:$0xff]
        %v649 = vld [vmem:[%s248 + $0xc18] sm:$0xff]
        %v650 = vld [vmem:[%s248 + $0xc20] sm:$0xff]
        %v651 = vld [vmem:[%s248 + $0xc28] sm:$0xff]
        %v652 = vld [vmem:[%s248 + $0xc30] sm:$0xff]
        %v653 = vld [vmem:[%s248 + $0xc38] sm:$0xff]
        %v654 = vld [vmem:[%s248 + $0xc40] sm:$0xff]
        %v655 = vld [vmem:[%s248 + $0xc48] sm:$0xff]
        %v656 = vld [vmem:[%s248 + $0xc50] sm:$0xff]
        %v657 = vld [vmem:[%s248 + $0xc58] sm:$0xff]
        %v658 = vld [vmem:[%s248 + $0xc60] sm:$0xff]
        %v659 = vld [vmem:[%s248 + $0xc68] sm:$0xff]
        %v660 = vld [vmem:[%s248 + $0xc70] sm:$0xff]
        %v661 = vld [vmem:[%s248 + $0xc78] sm:$0xff]
        %v662 = vld [vmem:[%s248 + $0xc80] sm:$0xff]
        %v663 = vld [vmem:[%s248 + $0xc88] sm:$0xff]
        %v664 = vld [vmem:[%s248 + $0xc90] sm:$0xff]
        %v665 = vld [vmem:[%s248 + $0xc98] sm:$0xff]
        %v666 = vld [vmem:[%s248 + $0xca0] sm:$0xff]
        %v667 = vld [vmem:[%s248 + $0xca8] sm:$0xff]
        %v668 = vld [vmem:[%s248 + $0xcb0] sm:$0xff]
        %v669 = vld [vmem:[%s248 + $0xcb8] sm:$0xff]
        %v670 = vld [vmem:[%s248 + $0xcc0] sm:$0xff]
        %v671 = vld [vmem:[%s248 + $0xcc8] sm:$0xff]
        %v672 = vld [vmem:[%s248 + $0xcd0] sm:$0xff]
        %v673 = vld [vmem:[%s248 + $0xcd8] sm:$0xff]
        %v674 = vld [vmem:[%s248 + $0xce0] sm:$0xff]
        %v675 = vld [vmem:[%s248 + $0xce8] sm:$0xff]
        %v676 = vld [vmem:[%s248 + $0xcf0] sm:$0xff]
        %v677 = vld [vmem:[%s248 + $0xcf8] sm:$0xff]
        %v678 = vld [vmem:[%s248 + $0xd00] sm:$0xff]
        %v679 = vld [vmem:[%s248 + $0xd08] sm:$0xff]
        %v680 = vld [vmem:[%s248 + $0xd10] sm:$0xff]
        %v681 = vld [vmem:[%s248 + $0xd18] sm:$0xff]
        %v682 = vld [vmem:[%s248 + $0xd20] sm:$0xff]
        %v683 = vld [vmem:[%s248 + $0xd28] sm:$0xff]
        %v684 = vld [vmem:[%s248 + $0xd30] sm:$0xff]
        %v685 = vld [vmem:[%s248 + $0xd38] sm:$0xff]
        %v686 = vld [vmem:[%s248 + $0xd40] sm:$0xff]
        %v687 = vld [vmem:[%s248 + $0xd48] sm:$0xff]
        %v688 = vld [vmem:[%s248 + $0xd50] sm:$0xff]
        %v689 = vld [vmem:[%s248 + $0xd58] sm:$0xff]
        %v690 = vld [vmem:[%s248 + $0xd60] sm:$0xff]
        %v691 = vld [vmem:[%s248 + $0xd68] sm:$0xff]
        %v692 = vld [vmem:[%s248 + $0xd70] sm:$0xff]
        %v693 = vld [vmem:[%s248 + $0xd78] sm:$0xff]
        %v694 = vld [vmem:[%s248 + $0xd80] sm:$0xff]
        %v695 = vld [vmem:[%s248 + $0xd88] sm:$0xff]
        %v696 = vld [vmem:[%s248 + $0xd90] sm:$0xff]
        %v697 = vld [vmem:[%s248 + $0xd98] sm:$0xff]
        %v698 = vld [vmem:[%s248 + $0xda0] sm:$0xff]
        %v699 = vld [vmem:[%s248 + $0xda8] sm:$0xff]
        %v700 = vld [vmem:[%s248 + $0xdb0] sm:$0xff]
        %v701 = vld [vmem:[%s248 + $0xdb8] sm:$0xff]
        %v702 = vld [vmem:[%s248 + $0xdc0] sm:$0xff]
        %v703 = vld [vmem:[%s248 + $0xdc8] sm:$0xff]
        %v704 = vld [vmem:[%s248 + $0xdd0] sm:$0xff]
        %v705 = vld [vmem:[%s248 + $0xdd8] sm:$0xff]
        %v706 = vld [vmem:[%s248 + $0xde0] sm:$0xff]
        %v707 = vld [vmem:[%s248 + $0xde8] sm:$0xff]
        %v708 = vld [vmem:[%s248 + $0xdf0] sm:$0xff]
        %v709 = vld [vmem:[%s248 + $0xdf8] sm:$0xff]
        %v710 = vld [vmem:[%s253] sm:$0xf]
        %v711 = vld [vmem:[%s253 + $0x4] sm:$0xf]
        %v712 = vld [vmem:[%s253 + $0x8] sm:$0xf]
        %v713 = vld [vmem:[%s253 + $0xc] sm:$0xf]
        %v714 = vld [vmem:[%s253 + $0x10] sm:$0xf]
        %v715 = vld [vmem:[%s253 + $0x14] sm:$0xf]
        %v716 = vld [vmem:[%s253 + $0x18] sm:$0xf]
        %v717 = vld [vmem:[%s253 + $0x1c] sm:$0xf]
        %v718 = vld [vmem:[%s253 + $0x20] sm:$0xf]
        %v719 = vld [vmem:[%s253 + $0x24] sm:$0xf]
        %v720 = vld [vmem:[%s253 + $0x28] sm:$0xf]
        %v721 = vld [vmem:[%s253 + $0x2c] sm:$0xf]
        %v722 = vld [vmem:[%s253 + $0x30] sm:$0xf]
        %v723 = vld [vmem:[%s253 + $0x34] sm:$0xf]
        %v724 = vld [vmem:[%s253 + $0x38] sm:$0xf]
        %v725 = vld [vmem:[%s253 + $0x3c] sm:$0xf]
        %v726 = vld [vmem:[%s253 + $0x40] sm:$0xf]
        %v727 = vld [vmem:[%s253 + $0x44] sm:$0xf]
        %v728 = vld [vmem:[%s253 + $0x48] sm:$0x3]
        %v1177 = vunpack.c.l.b16 %v262
        %v1178 = vunpack.c.h.b16 %v262
        %v1179 = vunpack.c.l.b16 %v263
        %v1180 = vunpack.c.h.b16 %v263
        %v1181 = vunpack.c.l.b16 %v264
        %v1182 = vunpack.c.h.b16 %v264
        %v1183 = vunpack.c.l.b16 %v265
        %v1184 = vunpack.c.h.b16 %v265
        %v1185 = vunpack.c.l.b16 %v266
        %v1186 = vunpack.c.h.b16 %v266
        %v1187 = vunpack.c.l.b16 %v267
        %v1188 = vunpack.c.h.b16 %v267
        %v1189 = vunpack.c.l.b16 %v268
        %v1190 = vunpack.c.h.b16 %v268
        %v1191 = vunpack.c.l.b16 %v269
        %v1192 = vunpack.c.h.b16 %v269
        %v1193 = vunpack.c.l.b16 %v270
        %v1194 = vunpack.c.h.b16 %v270
        %v1195 = vunpack.c.l.b16 %v271
        %v1196 = vunpack.c.h.b16 %v271
        %v1197 = vunpack.c.l.b16 %v272
        %v1198 = vunpack.c.h.b16 %v272
        %v1199 = vunpack.c.l.b16 %v273
        %v1200 = vunpack.c.h.b16 %v273
        %v1201 = vunpack.c.l.b16 %v274
        %v1202 = vunpack.c.h.b16 %v274
        %v1203 = vunpack.c.l.b16 %v275
        %v1204 = vunpack.c.h.b16 %v275
        %v1205 = vunpack.c.l.b16 %v276
        %v1206 = vunpack.c.h.b16 %v276
        %v1207 = vunpack.c.l.b16 %v277
        %v1208 = vunpack.c.h.b16 %v277
        %v1209 = vunpack.c.l.b16 %v278
        %v1210 = vunpack.c.h.b16 %v278
        %v1211 = vunpack.c.l.b16 %v279
        %v1212 = vunpack.c.h.b16 %v279
        %v1213 = vunpack.c.l.b16 %v280
        %v1214 = vunpack.c.h.b16 %v280
        %v1215 = vunpack.c.l.b16 %v281
        %v1216 = vunpack.c.h.b16 %v281
        %v1217 = vunpack.c.l.b16 %v282
        %v1218 = vunpack.c.h.b16 %v282
        %v1219 = vunpack.c.l.b16 %v283
        %v1220 = vunpack.c.h.b16 %v283
        %v1221 = vunpack.c.l.b16 %v284
        %v1222 = vunpack.c.h.b16 %v284
        %v1223 = vunpack.c.l.b16 %v285
        %v1224 = vunpack.c.h.b16 %v285
        %v1225 = vunpack.c.l.b16 %v286
        %v1226 = vunpack.c.h.b16 %v286
        %v1227 = vunpack.c.l.b16 %v287
        %v1228 = vunpack.c.h.b16 %v287
        %v1229 = vunpack.c.l.b16 %v288
        %v1230 = vunpack.c.h.b16 %v288
        %v1231 = vunpack.c.l.b16 %v289
        %v1232 = vunpack.c.h.b16 %v289
        %v1233 = vunpack.c.l.b16 %v290
        %v1234 = vunpack.c.h.b16 %v290
        %v1235 = vunpack.c.l.b16 %v291
        %v1236 = vunpack.c.h.b16 %v291
        %v1237 = vunpack.c.l.b16 %v292
        %v1238 = vunpack.c.h.b16 %v292
        %v1239 = vunpack.c.l.b16 %v293
        %v1240 = vunpack.c.h.b16 %v293
        %v1241 = vunpack.c.l.b16 %v294
        %v1242 = vunpack.c.h.b16 %v294
        %v1243 = vunpack.c.l.b16 %v295
        %v1244 = vunpack.c.h.b16 %v295
        %v1245 = vunpack.c.l.b16 %v296
        %v1246 = vunpack.c.h.b16 %v296
        %v1247 = vunpack.c.l.b16 %v297
        %v1248 = vunpack.c.h.b16 %v297
        %v1249 = vunpack.c.l.b16 %v298
        %v1250 = vunpack.c.h.b16 %v298
        %v1251 = vunpack.c.l.b16 %v299
        %v1252 = vunpack.c.h.b16 %v299
        %v1253 = vunpack.c.l.b16 %v300
        %v1254 = vunpack.c.h.b16 %v300
        %v1255 = vunpack.c.l.b16 %v301
        %v1256 = vunpack.c.h.b16 %v301
        %v1257 = vunpack.c.l.b16 %v302
        %v1258 = vunpack.c.h.b16 %v302
        %v1259 = vunpack.c.l.b16 %v303
        %v1260 = vunpack.c.h.b16 %v303
        %v1261 = vunpack.c.l.b16 %v304
        %v1262 = vunpack.c.h.b16 %v304
        %v1263 = vunpack.c.l.b16 %v305
        %v1264 = vunpack.c.h.b16 %v305
        %v1265 = vunpack.c.l.b16 %v306
        %v1266 = vunpack.c.h.b16 %v306
        %v1267 = vunpack.c.l.b16 %v307
        %v1268 = vunpack.c.h.b16 %v307
        %v1269 = vunpack.c.l.b16 %v308
        %v1270 = vunpack.c.h.b16 %v308
        %v1271 = vunpack.c.l.b16 %v309
        %v1272 = vunpack.c.h.b16 %v309
        %v1273 = vunpack.c.l.b16 %v310
        %v1274 = vunpack.c.h.b16 %v310
        %v1275 = vunpack.c.l.b16 %v311
        %v1276 = vunpack.c.h.b16 %v311
        %v1277 = vunpack.c.l.b16 %v312
        %v1278 = vunpack.c.h.b16 %v312
        %v1279 = vunpack.c.l.b16 %v313
        %v1280 = vunpack.c.h.b16 %v313
        %v1281 = vunpack.c.l.b16 %v314
        %v1282 = vunpack.c.h.b16 %v314
        %v1283 = vunpack.c.l.b16 %v315
        %v1284 = vunpack.c.h.b16 %v315
        %v1285 = vunpack.c.l.b16 %v316
        %v1286 = vunpack.c.h.b16 %v316
        %v1287 = vunpack.c.l.b16 %v317
        %v1288 = vunpack.c.h.b16 %v317
        %v1289 = vunpack.c.l.b16 %v318
        %v1290 = vunpack.c.h.b16 %v318
        %v1291 = vunpack.c.l.b16 %v319
        %v1292 = vunpack.c.h.b16 %v319
        %v1293 = vunpack.c.l.b16 %v320
        %v1294 = vunpack.c.h.b16 %v320
        %v1295 = vunpack.c.l.b16 %v321
        %v1296 = vunpack.c.h.b16 %v321
        %v1297 = vunpack.c.l.b16 %v322
        %v1298 = vunpack.c.h.b16 %v322
        %v1299 = vunpack.c.l.b16 %v323
        %v1300 = vunpack.c.h.b16 %v323
        %v1301 = vunpack.c.l.b16 %v324
        %v1302 = vunpack.c.h.b16 %v324
        %v1303 = vunpack.c.l.b16 %v325
        %v1304 = vunpack.c.h.b16 %v325
        %v1305 = vunpack.c.l.b16 %v326
        %v1306 = vunpack.c.h.b16 %v326
        %v1307 = vunpack.c.l.b16 %v327
        %v1308 = vunpack.c.h.b16 %v327
        %v1309 = vunpack.c.l.b16 %v328
        %v1310 = vunpack.c.h.b16 %v328
        %v1311 = vunpack.c.l.b16 %v329
        %v1312 = vunpack.c.h.b16 %v329
        %v1313 = vunpack.c.l.b16 %v330
        %v1314 = vunpack.c.h.b16 %v330
        %v1315 = vunpack.c.l.b16 %v331
        %v1316 = vunpack.c.h.b16 %v331
        %v1317 = vunpack.c.l.b16 %v332
        %v1318 = vunpack.c.h.b16 %v332
        %v1319 = vunpack.c.l.b16 %v333
        %v1320 = vunpack.c.h.b16 %v333
        %v1321 = vunpack.c.l.b16 %v334
        %v1322 = vunpack.c.h.b16 %v334
        %v1323 = vunpack.c.l.b16 %v335
        %v1324 = vunpack.c.h.b16 %v335
        %v1325 = vunpack.c.l.b16 %v336
        %v1326 = vunpack.c.h.b16 %v336
        %v1327 = vunpack.c.l.b16 %v337
        %v1328 = vunpack.c.h.b16 %v337
        %v1329 = vunpack.c.l.b16 %v338
        %v1330 = vunpack.c.h.b16 %v338
        %v1331 = vunpack.c.l.b16 %v339
        %v1332 = vunpack.c.h.b16 %v339
        %v1333 = vunpack.c.l.b16 %v340
        %v1334 = vunpack.c.h.b16 %v340
        %v1335 = vunpack.c.l.b16 %v341
        %v1336 = vunpack.c.h.b16 %v341
        %v1337 = vunpack.c.l.b16 %v342
        %v1338 = vunpack.c.h.b16 %v342
        %v1339 = vunpack.c.l.b16 %v343
        %v1340 = vunpack.c.h.b16 %v343
        %v1341 = vunpack.c.l.b16 %v344
        %v1342 = vunpack.c.h.b16 %v344
        %v1343 = vunpack.c.l.b16 %v345
        %v1344 = vunpack.c.h.b16 %v345
        %v1345 = vunpack.c.l.b16 %v346
        %v1346 = vunpack.c.h.b16 %v346
        %v1347 = vunpack.c.l.b16 %v347
        %v1348 = vunpack.c.h.b16 %v347
        %v1349 = vunpack.c.l.b16 %v348
        %v1350 = vunpack.c.h.b16 %v348
        %v1351 = vunpack.c.l.b16 %v349
        %v1352 = vunpack.c.h.b16 %v349
        %v1353 = vunpack.c.l.b16 %v350
        %v1354 = vunpack.c.h.b16 %v350
        %v1355 = vunpack.c.l.b16 %v351
        %v1356 = vunpack.c.h.b16 %v351
        %v1357 = vunpack.c.l.b16 %v352
        %v1358 = vunpack.c.h.b16 %v352
        %v1359 = vunpack.c.l.b16 %v353
        %v1360 = vunpack.c.h.b16 %v353
        %v1361 = vunpack.c.l.b16 %v354
        %v1362 = vunpack.c.h.b16 %v354
        %v1363 = vunpack.c.l.b16 %v355
        %v1364 = vunpack.c.h.b16 %v355
        %v1365 = vunpack.c.l.b16 %v356
        %v1366 = vunpack.c.h.b16 %v356
        %v1367 = vunpack.c.l.b16 %v357
        %v1368 = vunpack.c.h.b16 %v357
        %v1369 = vunpack.c.l.b16 %v358
        %v1370 = vunpack.c.h.b16 %v358
        %v1371 = vunpack.c.l.b16 %v359
        %v1372 = vunpack.c.h.b16 %v359
        %v1373 = vunpack.c.l.b16 %v360
        %v1374 = vunpack.c.h.b16 %v360
        %v1375 = vunpack.c.l.b16 %v361
        %v1376 = vunpack.c.h.b16 %v361
        %v1377 = vunpack.c.l.b16 %v362
        %v1378 = vunpack.c.h.b16 %v362
        %v1379 = vunpack.c.l.b16 %v363
        %v1380 = vunpack.c.h.b16 %v363
        %v1381 = vunpack.c.l.b16 %v364
        %v1382 = vunpack.c.h.b16 %v364
        %v1383 = vunpack.c.l.b16 %v365
        %v1384 = vunpack.c.h.b16 %v365
        %v1385 = vunpack.c.l.b16 %v366
        %v1386 = vunpack.c.h.b16 %v366
        %v1387 = vunpack.c.l.b16 %v367
        %v1388 = vunpack.c.h.b16 %v367
        %v1389 = vunpack.c.l.b16 %v368
        %v1390 = vunpack.c.h.b16 %v368
        %v1391 = vunpack.c.l.b16 %v369
        %v1392 = vunpack.c.h.b16 %v369
        %v1393 = vunpack.c.l.b16 %v370
        %v1394 = vunpack.c.h.b16 %v370
        %v1395 = vunpack.c.l.b16 %v371
        %v1396 = vunpack.c.h.b16 %v371
        %v1397 = vunpack.c.l.b16 %v372
        %v1398 = vunpack.c.h.b16 %v372
        %v1399 = vunpack.c.l.b16 %v373
        %v1400 = vunpack.c.h.b16 %v373
        %v1401 = vunpack.c.l.b16 %v374
        %v1402 = vunpack.c.h.b16 %v374
        %v1403 = vunpack.c.l.b16 %v375
        %v1404 = vunpack.c.h.b16 %v375
        %v1405 = vunpack.c.l.b16 %v376
        %v1406 = vunpack.c.h.b16 %v376
        %v1407 = vunpack.c.l.b16 %v377
        %v1408 = vunpack.c.h.b16 %v377
        %v1409 = vunpack.c.l.b16 %v378
        %v1410 = vunpack.c.h.b16 %v378
        %v1411 = vunpack.c.l.b16 %v379
        %v1412 = vunpack.c.h.b16 %v379
        %v1413 = vunpack.c.l.b16 %v380
        %v1414 = vunpack.c.h.b16 %v380
        %v1415 = vunpack.c.l.b16 %v381
        %v1416 = vunpack.c.h.b16 %v381
        %v1417 = vunpack.c.l.b16 %v382
        %v1418 = vunpack.c.h.b16 %v382
        %v1419 = vunpack.c.l.b16 %v383
        %v1420 = vunpack.c.h.b16 %v383
        %v1421 = vunpack.c.l.b16 %v384
        %v1422 = vunpack.c.h.b16 %v384
        %v1423 = vunpack.c.l.b16 %v385
        %v1424 = vunpack.c.h.b16 %v385
        %v1425 = vunpack.c.l.b16 %v386
        %v1426 = vunpack.c.h.b16 %v386
        %v1427 = vunpack.c.l.b16 %v387
        %v1428 = vunpack.c.h.b16 %v387
        %v1429 = vunpack.c.l.b16 %v388
        %v1430 = vunpack.c.h.b16 %v388
        %v1431 = vunpack.c.l.b16 %v389
        %v1432 = vunpack.c.h.b16 %v389
        %v1433 = vunpack.c.l.b16 %v390
        %v1434 = vunpack.c.h.b16 %v390
        %v1435 = vunpack.c.l.b16 %v391
        %v1436 = vunpack.c.h.b16 %v391
        %v1437 = vunpack.c.l.b16 %v392
        %v1438 = vunpack.c.h.b16 %v392
        %v1439 = vunpack.c.l.b16 %v393
        %v1440 = vunpack.c.h.b16 %v393
        %v1441 = vunpack.c.l.b16 %v394
        %v1442 = vunpack.c.h.b16 %v394
        %v1443 = vunpack.c.l.b16 %v395
        %v1444 = vunpack.c.h.b16 %v395
        %v1445 = vunpack.c.l.b16 %v396
        %v1446 = vunpack.c.h.b16 %v396
        %v1447 = vunpack.c.l.b16 %v397
        %v1448 = vunpack.c.h.b16 %v397
        %v1449 = vunpack.c.l.b16 %v398
        %v1450 = vunpack.c.h.b16 %v398
        %v1451 = vunpack.c.l.b16 %v399
        %v1452 = vunpack.c.h.b16 %v399
        %v1453 = vunpack.c.l.b16 %v400
        %v1454 = vunpack.c.h.b16 %v400
        %v1455 = vunpack.c.l.b16 %v401
        %v1456 = vunpack.c.h.b16 %v401
        %v1457 = vunpack.c.l.b16 %v402
        %v1458 = vunpack.c.h.b16 %v402
        %v1459 = vunpack.c.l.b16 %v403
        %v1460 = vunpack.c.h.b16 %v403
        %v1461 = vunpack.c.l.b16 %v404
        %v1462 = vunpack.c.h.b16 %v404
        %v1463 = vunpack.c.l.b16 %v405
        %v1464 = vunpack.c.h.b16 %v405
        %v1465 = vunpack.c.l.b16 %v406
        %v1466 = vunpack.c.h.b16 %v406
        %v1467 = vunpack.c.l.b16 %v407
        %v1468 = vunpack.c.h.b16 %v407
        %v1469 = vunpack.c.l.b16 %v408
        %v1470 = vunpack.c.h.b16 %v408
        %v1471 = vunpack.c.l.b16 %v409
        %v1472 = vunpack.c.h.b16 %v409
        %v1473 = vunpack.c.l.b16 %v410
        %v1474 = vunpack.c.h.b16 %v410
        %v1475 = vunpack.c.l.b16 %v411
        %v1476 = vunpack.c.h.b16 %v411
        %v1477 = vunpack.c.l.b16 %v412
        %v1478 = vunpack.c.h.b16 %v412
        %v1479 = vunpack.c.l.b16 %v413
        %v1480 = vunpack.c.h.b16 %v413
        %v1481 = vunpack.c.l.b16 %v414
        %v1482 = vunpack.c.h.b16 %v414
        %v1483 = vunpack.c.l.b16 %v415
        %v1484 = vunpack.c.h.b16 %v415
        %v1485 = vunpack.c.l.b16 %v416
        %v1486 = vunpack.c.h.b16 %v416
        %v1487 = vunpack.c.l.b16 %v417
        %v1488 = vunpack.c.h.b16 %v417
        %v1489 = vunpack.c.l.b16 %v418
        %v1490 = vunpack.c.h.b16 %v418
        %v1491 = vunpack.c.l.b16 %v419
        %v1492 = vunpack.c.h.b16 %v419
        %v1493 = vunpack.c.l.b16 %v420
        %v1494 = vunpack.c.h.b16 %v420
        %v1495 = vunpack.c.l.b16 %v421
        %v1496 = vunpack.c.h.b16 %v421
        %v1497 = vunpack.c.l.b16 %v422
        %v1498 = vunpack.c.h.b16 %v422
        %v1499 = vunpack.c.l.b16 %v423
        %v1500 = vunpack.c.h.b16 %v423
        %v1501 = vunpack.c.l.b16 %v424
        %v1502 = vunpack.c.h.b16 %v424
        %v1503 = vunpack.c.l.b16 %v425
        %v1504 = vunpack.c.h.b16 %v425
        %v1505 = vunpack.c.l.b16 %v426
        %v1506 = vunpack.c.h.b16 %v426
        %v1507 = vunpack.c.l.b16 %v427
        %v1508 = vunpack.c.h.b16 %v427
        %v1509 = vunpack.c.l.b16 %v428
        %v1510 = vunpack.c.h.b16 %v428
        %v1511 = vunpack.c.l.b16 %v429
        %v1512 = vunpack.c.h.b16 %v429
        %v1513 = vunpack.c.l.b16 %v430
        %v1514 = vunpack.c.h.b16 %v430
        %v1515 = vunpack.c.l.b16 %v431
        %v1516 = vunpack.c.h.b16 %v431
        %v1517 = vunpack.c.l.b16 %v432
        %v1518 = vunpack.c.h.b16 %v432
        %v1519 = vunpack.c.l.b16 %v433
        %v1520 = vunpack.c.h.b16 %v433
        %v1521 = vunpack.c.l.b16 %v434
        %v1522 = vunpack.c.h.b16 %v434
        %v1523 = vunpack.c.l.b16 %v435
        %v1524 = vunpack.c.h.b16 %v435
        %v1525 = vunpack.c.l.b16 %v436
        %v1526 = vunpack.c.h.b16 %v436
        %v1527 = vunpack.c.l.b16 %v437
        %v1528 = vunpack.c.h.b16 %v437
        %v1529 = vunpack.c.l.b16 %v438
        %v1530 = vunpack.c.h.b16 %v438
        %v1531 = vunpack.c.l.b16 %v439
        %v1532 = vunpack.c.h.b16 %v439
        %v1533 = vunpack.c.l.b16 %v440
        %v1534 = vunpack.c.h.b16 %v440
        %v1535 = vunpack.c.l.b16 %v441
        %v1536 = vunpack.c.h.b16 %v441
        %v1537 = vunpack.c.l.b16 %v442
        %v1538 = vunpack.c.h.b16 %v442
        %v1539 = vunpack.c.l.b16 %v443
        %v1540 = vunpack.c.h.b16 %v443
        %v1541 = vunpack.c.l.b16 %v444
        %v1542 = vunpack.c.h.b16 %v444
        %v1543 = vunpack.c.l.b16 %v445
        %v1544 = vunpack.c.h.b16 %v445
        %v1545 = vunpack.c.l.b16 %v446
        %v1546 = vunpack.c.h.b16 %v446
        %v1547 = vunpack.c.l.b16 %v447
        %v1548 = vunpack.c.h.b16 %v447
        %v1549 = vunpack.c.l.b16 %v448
        %v1550 = vunpack.c.h.b16 %v448
        %v1551 = vunpack.c.l.b16 %v449
        %v1552 = vunpack.c.h.b16 %v449
        %v1553 = vunpack.c.l.b16 %v450
        %v1554 = vunpack.c.h.b16 %v450
        %v1555 = vunpack.c.l.b16 %v451
        %v1556 = vunpack.c.h.b16 %v451
        %v1557 = vunpack.c.l.b16 %v452
        %v1558 = vunpack.c.h.b16 %v452
        %v1559 = vunpack.c.l.b16 %v453
        %v1560 = vunpack.c.h.b16 %v453
        %v1561 = vunpack.c.l.b16 %v454
        %v1562 = vunpack.c.h.b16 %v454
        %v1563 = vunpack.c.l.b16 %v455
        %v1564 = vunpack.c.h.b16 %v455
        %v1565 = vunpack.c.l.b16 %v456
        %v1566 = vunpack.c.h.b16 %v456
        %v1567 = vunpack.c.l.b16 %v457
        %v1568 = vunpack.c.h.b16 %v457
        %v1569 = vunpack.c.l.b16 %v458
        %v1570 = vunpack.c.h.b16 %v458
        %v1571 = vunpack.c.l.b16 %v459
        %v1572 = vunpack.c.h.b16 %v459
        %v1573 = vunpack.c.l.b16 %v460
        %v1574 = vunpack.c.h.b16 %v460
        %v1575 = vunpack.c.l.b16 %v461
        %v1576 = vunpack.c.h.b16 %v461
        %v1577 = vunpack.c.l.b16 %v462
        %v1578 = vunpack.c.h.b16 %v462
        %v1579 = vunpack.c.l.b16 %v463
        %v1580 = vunpack.c.h.b16 %v463
        %v1581 = vunpack.c.l.b16 %v464
        %v1582 = vunpack.c.h.b16 %v464
        %v1583 = vunpack.c.l.b16 %v465
        %v1584 = vunpack.c.h.b16 %v465
        %v1585 = vunpack.c.l.b16 %v466
        %v1586 = vunpack.c.h.b16 %v466
        %v1587 = vunpack.c.l.b16 %v467
        %v1588 = vunpack.c.h.b16 %v467
        %v1589 = vunpack.c.l.b16 %v468
        %v1590 = vunpack.c.h.b16 %v468
        %v1591 = vunpack.c.l.b16 %v469
        %v1592 = vunpack.c.h.b16 %v469
        %v1593 = vunpack.c.l.b16 %v470
        %v1594 = vunpack.c.h.b16 %v470
        %v1595 = vunpack.c.l.b16 %v471
        %v1596 = vunpack.c.h.b16 %v471
        %v1597 = vunpack.c.l.b16 %v472
        %v1598 = vunpack.c.h.b16 %v472
        %v1599 = vunpack.c.l.b16 %v473
        %v1600 = vunpack.c.h.b16 %v473
        %v1601 = vunpack.c.l.b16 %v474
        %v1602 = vunpack.c.h.b16 %v474
        %v1603 = vunpack.c.l.b16 %v475
        %v1604 = vunpack.c.h.b16 %v475
        %v1605 = vunpack.c.l.b16 %v476
        %v1606 = vunpack.c.h.b16 %v476
        %v1607 = vunpack.c.l.b16 %v477
        %v1608 = vunpack.c.h.b16 %v477
        %v1609 = vunpack.c.l.b16 %v478
        %v1610 = vunpack.c.h.b16 %v478
        %v1611 = vunpack.c.l.b16 %v479
        %v1612 = vunpack.c.h.b16 %v479
        %v1613 = vunpack.c.l.b16 %v480
        %v1614 = vunpack.c.h.b16 %v480
        %v1615 = vunpack.c.l.b16 %v481
        %v1616 = vunpack.c.h.b16 %v481
        %v1617 = vunpack.c.l.b16 %v482
        %v1618 = vunpack.c.h.b16 %v482
        %v1619 = vunpack.c.l.b16 %v483
        %v1620 = vunpack.c.h.b16 %v483
        %v1621 = vunpack.c.l.b16 %v484
        %v1622 = vunpack.c.h.b16 %v484
        %v1623 = vunpack.c.l.b16 %v485
        %v1624 = vunpack.c.h.b16 %v485
        %v1625 = vunpack.c.l.b16 %v486
        %v1626 = vunpack.c.h.b16 %v486
        %v1627 = vunpack.c.l.b16 %v487
        %v1628 = vunpack.c.h.b16 %v487
        %v1629 = vunpack.c.l.b16 %v488
        %v1630 = vunpack.c.h.b16 %v488
        %v1631 = vunpack.c.l.b16 %v489
        %v1632 = vunpack.c.h.b16 %v489
        %v1633 = vunpack.c.l.b16 %v490
        %v1634 = vunpack.c.h.b16 %v490
        %v1635 = vunpack.c.l.b16 %v491
        %v1636 = vunpack.c.h.b16 %v491
        %v1637 = vunpack.c.l.b16 %v492
        %v1638 = vunpack.c.h.b16 %v492
        %v1639 = vunpack.c.l.b16 %v493
        %v1640 = vunpack.c.h.b16 %v493
        %v1641 = vunpack.c.l.b16 %v494
        %v1642 = vunpack.c.h.b16 %v494
        %v1643 = vunpack.c.l.b16 %v495
        %v1644 = vunpack.c.h.b16 %v495
        %v1645 = vunpack.c.l.b16 %v496
        %v1646 = vunpack.c.h.b16 %v496
        %v1647 = vunpack.c.l.b16 %v497
        %v1648 = vunpack.c.h.b16 %v497
        %v1649 = vunpack.c.l.b16 %v498
        %v1650 = vunpack.c.h.b16 %v498
        %v1651 = vunpack.c.l.b16 %v499
        %v1652 = vunpack.c.h.b16 %v499
        %v1653 = vunpack.c.l.b16 %v500
        %v1654 = vunpack.c.h.b16 %v500
        %v1655 = vunpack.c.l.b16 %v501
        %v1656 = vunpack.c.h.b16 %v501
        %v1657 = vunpack.c.l.b16 %v502
        %v1658 = vunpack.c.h.b16 %v502
        %v1659 = vunpack.c.l.b16 %v503
        %v1660 = vunpack.c.h.b16 %v503
        %v1661 = vunpack.c.l.b16 %v504
        %v1662 = vunpack.c.h.b16 %v504
        %v1663 = vunpack.c.l.b16 %v505
        %v1664 = vunpack.c.h.b16 %v505
        %v1665 = vunpack.c.l.b16 %v506
        %v1666 = vunpack.c.h.b16 %v506
        %v1667 = vunpack.c.l.b16 %v507
        %v1668 = vunpack.c.h.b16 %v507
        %v1669 = vunpack.c.l.b16 %v508
        %v1670 = vunpack.c.h.b16 %v508
        %v1671 = vunpack.c.l.b16 %v509
        %v1672 = vunpack.c.h.b16 %v509
        %v1673 = vunpack.c.l.b16 %v510
        %v1674 = vunpack.c.h.b16 %v510
        %v1675 = vunpack.c.l.b16 %v511
        %v1676 = vunpack.c.h.b16 %v511
        %v1677 = vunpack.c.l.b16 %v512
        %v1678 = vunpack.c.h.b16 %v512
        %v1679 = vunpack.c.l.b16 %v513
        %v1680 = vunpack.c.h.b16 %v513
        %v1681 = vunpack.c.l.b16 %v514
        %v1682 = vunpack.c.h.b16 %v514
        %v1683 = vunpack.c.l.b16 %v515
        %v1684 = vunpack.c.h.b16 %v515
        %v1685 = vunpack.c.l.b16 %v516
        %v1686 = vunpack.c.h.b16 %v516
        %v1687 = vunpack.c.l.b16 %v517
        %v1688 = vunpack.c.h.b16 %v517
        %v1689 = vunpack.c.l.b16 %v518
        %v1690 = vunpack.c.h.b16 %v518
        %v1691 = vunpack.c.l.b16 %v519
        %v1692 = vunpack.c.h.b16 %v519
        %v1693 = vunpack.c.l.b16 %v520
        %v1694 = vunpack.c.h.b16 %v520
        %v1695 = vunpack.c.l.b16 %v521
        %v1696 = vunpack.c.h.b16 %v521
        %v1697 = vunpack.c.l.b16 %v522
        %v1698 = vunpack.c.h.b16 %v522
        %v1699 = vunpack.c.l.b16 %v523
        %v1700 = vunpack.c.h.b16 %v523
        %v1701 = vunpack.c.l.b16 %v524
        %v1702 = vunpack.c.h.b16 %v524
        %v1703 = vunpack.c.l.b16 %v525
        %v1704 = vunpack.c.h.b16 %v525
        %v1705 = vunpack.c.l.b16 %v526
        %v1706 = vunpack.c.h.b16 %v526
        %v1707 = vunpack.c.l.b16 %v527
        %v1708 = vunpack.c.h.b16 %v527
        %v1709 = vunpack.c.l.b16 %v528
        %v1710 = vunpack.c.h.b16 %v528
        %v1711 = vunpack.c.l.b16 %v529
        %v1712 = vunpack.c.h.b16 %v529
        %v1713 = vunpack.c.l.b16 %v530
        %v1714 = vunpack.c.h.b16 %v530
        %v1715 = vunpack.c.l.b16 %v531
        %v1716 = vunpack.c.h.b16 %v531
        %v1717 = vunpack.c.l.b16 %v532
        %v1718 = vunpack.c.h.b16 %v532
        %v1719 = vunpack.c.l.b16 %v533
        %v1720 = vunpack.c.h.b16 %v533
        %v1721 = vunpack.c.l.b16 %v534
        %v1722 = vunpack.c.h.b16 %v534
        %v1723 = vunpack.c.l.b16 %v535
        %v1724 = vunpack.c.h.b16 %v535
        %v1725 = vunpack.c.l.b16 %v536
        %v1726 = vunpack.c.h.b16 %v536
        %v1727 = vunpack.c.l.b16 %v537
        %v1728 = vunpack.c.h.b16 %v537
        %v1729 = vunpack.c.l.b16 %v538
        %v1730 = vunpack.c.h.b16 %v538
        %v1731 = vunpack.c.l.b16 %v539
        %v1732 = vunpack.c.h.b16 %v539
        %v1733 = vunpack.c.l.b16 %v540
        %v1734 = vunpack.c.h.b16 %v540
        %v1735 = vunpack.c.l.b16 %v541
        %v1736 = vunpack.c.h.b16 %v541
        %v1737 = vunpack.c.l.b16 %v542
        %v1738 = vunpack.c.h.b16 %v542
        %v1739 = vunpack.c.l.b16 %v543
        %v1740 = vunpack.c.h.b16 %v543
        %v1741 = vunpack.c.l.b16 %v544
        %v1742 = vunpack.c.h.b16 %v544
        %v1743 = vunpack.c.l.b16 %v545
        %v1744 = vunpack.c.h.b16 %v545
        %v1745 = vunpack.c.l.b16 %v546
        %v1746 = vunpack.c.h.b16 %v546
        %v1747 = vunpack.c.l.b16 %v547
        %v1748 = vunpack.c.h.b16 %v547
        %v1749 = vunpack.c.l.b16 %v548
        %v1750 = vunpack.c.h.b16 %v548
        %v1751 = vunpack.c.l.b16 %v549
        %v1752 = vunpack.c.h.b16 %v549
        %v1753 = vunpack.c.l.b16 %v550
        %v1754 = vunpack.c.h.b16 %v550
        %v1755 = vunpack.c.l.b16 %v551
        %v1756 = vunpack.c.h.b16 %v551
        %v1757 = vunpack.c.l.b16 %v552
        %v1758 = vunpack.c.h.b16 %v552
        %v1759 = vunpack.c.l.b16 %v553
        %v1760 = vunpack.c.h.b16 %v553
        %v1761 = vunpack.c.l.b16 %v554
        %v1762 = vunpack.c.h.b16 %v554
        %v1763 = vunpack.c.l.b16 %v555
        %v1764 = vunpack.c.h.b16 %v555
        %v1765 = vunpack.c.l.b16 %v556
        %v1766 = vunpack.c.h.b16 %v556
        %v1767 = vunpack.c.l.b16 %v557
        %v1768 = vunpack.c.h.b16 %v557
        %v1769 = vunpack.c.l.b16 %v558
        %v1770 = vunpack.c.h.b16 %v558
        %v1771 = vunpack.c.l.b16 %v559
        %v1772 = vunpack.c.h.b16 %v559
        %v1773 = vunpack.c.l.b16 %v560
        %v1774 = vunpack.c.h.b16 %v560
        %v1775 = vunpack.c.l.b16 %v561
        %v1776 = vunpack.c.h.b16 %v561
        %v1777 = vunpack.c.l.b16 %v562
        %v1778 = vunpack.c.h.b16 %v562
        %v1779 = vunpack.c.l.b16 %v563
        %v1780 = vunpack.c.h.b16 %v563
        %v1781 = vunpack.c.l.b16 %v564
        %v1782 = vunpack.c.h.b16 %v564
        %v1783 = vunpack.c.l.b16 %v565
        %v1784 = vunpack.c.h.b16 %v565
        %v1785 = vunpack.c.l.b16 %v566
        %v1786 = vunpack.c.h.b16 %v566
        %v1787 = vunpack.c.l.b16 %v567
        %v1788 = vunpack.c.h.b16 %v567
        %v1789 = vunpack.c.l.b16 %v568
        %v1790 = vunpack.c.h.b16 %v568
        %v1791 = vunpack.c.l.b16 %v569
        %v1792 = vunpack.c.h.b16 %v569
        %v1793 = vunpack.c.l.b16 %v570
        %v1794 = vunpack.c.h.b16 %v570
        %v1795 = vunpack.c.l.b16 %v571
        %v1796 = vunpack.c.h.b16 %v571
        %v1797 = vunpack.c.l.b16 %v572
        %v1798 = vunpack.c.h.b16 %v572
        %v1799 = vunpack.c.l.b16 %v573
        %v1800 = vunpack.c.h.b16 %v573
        %v1801 = vunpack.c.l.b16 %v574
        %v1802 = vunpack.c.h.b16 %v574
        %v1803 = vunpack.c.l.b16 %v575
        %v1804 = vunpack.c.h.b16 %v575
        %v1805 = vunpack.c.l.b16 %v576
        %v1806 = vunpack.c.h.b16 %v576
        %v1807 = vunpack.c.l.b16 %v577
        %v1808 = vunpack.c.h.b16 %v577
        %v1809 = vunpack.c.l.b16 %v578
        %v1810 = vunpack.c.h.b16 %v578
        %v1811 = vunpack.c.l.b16 %v579
        %v1812 = vunpack.c.h.b16 %v579
        %v1813 = vunpack.c.l.b16 %v580
        %v1814 = vunpack.c.h.b16 %v580
        %v1815 = vunpack.c.l.b16 %v581
        %v1816 = vunpack.c.h.b16 %v581
        %v1817 = vunpack.c.l.b16 %v582
        %v1818 = vunpack.c.h.b16 %v582
        %v1819 = vunpack.c.l.b16 %v583
        %v1820 = vunpack.c.h.b16 %v583
        %v1821 = vunpack.c.l.b16 %v584
        %v1822 = vunpack.c.h.b16 %v584
        %v1823 = vunpack.c.l.b16 %v585
        %v1824 = vunpack.c.h.b16 %v585
        %v1825 = vunpack.c.l.b16 %v586
        %v1826 = vunpack.c.h.b16 %v586
        %v1827 = vunpack.c.l.b16 %v587
        %v1828 = vunpack.c.h.b16 %v587
        %v1829 = vunpack.c.l.b16 %v588
        %v1830 = vunpack.c.h.b16 %v588
        %v1831 = vunpack.c.l.b16 %v589
        %v1832 = vunpack.c.h.b16 %v589
        %v1833 = vunpack.c.l.b16 %v590
        %v1834 = vunpack.c.h.b16 %v590
        %v1835 = vunpack.c.l.b16 %v591
        %v1836 = vunpack.c.h.b16 %v591
        %v1837 = vunpack.c.l.b16 %v592
        %v1838 = vunpack.c.h.b16 %v592
        %v1839 = vunpack.c.l.b16 %v593
        %v1840 = vunpack.c.h.b16 %v593
        %v1841 = vunpack.c.l.b16 %v594
        %v1842 = vunpack.c.h.b16 %v594
        %v1843 = vunpack.c.l.b16 %v595
        %v1844 = vunpack.c.h.b16 %v595
        %v1845 = vunpack.c.l.b16 %v596
        %v1846 = vunpack.c.h.b16 %v596
        %v1847 = vunpack.c.l.b16 %v597
        %v1848 = vunpack.c.h.b16 %v597
        %v1849 = vunpack.c.l.b16 %v598
        %v1850 = vunpack.c.h.b16 %v598
        %v1851 = vunpack.c.l.b16 %v599
        %v1852 = vunpack.c.h.b16 %v599
        %v1853 = vunpack.c.l.b16 %v600
        %v1854 = vunpack.c.h.b16 %v600
        %v1855 = vunpack.c.l.b16 %v601
        %v1856 = vunpack.c.h.b16 %v601
        %v1857 = vunpack.c.l.b16 %v602
        %v1858 = vunpack.c.h.b16 %v602
        %v1859 = vunpack.c.l.b16 %v603
        %v1860 = vunpack.c.h.b16 %v603
        %v1861 = vunpack.c.l.b16 %v604
        %v1862 = vunpack.c.h.b16 %v604
        %v1863 = vunpack.c.l.b16 %v605
        %v1864 = vunpack.c.h.b16 %v605
        %v1865 = vunpack.c.l.b16 %v606
        %v1866 = vunpack.c.h.b16 %v606
        %v1867 = vunpack.c.l.b16 %v607
        %v1868 = vunpack.c.h.b16 %v607
        %v1869 = vunpack.c.l.b16 %v608
        %v1870 = vunpack.c.h.b16 %v608
        %v1871 = vunpack.c.l.b16 %v609
        %v1872 = vunpack.c.h.b16 %v609
        %v1873 = vunpack.c.l.b16 %v610
        %v1874 = vunpack.c.h.b16 %v610
        %v1875 = vunpack.c.l.b16 %v611
        %v1876 = vunpack.c.h.b16 %v611
        %v1877 = vunpack.c.l.b16 %v612
        %v1878 = vunpack.c.h.b16 %v612
        %v1879 = vunpack.c.l.b16 %v613
        %v1880 = vunpack.c.h.b16 %v613
        %v1881 = vunpack.c.l.b16 %v614
        %v1882 = vunpack.c.h.b16 %v614
        %v1883 = vunpack.c.l.b16 %v615
        %v1884 = vunpack.c.h.b16 %v615
        %v1885 = vunpack.c.l.b16 %v616
        %v1886 = vunpack.c.h.b16 %v616
        %v1887 = vunpack.c.l.b16 %v617
        %v1888 = vunpack.c.h.b16 %v617
        %v1889 = vunpack.c.l.b16 %v618
        %v1890 = vunpack.c.h.b16 %v618
        %v1891 = vunpack.c.l.b16 %v619
        %v1892 = vunpack.c.h.b16 %v619
        %v1893 = vunpack.c.l.b16 %v620
        %v1894 = vunpack.c.h.b16 %v620
        %v1895 = vunpack.c.l.b16 %v621
        %v1896 = vunpack.c.h.b16 %v621
        %v1897 = vunpack.c.l.b16 %v622
        %v1898 = vunpack.c.h.b16 %v622
        %v1899 = vunpack.c.l.b16 %v623
        %v1900 = vunpack.c.h.b16 %v623
        %v1901 = vunpack.c.l.b16 %v624
        %v1902 = vunpack.c.h.b16 %v624
        %v1903 = vunpack.c.l.b16 %v625
        %v1904 = vunpack.c.h.b16 %v625
        %v1905 = vunpack.c.l.b16 %v626
        %v1906 = vunpack.c.h.b16 %v626
        %v1907 = vunpack.c.l.b16 %v627
        %v1908 = vunpack.c.h.b16 %v627
        %v1909 = vunpack.c.l.b16 %v628
        %v1910 = vunpack.c.h.b16 %v628
        %v1911 = vunpack.c.l.b16 %v629
        %v1912 = vunpack.c.h.b16 %v629
        %v1913 = vunpack.c.l.b16 %v630
        %v1914 = vunpack.c.h.b16 %v630
        %v1915 = vunpack.c.l.b16 %v631
        %v1916 = vunpack.c.h.b16 %v631
        %v1917 = vunpack.c.l.b16 %v632
        %v1918 = vunpack.c.h.b16 %v632
        %v1919 = vunpack.c.l.b16 %v633
        %v1920 = vunpack.c.h.b16 %v633
        %v1921 = vunpack.c.l.b16 %v634
        %v1922 = vunpack.c.h.b16 %v634
        %v1923 = vunpack.c.l.b16 %v635
        %v1924 = vunpack.c.h.b16 %v635
        %v1925 = vunpack.c.l.b16 %v636
        %v1926 = vunpack.c.h.b16 %v636
        %v1927 = vunpack.c.l.b16 %v637
        %v1928 = vunpack.c.h.b16 %v637
        %v1929 = vunpack.c.l.b16 %v638
        %v1930 = vunpack.c.h.b16 %v638
        %v1931 = vunpack.c.l.b16 %v639
        %v1932 = vunpack.c.h.b16 %v639
        %v1933 = vunpack.c.l.b16 %v640
        %v1934 = vunpack.c.h.b16 %v640
        %v1935 = vunpack.c.l.b16 %v641
        %v1936 = vunpack.c.h.b16 %v641
        %v1937 = vunpack.c.l.b16 %v642
        %v1938 = vunpack.c.h.b16 %v642
        %v1939 = vunpack.c.l.b16 %v643
        %v1940 = vunpack.c.h.b16 %v643
        %v1941 = vunpack.c.l.b16 %v644
        %v1942 = vunpack.c.h.b16 %v644
        %v1943 = vunpack.c.l.b16 %v645
        %v1944 = vunpack.c.h.b16 %v645
        %v1945 = vunpack.c.l.b16 %v646
        %v1946 = vunpack.c.h.b16 %v646
        %v1947 = vunpack.c.l.b16 %v647
        %v1948 = vunpack.c.h.b16 %v647
        %v1949 = vunpack.c.l.b16 %v648
        %v1950 = vunpack.c.h.b16 %v648
        %v1951 = vunpack.c.l.b16 %v649
        %v1952 = vunpack.c.h.b16 %v649
        %v1953 = vunpack.c.l.b16 %v650
        %v1954 = vunpack.c.h.b16 %v650
        %v1955 = vunpack.c.l.b16 %v651
        %v1956 = vunpack.c.h.b16 %v651
        %v1957 = vunpack.c.l.b16 %v652
        %v1958 = vunpack.c.h.b16 %v652
        %v1959 = vunpack.c.l.b16 %v653
        %v1960 = vunpack.c.h.b16 %v653
        %v1961 = vunpack.c.l.b16 %v654
        %v1962 = vunpack.c.h.b16 %v654
        %v1963 = vunpack.c.l.b16 %v655
        %v1964 = vunpack.c.h.b16 %v655
        %v1965 = vunpack.c.l.b16 %v656
        %v1966 = vunpack.c.h.b16 %v656
        %v1967 = vunpack.c.l.b16 %v657
        %v1968 = vunpack.c.h.b16 %v657
        %v1969 = vunpack.c.l.b16 %v658
        %v1970 = vunpack.c.h.b16 %v658
        %v1971 = vunpack.c.l.b16 %v659
        %v1972 = vunpack.c.h.b16 %v659
        %v1973 = vunpack.c.l.b16 %v660
        %v1974 = vunpack.c.h.b16 %v660
        %v1975 = vunpack.c.l.b16 %v661
        %v1976 = vunpack.c.h.b16 %v661
        %v1977 = vunpack.c.l.b16 %v662
        %v1978 = vunpack.c.h.b16 %v662
        %v1979 = vunpack.c.l.b16 %v663
        %v1980 = vunpack.c.h.b16 %v663
        %v1981 = vunpack.c.l.b16 %v664
        %v1982 = vunpack.c.h.b16 %v664
        %v1983 = vunpack.c.l.b16 %v665
        %v1984 = vunpack.c.h.b16 %v665
        %v1985 = vunpack.c.l.b16 %v666
        %v1986 = vunpack.c.h.b16 %v666
        %v1987 = vunpack.c.l.b16 %v667
        %v1988 = vunpack.c.h.b16 %v667
        %v1989 = vunpack.c.l.b16 %v668
        %v1990 = vunpack.c.h.b16 %v668
        %v1991 = vunpack.c.l.b16 %v669
        %v1992 = vunpack.c.h.b16 %v669
        %v1993 = vunpack.c.l.b16 %v670
        %v1994 = vunpack.c.h.b16 %v670
        %v1995 = vunpack.c.l.b16 %v671
        %v1996 = vunpack.c.h.b16 %v671
        %v1997 = vunpack.c.l.b16 %v672
        %v1998 = vunpack.c.h.b16 %v672
        %v1999 = vunpack.c.l.b16 %v673
        %v2000 = vunpack.c.h.b16 %v673
        %v2001 = vunpack.c.l.b16 %v674
        %v2002 = vunpack.c.h.b16 %v674
        %v2003 = vunpack.c.l.b16 %v675
        %v2004 = vunpack.c.h.b16 %v675
        %v2005 = vunpack.c.l.b16 %v676
        %v2006 = vunpack.c.h.b16 %v676
        %v2007 = vunpack.c.l.b16 %v677
        %v2008 = vunpack.c.h.b16 %v677
        %v2009 = vunpack.c.l.b16 %v678
        %v2010 = vunpack.c.h.b16 %v678
        %v2011 = vunpack.c.l.b16 %v679
        %v2012 = vunpack.c.h.b16 %v679
        %v2013 = vunpack.c.l.b16 %v680
        %v2014 = vunpack.c.h.b16 %v680
        %v2015 = vunpack.c.l.b16 %v681
        %v2016 = vunpack.c.h.b16 %v681
        %v2017 = vunpack.c.l.b16 %v682
        %v2018 = vunpack.c.h.b16 %v682
        %v2019 = vunpack.c.l.b16 %v683
        %v2020 = vunpack.c.h.b16 %v683
        %v2021 = vunpack.c.l.b16 %v684
        %v2022 = vunpack.c.h.b16 %v684
        %v2023 = vunpack.c.l.b16 %v685
        %v2024 = vunpack.c.h.b16 %v685
        %v2025 = vunpack.c.l.b16 %v686
        %v2026 = vunpack.c.h.b16 %v686
        %v2027 = vunpack.c.l.b16 %v687
        %v2028 = vunpack.c.h.b16 %v687
        %v2029 = vunpack.c.l.b16 %v688
        %v2030 = vunpack.c.h.b16 %v688
        %v2031 = vunpack.c.l.b16 %v689
        %v2032 = vunpack.c.h.b16 %v689
        %v2033 = vunpack.c.l.b16 %v690
        %v2034 = vunpack.c.h.b16 %v690
        %v2035 = vunpack.c.l.b16 %v691
        %v2036 = vunpack.c.h.b16 %v691
        %v2037 = vunpack.c.l.b16 %v692
        %v2038 = vunpack.c.h.b16 %v692
        %v2039 = vunpack.c.l.b16 %v693
        %v2040 = vunpack.c.h.b16 %v693
        %v2041 = vunpack.c.l.b16 %v694
        %v2042 = vunpack.c.h.b16 %v694
        %v2043 = vunpack.c.l.b16 %v695
        %v2044 = vunpack.c.h.b16 %v695
        %v2045 = vunpack.c.l.b16 %v696
        %v2046 = vunpack.c.h.b16 %v696
        %v2047 = vunpack.c.l.b16 %v697
        %v2048 = vunpack.c.h.b16 %v697
        %v2049 = vunpack.c.l.b16 %v698
        %v2050 = vunpack.c.h.b16 %v698
        %v2051 = vunpack.c.l.b16 %v699
        %v2052 = vunpack.c.h.b16 %v699
        %v2053 = vunpack.c.l.b16 %v700
        %v2054 = vunpack.c.h.b16 %v700
        %v2055 = vunpack.c.l.b16 %v701
        %v2056 = vunpack.c.h.b16 %v701
        %v2057 = vunpack.c.l.b16 %v702
        %v2058 = vunpack.c.h.b16 %v702
        %v2059 = vunpack.c.l.b16 %v703
        %v2060 = vunpack.c.h.b16 %v703
        %v2061 = vunpack.c.l.b16 %v704
        %v2062 = vunpack.c.h.b16 %v704
        %v2063 = vunpack.c.l.b16 %v705
        %v2064 = vunpack.c.h.b16 %v705
        %v2065 = vunpack.c.l.b16 %v706
        %v2066 = vunpack.c.h.b16 %v706
        %v2067 = vunpack.c.l.b16 %v707
        %v2068 = vunpack.c.h.b16 %v707
        %v2069 = vunpack.c.l.b16 %v708
        %v2070 = vunpack.c.h.b16 %v708
        %v2071 = vunpack.c.l.b16 %v709
        %v2072 = vunpack.c.h.b16 %v709
        %v2073 = vpack.c.b16 %v1179, %v1177
        %v2074 = vpack.c.b16 %v1180, %v1178
        %v2075 = vpack.c.b16 %v1183, %v1181
        %v2076 = vpack.c.b16 %v1184, %v1182
        %v2077 = vpack.c.b16 %v1187, %v1185
        %v2078 = vpack.c.b16 %v1188, %v1186
        %v2079 = vpack.c.b16 %v1191, %v1189
        %v2080 = vpack.c.b16 %v1192, %v1190
        %v2081 = vpack.c.b16 %v1195, %v1193
        %v2082 = vpack.c.b16 %v1196, %v1194
        %v2083 = vpack.c.b16 %v1199, %v1197
        %v2084 = vpack.c.b16 %v1200, %v1198
        %v2085 = vpack.c.b16 %v1203, %v1201
        %v2086 = vpack.c.b16 %v1204, %v1202
        %v2087 = vpack.c.b16 %v1207, %v1205
        %v2088 = vpack.c.b16 %v1208, %v1206
        %v2089 = vpack.c.b16 %v1211, %v1209
        %v2090 = vpack.c.b16 %v1212, %v1210
        %v2091 = vpack.c.b16 %v1215, %v1213
        %v2092 = vpack.c.b16 %v1216, %v1214
        %v2093 = vpack.c.b16 %v1219, %v1217
        %v2094 = vpack.c.b16 %v1220, %v1218
        %v2095 = vpack.c.b16 %v1223, %v1221
        %v2096 = vpack.c.b16 %v1224, %v1222
        %v2097 = vpack.c.b16 %v1227, %v1225
        %v2098 = vpack.c.b16 %v1228, %v1226
        %v2099 = vpack.c.b16 %v1231, %v1229
        %v2100 = vpack.c.b16 %v1232, %v1230
        %v2101 = vpack.c.b16 %v1235, %v1233
        %v2102 = vpack.c.b16 %v1236, %v1234
        %v2103 = vpack.c.b16 %v1239, %v1237
        %v2104 = vpack.c.b16 %v1240, %v1238
        %v2105 = vpack.c.b16 %v1243, %v1241
        %v2106 = vpack.c.b16 %v1244, %v1242
        %v2107 = vpack.c.b16 %v1247, %v1245
        %v2108 = vpack.c.b16 %v1248, %v1246
        %v2109 = vpack.c.b16 %v1251, %v1249
        %v2110 = vpack.c.b16 %v1252, %v1250
        %v2111 = vpack.c.b16 %v1255, %v1253
        %v2112 = vpack.c.b16 %v1256, %v1254
        %v2113 = vpack.c.b16 %v1259, %v1257
        %v2114 = vpack.c.b16 %v1260, %v1258
        %v2115 = vpack.c.b16 %v1263, %v1261
        %v2116 = vpack.c.b16 %v1264, %v1262
        %v2117 = vpack.c.b16 %v1267, %v1265
        %v2118 = vpack.c.b16 %v1268, %v1266
        %v2119 = vpack.c.b16 %v1271, %v1269
        %v2120 = vpack.c.b16 %v1272, %v1270
        %v2121 = vpack.c.b16 %v1275, %v1273
        %v2122 = vpack.c.b16 %v1276, %v1274
        %v2123 = vpack.c.b16 %v1279, %v1277
        %v2124 = vpack.c.b16 %v1280, %v1278
        %v2125 = vpack.c.b16 %v1283, %v1281
        %v2126 = vpack.c.b16 %v1284, %v1282
        %v2127 = vpack.c.b16 %v1287, %v1285
        %v2128 = vpack.c.b16 %v1288, %v1286
        %v2129 = vpack.c.b16 %v1291, %v1289
        %v2130 = vpack.c.b16 %v1292, %v1290
        %v2131 = vpack.c.b16 %v1295, %v1293
        %v2132 = vpack.c.b16 %v1296, %v1294
        %v2133 = vpack.c.b16 %v1299, %v1297
        %v2134 = vpack.c.b16 %v1300, %v1298
        %v2135 = vpack.c.b16 %v1303, %v1301
        %v2136 = vpack.c.b16 %v1304, %v1302
        %v2137 = vpack.c.b16 %v1307, %v1305
        %v2138 = vpack.c.b16 %v1308, %v1306
        %v2139 = vpack.c.b16 %v1311, %v1309
        %v2140 = vpack.c.b16 %v1312, %v1310
        %v2141 = vpack.c.b16 %v1315, %v1313
        %v2142 = vpack.c.b16 %v1316, %v1314
        %v2143 = vpack.c.b16 %v1319, %v1317
        %v2144 = vpack.c.b16 %v1320, %v1318
        %v2145 = vpack.c.b16 %v1323, %v1321
        %v2146 = vpack.c.b16 %v1324, %v1322
        %v2147 = vpack.c.b16 %v1327, %v1325
        %v2148 = vpack.c.b16 %v1328, %v1326
        %v2149 = vpack.c.b16 %v1331, %v1329
        %v2150 = vpack.c.b16 %v1332, %v1330
        %v2151 = vpack.c.b16 %v1335, %v1333
        %v2152 = vpack.c.b16 %v1336, %v1334
        %v2153 = vpack.c.b16 %v1339, %v1337
        %v2154 = vpack.c.b16 %v1340, %v1338
        %v2155 = vpack.c.b16 %v1343, %v1341
        %v2156 = vpack.c.b16 %v1344, %v1342
        %v2157 = vpack.c.b16 %v1347, %v1345
        %v2158 = vpack.c.b16 %v1348, %v1346
        %v2159 = vpack.c.b16 %v1351, %v1349
        %v2160 = vpack.c.b16 %v1352, %v1350
        %v2161 = vpack.c.b16 %v1355, %v1353
        %v2162 = vpack.c.b16 %v1356, %v1354
        %v2163 = vpack.c.b16 %v1359, %v1357
        %v2164 = vpack.c.b16 %v1360, %v1358
        %v2165 = vpack.c.b16 %v1363, %v1361
        %v2166 = vpack.c.b16 %v1364, %v1362
        %v2167 = vpack.c.b16 %v1367, %v1365
        %v2168 = vpack.c.b16 %v1368, %v1366
        %v2169 = vpack.c.b16 %v1371, %v1369
        %v2170 = vpack.c.b16 %v1372, %v1370
        %v2171 = vpack.c.b16 %v1375, %v1373
        %v2172 = vpack.c.b16 %v1376, %v1374
        %v2173 = vpack.c.b16 %v1379, %v1377
        %v2174 = vpack.c.b16 %v1380, %v1378
        %v2175 = vpack.c.b16 %v1383, %v1381
        %v2176 = vpack.c.b16 %v1384, %v1382
        %v2177 = vpack.c.b16 %v1387, %v1385
        %v2178 = vpack.c.b16 %v1388, %v1386
        %v2179 = vpack.c.b16 %v1391, %v1389
        %v2180 = vpack.c.b16 %v1392, %v1390
        %v2181 = vpack.c.b16 %v1395, %v1393
        %v2182 = vpack.c.b16 %v1396, %v1394
        %v2183 = vpack.c.b16 %v1399, %v1397
        %v2184 = vpack.c.b16 %v1400, %v1398
        %v2185 = vpack.c.b16 %v1403, %v1401
        %v2186 = vpack.c.b16 %v1404, %v1402
        %v2187 = vpack.c.b16 %v1407, %v1405
        %v2188 = vpack.c.b16 %v1408, %v1406
        %v2189 = vpack.c.b16 %v1411, %v1409
        %v2190 = vpack.c.b16 %v1412, %v1410
        %v2191 = vpack.c.b16 %v1415, %v1413
        %v2192 = vpack.c.b16 %v1416, %v1414
        %v2193 = vpack.c.b16 %v1419, %v1417
        %v2194 = vpack.c.b16 %v1420, %v1418
        %v2195 = vpack.c.b16 %v1423, %v1421
        %v2196 = vpack.c.b16 %v1424, %v1422
        %v2197 = vpack.c.b16 %v1427, %v1425
        %v2198 = vpack.c.b16 %v1428, %v1426
        %v2199 = vpack.c.b16 %v1431, %v1429
        %v2200 = vpack.c.b16 %v1432, %v1430
        %v2201 = vpack.c.b16 %v1435, %v1433
        %v2202 = vpack.c.b16 %v1436, %v1434
        %v2203 = vpack.c.b16 %v1439, %v1437
        %v2204 = vpack.c.b16 %v1440, %v1438
        %v2205 = vpack.c.b16 %v1443, %v1441
        %v2206 = vpack.c.b16 %v1444, %v1442
        %v2207 = vpack.c.b16 %v1447, %v1445
        %v2208 = vpack.c.b16 %v1448, %v1446
        %v2209 = vpack.c.b16 %v1451, %v1449
        %v2210 = vpack.c.b16 %v1452, %v1450
        %v2211 = vpack.c.b16 %v1455, %v1453
        %v2212 = vpack.c.b16 %v1456, %v1454
        %v2213 = vpack.c.b16 %v1459, %v1457
        %v2214 = vpack.c.b16 %v1460, %v1458
        %v2215 = vpack.c.b16 %v1463, %v1461
        %v2216 = vpack.c.b16 %v1464, %v1462
        %v2217 = vpack.c.b16 %v1467, %v1465
        %v2218 = vpack.c.b16 %v1468, %v1466
        %v2219 = vpack.c.b16 %v1471, %v1469
        %v2220 = vpack.c.b16 %v1472, %v1470
        %v2221 = vpack.c.b16 %v1475, %v1473
        %v2222 = vpack.c.b16 %v1476, %v1474
        %v2223 = vpack.c.b16 %v1479, %v1477
        %v2224 = vpack.c.b16 %v1480, %v1478
        %v2225 = vpack.c.b16 %v1483, %v1481
        %v2226 = vpack.c.b16 %v1484, %v1482
        %v2227 = vpack.c.b16 %v1487, %v1485
        %v2228 = vpack.c.b16 %v1488, %v1486
        %v2229 = vpack.c.b16 %v1491, %v1489
        %v2230 = vpack.c.b16 %v1492, %v1490
        %v2231 = vpack.c.b16 %v1495, %v1493
        %v2232 = vpack.c.b16 %v1496, %v1494
        %v2233 = vpack.c.b16 %v1499, %v1497
        %v2234 = vpack.c.b16 %v1500, %v1498
        %v2235 = vpack.c.b16 %v1503, %v1501
        %v2236 = vpack.c.b16 %v1504, %v1502
        %v2237 = vpack.c.b16 %v1507, %v1505
        %v2238 = vpack.c.b16 %v1508, %v1506
        %v2239 = vpack.c.b16 %v1511, %v1509
        %v2240 = vpack.c.b16 %v1512, %v1510
        %v2241 = vpack.c.b16 %v1515, %v1513
        %v2242 = vpack.c.b16 %v1516, %v1514
        %v2243 = vpack.c.b16 %v1519, %v1517
        %v2244 = vpack.c.b16 %v1520, %v1518
        %v2245 = vpack.c.b16 %v1523, %v1521
        %v2246 = vpack.c.b16 %v1524, %v1522
        %v2247 = vpack.c.b16 %v1527, %v1525
        %v2248 = vpack.c.b16 %v1528, %v1526
        %v2249 = vpack.c.b16 %v1531, %v1529
        %v2250 = vpack.c.b16 %v1532, %v1530
        %v2251 = vpack.c.b16 %v1535, %v1533
        %v2252 = vpack.c.b16 %v1536, %v1534
        %v2253 = vpack.c.b16 %v1539, %v1537
        %v2254 = vpack.c.b16 %v1540, %v1538
        %v2255 = vpack.c.b16 %v1543, %v1541
        %v2256 = vpack.c.b16 %v1544, %v1542
        %v2257 = vpack.c.b16 %v1547, %v1545
        %v2258 = vpack.c.b16 %v1548, %v1546
        %v2259 = vpack.c.b16 %v1551, %v1549
        %v2260 = vpack.c.b16 %v1552, %v1550
        %v2261 = vpack.c.b16 %v1555, %v1553
        %v2262 = vpack.c.b16 %v1556, %v1554
        %v2263 = vpack.c.b16 %v1559, %v1557
        %v2264 = vpack.c.b16 %v1560, %v1558
        %v2265 = vpack.c.b16 %v1563, %v1561
        %v2266 = vpack.c.b16 %v1564, %v1562
        %v2267 = vpack.c.b16 %v1567, %v1565
        %v2268 = vpack.c.b16 %v1568, %v1566
        %v2269 = vpack.c.b16 %v1571, %v1569
        %v2270 = vpack.c.b16 %v1572, %v1570
        %v2271 = vpack.c.b16 %v1575, %v1573
        %v2272 = vpack.c.b16 %v1576, %v1574
        %v2273 = vpack.c.b16 %v1579, %v1577
        %v2274 = vpack.c.b16 %v1580, %v1578
        %v2275 = vpack.c.b16 %v1583, %v1581
        %v2276 = vpack.c.b16 %v1584, %v1582
        %v2277 = vpack.c.b16 %v1587, %v1585
        %v2278 = vpack.c.b16 %v1588, %v1586
        %v2279 = vpack.c.b16 %v1591, %v1589
        %v2280 = vpack.c.b16 %v1592, %v1590
        %v2281 = vpack.c.b16 %v1595, %v1593
        %v2282 = vpack.c.b16 %v1596, %v1594
        %v2283 = vpack.c.b16 %v1599, %v1597
        %v2284 = vpack.c.b16 %v1600, %v1598
        %v2285 = vpack.c.b16 %v1603, %v1601
        %v2286 = vpack.c.b16 %v1604, %v1602
        %v2287 = vpack.c.b16 %v1607, %v1605
        %v2288 = vpack.c.b16 %v1608, %v1606
        %v2289 = vpack.c.b16 %v1611, %v1609
        %v2290 = vpack.c.b16 %v1612, %v1610
        %v2291 = vpack.c.b16 %v1615, %v1613
        %v2292 = vpack.c.b16 %v1616, %v1614
        %v2293 = vpack.c.b16 %v1619, %v1617
        %v2294 = vpack.c.b16 %v1620, %v1618
        %v2295 = vpack.c.b16 %v1623, %v1621
        %v2296 = vpack.c.b16 %v1624, %v1622
        %v2297 = vpack.c.b16 %v1627, %v1625
        %v2298 = vpack.c.b16 %v1628, %v1626
        %v2299 = vpack.c.b16 %v1631, %v1629
        %v2300 = vpack.c.b16 %v1632, %v1630
        %v2301 = vpack.c.b16 %v1635, %v1633
        %v2302 = vpack.c.b16 %v1636, %v1634
        %v2303 = vpack.c.b16 %v1639, %v1637
        %v2304 = vpack.c.b16 %v1640, %v1638
        %v2305 = vpack.c.b16 %v1643, %v1641
        %v2306 = vpack.c.b16 %v1644, %v1642
        %v2307 = vpack.c.b16 %v1647, %v1645
        %v2308 = vpack.c.b16 %v1648, %v1646
        %v2309 = vpack.c.b16 %v1651, %v1649
        %v2310 = vpack.c.b16 %v1652, %v1650
        %v2311 = vpack.c.b16 %v1655, %v1653
        %v2312 = vpack.c.b16 %v1656, %v1654
        %v2313 = vpack.c.b16 %v1659, %v1657
        %v2314 = vpack.c.b16 %v1660, %v1658
        %v2315 = vpack.c.b16 %v1663, %v1661
        %v2316 = vpack.c.b16 %v1664, %v1662
        %v2317 = vpack.c.b16 %v1667, %v1665
        %v2318 = vpack.c.b16 %v1668, %v1666
        %v2319 = vpack.c.b16 %v1671, %v1669
        %v2320 = vpack.c.b16 %v1672, %v1670
        %v2321 = vpack.c.b16 %v1675, %v1673
        %v2322 = vpack.c.b16 %v1676, %v1674
        %v2323 = vpack.c.b16 %v1679, %v1677
        %v2324 = vpack.c.b16 %v1680, %v1678
        %v2325 = vpack.c.b16 %v1683, %v1681
        %v2326 = vpack.c.b16 %v1684, %v1682
        %v2327 = vpack.c.b16 %v1687, %v1685
        %v2328 = vpack.c.b16 %v1688, %v1686
        %v2329 = vpack.c.b16 %v1691, %v1689
        %v2330 = vpack.c.b16 %v1692, %v1690
        %v2331 = vpack.c.b16 %v1695, %v1693
        %v2332 = vpack.c.b16 %v1696, %v1694
        %v2333 = vpack.c.b16 %v1699, %v1697
        %v2334 = vpack.c.b16 %v1700, %v1698
        %v2335 = vpack.c.b16 %v1703, %v1701
        %v2336 = vpack.c.b16 %v1704, %v1702
        %v2337 = vpack.c.b16 %v1707, %v1705
        %v2338 = vpack.c.b16 %v1708, %v1706
        %v2339 = vpack.c.b16 %v1711, %v1709
        %v2340 = vpack.c.b16 %v1712, %v1710
        %v2341 = vpack.c.b16 %v1715, %v1713
        %v2342 = vpack.c.b16 %v1716, %v1714
        %v2343 = vpack.c.b16 %v1719, %v1717
        %v2344 = vpack.c.b16 %v1720, %v1718
        %v2345 = vpack.c.b16 %v1723, %v1721
        %v2346 = vpack.c.b16 %v1724, %v1722
        %v2347 = vpack.c.b16 %v1727, %v1725
        %v2348 = vpack.c.b16 %v1728, %v1726
        %v2349 = vpack.c.b16 %v1731, %v1729
        %v2350 = vpack.c.b16 %v1732, %v1730
        %v2351 = vpack.c.b16 %v1735, %v1733
        %v2352 = vpack.c.b16 %v1736, %v1734
        %v2353 = vpack.c.b16 %v1739, %v1737
        %v2354 = vpack.c.b16 %v1740, %v1738
        %v2355 = vpack.c.b16 %v1743, %v1741
        %v2356 = vpack.c.b16 %v1744, %v1742
        %v2357 = vpack.c.b16 %v1747, %v1745
        %v2358 = vpack.c.b16 %v1748, %v1746
        %v2359 = vpack.c.b16 %v1751, %v1749
        %v2360 = vpack.c.b16 %v1752, %v1750
        %v2361 = vpack.c.b16 %v1755, %v1753
        %v2362 = vpack.c.b16 %v1756, %v1754
        %v2363 = vpack.c.b16 %v1759, %v1757
        %v2364 = vpack.c.b16 %v1760, %v1758
        %v2365 = vpack.c.b16 %v1763, %v1761
        %v2366 = vpack.c.b16 %v1764, %v1762
        %v2367 = vpack.c.b16 %v1767, %v1765
        %v2368 = vpack.c.b16 %v1768, %v1766
        %v2369 = vpack.c.b16 %v1771, %v1769
        %v2370 = vpack.c.b16 %v1772, %v1770
        %v2371 = vpack.c.b16 %v1775, %v1773
        %v2372 = vpack.c.b16 %v1776, %v1774
        %v2373 = vpack.c.b16 %v1779, %v1777
        %v2374 = vpack.c.b16 %v1780, %v1778
        %v2375 = vpack.c.b16 %v1783, %v1781
        %v2376 = vpack.c.b16 %v1784, %v1782
        %v2377 = vpack.c.b16 %v1787, %v1785
        %v2378 = vpack.c.b16 %v1788, %v1786
        %v2379 = vpack.c.b16 %v1791, %v1789
        %v2380 = vpack.c.b16 %v1792, %v1790
        %v2381 = vpack.c.b16 %v1795, %v1793
        %v2382 = vpack.c.b16 %v1796, %v1794
        %v2383 = vpack.c.b16 %v1799, %v1797
        %v2384 = vpack.c.b16 %v1800, %v1798
        %v2385 = vpack.c.b16 %v1803, %v1801
        %v2386 = vpack.c.b16 %v1804, %v1802
        %v2387 = vpack.c.b16 %v1807, %v1805
        %v2388 = vpack.c.b16 %v1808, %v1806
        %v2389 = vpack.c.b16 %v1811, %v1809
        %v2390 = vpack.c.b16 %v1812, %v1810
        %v2391 = vpack.c.b16 %v1815, %v1813
        %v2392 = vpack.c.b16 %v1816, %v1814
        %v2393 = vpack.c.b16 %v1819, %v1817
        %v2394 = vpack.c.b16 %v1820, %v1818
        %v2395 = vpack.c.b16 %v1823, %v1821
        %v2396 = vpack.c.b16 %v1824, %v1822
        %v2397 = vpack.c.b16 %v1827, %v1825
        %v2398 = vpack.c.b16 %v1828, %v1826
        %v2399 = vpack.c.b16 %v1831, %v1829
        %v2400 = vpack.c.b16 %v1832, %v1830
        %v2401 = vpack.c.b16 %v1835, %v1833
        %v2402 = vpack.c.b16 %v1836, %v1834
        %v2403 = vpack.c.b16 %v1839, %v1837
        %v2404 = vpack.c.b16 %v1840, %v1838
        %v2405 = vpack.c.b16 %v1843, %v1841
        %v2406 = vpack.c.b16 %v1844, %v1842
        %v2407 = vpack.c.b16 %v1847, %v1845
        %v2408 = vpack.c.b16 %v1848, %v1846
        %v2409 = vpack.c.b16 %v1851, %v1849
        %v2410 = vpack.c.b16 %v1852, %v1850
        %v2411 = vpack.c.b16 %v1855, %v1853
        %v2412 = vpack.c.b16 %v1856, %v1854
        %v2413 = vpack.c.b16 %v1859, %v1857
        %v2414 = vpack.c.b16 %v1860, %v1858
        %v2415 = vpack.c.b16 %v1863, %v1861
        %v2416 = vpack.c.b16 %v1864, %v1862
        %v2417 = vpack.c.b16 %v1867, %v1865
        %v2418 = vpack.c.b16 %v1868, %v1866
        %v2419 = vpack.c.b16 %v1871, %v1869
        %v2420 = vpack.c.b16 %v1872, %v1870
        %v2421 = vpack.c.b16 %v1875, %v1873
        %v2422 = vpack.c.b16 %v1876, %v1874
        %v2423 = vpack.c.b16 %v1879, %v1877
        %v2424 = vpack.c.b16 %v1880, %v1878
        %v2425 = vpack.c.b16 %v1883, %v1881
        %v2426 = vpack.c.b16 %v1884, %v1882
        %v2427 = vpack.c.b16 %v1887, %v1885
        %v2428 = vpack.c.b16 %v1888, %v1886
        %v2429 = vpack.c.b16 %v1891, %v1889
        %v2430 = vpack.c.b16 %v1892, %v1890
        %v2431 = vpack.c.b16 %v1895, %v1893
        %v2432 = vpack.c.b16 %v1896, %v1894
        %v2433 = vpack.c.b16 %v1899, %v1897
        %v2434 = vpack.c.b16 %v1900, %v1898
        %v2435 = vpack.c.b16 %v1903, %v1901
        %v2436 = vpack.c.b16 %v1904, %v1902
        %v2437 = vpack.c.b16 %v1907, %v1905
        %v2438 = vpack.c.b16 %v1908, %v1906
        %v2439 = vpack.c.b16 %v1911, %v1909
        %v2440 = vpack.c.b16 %v1912, %v1910
        %v2441 = vpack.c.b16 %v1915, %v1913
        %v2442 = vpack.c.b16 %v1916, %v1914
        %v2443 = vpack.c.b16 %v1919, %v1917
        %v2444 = vpack.c.b16 %v1920, %v1918
        %v2445 = vpack.c.b16 %v1923, %v1921
        %v2446 = vpack.c.b16 %v1924, %v1922
        %v2447 = vpack.c.b16 %v1927, %v1925
        %v2448 = vpack.c.b16 %v1928, %v1926
        %v2449 = vpack.c.b16 %v1931, %v1929
        %v2450 = vpack.c.b16 %v1932, %v1930
        %v2451 = vpack.c.b16 %v1935, %v1933
        %v2452 = vpack.c.b16 %v1936, %v1934
        %v2453 = vpack.c.b16 %v1939, %v1937
        %v2454 = vpack.c.b16 %v1940, %v1938
        %v2455 = vpack.c.b16 %v1943, %v1941
        %v2456 = vpack.c.b16 %v1944, %v1942
        %v2457 = vpack.c.b16 %v1947, %v1945
        %v2458 = vpack.c.b16 %v1948, %v1946
        %v2459 = vpack.c.b16 %v1951, %v1949
        %v2460 = vpack.c.b16 %v1952, %v1950
        %v2461 = vpack.c.b16 %v1955, %v1953
        %v2462 = vpack.c.b16 %v1956, %v1954
        %v2463 = vpack.c.b16 %v1959, %v1957
        %v2464 = vpack.c.b16 %v1960, %v1958
        %v2465 = vpack.c.b16 %v1963, %v1961
        %v2466 = vpack.c.b16 %v1964, %v1962
        %v2467 = vpack.c.b16 %v1967, %v1965
        %v2468 = vpack.c.b16 %v1968, %v1966
        %v2469 = vpack.c.b16 %v1971, %v1969
        %v2470 = vpack.c.b16 %v1972, %v1970
        %v2471 = vpack.c.b16 %v1975, %v1973
        %v2472 = vpack.c.b16 %v1976, %v1974
        %v2473 = vpack.c.b16 %v1979, %v1977
        %v2474 = vpack.c.b16 %v1980, %v1978
        %v2475 = vpack.c.b16 %v1983, %v1981
        %v2476 = vpack.c.b16 %v1984, %v1982
        %v2477 = vpack.c.b16 %v1987, %v1985
        %v2478 = vpack.c.b16 %v1988, %v1986
        %v2479 = vpack.c.b16 %v1991, %v1989
        %v2480 = vpack.c.b16 %v1992, %v1990
        %v2481 = vpack.c.b16 %v1995, %v1993
        %v2482 = vpack.c.b16 %v1996, %v1994
        %v2483 = vpack.c.b16 %v1999, %v1997
        %v2484 = vpack.c.b16 %v2000, %v1998
        %v2485 = vpack.c.b16 %v2003, %v2001
        %v2486 = vpack.c.b16 %v2004, %v2002
        %v2487 = vpack.c.b16 %v2007, %v2005
        %v2488 = vpack.c.b16 %v2008, %v2006
        %v2489 = vpack.c.b16 %v2011, %v2009
        %v2490 = vpack.c.b16 %v2012, %v2010
        %v2491 = vpack.c.b16 %v2015, %v2013
        %v2492 = vpack.c.b16 %v2016, %v2014
        %v2493 = vpack.c.b16 %v2019, %v2017
        %v2494 = vpack.c.b16 %v2020, %v2018
        %v2495 = vpack.c.b16 %v2023, %v2021
        %v2496 = vpack.c.b16 %v2024, %v2022
        %v2497 = vpack.c.b16 %v2027, %v2025
        %v2498 = vpack.c.b16 %v2028, %v2026
        %v2499 = vpack.c.b16 %v2031, %v2029
        %v2500 = vpack.c.b16 %v2032, %v2030
        %v2501 = vpack.c.b16 %v2035, %v2033
        %v2502 = vpack.c.b16 %v2036, %v2034
        %v2503 = vpack.c.b16 %v2039, %v2037
        %v2504 = vpack.c.b16 %v2040, %v2038
        %v2505 = vpack.c.b16 %v2043, %v2041
        %v2506 = vpack.c.b16 %v2044, %v2042
        %v2507 = vpack.c.b16 %v2047, %v2045
        %v2508 = vpack.c.b16 %v2048, %v2046
        %v2509 = vpack.c.b16 %v2051, %v2049
        %v2510 = vpack.c.b16 %v2052, %v2050
        %v2511 = vpack.c.b16 %v2055, %v2053
        %v2512 = vpack.c.b16 %v2056, %v2054
        %v2513 = vpack.c.b16 %v2059, %v2057
        %v2514 = vpack.c.b16 %v2060, %v2058
        %v2515 = vpack.c.b16 %v2063, %v2061
        %v2516 = vpack.c.b16 %v2064, %v2062
        %v2517 = vpack.c.b16 %v2067, %v2065
        %v2518 = vpack.c.b16 %v2068, %v2066
        %v2519 = vpack.c.b16 %v2071, %v2069
        %v2520 = vpack.c.b16 %v2072, %v2070
        %v2764 = vunpack.c.l.b16 %v710
        %v2765 = vunpack.c.l.b16 %v711
        %v2766 = vunpack.c.l.b16 %v712
        %v2767 = vunpack.c.l.b16 %v713
        %v2768 = vunpack.c.l.b16 %v714
        %v2769 = vunpack.c.l.b16 %v715
        %v2770 = vunpack.c.l.b16 %v716
        %v2771 = vunpack.c.l.b16 %v717
        %v2772 = vunpack.c.l.b16 %v718
        %v2773 = vunpack.c.l.b16 %v719
        %v2774 = vunpack.c.l.b16 %v720
        %v2775 = vunpack.c.l.b16 %v721
        %v2776 = vunpack.c.l.b16 %v722
        %v2777 = vunpack.c.l.b16 %v723
        %v2778 = vunpack.c.l.b16 %v724
        %v2779 = vunpack.c.l.b16 %v725
        %v2780 = vunpack.c.l.b16 %v726
        %v2781 = vunpack.c.l.b16 %v727
        %v2782 = vunpack.c.l.b16 %v728
        %v2783 = vpack.c.b16 %v2765, %v2764
        %v2784 = vpack.c.b16 %v2767, %v2766
        %v2785 = vpack.c.b16 %v2769, %v2768
        %v2786 = vpack.c.b16 %v2771, %v2770
        %v2787 = vpack.c.b16 %v2773, %v2772
        %v2788 = vpack.c.b16 %v2775, %v2774
        %v2789 = vpack.c.b16 %v2777, %v2776
        %v2790 = vpack.c.b16 %v2779, %v2778
        %v2791 = vpack.c.b16 %v2781, %v2780
        %v2792 = vpack.c.b16 %v2782, %v2782
        %vm2802 = vcmask 154624
        %v2804 = vsel %vm2802, %v2074, 0
        %v2807 = vsel %vm2802, %v2076, 0
        %v2810 = vsel %vm2802, %v2078, 0
        %v2813 = vsel %vm2802, %v2080, 0
        %v2816 = vsel %vm2802, %v2082, 0
        %v2819 = vsel %vm2802, %v2084, 0
        %v2822 = vsel %vm2802, %v2086, 0
        %v2825 = vsel %vm2802, %v2088, 0
        %v2828 = vsel %vm2802, %v2090, 0
        %v2831 = vsel %vm2802, %v2092, 0
        %v2834 = vsel %vm2802, %v2094, 0
        %v2837 = vsel %vm2802, %v2096, 0
        %v2840 = vsel %vm2802, %v2098, 0
        %v2843 = vsel %vm2802, %v2100, 0
        %v2846 = vsel %vm2802, %v2102, 0
        %v2849 = vsel %vm2802, %v2104, 0
        %v2852 = vsel %vm2802, %v2106, 0
        %v2855 = vsel %vm2802, %v2108, 0
        %v2858 = vsel %vm2802, %v2110, 0
        %v2861 = vsel %vm2802, %v2112, 0
        %v2864 = vsel %vm2802, %v2114, 0
        %v2867 = vsel %vm2802, %v2116, 0
        %v2870 = vsel %vm2802, %v2118, 0
        %v2873 = vsel %vm2802, %v2120, 0
        %v2876 = vsel %vm2802, %v2122, 0
        %v2879 = vsel %vm2802, %v2124, 0
        %v2882 = vsel %vm2802, %v2126, 0
        %v2885 = vsel %vm2802, %v2128, 0
        %v2888 = vsel %vm2802, %v2130, 0
        %v2891 = vsel %vm2802, %v2132, 0
        %v2894 = vsel %vm2802, %v2134, 0
        %v2897 = vsel %vm2802, %v2136, 0
        %v2900 = vsel %vm2802, %v2138, 0
        %v2903 = vsel %vm2802, %v2140, 0
        %v2906 = vsel %vm2802, %v2142, 0
        %v2909 = vsel %vm2802, %v2144, 0
        %v2912 = vsel %vm2802, %v2146, 0
        %v2915 = vsel %vm2802, %v2148, 0
        %v2918 = vsel %vm2802, %v2150, 0
        %v2921 = vsel %vm2802, %v2152, 0
        %v2924 = vsel %vm2802, %v2154, 0
        %v2927 = vsel %vm2802, %v2156, 0
        %v2930 = vsel %vm2802, %v2158, 0
        %v2933 = vsel %vm2802, %v2160, 0
        %v2936 = vsel %vm2802, %v2162, 0
        %v2939 = vsel %vm2802, %v2164, 0
        %v2942 = vsel %vm2802, %v2166, 0
        %v2945 = vsel %vm2802, %v2168, 0
        %v2948 = vsel %vm2802, %v2170, 0
        %v2951 = vsel %vm2802, %v2172, 0
        %v2954 = vsel %vm2802, %v2174, 0
        %v2957 = vsel %vm2802, %v2176, 0
        %v2960 = vsel %vm2802, %v2178, 0
        %v2963 = vsel %vm2802, %v2180, 0
        %v2966 = vsel %vm2802, %v2182, 0
        %v2969 = vsel %vm2802, %v2184, 0
        %v2972 = vsel %vm2802, %v2186, 0
        %v2975 = vsel %vm2802, %v2188, 0
        %v2978 = vsel %vm2802, %v2190, 0
        %v2981 = vsel %vm2802, %v2192, 0
        %v2984 = vsel %vm2802, %v2194, 0
        %v2987 = vsel %vm2802, %v2196, 0
        %v2990 = vsel %vm2802, %v2198, 0
        %v2993 = vsel %vm2802, %v2200, 0
        %v2996 = vsel %vm2802, %v2202, 0
        %v2999 = vsel %vm2802, %v2204, 0
        %v3002 = vsel %vm2802, %v2206, 0
        %v3005 = vsel %vm2802, %v2208, 0
        %v3008 = vsel %vm2802, %v2210, 0
        %v3011 = vsel %vm2802, %v2212, 0
        %v3014 = vsel %vm2802, %v2214, 0
        %v3017 = vsel %vm2802, %v2216, 0
        %v3020 = vsel %vm2802, %v2218, 0
        %v3023 = vsel %vm2802, %v2220, 0
        %v3026 = vsel %vm2802, %v2222, 0
        %v3029 = vsel %vm2802, %v2224, 0
        %v3032 = vsel %vm2802, %v2226, 0
        %v3035 = vsel %vm2802, %v2228, 0
        %v3038 = vsel %vm2802, %v2230, 0
        %v3041 = vsel %vm2802, %v2232, 0
        %v3044 = vsel %vm2802, %v2234, 0
        %v3047 = vsel %vm2802, %v2236, 0
        %v3050 = vsel %vm2802, %v2238, 0
        %v3053 = vsel %vm2802, %v2240, 0
        %v3056 = vsel %vm2802, %v2242, 0
        %v3059 = vsel %vm2802, %v2244, 0
        %v3062 = vsel %vm2802, %v2246, 0
        %v3065 = vsel %vm2802, %v2248, 0
        %v3068 = vsel %vm2802, %v2250, 0
        %v3071 = vsel %vm2802, %v2252, 0
        %v3074 = vsel %vm2802, %v2254, 0
        %v3077 = vsel %vm2802, %v2256, 0
        %v3080 = vsel %vm2802, %v2258, 0
        %v3083 = vsel %vm2802, %v2260, 0
        %v3086 = vsel %vm2802, %v2262, 0
        %v3089 = vsel %vm2802, %v2264, 0
        %v3092 = vsel %vm2802, %v2266, 0
        %v3095 = vsel %vm2802, %v2268, 0
        %v3098 = vsel %vm2802, %v2270, 0
        %v3101 = vsel %vm2802, %v2272, 0
        %v3104 = vsel %vm2802, %v2274, 0
        %v3107 = vsel %vm2802, %v2276, 0
        %v3110 = vsel %vm2802, %v2278, 0
        %v3113 = vsel %vm2802, %v2280, 0
        %v3116 = vsel %vm2802, %v2282, 0
        %v3119 = vsel %vm2802, %v2284, 0
        %v3122 = vsel %vm2802, %v2286, 0
        %v3125 = vsel %vm2802, %v2288, 0
        %v3128 = vsel %vm2802, %v2290, 0
        %v3131 = vsel %vm2802, %v2292, 0
        %v3134 = vsel %vm2802, %v2294, 0
        %v3137 = vsel %vm2802, %v2296, 0
        %v3140 = vsel %vm2802, %v2298, 0
        %v3143 = vsel %vm2802, %v2300, 0
        %v3146 = vsel %vm2802, %v2302, 0
        %v3149 = vsel %vm2802, %v2304, 0
        %v3152 = vsel %vm2802, %v2306, 0
        %v3155 = vsel %vm2802, %v2308, 0
        %v3158 = vsel %vm2802, %v2310, 0
        %v3161 = vsel %vm2802, %v2312, 0
        %v3164 = vsel %vm2802, %v2314, 0
        %v3167 = vsel %vm2802, %v2316, 0
        %v3170 = vsel %vm2802, %v2318, 0
        %v3173 = vsel %vm2802, %v2320, 0
        %v3176 = vsel %vm2802, %v2322, 0
        %v3179 = vsel %vm2802, %v2324, 0
        %v3182 = vsel %vm2802, %v2326, 0
        %v3185 = vsel %vm2802, %v2328, 0
        %v3188 = vsel %vm2802, %v2330, 0
        %v3191 = vsel %vm2802, %v2332, 0
        %v3194 = vsel %vm2802, %v2334, 0
        %v3197 = vsel %vm2802, %v2336, 0
        %v3200 = vsel %vm2802, %v2338, 0
        %v3203 = vsel %vm2802, %v2340, 0
        %v3206 = vsel %vm2802, %v2342, 0
        %v3209 = vsel %vm2802, %v2344, 0
        %v3212 = vsel %vm2802, %v2346, 0
        %v3215 = vsel %vm2802, %v2348, 0
        %v3218 = vsel %vm2802, %v2350, 0
        %v3221 = vsel %vm2802, %v2352, 0
        %v3224 = vsel %vm2802, %v2354, 0
        %v3227 = vsel %vm2802, %v2356, 0
        %v3230 = vsel %vm2802, %v2358, 0
        %v3233 = vsel %vm2802, %v2360, 0
        %v3236 = vsel %vm2802, %v2362, 0
        %v3239 = vsel %vm2802, %v2364, 0
        %v3242 = vsel %vm2802, %v2366, 0
        %v3245 = vsel %vm2802, %v2368, 0
        %v3248 = vsel %vm2802, %v2370, 0
        %v3251 = vsel %vm2802, %v2372, 0
        %v3254 = vsel %vm2802, %v2374, 0
        %v3257 = vsel %vm2802, %v2376, 0
        %v3260 = vsel %vm2802, %v2378, 0
        %v3263 = vsel %vm2802, %v2380, 0
        %v3266 = vsel %vm2802, %v2382, 0
        %v3269 = vsel %vm2802, %v2384, 0
        %v3272 = vsel %vm2802, %v2386, 0
        %v3275 = vsel %vm2802, %v2388, 0
        %v3278 = vsel %vm2802, %v2390, 0
        %v3281 = vsel %vm2802, %v2392, 0
        %v3284 = vsel %vm2802, %v2394, 0
        %v3287 = vsel %vm2802, %v2396, 0
        %v3290 = vsel %vm2802, %v2398, 0
        %v3293 = vsel %vm2802, %v2400, 0
        %v3296 = vsel %vm2802, %v2402, 0
        %v3299 = vsel %vm2802, %v2404, 0
        %v3302 = vsel %vm2802, %v2406, 0
        %v3305 = vsel %vm2802, %v2408, 0
        %v3308 = vsel %vm2802, %v2410, 0
        %v3311 = vsel %vm2802, %v2412, 0
        %v3314 = vsel %vm2802, %v2414, 0
        %v3317 = vsel %vm2802, %v2416, 0
        %v3320 = vsel %vm2802, %v2418, 0
        %v3323 = vsel %vm2802, %v2420, 0
        %v3326 = vsel %vm2802, %v2422, 0
        %v3329 = vsel %vm2802, %v2424, 0
        %v3332 = vsel %vm2802, %v2426, 0
        %v3335 = vsel %vm2802, %v2428, 0
        %v3338 = vsel %vm2802, %v2430, 0
        %v3341 = vsel %vm2802, %v2432, 0
        %v3344 = vsel %vm2802, %v2434, 0
        %v3347 = vsel %vm2802, %v2436, 0
        %v3350 = vsel %vm2802, %v2438, 0
        %v3353 = vsel %vm2802, %v2440, 0
        %v3356 = vsel %vm2802, %v2442, 0
        %v3359 = vsel %vm2802, %v2444, 0
        %v3362 = vsel %vm2802, %v2446, 0
        %v3365 = vsel %vm2802, %v2448, 0
        %v3368 = vsel %vm2802, %v2450, 0
        %v3371 = vsel %vm2802, %v2452, 0
        %v3374 = vsel %vm2802, %v2454, 0
        %v3377 = vsel %vm2802, %v2456, 0
        %v3380 = vsel %vm2802, %v2458, 0
        %v3383 = vsel %vm2802, %v2460, 0
        %v3386 = vsel %vm2802, %v2462, 0
        %v3389 = vsel %vm2802, %v2464, 0
        %v3392 = vsel %vm2802, %v2466, 0
        %v3395 = vsel %vm2802, %v2468, 0
        %v3398 = vsel %vm2802, %v2470, 0
        %v3401 = vsel %vm2802, %v2472, 0
        %v3404 = vsel %vm2802, %v2474, 0
        %v3407 = vsel %vm2802, %v2476, 0
        %v3410 = vsel %vm2802, %v2478, 0
        %v3413 = vsel %vm2802, %v2480, 0
        %v3416 = vsel %vm2802, %v2482, 0
        %v3419 = vsel %vm2802, %v2484, 0
        %v3422 = vsel %vm2802, %v2486, 0
        %v3425 = vsel %vm2802, %v2488, 0
        %v3428 = vsel %vm2802, %v2490, 0
        %v3431 = vsel %vm2802, %v2492, 0
        %v3434 = vsel %vm2802, %v2494, 0
        %v3437 = vsel %vm2802, %v2496, 0
        %v3440 = vsel %vm2802, %v2498, 0
        %v3443 = vsel %vm2802, %v2500, 0
        %v3446 = vsel %vm2802, %v2502, 0
        %v3449 = vsel %vm2802, %v2504, 0
        %v3452 = vsel %vm2802, %v2506, 0
        %v3455 = vsel %vm2802, %v2508, 0
        %v3458 = vsel %vm2802, %v2510, 0
        %v3461 = vsel %vm2802, %v2512, 0
        %v3464 = vsel %vm2802, %v2514, 0
        %v3467 = vsel %vm2802, %v2516, 0
        %v3470 = vsel %vm2802, %v2518, 0
        %v3473 = vsel %vm2802, %v2520, 0
        %vm3475 = vcmask 1040384
        %vm3476 = vcmask 1041408
        %v3477 = vsel %vm3475, 4294967295, 65535
        %v3478 = vsel %vm3476, %v3477, 0
        %v3480 = vand.u32 %v2792, %v3478
        %3482 = vmatprep.subr.bf16.mxu0 0
        %3483 = vmatpush1.bf16.msra.mxu0 %v2783
        %3484 = vmatprep.subr.bf16.mxu0 0
        %3485 = vmatpush1.bf16.msra.mxu0 %v2784
        %3486 = vmatprep.subr.bf16.mxu0 0
        %3487 = vmatpush1.bf16.msra.mxu0 %v2785
        %3488 = vmatprep.subr.bf16.mxu0 0
        %3489 = vmatpush1.bf16.msra.mxu0 %v2786
        %3490 = vmatprep.subr.bf16.mxu0 0
        %3491 = vmatpush1.bf16.msra.mxu0 %v2787
        %3492 = vmatprep.subr.bf16.mxu0 0
        %3493 = vmatpush1.bf16.msra.mxu0 %v2788
        %3494 = vmatprep.subr.bf16.mxu0 0
        %3495 = vmatpush1.bf16.msra.mxu0 %v2789
        %3496 = vmatprep.subr.bf16.mxu0 0
        %3497 = vmatpush1.bf16.msra.mxu0 %v2790
        %3498 = vmatprep.subr.bf16.mxu0 0
        %3499 = vmatpush1.bf16.msra.mxu0 %v2791
        %3500 = vmatprep.subr.bf16.mxu0 0
        %3501 = vmatpush1.bf16.msra.mxu0 %v3480
        %3502 = vmatprep.subr.bf16.mxu0 0
        %3503 = vmatpush1.bf16.msra.mxu0 0
        %3504 = vmatprep.subr.bf16.mxu0 0
        %3505 = vmatpush1.bf16.msra.mxu0 0
        %3506 = vmatprep.subr.bf16.mxu0 0
        %3507 = vmatpush1.bf16.msra.mxu0 0
        %3508 = vmatprep.subr.bf16.mxu0 0
        %3509 = vmatpush1.bf16.msra.mxu0 0
        %3510 = vmatprep.subr.bf16.mxu0 0
        %3511 = vmatpush1.bf16.msra.mxu0 0
        %3512 = vmatprep.subr.bf16.mxu0 0
        %3513 = vmatpush1.bf16.msra.mxu0 0
        %3514 = vmatprep.mubr.bf16.mxu0 %v2804
        %3515 = vmatmul.mubr.bf16.gmra.mrb[0].mxu0 %v2073
        %v3516 = vpop.f32.mrb[0].mxu0
        %v3517 = vadd.f32 0.0, %v3516
        %v3518 = vpop.f32.mrb[0].mxu0
        %v3519 = vpop.f32.mrb[0].mxu0
        %v3520 = vadd.f32 0.0, %v3519
        %v3521 = vpop.f32.mrb[0].mxu0
        %3522 = vmatprep.mubr.bf16.mxu0 %v2807
        %3523 = vmatmul.mubr.bf16.gmra.mrb[0].mxu0 %v2075
        %v3524 = vpop.f32.mrb[0].mxu0
        %v3525 = vadd.f32 0.0, %v3524
        %v3526 = vpop.f32.mrb[0].mxu0
        %v3527 = vpop.f32.mrb[0].mxu0
        %v3528 = vadd.f32 0.0, %v3527
        %v3529 = vpop.f32.mrb[0].mxu0
        %3530 = vmatprep.mubr.bf16.mxu0 %v2810
        %3531 = vmatmul.mubr.bf16.gmra.mrb[0].mxu0 %v2077
        %v3532 = vpop.f32.mrb[0].mxu0
        %v3533 = vadd.f32 0.0, %v3532
        %v3534 = vpop.f32.mrb[0].mxu0
        %v3535 = vpop.f32.mrb[0].mxu0
        %v3536 = vadd.f32 0.0, %v3535
        %v3537 = vpop.f32.mrb[0].mxu0
        %3538 = vmatprep.mubr.bf16.mxu0 %v2813
        %3539 = vmatmul.mubr.bf16.gmra.mrb[0].mxu0 %v2079
        %v3540 = vpop.f32.mrb[0].mxu0
        %v3541 = vadd.f32 0.0, %v3540
        %v3542 = vpop.f32.mrb[0].mxu0
        %v3543 = vpop.f32.mrb[0].mxu0
        %v3544 = vadd.f32 0.0, %v3543
        %v3545 = vpop.f32.mrb[0].mxu0
        %3546 = vmatprep.mubr.bf16.mxu0 %v2816
        %3547 = vmatmul.mubr.bf16.gmra.mrb[0].mxu0 %v2081
        %v3548 = vpop.f32.mrb[0].mxu0
        %v3549 = vadd.f32 0.0, %v3548
        %v3550 = vpop.f32.mrb[0].mxu0
        %v3551 = vpop.f32.mrb[0].mxu0
        %v3552 = vadd.f32 0.0, %v3551
        %v3553 = vpop.f32.mrb[0].mxu0
        %3554 = vmatprep.mubr.bf16.mxu0 %v2819
        %3555 = vmatmul.mubr.bf16.gmra.mrb[0].mxu0 %v2083
        %v3556 = vpop.f32.mrb[0].mxu0
        %v3557 = vadd.f32 0.0, %v3556
        %v3558 = vpop.f32.mrb[0].mxu0
        %v3559 = vpop.f32.mrb[0].mxu0
        %v3560 = vadd.f32 0.0, %v3559
        %v3561 = vpop.f32.mrb[0].mxu0
        %3562 = vmatprep.mubr.bf16.mxu0 %v2822
        %3563 = vmatmul.mubr.bf16.gmra.mrb[0].mxu0 %v2085
        %v3564 = vpop.f32.mrb[0].mxu0
        %v3565 = vadd.f32 0.0, %v3564
        %v3566 = vpop.f32.mrb[0].mxu0
        %v3567 = vpop.f32.mrb[0].mxu0
        %v3568 = vadd.f32 0.0, %v3567
        %v3569 = vpop.f32.mrb[0].mxu0
        %3570 = vmatprep.mubr.bf16.mxu0 %v2825
        %3571 = vmatmul.mubr.bf16.gmra.mrb[0].mxu0 %v2087
        %v3572 = vpop.f32.mrb[0].mxu0
        %v3573 = vadd.f32 0.0, %v3572
        %v3574 = vpop.f32.mrb[0].mxu0
        %v3575 = vpop.f32.mrb[0].mxu0
        %v3576 = vadd.f32 0.0, %v3575
        %v3577 = vpop.f32.mrb[0].mxu0
        %3578 = vmatprep.mubr.bf16.mxu0 %v2828
        %3579 = vmatmul.mubr.bf16.gmra.mrb[0].mxu0 %v2089
        %v3580 = vpop.f32.mrb[0].mxu0
        %v3581 = vadd.f32 0.0, %v3580
        %v3582 = vpop.f32.mrb[0].mxu0
        %v3583 = vpop.f32.mrb[0].mxu0
        %v3584 = vadd.f32 0.0, %v3583
        %v3585 = vpop.f32.mrb[0].mxu0
        %3586 = vmatprep.mubr.bf16.mxu0 %v2831
        %3587 = vmatmul.mubr.bf16.gmra.mrb[0].mxu0 %v2091
        %v3588 = vpop.f32.mrb[0].mxu0
        %v3589 = vadd.f32 0.0, %v3588
        %v3590 = vpop.f32.mrb[0].mxu0
        %v3591 = vpop.f32.mrb[0].mxu0
        %v3592 = vadd.f32 0.0, %v3591
        %v3593 = vpop.f32.mrb[0].mxu0
        %3594 = vmatprep.mubr.bf16.mxu0 %v2834
        %3595 = vmatmul.mubr.bf16.gmra.mrb[0].mxu0 %v2093
        %v3596 = vpop.f32.mrb[0].mxu0
        %v3597 = vadd.f32 0.0, %v3596
        %v3598 = vpop.f32.mrb[0].mxu0
        %v3599 = vpop.f32.mrb[0].mxu0
        %v3600 = vadd.f32 0.0, %v3599
        %v3601 = vpop.f32.mrb[0].mxu0
        %3602 = vmatprep.mubr.bf16.mxu0 %v2837
        %3603 = vmatmul.mubr.bf16.gmra.mrb[0].mxu0 %v2095
        %v3604 = vpop.f32.mrb[0].mxu0
        %v3605 = vadd.f32 0.0, %v3604
        %v3606 = vpop.f32.mrb[0].mxu0
        %v3607 = vpop.f32.mrb[0].mxu0
        %v3608 = vadd.f32 0.0, %v3607
        %v3609 = vpop.f32.mrb[0].mxu0
        %3610 = vmatprep.mubr.bf16.mxu0 %v2840
        %3611 = vmatmul.mubr.bf16.gmra.mrb[0].mxu0 %v2097
        %v3612 = vpop.f32.mrb[0].mxu0
        %v3613 = vadd.f32 0.0, %v3612
        %v3614 = vpop.f32.mrb[0].mxu0
        %v3615 = vpop.f32.mrb[0].mxu0
        %v3616 = vadd.f32 0.0, %v3615
        %v3617 = vpop.f32.mrb[0].mxu0
        %3618 = vmatprep.mubr.bf16.mxu0 %v2843
        %3619 = vmatmul.mubr.bf16.gmra.mrb[0].mxu0 %v2099
        %v3620 = vpop.f32.mrb[0].mxu0
        %v3621 = vadd.f32 0.0, %v3620
        %v3622 = vpop.f32.mrb[0].mxu0
        %v3623 = vpop.f32.mrb[0].mxu0
        %v3624 = vadd.f32 0.0, %v3623
        %v3625 = vpop.f32.mrb[0].mxu0
        %3626 = vmatprep.mubr.bf16.mxu0 %v2846
        %3627 = vmatmul.mubr.bf16.gmra.mrb[0].mxu0 %v2101
        %v3628 = vpop.f32.mrb[0].mxu0
        %v3629 = vadd.f32 0.0, %v3628
        %v3630 = vpop.f32.mrb[0].mxu0
        %v3631 = vpop.f32.mrb[0].mxu0
        %v3632 = vadd.f32 0.0, %v3631
        %v3633 = vpop.f32.mrb[0].mxu0
        %3634 = vmatprep.mubr.bf16.mxu0 %v2849
        %3635 = vmatmul.mubr.bf16.gmra.mrb[0].mxu0 %v2103
        %v3636 = vpop.f32.mrb[0].mxu0
        %v3637 = vadd.f32 0.0, %v3636
        %v3638 = vpop.f32.mrb[0].mxu0
        %v3639 = vpop.f32.mrb[0].mxu0
        %v3640 = vadd.f32 0.0, %v3639
        %v3641 = vpop.f32.mrb[0].mxu0
        %3642 = vmatprep.mubr.bf16.mxu0 %v2852
        %3643 = vmatmul.mubr.bf16.gmra.mrb[0].mxu0 %v2105
        %v3644 = vpop.f32.mrb[0].mxu0
        %v3645 = vadd.f32 0.0, %v3644
        %v3646 = vpop.f32.mrb[0].mxu0
        %v3647 = vpop.f32.mrb[0].mxu0
        %v3648 = vadd.f32 0.0, %v3647
        %v3649 = vpop.f32.mrb[0].mxu0
        %3650 = vmatprep.mubr.bf16.mxu0 %v2855
        %3651 = vmatmul.mubr.bf16.gmra.mrb[0].mxu0 %v2107
        %v3652 = vpop.f32.mrb[0].mxu0
        %v3653 = vadd.f32 0.0, %v3652
        %v3654 = vpop.f32.mrb[0].mxu0
        %v3655 = vpop.f32.mrb[0].mxu0
        %v3656 = vadd.f32 0.0, %v3655
        %v3657 = vpop.f32.mrb[0].mxu0
        %3658 = vmatprep.mubr.bf16.mxu0 %v2858
        %3659 = vmatmul.mubr.bf16.gmra.mrb[0].mxu0 %v2109
        %v3660 = vpop.f32.mrb[0].mxu0
        %v3661 = vadd.f32 0.0, %v3660
        %v3662 = vpop.f32.mrb[0].mxu0
        %v3663 = vpop.f32.mrb[0].mxu0
        %v3664 = vadd.f32 0.0, %v3663
        %v3665 = vpop.f32.mrb[0].mxu0
        %3666 = vmatprep.mubr.bf16.mxu0 %v2861
        %3667 = vmatmul.mubr.bf16.gmra.mrb[0].mxu0 %v2111
        %v3668 = vpop.f32.mrb[0].mxu0
        %v3669 = vadd.f32 0.0, %v3668
        %v3670 = vpop.f32.mrb[0].mxu0
        %v3671 = vpop.f32.mrb[0].mxu0
        %v3672 = vadd.f32 0.0, %v3671
        %v3673 = vpop.f32.mrb[0].mxu0
        %3674 = vmatprep.mubr.bf16.mxu0 %v2864
        %3675 = vmatmul.mubr.bf16.gmra.mrb[0].mxu0 %v2113
        %v3676 = vpop.f32.mrb[0].mxu0
        %v3677 = vadd.f32 0.0, %v3676
        %v3678 = vpop.f32.mrb[0].mxu0
        %v3679 = vpop.f32.mrb[0].mxu0
        %v3680 = vadd.f32 0.0, %v3679
        %v3681 = vpop.f32.mrb[0].mxu0
        %3682 = vmatprep.mubr.bf16.mxu0 %v2867
        %3683 = vmatmul.mubr.bf16.gmra.mrb[0].mxu0 %v2115
        %v3684 = vpop.f32.mrb[0].mxu0
        %v3685 = vadd.f32 0.0, %v3684
        %v3686 = vpop.f32.mrb[0].mxu0
        %v3687 = vpop.f32.mrb[0].mxu0
        %v3688 = vadd.f32 0.0, %v3687
        %v3689 = vpop.f32.mrb[0].mxu0
        %3690 = vmatprep.mubr.bf16.mxu0 %v2870
        %3691 = vmatmul.mubr.bf16.gmra.mrb[0].mxu0 %v2117
        %v3692 = vpop.f32.mrb[0].mxu0
        %v3693 = vadd.f32 0.0, %v3692
        %v3694 = vpop.f32.mrb[0].mxu0
        %v3695 = vpop.f32.mrb[0].mxu0
        %v3696 = vadd.f32 0.0, %v3695
        %v3697 = vpop.f32.mrb[0].mxu0
        %3698 = vmatprep.mubr.bf16.mxu0 %v2873
        %3699 = vmatmul.mubr.bf16.gmra.mrb[0].mxu0 %v2119
        %v3700 = vpop.f32.mrb[0].mxu0
        %v3701 = vadd.f32 0.0, %v3700
        %v3702 = vpop.f32.mrb[0].mxu0
        %v3703 = vpop.f32.mrb[0].mxu0
        %v3704 = vadd.f32 0.0, %v3703
        %v3705 = vpop.f32.mrb[0].mxu0
        %3706 = vmatprep.mubr.bf16.mxu0 %v2876
        %3707 = vmatmul.mubr.bf16.gmra.mrb[0].mxu0 %v2121
        %v3708 = vpop.f32.mrb[0].mxu0
        %v3709 = vadd.f32 0.0, %v3708
        %v3710 = vpop.f32.mrb[0].mxu0
        %v3711 = vpop.f32.mrb[0].mxu0
        %v3712 = vadd.f32 0.0, %v3711
        %v3713 = vpop.f32.mrb[0].mxu0
        %3714 = vmatprep.mubr.bf16.mxu0 %v2879
        %3715 = vmatmul.mubr.bf16.gmra.mrb[0].mxu0 %v2123
        %v3716 = vpop.f32.mrb[0].mxu0
        %v3717 = vadd.f32 0.0, %v3716
        %v3718 = vpop.f32.mrb[0].mxu0
        %v3719 = vpop.f32.mrb[0].mxu0
        %v3720 = vadd.f32 0.0, %v3719
        %v3721 = vpop.f32.mrb[0].mxu0
        %3722 = vmatprep.mubr.bf16.mxu0 %v2882
        %3723 = vmatmul.mubr.bf16.gmra.mrb[0].mxu0 %v2125
        %v3724 = vpop.f32.mrb[0].mxu0
        %v3725 = vadd.f32 0.0, %v3724
        %v3726 = vpop.f32.mrb[0].mxu0
        %v3727 = vpop.f32.mrb[0].mxu0
        %v3728 = vadd.f32 0.0, %v3727
        %v3729 = vpop.f32.mrb[0].mxu0
        %3730 = vmatprep.mubr.bf16.mxu0 %v2885
        %3731 = vmatmul.mubr.bf16.gmra.mrb[0].mxu0 %v2127
        %v3732 = vpop.f32.mrb[0].mxu0
        %v3733 = vadd.f32 0.0, %v3732
        %v3734 = vpop.f32.mrb[0].mxu0
        %v3735 = vpop.f32.mrb[0].mxu0
        %v3736 = vadd.f32 0.0, %v3735
        %v3737 = vpop.f32.mrb[0].mxu0
        %3738 = vmatprep.mubr.bf16.mxu0 %v2888
        %3739 = vmatmul.mubr.bf16.gmra.mrb[0].mxu0 %v2129
        %v3740 = vpop.f32.mrb[0].mxu0
        %v3741 = vadd.f32 0.0, %v3740
        %v3742 = vpop.f32.mrb[0].mxu0
        %v3743 = vpop.f32.mrb[0].mxu0
        %v3744 = vadd.f32 0.0, %v3743
        %v3745 = vpop.f32.mrb[0].mxu0
        %3746 = vmatprep.mubr.bf16.mxu0 %v2891
        %3747 = vmatmul.mubr.bf16.gmra.mrb[0].mxu0 %v2131
        %v3748 = vpop.f32.mrb[0].mxu0
        %v3749 = vadd.f32 0.0, %v3748
        %v3750 = vpop.f32.mrb[0].mxu0
        %v3751 = vpop.f32.mrb[0].mxu0
        %v3752 = vadd.f32 0.0, %v3751
        %v3753 = vpop.f32.mrb[0].mxu0
        %3754 = vmatprep.mubr.bf16.mxu0 %v2894
        %3755 = vmatmul.mubr.bf16.gmra.mrb[0].mxu0 %v2133
        %v3756 = vpop.f32.mrb[0].mxu0
        %v3757 = vadd.f32 0.0, %v3756
        %v3758 = vpop.f32.mrb[0].mxu0
        %v3759 = vpop.f32.mrb[0].mxu0
        %v3760 = vadd.f32 0.0, %v3759
        %v3761 = vpop.f32.mrb[0].mxu0
        %3762 = vmatprep.mubr.bf16.mxu0 %v2897
        %3763 = vmatmul.mubr.bf16.gmra.mrb[0].mxu0 %v2135
        %v3764 = vpop.f32.mrb[0].mxu0
        %v3765 = vadd.f32 0.0, %v3764
        %v3766 = vpop.f32.mrb[0].mxu0
        %v3767 = vpop.f32.mrb[0].mxu0
        %v3768 = vadd.f32 0.0, %v3767
        %v3769 = vpop.f32.mrb[0].mxu0
        %3770 = vmatprep.mubr.bf16.mxu0 %v2900
        %3771 = vmatmul.mubr.bf16.gmra.mrb[0].mxu0 %v2137
        %v3772 = vpop.f32.mrb[0].mxu0
        %v3773 = vadd.f32 0.0, %v3772
        %v3774 = vpop.f32.mrb[0].mxu0
        %v3775 = vpop.f32.mrb[0].mxu0
        %v3776 = vadd.f32 0.0, %v3775
        %v3777 = vpop.f32.mrb[0].mxu0
        %3778 = vmatprep.mubr.bf16.mxu0 %v2903
        %3779 = vmatmul.mubr.bf16.gmra.mrb[0].mxu0 %v2139
        %v3780 = vpop.f32.mrb[0].mxu0
        %v3781 = vadd.f32 0.0, %v3780
        %v3782 = vpop.f32.mrb[0].mxu0
        %v3783 = vpop.f32.mrb[0].mxu0
        %v3784 = vadd.f32 0.0, %v3783
        %v3785 = vpop.f32.mrb[0].mxu0
        %3786 = vmatprep.mubr.bf16.mxu0 %v2906
        %3787 = vmatmul.mubr.bf16.gmra.mrb[0].mxu0 %v2141
        %v3788 = vpop.f32.mrb[0].mxu0
        %v3789 = vadd.f32 0.0, %v3788
        %v3790 = vpop.f32.mrb[0].mxu0
        %v3791 = vpop.f32.mrb[0].mxu0
        %v3792 = vadd.f32 0.0, %v3791
        %v3793 = vpop.f32.mrb[0].mxu0
        %3794 = vmatprep.mubr.bf16.mxu0 %v2909
        %3795 = vmatmul.mubr.bf16.gmra.mrb[0].mxu0 %v2143
        %v3796 = vpop.f32.mrb[0].mxu0
        %v3797 = vadd.f32 0.0, %v3796
        %v3798 = vpop.f32.mrb[0].mxu0
        %v3799 = vpop.f32.mrb[0].mxu0
        %v3800 = vadd.f32 0.0, %v3799
        %v3801 = vpop.f32.mrb[0].mxu0
        %3802 = vmatprep.mubr.bf16.mxu0 %v2912
        %3803 = vmatmul.mubr.bf16.gmra.mrb[0].mxu0 %v2145
        %v3804 = vpop.f32.mrb[0].mxu0
        %v3805 = vadd.f32 0.0, %v3804
        %v3806 = vpop.f32.mrb[0].mxu0
        %v3807 = vpop.f32.mrb[0].mxu0
        %v3808 = vadd.f32 0.0, %v3807
        %v3809 = vpop.f32.mrb[0].mxu0
        %3810 = vmatprep.mubr.bf16.mxu0 %v2915
        %3811 = vmatmul.mubr.bf16.gmra.mrb[0].mxu0 %v2147
        %v3812 = vpop.f32.mrb[0].mxu0
        %v3813 = vadd.f32 0.0, %v3812
        %v3814 = vpop.f32.mrb[0].mxu0
        %v3815 = vpop.f32.mrb[0].mxu0
        %v3816 = vadd.f32 0.0, %v3815
        %v3817 = vpop.f32.mrb[0].mxu0
        %3818 = vmatprep.mubr.bf16.mxu0 %v2918
        %3819 = vmatmul.mubr.bf16.gmra.mrb[0].mxu0 %v2149
        %v3820 = vpop.f32.mrb[0].mxu0
        %v3821 = vadd.f32 0.0, %v3820
        %v3822 = vpop.f32.mrb[0].mxu0
        %v3823 = vpop.f32.mrb[0].mxu0
        %v3824 = vadd.f32 0.0, %v3823
        %v3825 = vpop.f32.mrb[0].mxu0
        %3826 = vmatprep.mubr.bf16.mxu0 %v2921
        %3827 = vmatmul.mubr.bf16.gmra.mrb[0].mxu0 %v2151
        %v3828 = vpop.f32.mrb[0].mxu0
        %v3829 = vadd.f32 0.0, %v3828
        %v3830 = vpop.f32.mrb[0].mxu0
        %v3831 = vpop.f32.mrb[0].mxu0
        %v3832 = vadd.f32 0.0, %v3831
        %v3833 = vpop.f32.mrb[0].mxu0
        %3834 = vmatprep.mubr.bf16.mxu0 %v2924
        %3835 = vmatmul.mubr.bf16.gmra.mrb[0].mxu0 %v2153
        %v3836 = vpop.f32.mrb[0].mxu0
        %v3837 = vadd.f32 0.0, %v3836
        %v3838 = vpop.f32.mrb[0].mxu0
        %v3839 = vpop.f32.mrb[0].mxu0
        %v3840 = vadd.f32 0.0, %v3839
        %v3841 = vpop.f32.mrb[0].mxu0
        %3842 = vmatprep.mubr.bf16.mxu0 %v2927
        %3843 = vmatmul.mubr.bf16.gmra.mrb[0].mxu0 %v2155
        %v3844 = vpop.f32.mrb[0].mxu0
        %v3845 = vadd.f32 0.0, %v3844
        %v3846 = vpop.f32.mrb[0].mxu0
        %v3847 = vpop.f32.mrb[0].mxu0
        %v3848 = vadd.f32 0.0, %v3847
        %v3849 = vpop.f32.mrb[0].mxu0
        %3850 = vmatprep.mubr.bf16.mxu0 %v2930
        %3851 = vmatmul.mubr.bf16.gmra.mrb[0].mxu0 %v2157
        %v3852 = vpop.f32.mrb[0].mxu0
        %v3853 = vadd.f32 0.0, %v3852
        %v3854 = vpop.f32.mrb[0].mxu0
        %v3855 = vpop.f32.mrb[0].mxu0
        %v3856 = vadd.f32 0.0, %v3855
        %v3857 = vpop.f32.mrb[0].mxu0
        %3858 = vmatprep.mubr.bf16.mxu0 %v2933
        %3859 = vmatmul.mubr.bf16.gmra.mrb[0].mxu0 %v2159
        %v3860 = vpop.f32.mrb[0].mxu0
        %v3861 = vadd.f32 0.0, %v3860
        %v3862 = vpop.f32.mrb[0].mxu0
        %v3863 = vpop.f32.mrb[0].mxu0
        %v3864 = vadd.f32 0.0, %v3863
        %v3865 = vpop.f32.mrb[0].mxu0
        %3866 = vmatprep.mubr.bf16.mxu0 %v2936
        %3867 = vmatmul.mubr.bf16.gmra.mrb[0].mxu0 %v2161
        %v3868 = vpop.f32.mrb[0].mxu0
        %v3869 = vadd.f32 0.0, %v3868
        %v3870 = vpop.f32.mrb[0].mxu0
        %v3871 = vpop.f32.mrb[0].mxu0
        %v3872 = vadd.f32 0.0, %v3871
        %v3873 = vpop.f32.mrb[0].mxu0
        %3874 = vmatprep.mubr.bf16.mxu0 %v2939
        %3875 = vmatmul.mubr.bf16.gmra.mrb[0].mxu0 %v2163
        %v3876 = vpop.f32.mrb[0].mxu0
        %v3877 = vadd.f32 0.0, %v3876
        %v3878 = vpop.f32.mrb[0].mxu0
        %v3879 = vpop.f32.mrb[0].mxu0
        %v3880 = vadd.f32 0.0, %v3879
        %v3881 = vpop.f32.mrb[0].mxu0
        %3882 = vmatprep.mubr.bf16.mxu0 %v2942
        %3883 = vmatmul.mubr.bf16.gmra.mrb[0].mxu0 %v2165
        %v3884 = vpop.f32.mrb[0].mxu0
        %v3885 = vadd.f32 0.0, %v3884
        %v3886 = vpop.f32.mrb[0].mxu0
        %v3887 = vpop.f32.mrb[0].mxu0
        %v3888 = vadd.f32 0.0, %v3887
        %v3889 = vpop.f32.mrb[0].mxu0
        %3890 = vmatprep.mubr.bf16.mxu0 %v2945
        %3891 = vmatmul.mubr.bf16.gmra.mrb[0].mxu0 %v2167
        %v3892 = vpop.f32.mrb[0].mxu0
        %v3893 = vadd.f32 0.0, %v3892
        %v3894 = vpop.f32.mrb[0].mxu0
        %v3895 = vpop.f32.mrb[0].mxu0
        %v3896 = vadd.f32 0.0, %v3895
        %v3897 = vpop.f32.mrb[0].mxu0
        %3898 = vmatprep.mubr.bf16.mxu0 %v2948
        %3899 = vmatmul.mubr.bf16.gmra.mrb[0].mxu0 %v2169
        %v3900 = vpop.f32.mrb[0].mxu0
        %v3901 = vadd.f32 0.0, %v3900
        %v3902 = vpop.f32.mrb[0].mxu0
        %v3903 = vpop.f32.mrb[0].mxu0
        %v3904 = vadd.f32 0.0, %v3903
        %v3905 = vpop.f32.mrb[0].mxu0
        %3906 = vmatprep.mubr.bf16.mxu0 %v2951
        %3907 = vmatmul.mubr.bf16.gmra.mrb[0].mxu0 %v2171
        %v3908 = vpop.f32.mrb[0].mxu0
        %v3909 = vadd.f32 0.0, %v3908
        %v3910 = vpop.f32.mrb[0].mxu0
        %v3911 = vpop.f32.mrb[0].mxu0
        %v3912 = vadd.f32 0.0, %v3911
        %v3913 = vpop.f32.mrb[0].mxu0
        %3914 = vmatprep.mubr.bf16.mxu0 %v2954
        %3915 = vmatmul.mubr.bf16.gmra.mrb[0].mxu0 %v2173
        %v3916 = vpop.f32.mrb[0].mxu0
        %v3917 = vadd.f32 0.0, %v3916
        %v3918 = vpop.f32.mrb[0].mxu0
        %v3919 = vpop.f32.mrb[0].mxu0
        %v3920 = vadd.f32 0.0, %v3919
        %v3921 = vpop.f32.mrb[0].mxu0
        %3922 = vmatprep.mubr.bf16.mxu0 %v2957
        %3923 = vmatmul.mubr.bf16.gmra.mrb[0].mxu0 %v2175
        %v3924 = vpop.f32.mrb[0].mxu0
        %v3925 = vadd.f32 0.0, %v3924
        %v3926 = vpop.f32.mrb[0].mxu0
        %v3927 = vpop.f32.mrb[0].mxu0
        %v3928 = vadd.f32 0.0, %v3927
        %v3929 = vpop.f32.mrb[0].mxu0
        %3930 = vmatprep.mubr.bf16.mxu0 %v2960
        %3931 = vmatmul.mubr.bf16.gmra.mrb[0].mxu0 %v2177
        %v3932 = vpop.f32.mrb[0].mxu0
        %v3933 = vadd.f32 0.0, %v3932
        %v3934 = vpop.f32.mrb[0].mxu0
        %v3935 = vpop.f32.mrb[0].mxu0
        %v3936 = vadd.f32 0.0, %v3935
        %v3937 = vpop.f32.mrb[0].mxu0
        %3938 = vmatprep.mubr.bf16.mxu0 %v2963
        %3939 = vmatmul.mubr.bf16.gmra.mrb[0].mxu0 %v2179
        %v3940 = vpop.f32.mrb[0].mxu0
        %v3941 = vadd.f32 0.0, %v3940
        %v3942 = vpop.f32.mrb[0].mxu0
        %v3943 = vpop.f32.mrb[0].mxu0
        %v3944 = vadd.f32 0.0, %v3943
        %v3945 = vpop.f32.mrb[0].mxu0
        %3946 = vmatprep.mubr.bf16.mxu0 %v2966
        %3947 = vmatmul.mubr.bf16.gmra.mrb[0].mxu0 %v2181
        %v3948 = vpop.f32.mrb[0].mxu0
        %v3949 = vadd.f32 0.0, %v3948
        %v3950 = vpop.f32.mrb[0].mxu0
        %v3951 = vpop.f32.mrb[0].mxu0
        %v3952 = vadd.f32 0.0, %v3951
        %v3953 = vpop.f32.mrb[0].mxu0
        %3954 = vmatprep.mubr.bf16.mxu0 %v2969
        %3955 = vmatmul.mubr.bf16.gmra.mrb[0].mxu0 %v2183
        %v3956 = vpop.f32.mrb[0].mxu0
        %v3957 = vadd.f32 0.0, %v3956
        %v3958 = vpop.f32.mrb[0].mxu0
        %v3959 = vpop.f32.mrb[0].mxu0
        %v3960 = vadd.f32 0.0, %v3959
        %v3961 = vpop.f32.mrb[0].mxu0
        %3962 = vmatprep.mubr.bf16.mxu0 %v2972
        %3963 = vmatmul.mubr.bf16.gmra.mrb[0].mxu0 %v2185
        %v3964 = vpop.f32.mrb[0].mxu0
        %v3965 = vadd.f32 0.0, %v3964
        %v3966 = vpop.f32.mrb[0].mxu0
        %v3967 = vpop.f32.mrb[0].mxu0
        %v3968 = vadd.f32 0.0, %v3967
        %v3969 = vpop.f32.mrb[0].mxu0
        %3970 = vmatprep.mubr.bf16.mxu0 %v2975
        %3971 = vmatmul.mubr.bf16.gmra.mrb[0].mxu0 %v2187
        %v3972 = vpop.f32.mrb[0].mxu0
        %v3973 = vadd.f32 0.0, %v3972
        %v3974 = vpop.f32.mrb[0].mxu0
        %v3975 = vpop.f32.mrb[0].mxu0
        %v3976 = vadd.f32 0.0, %v3975
        %v3977 = vpop.f32.mrb[0].mxu0
        %3978 = vmatprep.mubr.bf16.mxu0 %v2978
        %3979 = vmatmul.mubr.bf16.gmra.mrb[0].mxu0 %v2189
        %v3980 = vpop.f32.mrb[0].mxu0
        %v3981 = vadd.f32 0.0, %v3980
        %v3982 = vpop.f32.mrb[0].mxu0
        %v3983 = vpop.f32.mrb[0].mxu0
        %v3984 = vadd.f32 0.0, %v3983
        %v3985 = vpop.f32.mrb[0].mxu0
        %3986 = vmatprep.mubr.bf16.mxu0 %v2981
        %3987 = vmatmul.mubr.bf16.gmra.mrb[0].mxu0 %v2191
        %v3988 = vpop.f32.mrb[0].mxu0
        %v3989 = vadd.f32 0.0, %v3988
        %v3990 = vpop.f32.mrb[0].mxu0
        %v3991 = vpop.f32.mrb[0].mxu0
        %v3992 = vadd.f32 0.0, %v3991
        %v3993 = vpop.f32.mrb[0].mxu0
        %3994 = vmatprep.mubr.bf16.mxu0 %v2984
        %3995 = vmatmul.mubr.bf16.gmra.mrb[0].mxu0 %v2193
        %v3996 = vpop.f32.mrb[0].mxu0
        %v3997 = vadd.f32 0.0, %v3996
        %v3998 = vpop.f32.mrb[0].mxu0
        %v3999 = vpop.f32.mrb[0].mxu0
        %v4000 = vadd.f32 0.0, %v3999
        %v4001 = vpop.f32.mrb[0].mxu0
        %4002 = vmatprep.mubr.bf16.mxu0 %v2987
        %4003 = vmatmul.mubr.bf16.gmra.mrb[0].mxu0 %v2195
        %v4004 = vpop.f32.mrb[0].mxu0
        %v4005 = vadd.f32 0.0, %v4004
        %v4006 = vpop.f32.mrb[0].mxu0
        %v4007 = vpop.f32.mrb[0].mxu0
        %v4008 = vadd.f32 0.0, %v4007
        %v4009 = vpop.f32.mrb[0].mxu0
        %4010 = vmatprep.mubr.bf16.mxu0 %v2990
        %4011 = vmatmul.mubr.bf16.gmra.mrb[0].mxu0 %v2197
        %v4012 = vpop.f32.mrb[0].mxu0
        %v4013 = vadd.f32 0.0, %v4012
        %v4014 = vpop.f32.mrb[0].mxu0
        %v4015 = vpop.f32.mrb[0].mxu0
        %v4016 = vadd.f32 0.0, %v4015
        %v4017 = vpop.f32.mrb[0].mxu0
        %4018 = vmatprep.mubr.bf16.mxu0 %v2993
        %4019 = vmatmul.mubr.bf16.gmra.mrb[0].mxu0 %v2199
        %v4020 = vpop.f32.mrb[0].mxu0
        %v4021 = vadd.f32 0.0, %v4020
        %v4022 = vpop.f32.mrb[0].mxu0
        %v4023 = vpop.f32.mrb[0].mxu0
        %v4024 = vadd.f32 0.0, %v4023
        %v4025 = vpop.f32.mrb[0].mxu0
        %4026 = vmatprep.mubr.bf16.mxu0 %v2996
        %4027 = vmatmul.mubr.bf16.gmra.mrb[0].mxu0 %v2201
        %v4028 = vpop.f32.mrb[0].mxu0
        %v4029 = vadd.f32 0.0, %v4028
        %v4030 = vpop.f32.mrb[0].mxu0
        %v4031 = vpop.f32.mrb[0].mxu0
        %v4032 = vadd.f32 0.0, %v4031
        %v4033 = vpop.f32.mrb[0].mxu0
        %4034 = vmatprep.mubr.bf16.mxu0 %v2999
        %4035 = vmatmul.mubr.bf16.gmra.mrb[0].mxu0 %v2203
        %v4036 = vpop.f32.mrb[0].mxu0
        %v4037 = vadd.f32 0.0, %v4036
        %v4038 = vpop.f32.mrb[0].mxu0
        %v4039 = vpop.f32.mrb[0].mxu0
        %v4040 = vadd.f32 0.0, %v4039
        %v4041 = vpop.f32.mrb[0].mxu0
        %4042 = vmatprep.mubr.bf16.mxu0 %v3002
        %4043 = vmatmul.mubr.bf16.gmra.mrb[0].mxu0 %v2205
        %v4044 = vpop.f32.mrb[0].mxu0
        %v4045 = vadd.f32 0.0, %v4044
        %v4046 = vpop.f32.mrb[0].mxu0
        %v4047 = vpop.f32.mrb[0].mxu0
        %v4048 = vadd.f32 0.0, %v4047
        %v4049 = vpop.f32.mrb[0].mxu0
        %4050 = vmatprep.mubr.bf16.mxu0 %v3005
        %4051 = vmatmul.mubr.bf16.gmra.mrb[0].mxu0 %v2207
        %v4052 = vpop.f32.mrb[0].mxu0
        %v4053 = vadd.f32 0.0, %v4052
        %v4054 = vpop.f32.mrb[0].mxu0
        %v4055 = vpop.f32.mrb[0].mxu0
        %v4056 = vadd.f32 0.0, %v4055
        %v4057 = vpop.f32.mrb[0].mxu0
        %4058 = vmatprep.mubr.bf16.mxu0 %v3008
        %4059 = vmatmul.mubr.bf16.gmra.mrb[0].mxu0 %v2209
        %v4060 = vpop.f32.mrb[0].mxu0
        %v4061 = vadd.f32 0.0, %v4060
        %v4062 = vpop.f32.mrb[0].mxu0
        %v4063 = vpop.f32.mrb[0].mxu0
        %v4064 = vadd.f32 0.0, %v4063
        %v4065 = vpop.f32.mrb[0].mxu0
        %4066 = vmatprep.mubr.bf16.mxu0 %v3011
        %4067 = vmatmul.mubr.bf16.gmra.mrb[0].mxu0 %v2211
        %v4068 = vpop.f32.mrb[0].mxu0
        %v4069 = vadd.f32 0.0, %v4068
        %v4070 = vpop.f32.mrb[0].mxu0
        %v4071 = vpop.f32.mrb[0].mxu0
        %v4072 = vadd.f32 0.0, %v4071
        %v4073 = vpop.f32.mrb[0].mxu0
        %4074 = vmatprep.mubr.bf16.mxu0 %v3014
        %4075 = vmatmul.mubr.bf16.gmra.mrb[0].mxu0 %v2213
        %v4076 = vpop.f32.mrb[0].mxu0
        %v4077 = vadd.f32 0.0, %v4076
        %v4078 = vpop.f32.mrb[0].mxu0
        %v4079 = vpop.f32.mrb[0].mxu0
        %v4080 = vadd.f32 0.0, %v4079
        %v4081 = vpop.f32.mrb[0].mxu0
        %4082 = vmatprep.mubr.bf16.mxu0 %v3017
        %4083 = vmatmul.mubr.bf16.gmra.mrb[0].mxu0 %v2215
        %v4084 = vpop.f32.mrb[0].mxu0
        %v4085 = vadd.f32 0.0, %v4084
        %v4086 = vpop.f32.mrb[0].mxu0
        %v4087 = vpop.f32.mrb[0].mxu0
        %v4088 = vadd.f32 0.0, %v4087
        %v4089 = vpop.f32.mrb[0].mxu0
        %4090 = vmatprep.mubr.bf16.mxu0 %v3020
        %4091 = vmatmul.mubr.bf16.gmra.mrb[0].mxu0 %v2217
        %v4092 = vpop.f32.mrb[0].mxu0
        %v4093 = vadd.f32 0.0, %v4092
        %v4094 = vpop.f32.mrb[0].mxu0
        %v4095 = vpop.f32.mrb[0].mxu0
        %v4096 = vadd.f32 0.0, %v4095
        %v4097 = vpop.f32.mrb[0].mxu0
        %4098 = vmatprep.mubr.bf16.mxu0 %v3023
        %4099 = vmatmul.mubr.bf16.gmra.mrb[0].mxu0 %v2219
        %v4100 = vpop.f32.mrb[0].mxu0
        %v4101 = vadd.f32 0.0, %v4100
        %v4102 = vpop.f32.mrb[0].mxu0
        %v4103 = vpop.f32.mrb[0].mxu0
        %v4104 = vadd.f32 0.0, %v4103
        %v4105 = vpop.f32.mrb[0].mxu0
        %4106 = vmatprep.mubr.bf16.mxu0 %v3026
        %4107 = vmatmul.mubr.bf16.gmra.mrb[0].mxu0 %v2221
        %v4108 = vpop.f32.mrb[0].mxu0
        %v4109 = vadd.f32 0.0, %v4108
        %v4110 = vpop.f32.mrb[0].mxu0
        %v4111 = vpop.f32.mrb[0].mxu0
        %v4112 = vadd.f32 0.0, %v4111
        %v4113 = vpop.f32.mrb[0].mxu0
        %4114 = vmatprep.mubr.bf16.mxu0 %v3029
        %4115 = vmatmul.mubr.bf16.gmra.mrb[0].mxu0 %v2223
        %v4116 = vpop.f32.mrb[0].mxu0
        %v4117 = vadd.f32 0.0, %v4116
        %v4118 = vpop.f32.mrb[0].mxu0
        %v4119 = vpop.f32.mrb[0].mxu0
        %v4120 = vadd.f32 0.0, %v4119
        %v4121 = vpop.f32.mrb[0].mxu0
        %4122 = vmatprep.mubr.bf16.mxu0 %v3032
        %4123 = vmatmul.mubr.bf16.gmra.mrb[0].mxu0 %v2225
        %v4124 = vpop.f32.mrb[0].mxu0
        %v4125 = vadd.f32 0.0, %v4124
        %v4126 = vpop.f32.mrb[0].mxu0
        %v4127 = vpop.f32.mrb[0].mxu0
        %v4128 = vadd.f32 0.0, %v4127
        %v4129 = vpop.f32.mrb[0].mxu0
        %4130 = vmatprep.mubr.bf16.mxu0 %v3035
        %4131 = vmatmul.mubr.bf16.gmra.mrb[0].mxu0 %v2227
        %v4132 = vpop.f32.mrb[0].mxu0
        %v4133 = vadd.f32 0.0, %v4132
        %v4134 = vpop.f32.mrb[0].mxu0
        %v4135 = vpop.f32.mrb[0].mxu0
        %v4136 = vadd.f32 0.0, %v4135
        %v4137 = vpop.f32.mrb[0].mxu0
        %4138 = vmatprep.mubr.bf16.mxu0 %v3038
        %4139 = vmatmul.mubr.bf16.gmra.mrb[0].mxu0 %v2229
        %v4140 = vpop.f32.mrb[0].mxu0
        %v4141 = vadd.f32 0.0, %v4140
        %v4142 = vpop.f32.mrb[0].mxu0
        %v4143 = vpop.f32.mrb[0].mxu0
        %v4144 = vadd.f32 0.0, %v4143
        %v4145 = vpop.f32.mrb[0].mxu0
        %4146 = vmatprep.mubr.bf16.mxu0 %v3041
        %4147 = vmatmul.mubr.bf16.gmra.mrb[0].mxu0 %v2231
        %v4148 = vpop.f32.mrb[0].mxu0
        %v4149 = vadd.f32 0.0, %v4148
        %v4150 = vpop.f32.mrb[0].mxu0
        %v4151 = vpop.f32.mrb[0].mxu0
        %v4152 = vadd.f32 0.0, %v4151
        %v4153 = vpop.f32.mrb[0].mxu0
        %4154 = vmatprep.mubr.bf16.mxu0 %v3044
        %4155 = vmatmul.mubr.bf16.gmra.mrb[0].mxu0 %v2233
        %v4156 = vpop.f32.mrb[0].mxu0
        %v4157 = vadd.f32 0.0, %v4156
        %v4158 = vpop.f32.mrb[0].mxu0
        %v4159 = vpop.f32.mrb[0].mxu0
        %v4160 = vadd.f32 0.0, %v4159
        %v4161 = vpop.f32.mrb[0].mxu0
        %4162 = vmatprep.mubr.bf16.mxu0 %v3047
        %4163 = vmatmul.mubr.bf16.gmra.mrb[0].mxu0 %v2235
        %v4164 = vpop.f32.mrb[0].mxu0
        %v4165 = vadd.f32 0.0, %v4164
        %v4166 = vpop.f32.mrb[0].mxu0
        %v4167 = vpop.f32.mrb[0].mxu0
        %v4168 = vadd.f32 0.0, %v4167
        %v4169 = vpop.f32.mrb[0].mxu0
        %4170 = vmatprep.mubr.bf16.mxu0 %v3050
        %4171 = vmatmul.mubr.bf16.gmra.mrb[0].mxu0 %v2237
        %v4172 = vpop.f32.mrb[0].mxu0
        %v4173 = vadd.f32 0.0, %v4172
        %v4174 = vpop.f32.mrb[0].mxu0
        %v4175 = vpop.f32.mrb[0].mxu0
        %v4176 = vadd.f32 0.0, %v4175
        %v4177 = vpop.f32.mrb[0].mxu0
        %4178 = vmatprep.mubr.bf16.mxu0 %v3053
        %4179 = vmatmul.mubr.bf16.gmra.mrb[0].mxu0 %v2239
        %v4180 = vpop.f32.mrb[0].mxu0
        %v4181 = vadd.f32 0.0, %v4180
        %v4182 = vpop.f32.mrb[0].mxu0
        %v4183 = vpop.f32.mrb[0].mxu0
        %v4184 = vadd.f32 0.0, %v4183
        %v4185 = vpop.f32.mrb[0].mxu0
        %4186 = vmatprep.mubr.bf16.mxu0 %v3056
        %4187 = vmatmul.mubr.bf16.gmra.mrb[0].mxu0 %v2241
        %v4188 = vpop.f32.mrb[0].mxu0
        %v4189 = vadd.f32 0.0, %v4188
        %v4190 = vpop.f32.mrb[0].mxu0
        %v4191 = vpop.f32.mrb[0].mxu0
        %v4192 = vadd.f32 0.0, %v4191
        %v4193 = vpop.f32.mrb[0].mxu0
        %4194 = vmatprep.mubr.bf16.mxu0 %v3059
        %4195 = vmatmul.mubr.bf16.gmra.mrb[0].mxu0 %v2243
        %v4196 = vpop.f32.mrb[0].mxu0
        %v4197 = vadd.f32 0.0, %v4196
        %v4198 = vpop.f32.mrb[0].mxu0
        %v4199 = vpop.f32.mrb[0].mxu0
        %v4200 = vadd.f32 0.0, %v4199
        %v4201 = vpop.f32.mrb[0].mxu0
        %4202 = vmatprep.mubr.bf16.mxu0 %v3062
        %4203 = vmatmul.mubr.bf16.gmra.mrb[0].mxu0 %v2245
        %v4204 = vpop.f32.mrb[0].mxu0
        %v4205 = vadd.f32 0.0, %v4204
        %v4206 = vpop.f32.mrb[0].mxu0
        %v4207 = vpop.f32.mrb[0].mxu0
        %v4208 = vadd.f32 0.0, %v4207
        %v4209 = vpop.f32.mrb[0].mxu0
        %4210 = vmatprep.mubr.bf16.mxu0 %v3065
        %4211 = vmatmul.mubr.bf16.gmra.mrb[0].mxu0 %v2247
        %v4212 = vpop.f32.mrb[0].mxu0
        %v4213 = vadd.f32 0.0, %v4212
        %v4214 = vpop.f32.mrb[0].mxu0
        %v4215 = vpop.f32.mrb[0].mxu0
        %v4216 = vadd.f32 0.0, %v4215
        %v4217 = vpop.f32.mrb[0].mxu0
        %4218 = vmatprep.mubr.bf16.mxu0 %v3068
        %4219 = vmatmul.mubr.bf16.gmra.mrb[0].mxu0 %v2249
        %v4220 = vpop.f32.mrb[0].mxu0
        %v4221 = vadd.f32 0.0, %v4220
        %v4222 = vpop.f32.mrb[0].mxu0
        %v4223 = vpop.f32.mrb[0].mxu0
        %v4224 = vadd.f32 0.0, %v4223
        %v4225 = vpop.f32.mrb[0].mxu0
        %4226 = vmatprep.mubr.bf16.mxu0 %v3071
        %4227 = vmatmul.mubr.bf16.gmra.mrb[0].mxu0 %v2251
        %v4228 = vpop.f32.mrb[0].mxu0
        %v4229 = vadd.f32 0.0, %v4228
        %v4230 = vpop.f32.mrb[0].mxu0
        %v4231 = vpop.f32.mrb[0].mxu0
        %v4232 = vadd.f32 0.0, %v4231
        %v4233 = vpop.f32.mrb[0].mxu0
        %4234 = vmatprep.mubr.bf16.mxu0 %v3074
        %4235 = vmatmul.mubr.bf16.gmra.mrb[0].mxu0 %v2253
        %v4236 = vpop.f32.mrb[0].mxu0
        %v4237 = vadd.f32 0.0, %v4236
        %v4238 = vpop.f32.mrb[0].mxu0
        %v4239 = vpop.f32.mrb[0].mxu0
        %v4240 = vadd.f32 0.0, %v4239
        %v4241 = vpop.f32.mrb[0].mxu0
        %4242 = vmatprep.mubr.bf16.mxu0 %v3077
        %4243 = vmatmul.mubr.bf16.gmra.mrb[0].mxu0 %v2255
        %v4244 = vpop.f32.mrb[0].mxu0
        %v4245 = vadd.f32 0.0, %v4244
        %v4246 = vpop.f32.mrb[0].mxu0
        %v4247 = vpop.f32.mrb[0].mxu0
        %v4248 = vadd.f32 0.0, %v4247
        %v4249 = vpop.f32.mrb[0].mxu0
        %4250 = vmatprep.mubr.bf16.mxu0 %v3080
        %4251 = vmatmul.mubr.bf16.gmra.mrb[0].mxu0 %v2257
        %v4252 = vpop.f32.mrb[0].mxu0
        %v4253 = vadd.f32 0.0, %v4252
        %v4254 = vpop.f32.mrb[0].mxu0
        %v4255 = vpop.f32.mrb[0].mxu0
        %v4256 = vadd.f32 0.0, %v4255
        %v4257 = vpop.f32.mrb[0].mxu0
        %4258 = vmatprep.mubr.bf16.mxu0 %v3083
        %4259 = vmatmul.mubr.bf16.gmra.mrb[0].mxu0 %v2259
        %v4260 = vpop.f32.mrb[0].mxu0
        %v4261 = vadd.f32 0.0, %v4260
        %v4262 = vpop.f32.mrb[0].mxu0
        %v4263 = vpop.f32.mrb[0].mxu0
        %v4264 = vadd.f32 0.0, %v4263
        %v4265 = vpop.f32.mrb[0].mxu0
        %4266 = vmatprep.mubr.bf16.mxu0 %v3086
        %4267 = vmatmul.mubr.bf16.gmra.mrb[0].mxu0 %v2261
        %v4268 = vpop.f32.mrb[0].mxu0
        %v4269 = vadd.f32 0.0, %v4268
        %v4270 = vpop.f32.mrb[0].mxu0
        %v4271 = vpop.f32.mrb[0].mxu0
        %v4272 = vadd.f32 0.0, %v4271
        %v4273 = vpop.f32.mrb[0].mxu0
        %4274 = vmatprep.mubr.bf16.mxu0 %v3089
        %4275 = vmatmul.mubr.bf16.gmra.mrb[0].mxu0 %v2263
        %v4276 = vpop.f32.mrb[0].mxu0
        %v4277 = vadd.f32 0.0, %v4276
        %v4278 = vpop.f32.mrb[0].mxu0
        %v4279 = vpop.f32.mrb[0].mxu0
        %v4280 = vadd.f32 0.0, %v4279
        %v4281 = vpop.f32.mrb[0].mxu0
        %4282 = vmatprep.mubr.bf16.mxu0 %v3092
        %4283 = vmatmul.mubr.bf16.gmra.mrb[0].mxu0 %v2265
        %v4284 = vpop.f32.mrb[0].mxu0
        %v4285 = vadd.f32 0.0, %v4284
        %v4286 = vpop.f32.mrb[0].mxu0
        %v4287 = vpop.f32.mrb[0].mxu0
        %v4288 = vadd.f32 0.0, %v4287
        %v4289 = vpop.f32.mrb[0].mxu0
        %4290 = vmatprep.mubr.bf16.mxu0 %v3095
        %4291 = vmatmul.mubr.bf16.gmra.mrb[0].mxu0 %v2267
        %v4292 = vpop.f32.mrb[0].mxu0
        %v4293 = vadd.f32 0.0, %v4292
        %v4294 = vpop.f32.mrb[0].mxu0
        %v4295 = vpop.f32.mrb[0].mxu0
        %v4296 = vadd.f32 0.0, %v4295
        %v4297 = vpop.f32.mrb[0].mxu0
        %4298 = vmatprep.mubr.bf16.mxu0 %v3098
        %4299 = vmatmul.mubr.bf16.gmra.mrb[0].mxu0 %v2269
        %v4300 = vpop.f32.mrb[0].mxu0
        %v4301 = vadd.f32 0.0, %v4300
        %v4302 = vpop.f32.mrb[0].mxu0
        %v4303 = vpop.f32.mrb[0].mxu0
        %v4304 = vadd.f32 0.0, %v4303
        %v4305 = vpop.f32.mrb[0].mxu0
        %4306 = vmatprep.mubr.bf16.mxu0 %v3101
        %4307 = vmatmul.mubr.bf16.gmra.mrb[0].mxu0 %v2271
        %v4308 = vpop.f32.mrb[0].mxu0
        %v4309 = vadd.f32 0.0, %v4308
        %v4310 = vpop.f32.mrb[0].mxu0
        %v4311 = vpop.f32.mrb[0].mxu0
        %v4312 = vadd.f32 0.0, %v4311
        %v4313 = vpop.f32.mrb[0].mxu0
        %4314 = vmatprep.mubr.bf16.mxu0 %v3104
        %4315 = vmatmul.mubr.bf16.gmra.mrb[0].mxu0 %v2273
        %v4316 = vpop.f32.mrb[0].mxu0
        %v4317 = vadd.f32 0.0, %v4316
        %v4318 = vpop.f32.mrb[0].mxu0
        %v4319 = vpop.f32.mrb[0].mxu0
        %v4320 = vadd.f32 0.0, %v4319
        %v4321 = vpop.f32.mrb[0].mxu0
        %4322 = vmatprep.mubr.bf16.mxu0 %v3107
        %4323 = vmatmul.mubr.bf16.gmra.mrb[0].mxu0 %v2275
        %v4324 = vpop.f32.mrb[0].mxu0
        %v4325 = vadd.f32 0.0, %v4324
        %v4326 = vpop.f32.mrb[0].mxu0
        %v4327 = vpop.f32.mrb[0].mxu0
        %v4328 = vadd.f32 0.0, %v4327
        %v4329 = vpop.f32.mrb[0].mxu0
        %4330 = vmatprep.mubr.bf16.mxu0 %v3110
        %4331 = vmatmul.mubr.bf16.gmra.mrb[0].mxu0 %v2277
        %v4332 = vpop.f32.mrb[0].mxu0
        %v4333 = vadd.f32 0.0, %v4332
        %v4334 = vpop.f32.mrb[0].mxu0
        %v4335 = vpop.f32.mrb[0].mxu0
        %v4336 = vadd.f32 0.0, %v4335
        %v4337 = vpop.f32.mrb[0].mxu0
        %4338 = vmatprep.mubr.bf16.mxu0 %v3113
        %4339 = vmatmul.mubr.bf16.gmra.mrb[0].mxu0 %v2279
        %v4340 = vpop.f32.mrb[0].mxu0
        %v4341 = vadd.f32 0.0, %v4340
        %v4342 = vpop.f32.mrb[0].mxu0
        %v4343 = vpop.f32.mrb[0].mxu0
        %v4344 = vadd.f32 0.0, %v4343
        %v4345 = vpop.f32.mrb[0].mxu0
        %4346 = vmatprep.mubr.bf16.mxu0 %v3116
        %4347 = vmatmul.mubr.bf16.gmra.mrb[0].mxu0 %v2281
        %v4348 = vpop.f32.mrb[0].mxu0
        %v4349 = vadd.f32 0.0, %v4348
        %v4350 = vpop.f32.mrb[0].mxu0
        %v4351 = vpop.f32.mrb[0].mxu0
        %v4352 = vadd.f32 0.0, %v4351
        %v4353 = vpop.f32.mrb[0].mxu0
        %4354 = vmatprep.mubr.bf16.mxu0 %v3119
        %4355 = vmatmul.mubr.bf16.gmra.mrb[0].mxu0 %v2283
        %v4356 = vpop.f32.mrb[0].mxu0
        %v4357 = vadd.f32 0.0, %v4356
        %v4358 = vpop.f32.mrb[0].mxu0
        %v4359 = vpop.f32.mrb[0].mxu0
        %v4360 = vadd.f32 0.0, %v4359
        %v4361 = vpop.f32.mrb[0].mxu0
        %4362 = vmatprep.mubr.bf16.mxu0 %v3122
        %4363 = vmatmul.mubr.bf16.gmra.mrb[0].mxu0 %v2285
        %v4364 = vpop.f32.mrb[0].mxu0
        %v4365 = vadd.f32 0.0, %v4364
        %v4366 = vpop.f32.mrb[0].mxu0
        %v4367 = vpop.f32.mrb[0].mxu0
        %v4368 = vadd.f32 0.0, %v4367
        %v4369 = vpop.f32.mrb[0].mxu0
        %4370 = vmatprep.mubr.bf16.mxu0 %v3125
        %4371 = vmatmul.mubr.bf16.gmra.mrb[0].mxu0 %v2287
        %v4372 = vpop.f32.mrb[0].mxu0
        %v4373 = vadd.f32 0.0, %v4372
        %v4374 = vpop.f32.mrb[0].mxu0
        %v4375 = vpop.f32.mrb[0].mxu0
        %v4376 = vadd.f32 0.0, %v4375
        %v4377 = vpop.f32.mrb[0].mxu0
        %4378 = vmatprep.mubr.bf16.mxu0 %v3128
        %4379 = vmatmul.mubr.bf16.gmra.mrb[0].mxu0 %v2289
        %v4380 = vpop.f32.mrb[0].mxu0
        %v4381 = vadd.f32 0.0, %v4380
        %v4382 = vpop.f32.mrb[0].mxu0
        %v4383 = vpop.f32.mrb[0].mxu0
        %v4384 = vadd.f32 0.0, %v4383
        %v4385 = vpop.f32.mrb[0].mxu0
        %4386 = vmatprep.mubr.bf16.mxu0 %v3131
        %4387 = vmatmul.mubr.bf16.gmra.mrb[0].mxu0 %v2291
        %v4388 = vpop.f32.mrb[0].mxu0
        %v4389 = vadd.f32 0.0, %v4388
        %v4390 = vpop.f32.mrb[0].mxu0
        %v4391 = vpop.f32.mrb[0].mxu0
        %v4392 = vadd.f32 0.0, %v4391
        %v4393 = vpop.f32.mrb[0].mxu0
        %4394 = vmatprep.mubr.bf16.mxu0 %v3134
        %4395 = vmatmul.mubr.bf16.gmra.mrb[0].mxu0 %v2293
        %v4396 = vpop.f32.mrb[0].mxu0
        %v4397 = vadd.f32 0.0, %v4396
        %v4398 = vpop.f32.mrb[0].mxu0
        %v4399 = vpop.f32.mrb[0].mxu0
        %v4400 = vadd.f32 0.0, %v4399
        %v4401 = vpop.f32.mrb[0].mxu0
        %4402 = vmatprep.mubr.bf16.mxu0 %v3137
        %4403 = vmatmul.mubr.bf16.gmra.mrb[0].mxu0 %v2295
        %v4404 = vpop.f32.mrb[0].mxu0
        %v4405 = vadd.f32 0.0, %v4404
        %v4406 = vpop.f32.mrb[0].mxu0
        %v4407 = vpop.f32.mrb[0].mxu0
        %v4408 = vadd.f32 0.0, %v4407
        %v4409 = vpop.f32.mrb[0].mxu0
        %4410 = vmatprep.mubr.bf16.mxu0 %v3140
        %4411 = vmatmul.mubr.bf16.gmra.mrb[0].mxu0 %v2297
        %v4412 = vpop.f32.mrb[0].mxu0
        %v4413 = vadd.f32 0.0, %v4412
        %v4414 = vpop.f32.mrb[0].mxu0
        %v4415 = vpop.f32.mrb[0].mxu0
        %v4416 = vadd.f32 0.0, %v4415
        %v4417 = vpop.f32.mrb[0].mxu0
        %4418 = vmatprep.mubr.bf16.mxu0 %v3143
        %4419 = vmatmul.mubr.bf16.gmra.mrb[0].mxu0 %v2299
        %v4420 = vpop.f32.mrb[0].mxu0
        %v4421 = vadd.f32 0.0, %v4420
        %v4422 = vpop.f32.mrb[0].mxu0
        %v4423 = vpop.f32.mrb[0].mxu0
        %v4424 = vadd.f32 0.0, %v4423
        %v4425 = vpop.f32.mrb[0].mxu0
        %4426 = vmatprep.mubr.bf16.mxu0 %v3146
        %4427 = vmatmul.mubr.bf16.gmra.mrb[0].mxu0 %v2301
        %v4428 = vpop.f32.mrb[0].mxu0
        %v4429 = vadd.f32 0.0, %v4428
        %v4430 = vpop.f32.mrb[0].mxu0
        %v4431 = vpop.f32.mrb[0].mxu0
        %v4432 = vadd.f32 0.0, %v4431
        %v4433 = vpop.f32.mrb[0].mxu0
        %4434 = vmatprep.mubr.bf16.mxu0 %v3149
        %4435 = vmatmul.mubr.bf16.gmra.mrb[0].mxu0 %v2303
        %v4436 = vpop.f32.mrb[0].mxu0
        %v4437 = vadd.f32 0.0, %v4436
        %v4438 = vpop.f32.mrb[0].mxu0
        %v4439 = vpop.f32.mrb[0].mxu0
        %v4440 = vadd.f32 0.0, %v4439
        %v4441 = vpop.f32.mrb[0].mxu0
        %4442 = vmatprep.mubr.bf16.mxu0 %v3152
        %4443 = vmatmul.mubr.bf16.gmra.mrb[0].mxu0 %v2305
        %v4444 = vpop.f32.mrb[0].mxu0
        %v4445 = vadd.f32 0.0, %v4444
        %v4446 = vpop.f32.mrb[0].mxu0
        %v4447 = vpop.f32.mrb[0].mxu0
        %v4448 = vadd.f32 0.0, %v4447
        %v4449 = vpop.f32.mrb[0].mxu0
        %4450 = vmatprep.mubr.bf16.mxu0 %v3155
        %4451 = vmatmul.mubr.bf16.gmra.mrb[0].mxu0 %v2307
        %v4452 = vpop.f32.mrb[0].mxu0
        %v4453 = vadd.f32 0.0, %v4452
        %v4454 = vpop.f32.mrb[0].mxu0
        %v4455 = vpop.f32.mrb[0].mxu0
        %v4456 = vadd.f32 0.0, %v4455
        %v4457 = vpop.f32.mrb[0].mxu0
        %4458 = vmatprep.mubr.bf16.mxu0 %v3158
        %4459 = vmatmul.mubr.bf16.gmra.mrb[0].mxu0 %v2309
        %v4460 = vpop.f32.mrb[0].mxu0
        %v4461 = vadd.f32 0.0, %v4460
        %v4462 = vpop.f32.mrb[0].mxu0
        %v4463 = vpop.f32.mrb[0].mxu0
        %v4464 = vadd.f32 0.0, %v4463
        %v4465 = vpop.f32.mrb[0].mxu0
        %4466 = vmatprep.mubr.bf16.mxu0 %v3161
        %4467 = vmatmul.mubr.bf16.gmra.mrb[0].mxu0 %v2311
        %v4468 = vpop.f32.mrb[0].mxu0
        %v4469 = vadd.f32 0.0, %v4468
        %v4470 = vpop.f32.mrb[0].mxu0
        %v4471 = vpop.f32.mrb[0].mxu0
        %v4472 = vadd.f32 0.0, %v4471
        %v4473 = vpop.f32.mrb[0].mxu0
        %4474 = vmatprep.mubr.bf16.mxu0 %v3164
        %4475 = vmatmul.mubr.bf16.gmra.mrb[0].mxu0 %v2313
        %v4476 = vpop.f32.mrb[0].mxu0
        %v4477 = vadd.f32 0.0, %v4476
        %v4478 = vpop.f32.mrb[0].mxu0
        %v4479 = vpop.f32.mrb[0].mxu0
        %v4480 = vadd.f32 0.0, %v4479
        %v4481 = vpop.f32.mrb[0].mxu0
        %4482 = vmatprep.mubr.bf16.mxu0 %v3167
        %4483 = vmatmul.mubr.bf16.gmra.mrb[0].mxu0 %v2315
        %v4484 = vpop.f32.mrb[0].mxu0
        %v4485 = vadd.f32 0.0, %v4484
        %v4486 = vpop.f32.mrb[0].mxu0
        %v4487 = vpop.f32.mrb[0].mxu0
        %v4488 = vadd.f32 0.0, %v4487
        %v4489 = vpop.f32.mrb[0].mxu0
        %4490 = vmatprep.mubr.bf16.mxu0 %v3170
        %4491 = vmatmul.mubr.bf16.gmra.mrb[0].mxu0 %v2317
        %v4492 = vpop.f32.mrb[0].mxu0
        %v4493 = vadd.f32 0.0, %v4492
        %v4494 = vpop.f32.mrb[0].mxu0
        %v4495 = vpop.f32.mrb[0].mxu0
        %v4496 = vadd.f32 0.0, %v4495
        %v4497 = vpop.f32.mrb[0].mxu0
        %4498 = vmatprep.mubr.bf16.mxu0 %v3173
        %4499 = vmatmul.mubr.bf16.gmra.mrb[0].mxu0 %v2319
        %v4500 = vpop.f32.mrb[0].mxu0
        %v4501 = vadd.f32 0.0, %v4500
        %v4502 = vpop.f32.mrb[0].mxu0
        %v4503 = vpop.f32.mrb[0].mxu0
        %v4504 = vadd.f32 0.0, %v4503
        %v4505 = vpop.f32.mrb[0].mxu0
        %4506 = vmatprep.mubr.bf16.mxu0 %v3176
        %4507 = vmatmul.mubr.bf16.gmra.mrb[0].mxu0 %v2321
        %v4508 = vpop.f32.mrb[0].mxu0
        %v4509 = vadd.f32 0.0, %v4508
        %v4510 = vpop.f32.mrb[0].mxu0
        %v4511 = vpop.f32.mrb[0].mxu0
        %v4512 = vadd.f32 0.0, %v4511
        %v4513 = vpop.f32.mrb[0].mxu0
        %4514 = vmatprep.mubr.bf16.mxu0 %v3179
        %4515 = vmatmul.mubr.bf16.gmra.mrb[0].mxu0 %v2323
        %v4516 = vpop.f32.mrb[0].mxu0
        %v4517 = vadd.f32 0.0, %v4516
        %v4518 = vpop.f32.mrb[0].mxu0
        %v4519 = vpop.f32.mrb[0].mxu0
        %v4520 = vadd.f32 0.0, %v4519
        %v4521 = vpop.f32.mrb[0].mxu0
        %4522 = vmatprep.mubr.bf16.mxu0 %v3182
        %4523 = vmatmul.mubr.bf16.gmra.mrb[0].mxu0 %v2325
        %v4524 = vpop.f32.mrb[0].mxu0
        %v4525 = vadd.f32 0.0, %v4524
        %v4526 = vpop.f32.mrb[0].mxu0
        %v4527 = vpop.f32.mrb[0].mxu0
        %v4528 = vadd.f32 0.0, %v4527
        %v4529 = vpop.f32.mrb[0].mxu0
        %4530 = vmatprep.mubr.bf16.mxu0 %v3185
        %4531 = vmatmul.mubr.bf16.gmra.mrb[0].mxu0 %v2327
        %v4532 = vpop.f32.mrb[0].mxu0
        %v4533 = vadd.f32 0.0, %v4532
        %v4534 = vpop.f32.mrb[0].mxu0
        %v4535 = vpop.f32.mrb[0].mxu0
        %v4536 = vadd.f32 0.0, %v4535
        %v4537 = vpop.f32.mrb[0].mxu0
        %4538 = vmatprep.mubr.bf16.mxu0 %v3188
        %4539 = vmatmul.mubr.bf16.gmra.mrb[0].mxu0 %v2329
        %v4540 = vpop.f32.mrb[0].mxu0
        %v4541 = vadd.f32 0.0, %v4540
        %v4542 = vpop.f32.mrb[0].mxu0
        %v4543 = vpop.f32.mrb[0].mxu0
        %v4544 = vadd.f32 0.0, %v4543
        %v4545 = vpop.f32.mrb[0].mxu0
        %4546 = vmatprep.mubr.bf16.mxu0 %v3191
        %4547 = vmatmul.mubr.bf16.gmra.mrb[0].mxu0 %v2331
        %v4548 = vpop.f32.mrb[0].mxu0
        %v4549 = vadd.f32 0.0, %v4548
        %v4550 = vpop.f32.mrb[0].mxu0
        %v4551 = vpop.f32.mrb[0].mxu0
        %v4552 = vadd.f32 0.0, %v4551
        %v4553 = vpop.f32.mrb[0].mxu0
        %4554 = vmatprep.mubr.bf16.mxu0 %v3194
        %4555 = vmatmul.mubr.bf16.gmra.mrb[0].mxu0 %v2333
        %v4556 = vpop.f32.mrb[0].mxu0
        %v4557 = vadd.f32 0.0, %v4556
        %v4558 = vpop.f32.mrb[0].mxu0
        %v4559 = vpop.f32.mrb[0].mxu0
        %v4560 = vadd.f32 0.0, %v4559
        %v4561 = vpop.f32.mrb[0].mxu0
        %4562 = vmatprep.mubr.bf16.mxu0 %v3197
        %4563 = vmatmul.mubr.bf16.gmra.mrb[0].mxu0 %v2335
        %v4564 = vpop.f32.mrb[0].mxu0
        %v4565 = vadd.f32 0.0, %v4564
        %v4566 = vpop.f32.mrb[0].mxu0
        %v4567 = vpop.f32.mrb[0].mxu0
        %v4568 = vadd.f32 0.0, %v4567
        %v4569 = vpop.f32.mrb[0].mxu0
        %4570 = vmatprep.mubr.bf16.mxu0 %v3200
        %4571 = vmatmul.mubr.bf16.gmra.mrb[0].mxu0 %v2337
        %v4572 = vpop.f32.mrb[0].mxu0
        %v4573 = vadd.f32 0.0, %v4572
        %v4574 = vpop.f32.mrb[0].mxu0
        %v4575 = vpop.f32.mrb[0].mxu0
        %v4576 = vadd.f32 0.0, %v4575
        %v4577 = vpop.f32.mrb[0].mxu0
        %4578 = vmatprep.mubr.bf16.mxu0 %v3203
        %4579 = vmatmul.mubr.bf16.gmra.mrb[0].mxu0 %v2339
        %v4580 = vpop.f32.mrb[0].mxu0
        %v4581 = vadd.f32 0.0, %v4580
        %v4582 = vpop.f32.mrb[0].mxu0
        %v4583 = vpop.f32.mrb[0].mxu0
        %v4584 = vadd.f32 0.0, %v4583
        %v4585 = vpop.f32.mrb[0].mxu0
        %4586 = vmatprep.mubr.bf16.mxu0 %v3206
        %4587 = vmatmul.mubr.bf16.gmra.mrb[0].mxu0 %v2341
        %v4588 = vpop.f32.mrb[0].mxu0
        %v4589 = vadd.f32 0.0, %v4588
        %v4590 = vpop.f32.mrb[0].mxu0
        %v4591 = vpop.f32.mrb[0].mxu0
        %v4592 = vadd.f32 0.0, %v4591
        %v4593 = vpop.f32.mrb[0].mxu0
        %4594 = vmatprep.mubr.bf16.mxu0 %v3209
        %4595 = vmatmul.mubr.bf16.gmra.mrb[0].mxu0 %v2343
        %v4596 = vpop.f32.mrb[0].mxu0
        %v4597 = vadd.f32 0.0, %v4596
        %v4598 = vpop.f32.mrb[0].mxu0
        %v4599 = vpop.f32.mrb[0].mxu0
        %v4600 = vadd.f32 0.0, %v4599
        %v4601 = vpop.f32.mrb[0].mxu0
        %4602 = vmatprep.mubr.bf16.mxu0 %v3212
        %4603 = vmatmul.mubr.bf16.gmra.mrb[0].mxu0 %v2345
        %v4604 = vpop.f32.mrb[0].mxu0
        %v4605 = vadd.f32 0.0, %v4604
        %v4606 = vpop.f32.mrb[0].mxu0
        %v4607 = vpop.f32.mrb[0].mxu0
        %v4608 = vadd.f32 0.0, %v4607
        %v4609 = vpop.f32.mrb[0].mxu0
        %4610 = vmatprep.mubr.bf16.mxu0 %v3215
        %4611 = vmatmul.mubr.bf16.gmra.mrb[0].mxu0 %v2347
        %v4612 = vpop.f32.mrb[0].mxu0
        %v4613 = vadd.f32 0.0, %v4612
        %v4614 = vpop.f32.mrb[0].mxu0
        %v4615 = vpop.f32.mrb[0].mxu0
        %v4616 = vadd.f32 0.0, %v4615
        %v4617 = vpop.f32.mrb[0].mxu0
        %4618 = vmatprep.mubr.bf16.mxu0 %v3218
        %4619 = vmatmul.mubr.bf16.gmra.mrb[0].mxu0 %v2349
        %v4620 = vpop.f32.mrb[0].mxu0
        %v4621 = vadd.f32 0.0, %v4620
        %v4622 = vpop.f32.mrb[0].mxu0
        %v4623 = vpop.f32.mrb[0].mxu0
        %v4624 = vadd.f32 0.0, %v4623
        %v4625 = vpop.f32.mrb[0].mxu0
        %4626 = vmatprep.mubr.bf16.mxu0 %v3221
        %4627 = vmatmul.mubr.bf16.gmra.mrb[0].mxu0 %v2351
        %v4628 = vpop.f32.mrb[0].mxu0
        %v4629 = vadd.f32 0.0, %v4628
        %v4630 = vpop.f32.mrb[0].mxu0
        %v4631 = vpop.f32.mrb[0].mxu0
        %v4632 = vadd.f32 0.0, %v4631
        %v4633 = vpop.f32.mrb[0].mxu0
        %4634 = vmatprep.mubr.bf16.mxu0 %v3224
        %4635 = vmatmul.mubr.bf16.gmra.mrb[0].mxu0 %v2353
        %v4636 = vpop.f32.mrb[0].mxu0
        %v4637 = vadd.f32 0.0, %v4636
        %v4638 = vpop.f32.mrb[0].mxu0
        %v4639 = vpop.f32.mrb[0].mxu0
        %v4640 = vadd.f32 0.0, %v4639
        %v4641 = vpop.f32.mrb[0].mxu0
        %4642 = vmatprep.mubr.bf16.mxu0 %v3227
        %4643 = vmatmul.mubr.bf16.gmra.mrb[0].mxu0 %v2355
        %v4644 = vpop.f32.mrb[0].mxu0
        %v4645 = vadd.f32 0.0, %v4644
        %v4646 = vpop.f32.mrb[0].mxu0
        %v4647 = vpop.f32.mrb[0].mxu0
        %v4648 = vadd.f32 0.0, %v4647
        %v4649 = vpop.f32.mrb[0].mxu0
        %4650 = vmatprep.mubr.bf16.mxu0 %v3230
        %4651 = vmatmul.mubr.bf16.gmra.mrb[0].mxu0 %v2357
        %v4652 = vpop.f32.mrb[0].mxu0
        %v4653 = vadd.f32 0.0, %v4652
        %v4654 = vpop.f32.mrb[0].mxu0
        %v4655 = vpop.f32.mrb[0].mxu0
        %v4656 = vadd.f32 0.0, %v4655
        %v4657 = vpop.f32.mrb[0].mxu0
        %4658 = vmatprep.mubr.bf16.mxu0 %v3233
        %4659 = vmatmul.mubr.bf16.gmra.mrb[0].mxu0 %v2359
        %v4660 = vpop.f32.mrb[0].mxu0
        %v4661 = vadd.f32 0.0, %v4660
        %v4662 = vpop.f32.mrb[0].mxu0
        %v4663 = vpop.f32.mrb[0].mxu0
        %v4664 = vadd.f32 0.0, %v4663
        %v4665 = vpop.f32.mrb[0].mxu0
        %4666 = vmatprep.mubr.bf16.mxu0 %v3236
        %4667 = vmatmul.mubr.bf16.gmra.mrb[0].mxu0 %v2361
        %v4668 = vpop.f32.mrb[0].mxu0
        %v4669 = vadd.f32 0.0, %v4668
        %v4670 = vpop.f32.mrb[0].mxu0
        %v4671 = vpop.f32.mrb[0].mxu0
        %v4672 = vadd.f32 0.0, %v4671
        %v4673 = vpop.f32.mrb[0].mxu0
        %4674 = vmatprep.mubr.bf16.mxu0 %v3239
        %4675 = vmatmul.mubr.bf16.gmra.mrb[0].mxu0 %v2363
        %v4676 = vpop.f32.mrb[0].mxu0
        %v4677 = vadd.f32 0.0, %v4676
        %v4678 = vpop.f32.mrb[0].mxu0
        %v4679 = vpop.f32.mrb[0].mxu0
        %v4680 = vadd.f32 0.0, %v4679
        %v4681 = vpop.f32.mrb[0].mxu0
        %4682 = vmatprep.mubr.bf16.mxu0 %v3242
        %4683 = vmatmul.mubr.bf16.gmra.mrb[0].mxu0 %v2365
        %v4684 = vpop.f32.mrb[0].mxu0
        %v4685 = vadd.f32 0.0, %v4684
        %v4686 = vpop.f32.mrb[0].mxu0
        %v4687 = vpop.f32.mrb[0].mxu0
        %v4688 = vadd.f32 0.0, %v4687
        %v4689 = vpop.f32.mrb[0].mxu0
        %4690 = vmatprep.mubr.bf16.mxu0 %v3245
        %4691 = vmatmul.mubr.bf16.gmra.mrb[0].mxu0 %v2367
        %v4692 = vpop.f32.mrb[0].mxu0
        %v4693 = vadd.f32 0.0, %v4692
        %v4694 = vpop.f32.mrb[0].mxu0
        %v4695 = vpop.f32.mrb[0].mxu0
        %v4696 = vadd.f32 0.0, %v4695
        %v4697 = vpop.f32.mrb[0].mxu0
        %4698 = vmatprep.mubr.bf16.mxu0 %v3248
        %4699 = vmatmul.mubr.bf16.gmra.mrb[0].mxu0 %v2369
        %v4700 = vpop.f32.mrb[0].mxu0
        %v4701 = vadd.f32 0.0, %v4700
        %v4702 = vpop.f32.mrb[0].mxu0
        %v4703 = vpop.f32.mrb[0].mxu0
        %v4704 = vadd.f32 0.0, %v4703
        %v4705 = vpop.f32.mrb[0].mxu0
        %4706 = vmatprep.mubr.bf16.mxu0 %v3251
        %4707 = vmatmul.mubr.bf16.gmra.mrb[0].mxu0 %v2371
        %v4708 = vpop.f32.mrb[0].mxu0
        %v4709 = vadd.f32 0.0, %v4708
        %v4710 = vpop.f32.mrb[0].mxu0
        %v4711 = vpop.f32.mrb[0].mxu0
        %v4712 = vadd.f32 0.0, %v4711
        %v4713 = vpop.f32.mrb[0].mxu0
        %4714 = vmatprep.mubr.bf16.mxu0 %v3254
        %4715 = vmatmul.mubr.bf16.gmra.mrb[0].mxu0 %v2373
        %v4716 = vpop.f32.mrb[0].mxu0
        %v4717 = vadd.f32 0.0, %v4716
        %v4718 = vpop.f32.mrb[0].mxu0
        %v4719 = vpop.f32.mrb[0].mxu0
        %v4720 = vadd.f32 0.0, %v4719
        %v4721 = vpop.f32.mrb[0].mxu0
        %4722 = vmatprep.mubr.bf16.mxu0 %v3257
        %4723 = vmatmul.mubr.bf16.gmra.mrb[0].mxu0 %v2375
        %v4724 = vpop.f32.mrb[0].mxu0
        %v4725 = vadd.f32 0.0, %v4724
        %v4726 = vpop.f32.mrb[0].mxu0
        %v4727 = vpop.f32.mrb[0].mxu0
        %v4728 = vadd.f32 0.0, %v4727
        %v4729 = vpop.f32.mrb[0].mxu0
        %4730 = vmatprep.mubr.bf16.mxu0 %v3260
        %4731 = vmatmul.mubr.bf16.gmra.mrb[0].mxu0 %v2377
        %v4732 = vpop.f32.mrb[0].mxu0
        %v4733 = vadd.f32 0.0, %v4732
        %v4734 = vpop.f32.mrb[0].mxu0
        %v4735 = vpop.f32.mrb[0].mxu0
        %v4736 = vadd.f32 0.0, %v4735
        %v4737 = vpop.f32.mrb[0].mxu0
        %4738 = vmatprep.mubr.bf16.mxu0 %v3263
        %4739 = vmatmul.mubr.bf16.gmra.mrb[0].mxu0 %v2379
        %v4740 = vpop.f32.mrb[0].mxu0
        %v4741 = vadd.f32 0.0, %v4740
        %v4742 = vpop.f32.mrb[0].mxu0
        %v4743 = vpop.f32.mrb[0].mxu0
        %v4744 = vadd.f32 0.0, %v4743
        %v4745 = vpop.f32.mrb[0].mxu0
        %4746 = vmatprep.mubr.bf16.mxu0 %v3266
        %4747 = vmatmul.mubr.bf16.gmra.mrb[0].mxu0 %v2381
        %v4748 = vpop.f32.mrb[0].mxu0
        %v4749 = vadd.f32 0.0, %v4748
        %v4750 = vpop.f32.mrb[0].mxu0
        %v4751 = vpop.f32.mrb[0].mxu0
        %v4752 = vadd.f32 0.0, %v4751
        %v4753 = vpop.f32.mrb[0].mxu0
        %4754 = vmatprep.mubr.bf16.mxu0 %v3269
        %4755 = vmatmul.mubr.bf16.gmra.mrb[0].mxu0 %v2383
        %v4756 = vpop.f32.mrb[0].mxu0
        %v4757 = vadd.f32 0.0, %v4756
        %v4758 = vpop.f32.mrb[0].mxu0
        %v4759 = vpop.f32.mrb[0].mxu0
        %v4760 = vadd.f32 0.0, %v4759
        %v4761 = vpop.f32.mrb[0].mxu0
        %4762 = vmatprep.mubr.bf16.mxu0 %v3272
        %4763 = vmatmul.mubr.bf16.gmra.mrb[0].mxu0 %v2385
        %v4764 = vpop.f32.mrb[0].mxu0
        %v4765 = vadd.f32 0.0, %v4764
        %v4766 = vpop.f32.mrb[0].mxu0
        %v4767 = vpop.f32.mrb[0].mxu0
        %v4768 = vadd.f32 0.0, %v4767
        %v4769 = vpop.f32.mrb[0].mxu0
        %4770 = vmatprep.mubr.bf16.mxu0 %v3275
        %4771 = vmatmul.mubr.bf16.gmra.mrb[0].mxu0 %v2387
        %v4772 = vpop.f32.mrb[0].mxu0
        %v4773 = vadd.f32 0.0, %v4772
        %v4774 = vpop.f32.mrb[0].mxu0
        %v4775 = vpop.f32.mrb[0].mxu0
        %v4776 = vadd.f32 0.0, %v4775
        %v4777 = vpop.f32.mrb[0].mxu0
        %4778 = vmatprep.mubr.bf16.mxu0 %v3278
        %4779 = vmatmul.mubr.bf16.gmra.mrb[0].mxu0 %v2389
        %v4780 = vpop.f32.mrb[0].mxu0
        %v4781 = vadd.f32 0.0, %v4780
        %v4782 = vpop.f32.mrb[0].mxu0
        %v4783 = vpop.f32.mrb[0].mxu0
        %v4784 = vadd.f32 0.0, %v4783
        %v4785 = vpop.f32.mrb[0].mxu0
        %4786 = vmatprep.mubr.bf16.mxu0 %v3281
        %4787 = vmatmul.mubr.bf16.gmra.mrb[0].mxu0 %v2391
        %v4788 = vpop.f32.mrb[0].mxu0
        %v4789 = vadd.f32 0.0, %v4788
        %v4790 = vpop.f32.mrb[0].mxu0
        %v4791 = vpop.f32.mrb[0].mxu0
        %v4792 = vadd.f32 0.0, %v4791
        %v4793 = vpop.f32.mrb[0].mxu0
        %4794 = vmatprep.mubr.bf16.mxu0 %v3284
        %4795 = vmatmul.mubr.bf16.gmra.mrb[0].mxu0 %v2393
        %v4796 = vpop.f32.mrb[0].mxu0
        %v4797 = vadd.f32 0.0, %v4796
        %v4798 = vpop.f32.mrb[0].mxu0
        %v4799 = vpop.f32.mrb[0].mxu0
        %v4800 = vadd.f32 0.0, %v4799
        %v4801 = vpop.f32.mrb[0].mxu0
        %4802 = vmatprep.mubr.bf16.mxu0 %v3287
        %4803 = vmatmul.mubr.bf16.gmra.mrb[0].mxu0 %v2395
        %v4804 = vpop.f32.mrb[0].mxu0
        %v4805 = vadd.f32 0.0, %v4804
        %v4806 = vpop.f32.mrb[0].mxu0
        %v4807 = vpop.f32.mrb[0].mxu0
        %v4808 = vadd.f32 0.0, %v4807
        %v4809 = vpop.f32.mrb[0].mxu0
        %4810 = vmatprep.mubr.bf16.mxu0 %v3290
        %4811 = vmatmul.mubr.bf16.gmra.mrb[0].mxu0 %v2397
        %v4812 = vpop.f32.mrb[0].mxu0
        %v4813 = vadd.f32 0.0, %v4812
        %v4814 = vpop.f32.mrb[0].mxu0
        %v4815 = vpop.f32.mrb[0].mxu0
        %v4816 = vadd.f32 0.0, %v4815
        %v4817 = vpop.f32.mrb[0].mxu0
        %4818 = vmatprep.mubr.bf16.mxu0 %v3293
        %4819 = vmatmul.mubr.bf16.gmra.mrb[0].mxu0 %v2399
        %v4820 = vpop.f32.mrb[0].mxu0
        %v4821 = vadd.f32 0.0, %v4820
        %v4822 = vpop.f32.mrb[0].mxu0
        %v4823 = vpop.f32.mrb[0].mxu0
        %v4824 = vadd.f32 0.0, %v4823
        %v4825 = vpop.f32.mrb[0].mxu0
        %4826 = vmatprep.mubr.bf16.mxu0 %v3296
        %4827 = vmatmul.mubr.bf16.gmra.mrb[0].mxu0 %v2401
        %v4828 = vpop.f32.mrb[0].mxu0
        %v4829 = vadd.f32 0.0, %v4828
        %v4830 = vpop.f32.mrb[0].mxu0
        %v4831 = vpop.f32.mrb[0].mxu0
        %v4832 = vadd.f32 0.0, %v4831
        %v4833 = vpop.f32.mrb[0].mxu0
        %4834 = vmatprep.mubr.bf16.mxu0 %v3299
        %4835 = vmatmul.mubr.bf16.gmra.mrb[0].mxu0 %v2403
        %v4836 = vpop.f32.mrb[0].mxu0
        %v4837 = vadd.f32 0.0, %v4836
        %v4838 = vpop.f32.mrb[0].mxu0
        %v4839 = vpop.f32.mrb[0].mxu0
        %v4840 = vadd.f32 0.0, %v4839
        %v4841 = vpop.f32.mrb[0].mxu0
        %4842 = vmatprep.mubr.bf16.mxu0 %v3302
        %4843 = vmatmul.mubr.bf16.gmra.mrb[0].mxu0 %v2405
        %v4844 = vpop.f32.mrb[0].mxu0
        %v4845 = vadd.f32 0.0, %v4844
        %v4846 = vpop.f32.mrb[0].mxu0
        %v4847 = vpop.f32.mrb[0].mxu0
        %v4848 = vadd.f32 0.0, %v4847
        %v4849 = vpop.f32.mrb[0].mxu0
        %4850 = vmatprep.mubr.bf16.mxu0 %v3305
        %4851 = vmatmul.mubr.bf16.gmra.mrb[0].mxu0 %v2407
        %v4852 = vpop.f32.mrb[0].mxu0
        %v4853 = vadd.f32 0.0, %v4852
        %v4854 = vpop.f32.mrb[0].mxu0
        %v4855 = vpop.f32.mrb[0].mxu0
        %v4856 = vadd.f32 0.0, %v4855
        %v4857 = vpop.f32.mrb[0].mxu0
        %4858 = vmatprep.mubr.bf16.mxu0 %v3308
        %4859 = vmatmul.mubr.bf16.gmra.mrb[0].mxu0 %v2409
        %v4860 = vpop.f32.mrb[0].mxu0
        %v4861 = vadd.f32 0.0, %v4860
        %v4862 = vpop.f32.mrb[0].mxu0
        %v4863 = vpop.f32.mrb[0].mxu0
        %v4864 = vadd.f32 0.0, %v4863
        %v4865 = vpop.f32.mrb[0].mxu0
        %4866 = vmatprep.mubr.bf16.mxu0 %v3311
        %4867 = vmatmul.mubr.bf16.gmra.mrb[0].mxu0 %v2411
        %v4868 = vpop.f32.mrb[0].mxu0
        %v4869 = vadd.f32 0.0, %v4868
        %v4870 = vpop.f32.mrb[0].mxu0
        %v4871 = vpop.f32.mrb[0].mxu0
        %v4872 = vadd.f32 0.0, %v4871
        %v4873 = vpop.f32.mrb[0].mxu0
        %4874 = vmatprep.mubr.bf16.mxu0 %v3314
        %4875 = vmatmul.mubr.bf16.gmra.mrb[0].mxu0 %v2413
        %v4876 = vpop.f32.mrb[0].mxu0
        %v4877 = vadd.f32 0.0, %v4876
        %v4878 = vpop.f32.mrb[0].mxu0
        %v4879 = vpop.f32.mrb[0].mxu0
        %v4880 = vadd.f32 0.0, %v4879
        %v4881 = vpop.f32.mrb[0].mxu0
        %4882 = vmatprep.mubr.bf16.mxu0 %v3317
        %4883 = vmatmul.mubr.bf16.gmra.mrb[0].mxu0 %v2415
        %v4884 = vpop.f32.mrb[0].mxu0
        %v4885 = vadd.f32 0.0, %v4884
        %v4886 = vpop.f32.mrb[0].mxu0
        %v4887 = vpop.f32.mrb[0].mxu0
        %v4888 = vadd.f32 0.0, %v4887
        %v4889 = vpop.f32.mrb[0].mxu0
        %4890 = vmatprep.mubr.bf16.mxu0 %v3320
        %4891 = vmatmul.mubr.bf16.gmra.mrb[0].mxu0 %v2417
        %v4892 = vpop.f32.mrb[0].mxu0
        %v4893 = vadd.f32 0.0, %v4892
        %v4894 = vpop.f32.mrb[0].mxu0
        %v4895 = vpop.f32.mrb[0].mxu0
        %v4896 = vadd.f32 0.0, %v4895
        %v4897 = vpop.f32.mrb[0].mxu0
        %4898 = vmatprep.mubr.bf16.mxu0 %v3323
        %4899 = vmatmul.mubr.bf16.gmra.mrb[0].mxu0 %v2419
        %v4900 = vpop.f32.mrb[0].mxu0
        %v4901 = vadd.f32 0.0, %v4900
        %v4902 = vpop.f32.mrb[0].mxu0
        %v4903 = vpop.f32.mrb[0].mxu0
        %v4904 = vadd.f32 0.0, %v4903
        %v4905 = vpop.f32.mrb[0].mxu0
        %4906 = vmatprep.mubr.bf16.mxu0 %v3326
        %4907 = vmatmul.mubr.bf16.gmra.mrb[0].mxu0 %v2421
        %v4908 = vpop.f32.mrb[0].mxu0
        %v4909 = vadd.f32 0.0, %v4908
        %v4910 = vpop.f32.mrb[0].mxu0
        %v4911 = vpop.f32.mrb[0].mxu0
        %v4912 = vadd.f32 0.0, %v4911
        %v4913 = vpop.f32.mrb[0].mxu0
        %4914 = vmatprep.mubr.bf16.mxu0 %v3329
        %4915 = vmatmul.mubr.bf16.gmra.mrb[0].mxu0 %v2423
        %v4916 = vpop.f32.mrb[0].mxu0
        %v4917 = vadd.f32 0.0, %v4916
        %v4918 = vpop.f32.mrb[0].mxu0
        %v4919 = vpop.f32.mrb[0].mxu0
        %v4920 = vadd.f32 0.0, %v4919
        %v4921 = vpop.f32.mrb[0].mxu0
        %4922 = vmatprep.mubr.bf16.mxu0 %v3332
        %4923 = vmatmul.mubr.bf16.gmra.mrb[0].mxu0 %v2425
        %v4924 = vpop.f32.mrb[0].mxu0
        %v4925 = vadd.f32 0.0, %v4924
        %v4926 = vpop.f32.mrb[0].mxu0
        %v4927 = vpop.f32.mrb[0].mxu0
        %v4928 = vadd.f32 0.0, %v4927
        %v4929 = vpop.f32.mrb[0].mxu0
        %4930 = vmatprep.mubr.bf16.mxu0 %v3335
        %4931 = vmatmul.mubr.bf16.gmra.mrb[0].mxu0 %v2427
        %v4932 = vpop.f32.mrb[0].mxu0
        %v4933 = vadd.f32 0.0, %v4932
        %v4934 = vpop.f32.mrb[0].mxu0
        %v4935 = vpop.f32.mrb[0].mxu0
        %v4936 = vadd.f32 0.0, %v4935
        %v4937 = vpop.f32.mrb[0].mxu0
        %4938 = vmatprep.mubr.bf16.mxu0 %v3338
        %4939 = vmatmul.mubr.bf16.gmra.mrb[0].mxu0 %v2429
        %v4940 = vpop.f32.mrb[0].mxu0
        %v4941 = vadd.f32 0.0, %v4940
        %v4942 = vpop.f32.mrb[0].mxu0
        %v4943 = vpop.f32.mrb[0].mxu0
        %v4944 = vadd.f32 0.0, %v4943
        %v4945 = vpop.f32.mrb[0].mxu0
        %4946 = vmatprep.mubr.bf16.mxu0 %v3341
        %4947 = vmatmul.mubr.bf16.gmra.mrb[0].mxu0 %v2431
        %v4948 = vpop.f32.mrb[0].mxu0
        %v4949 = vadd.f32 0.0, %v4948
        %v4950 = vpop.f32.mrb[0].mxu0
        %v4951 = vpop.f32.mrb[0].mxu0
        %v4952 = vadd.f32 0.0, %v4951
        %v4953 = vpop.f32.mrb[0].mxu0
        %4954 = vmatprep.mubr.bf16.mxu0 %v3344
        %4955 = vmatmul.mubr.bf16.gmra.mrb[0].mxu0 %v2433
        %v4956 = vpop.f32.mrb[0].mxu0
        %v4957 = vadd.f32 0.0, %v4956
        %v4958 = vpop.f32.mrb[0].mxu0
        %v4959 = vpop.f32.mrb[0].mxu0
        %v4960 = vadd.f32 0.0, %v4959
        %v4961 = vpop.f32.mrb[0].mxu0
        %4962 = vmatprep.mubr.bf16.mxu0 %v3347
        %4963 = vmatmul.mubr.bf16.gmra.mrb[0].mxu0 %v2435
        %v4964 = vpop.f32.mrb[0].mxu0
        %v4965 = vadd.f32 0.0, %v4964
        %v4966 = vpop.f32.mrb[0].mxu0
        %v4967 = vpop.f32.mrb[0].mxu0
        %v4968 = vadd.f32 0.0, %v4967
        %v4969 = vpop.f32.mrb[0].mxu0
        %4970 = vmatprep.mubr.bf16.mxu0 %v3350
        %4971 = vmatmul.mubr.bf16.gmra.mrb[0].mxu0 %v2437
        %v4972 = vpop.f32.mrb[0].mxu0
        %v4973 = vadd.f32 0.0, %v4972
        %v4974 = vpop.f32.mrb[0].mxu0
        %v4975 = vpop.f32.mrb[0].mxu0
        %v4976 = vadd.f32 0.0, %v4975
        %v4977 = vpop.f32.mrb[0].mxu0
        %4978 = vmatprep.mubr.bf16.mxu0 %v3353
        %4979 = vmatmul.mubr.bf16.gmra.mrb[0].mxu0 %v2439
        %v4980 = vpop.f32.mrb[0].mxu0
        %v4981 = vadd.f32 0.0, %v4980
        %v4982 = vpop.f32.mrb[0].mxu0
        %v4983 = vpop.f32.mrb[0].mxu0
        %v4984 = vadd.f32 0.0, %v4983
        %v4985 = vpop.f32.mrb[0].mxu0
        %4986 = vmatprep.mubr.bf16.mxu0 %v3356
        %4987 = vmatmul.mubr.bf16.gmra.mrb[0].mxu0 %v2441
        %v4988 = vpop.f32.mrb[0].mxu0
        %v4989 = vadd.f32 0.0, %v4988
        %v4990 = vpop.f32.mrb[0].mxu0
        %v4991 = vpop.f32.mrb[0].mxu0
        %v4992 = vadd.f32 0.0, %v4991
        %v4993 = vpop.f32.mrb[0].mxu0
        %4994 = vmatprep.mubr.bf16.mxu0 %v3359
        %4995 = vmatmul.mubr.bf16.gmra.mrb[0].mxu0 %v2443
        %v4996 = vpop.f32.mrb[0].mxu0
        %v4997 = vadd.f32 0.0, %v4996
        %v4998 = vpop.f32.mrb[0].mxu0
        %v4999 = vpop.f32.mrb[0].mxu0
        %v5000 = vadd.f32 0.0, %v4999
        %v5001 = vpop.f32.mrb[0].mxu0
        %5002 = vmatprep.mubr.bf16.mxu0 %v3362
        %5003 = vmatmul.mubr.bf16.gmra.mrb[0].mxu0 %v2445
        %v5004 = vpop.f32.mrb[0].mxu0
        %v5005 = vadd.f32 0.0, %v5004
        %v5006 = vpop.f32.mrb[0].mxu0
        %v5007 = vpop.f32.mrb[0].mxu0
        %v5008 = vadd.f32 0.0, %v5007
        %v5009 = vpop.f32.mrb[0].mxu0
        %5010 = vmatprep.mubr.bf16.mxu0 %v3365
        %5011 = vmatmul.mubr.bf16.gmra.mrb[0].mxu0 %v2447
        %v5012 = vpop.f32.mrb[0].mxu0
        %v5013 = vadd.f32 0.0, %v5012
        %v5014 = vpop.f32.mrb[0].mxu0
        %v5015 = vpop.f32.mrb[0].mxu0
        %v5016 = vadd.f32 0.0, %v5015
        %v5017 = vpop.f32.mrb[0].mxu0
        %5018 = vmatprep.mubr.bf16.mxu0 %v3368
        %5019 = vmatmul.mubr.bf16.gmra.mrb[0].mxu0 %v2449
        %v5020 = vpop.f32.mrb[0].mxu0
        %v5021 = vadd.f32 0.0, %v5020
        %v5022 = vpop.f32.mrb[0].mxu0
        %v5023 = vpop.f32.mrb[0].mxu0
        %v5024 = vadd.f32 0.0, %v5023
        %v5025 = vpop.f32.mrb[0].mxu0
        %5026 = vmatprep.mubr.bf16.mxu0 %v3371
        %5027 = vmatmul.mubr.bf16.gmra.mrb[0].mxu0 %v2451
        %v5028 = vpop.f32.mrb[0].mxu0
        %v5029 = vadd.f32 0.0, %v5028
        %v5030 = vpop.f32.mrb[0].mxu0
        %v5031 = vpop.f32.mrb[0].mxu0
        %v5032 = vadd.f32 0.0, %v5031
        %v5033 = vpop.f32.mrb[0].mxu0
        %5034 = vmatprep.mubr.bf16.mxu0 %v3374
        %5035 = vmatmul.mubr.bf16.gmra.mrb[0].mxu0 %v2453
        %v5036 = vpop.f32.mrb[0].mxu0
        %v5037 = vadd.f32 0.0, %v5036
        %v5038 = vpop.f32.mrb[0].mxu0
        %v5039 = vpop.f32.mrb[0].mxu0
        %v5040 = vadd.f32 0.0, %v5039
        %v5041 = vpop.f32.mrb[0].mxu0
        %5042 = vmatprep.mubr.bf16.mxu0 %v3377
        %5043 = vmatmul.mubr.bf16.gmra.mrb[0].mxu0 %v2455
        %v5044 = vpop.f32.mrb[0].mxu0
        %v5045 = vadd.f32 0.0, %v5044
        %v5046 = vpop.f32.mrb[0].mxu0
        %v5047 = vpop.f32.mrb[0].mxu0
        %v5048 = vadd.f32 0.0, %v5047
        %v5049 = vpop.f32.mrb[0].mxu0
        %5050 = vmatprep.mubr.bf16.mxu0 %v3380
        %5051 = vmatmul.mubr.bf16.gmra.mrb[0].mxu0 %v2457
        %v5052 = vpop.f32.mrb[0].mxu0
        %v5053 = vadd.f32 0.0, %v5052
        %v5054 = vpop.f32.mrb[0].mxu0
        %v5055 = vpop.f32.mrb[0].mxu0
        %v5056 = vadd.f32 0.0, %v5055
        %v5057 = vpop.f32.mrb[0].mxu0
        %5058 = vmatprep.mubr.bf16.mxu0 %v3383
        %5059 = vmatmul.mubr.bf16.gmra.mrb[0].mxu0 %v2459
        %v5060 = vpop.f32.mrb[0].mxu0
        %v5061 = vadd.f32 0.0, %v5060
        %v5062 = vpop.f32.mrb[0].mxu0
        %v5063 = vpop.f32.mrb[0].mxu0
        %v5064 = vadd.f32 0.0, %v5063
        %v5065 = vpop.f32.mrb[0].mxu0
        %5066 = vmatprep.mubr.bf16.mxu0 %v3386
        %5067 = vmatmul.mubr.bf16.gmra.mrb[0].mxu0 %v2461
        %v5068 = vpop.f32.mrb[0].mxu0
        %v5069 = vadd.f32 0.0, %v5068
        %v5070 = vpop.f32.mrb[0].mxu0
        %v5071 = vpop.f32.mrb[0].mxu0
        %v5072 = vadd.f32 0.0, %v5071
        %v5073 = vpop.f32.mrb[0].mxu0
        %5074 = vmatprep.mubr.bf16.mxu0 %v3389
        %5075 = vmatmul.mubr.bf16.gmra.mrb[0].mxu0 %v2463
        %v5076 = vpop.f32.mrb[0].mxu0
        %v5077 = vadd.f32 0.0, %v5076
        %v5078 = vpop.f32.mrb[0].mxu0
        %v5079 = vpop.f32.mrb[0].mxu0
        %v5080 = vadd.f32 0.0, %v5079
        %v5081 = vpop.f32.mrb[0].mxu0
        %5082 = vmatprep.mubr.bf16.mxu0 %v3392
        %5083 = vmatmul.mubr.bf16.gmra.mrb[0].mxu0 %v2465
        %v5084 = vpop.f32.mrb[0].mxu0
        %v5085 = vadd.f32 0.0, %v5084
        %v5086 = vpop.f32.mrb[0].mxu0
        %v5087 = vpop.f32.mrb[0].mxu0
        %v5088 = vadd.f32 0.0, %v5087
        %v5089 = vpop.f32.mrb[0].mxu0
        %5090 = vmatprep.mubr.bf16.mxu0 %v3395
        %5091 = vmatmul.mubr.bf16.gmra.mrb[0].mxu0 %v2467
        %v5092 = vpop.f32.mrb[0].mxu0
        %v5093 = vadd.f32 0.0, %v5092
        %v5094 = vpop.f32.mrb[0].mxu0
        %v5095 = vpop.f32.mrb[0].mxu0
        %v5096 = vadd.f32 0.0, %v5095
        %v5097 = vpop.f32.mrb[0].mxu0
        %5098 = vmatprep.mubr.bf16.mxu0 %v3398
        %5099 = vmatmul.mubr.bf16.gmra.mrb[0].mxu0 %v2469
        %v5100 = vpop.f32.mrb[0].mxu0
        %v5101 = vadd.f32 0.0, %v5100
        %v5102 = vpop.f32.mrb[0].mxu0
        %v5103 = vpop.f32.mrb[0].mxu0
        %v5104 = vadd.f32 0.0, %v5103
        %v5105 = vpop.f32.mrb[0].mxu0
        %5106 = vmatprep.mubr.bf16.mxu0 %v3401
        %5107 = vmatmul.mubr.bf16.gmra.mrb[0].mxu0 %v2471
        %v5108 = vpop.f32.mrb[0].mxu0
        %v5109 = vadd.f32 0.0, %v5108
        %v5110 = vpop.f32.mrb[0].mxu0
        %v5111 = vpop.f32.mrb[0].mxu0
        %v5112 = vadd.f32 0.0, %v5111
        %v5113 = vpop.f32.mrb[0].mxu0
        %5114 = vmatprep.mubr.bf16.mxu0 %v3404
        %5115 = vmatmul.mubr.bf16.gmra.mrb[0].mxu0 %v2473
        %v5116 = vpop.f32.mrb[0].mxu0
        %v5117 = vadd.f32 0.0, %v5116
        %v5118 = vpop.f32.mrb[0].mxu0
        %v5119 = vpop.f32.mrb[0].mxu0
        %v5120 = vadd.f32 0.0, %v5119
        %v5121 = vpop.f32.mrb[0].mxu0
        %5122 = vmatprep.mubr.bf16.mxu0 %v3407
        %5123 = vmatmul.mubr.bf16.gmra.mrb[0].mxu0 %v2475
        %v5124 = vpop.f32.mrb[0].mxu0
        %v5125 = vadd.f32 0.0, %v5124
        %v5126 = vpop.f32.mrb[0].mxu0
        %v5127 = vpop.f32.mrb[0].mxu0
        %v5128 = vadd.f32 0.0, %v5127
        %v5129 = vpop.f32.mrb[0].mxu0
        %5130 = vmatprep.mubr.bf16.mxu0 %v3410
        %5131 = vmatmul.mubr.bf16.gmra.mrb[0].mxu0 %v2477
        %v5132 = vpop.f32.mrb[0].mxu0
        %v5133 = vadd.f32 0.0, %v5132
        %v5134 = vpop.f32.mrb[0].mxu0
        %v5135 = vpop.f32.mrb[0].mxu0
        %v5136 = vadd.f32 0.0, %v5135
        %v5137 = vpop.f32.mrb[0].mxu0
        %5138 = vmatprep.mubr.bf16.mxu0 %v3413
        %5139 = vmatmul.mubr.bf16.gmra.mrb[0].mxu0 %v2479
        %v5140 = vpop.f32.mrb[0].mxu0
        %v5141 = vadd.f32 0.0, %v5140
        %v5142 = vpop.f32.mrb[0].mxu0
        %v5143 = vpop.f32.mrb[0].mxu0
        %v5144 = vadd.f32 0.0, %v5143
        %v5145 = vpop.f32.mrb[0].mxu0
        %5146 = vmatprep.mubr.bf16.mxu0 %v3416
        %5147 = vmatmul.mubr.bf16.gmra.mrb[0].mxu0 %v2481
        %v5148 = vpop.f32.mrb[0].mxu0
        %v5149 = vadd.f32 0.0, %v5148
        %v5150 = vpop.f32.mrb[0].mxu0
        %v5151 = vpop.f32.mrb[0].mxu0
        %v5152 = vadd.f32 0.0, %v5151
        %v5153 = vpop.f32.mrb[0].mxu0
        %5154 = vmatprep.mubr.bf16.mxu0 %v3419
        %5155 = vmatmul.mubr.bf16.gmra.mrb[0].mxu0 %v2483
        %v5156 = vpop.f32.mrb[0].mxu0
        %v5157 = vadd.f32 0.0, %v5156
        %v5158 = vpop.f32.mrb[0].mxu0
        %v5159 = vpop.f32.mrb[0].mxu0
        %v5160 = vadd.f32 0.0, %v5159
        %v5161 = vpop.f32.mrb[0].mxu0
        %5162 = vmatprep.mubr.bf16.mxu0 %v3422
        %5163 = vmatmul.mubr.bf16.gmra.mrb[0].mxu0 %v2485
        %v5164 = vpop.f32.mrb[0].mxu0
        %v5165 = vadd.f32 0.0, %v5164
        %v5166 = vpop.f32.mrb[0].mxu0
        %v5167 = vpop.f32.mrb[0].mxu0
        %v5168 = vadd.f32 0.0, %v5167
        %v5169 = vpop.f32.mrb[0].mxu0
        %5170 = vmatprep.mubr.bf16.mxu0 %v3425
        %5171 = vmatmul.mubr.bf16.gmra.mrb[0].mxu0 %v2487
        %v5172 = vpop.f32.mrb[0].mxu0
        %v5173 = vadd.f32 0.0, %v5172
        %v5174 = vpop.f32.mrb[0].mxu0
        %v5175 = vpop.f32.mrb[0].mxu0
        %v5176 = vadd.f32 0.0, %v5175
        %v5177 = vpop.f32.mrb[0].mxu0
        %5178 = vmatprep.mubr.bf16.mxu0 %v3428
        %5179 = vmatmul.mubr.bf16.gmra.mrb[0].mxu0 %v2489
        %v5180 = vpop.f32.mrb[0].mxu0
        %v5181 = vadd.f32 0.0, %v5180
        %v5182 = vpop.f32.mrb[0].mxu0
        %v5183 = vpop.f32.mrb[0].mxu0
        %v5184 = vadd.f32 0.0, %v5183
        %v5185 = vpop.f32.mrb[0].mxu0
        %5186 = vmatprep.mubr.bf16.mxu0 %v3431
        %5187 = vmatmul.mubr.bf16.gmra.mrb[0].mxu0 %v2491
        %v5188 = vpop.f32.mrb[0].mxu0
        %v5189 = vadd.f32 0.0, %v5188
        %v5190 = vpop.f32.mrb[0].mxu0
        %v5191 = vpop.f32.mrb[0].mxu0
        %v5192 = vadd.f32 0.0, %v5191
        %v5193 = vpop.f32.mrb[0].mxu0
        %5194 = vmatprep.mubr.bf16.mxu0 %v3434
        %5195 = vmatmul.mubr.bf16.gmra.mrb[0].mxu0 %v2493
        %v5196 = vpop.f32.mrb[0].mxu0
        %v5197 = vadd.f32 0.0, %v5196
        %v5198 = vpop.f32.mrb[0].mxu0
        %v5199 = vpop.f32.mrb[0].mxu0
        %v5200 = vadd.f32 0.0, %v5199
        %v5201 = vpop.f32.mrb[0].mxu0
        %5202 = vmatprep.mubr.bf16.mxu0 %v3437
        %5203 = vmatmul.mubr.bf16.gmra.mrb[0].mxu0 %v2495
        %v5204 = vpop.f32.mrb[0].mxu0
        %v5205 = vadd.f32 0.0, %v5204
        %v5206 = vpop.f32.mrb[0].mxu0
        %v5207 = vpop.f32.mrb[0].mxu0
        %v5208 = vadd.f32 0.0, %v5207
        %v5209 = vpop.f32.mrb[0].mxu0
        %5210 = vmatprep.mubr.bf16.mxu0 %v3440
        %5211 = vmatmul.mubr.bf16.gmra.mrb[0].mxu0 %v2497
        %v5212 = vpop.f32.mrb[0].mxu0
        %v5213 = vadd.f32 0.0, %v5212
        %v5214 = vpop.f32.mrb[0].mxu0
        %v5215 = vpop.f32.mrb[0].mxu0
        %v5216 = vadd.f32 0.0, %v5215
        %v5217 = vpop.f32.mrb[0].mxu0
        %5218 = vmatprep.mubr.bf16.mxu0 %v3443
        %5219 = vmatmul.mubr.bf16.gmra.mrb[0].mxu0 %v2499
        %v5220 = vpop.f32.mrb[0].mxu0
        %v5221 = vadd.f32 0.0, %v5220
        %v5222 = vpop.f32.mrb[0].mxu0
        %v5223 = vpop.f32.mrb[0].mxu0
        %v5224 = vadd.f32 0.0, %v5223
        %v5225 = vpop.f32.mrb[0].mxu0
        %5226 = vmatprep.mubr.bf16.mxu0 %v3446
        %5227 = vmatmul.mubr.bf16.gmra.mrb[0].mxu0 %v2501
        %v5228 = vpop.f32.mrb[0].mxu0
        %v5229 = vadd.f32 0.0, %v5228
        %v5230 = vpop.f32.mrb[0].mxu0
        %v5231 = vpop.f32.mrb[0].mxu0
        %v5232 = vadd.f32 0.0, %v5231
        %v5233 = vpop.f32.mrb[0].mxu0
        %5234 = vmatprep.mubr.bf16.mxu0 %v3449
        %5235 = vmatmul.mubr.bf16.gmra.mrb[0].mxu0 %v2503
        %v5236 = vpop.f32.mrb[0].mxu0
        %v5237 = vadd.f32 0.0, %v5236
        %v5238 = vpop.f32.mrb[0].mxu0
        %v5239 = vpop.f32.mrb[0].mxu0
        %v5240 = vadd.f32 0.0, %v5239
        %v5241 = vpop.f32.mrb[0].mxu0
        %5242 = vmatprep.mubr.bf16.mxu0 %v3452
        %5243 = vmatmul.mubr.bf16.gmra.mrb[0].mxu0 %v2505
        %v5244 = vpop.f32.mrb[0].mxu0
        %v5245 = vadd.f32 0.0, %v5244
        %v5246 = vpop.f32.mrb[0].mxu0
        %v5247 = vpop.f32.mrb[0].mxu0
        %v5248 = vadd.f32 0.0, %v5247
        %v5249 = vpop.f32.mrb[0].mxu0
        %5250 = vmatprep.mubr.bf16.mxu0 %v3455
        %5251 = vmatmul.mubr.bf16.gmra.mrb[0].mxu0 %v2507
        %v5252 = vpop.f32.mrb[0].mxu0
        %v5253 = vadd.f32 0.0, %v5252
        %v5254 = vpop.f32.mrb[0].mxu0
        %v5255 = vpop.f32.mrb[0].mxu0
        %v5256 = vadd.f32 0.0, %v5255
        %v5257 = vpop.f32.mrb[0].mxu0
        %5258 = vmatprep.mubr.bf16.mxu0 %v3458
        %5259 = vmatmul.mubr.bf16.gmra.mrb[0].mxu0 %v2509
        %v5260 = vpop.f32.mrb[0].mxu0
        %v5261 = vadd.f32 0.0, %v5260
        %v5262 = vpop.f32.mrb[0].mxu0
        %v5263 = vpop.f32.mrb[0].mxu0
        %v5264 = vadd.f32 0.0, %v5263
        %v5265 = vpop.f32.mrb[0].mxu0
        %5266 = vmatprep.mubr.bf16.mxu0 %v3461
        %5267 = vmatmul.mubr.bf16.gmra.mrb[0].mxu0 %v2511
        %v5268 = vpop.f32.mrb[0].mxu0
        %v5269 = vadd.f32 0.0, %v5268
        %v5270 = vpop.f32.mrb[0].mxu0
        %v5271 = vpop.f32.mrb[0].mxu0
        %v5272 = vadd.f32 0.0, %v5271
        %v5273 = vpop.f32.mrb[0].mxu0
        %5274 = vmatprep.mubr.bf16.mxu0 %v3464
        %5275 = vmatmul.mubr.bf16.gmra.mrb[0].mxu0 %v2513
        %v5276 = vpop.f32.mrb[0].mxu0
        %v5277 = vadd.f32 0.0, %v5276
        %v5278 = vpop.f32.mrb[0].mxu0
        %v5279 = vpop.f32.mrb[0].mxu0
        %v5280 = vadd.f32 0.0, %v5279
        %v5281 = vpop.f32.mrb[0].mxu0
        %5282 = vmatprep.mubr.bf16.mxu0 %v3467
        %5283 = vmatmul.mubr.bf16.gmra.mrb[0].mxu0 %v2515
        %v5284 = vpop.f32.mrb[0].mxu0
        %v5285 = vadd.f32 0.0, %v5284
        %v5286 = vpop.f32.mrb[0].mxu0
        %v5287 = vpop.f32.mrb[0].mxu0
        %v5288 = vadd.f32 0.0, %v5287
        %v5289 = vpop.f32.mrb[0].mxu0
        %5290 = vmatprep.mubr.bf16.mxu0 %v3470
        %5291 = vmatmul.mubr.bf16.gmra.mrb[0].mxu0 %v2517
        %v5292 = vpop.f32.mrb[0].mxu0
        %v5293 = vadd.f32 0.0, %v5292
        %v5294 = vpop.f32.mrb[0].mxu0
        %v5295 = vpop.f32.mrb[0].mxu0
        %v5296 = vadd.f32 0.0, %v5295
        %v5297 = vpop.f32.mrb[0].mxu0
        %5298 = vmatprep.mubr.bf16.mxu0 %v3473
        %5299 = vmatmul.mubr.bf16.gmra.mrb[0].mxu0 %v2519
        %v5300 = vpop.f32.mrb[0].mxu0
        %v5301 = vadd.f32 0.0, %v5300
        %v5302 = vpop.f32.mrb[0].mxu0
        %v5303 = vpop.f32.mrb[0].mxu0
        %v5304 = vadd.f32 0.0, %v5303
        %v5305 = vpop.f32.mrb[0].mxu0
        %5306 = vdwg.mxu0
        %v5307 = vld [vmem:[%s256] sm:$0x1]
        %v5309 = vlaneseq
        %v5310 = vshrl.u32 %v5309, 7
        %v5311 = vsub.s32 0, %v5310
        %v5312 = vrot.slane %v5307, %v5311
        %v5314 = vmul.f32 %v3517, %v5312
        %v5315 = vmul.f32 %v3520, %v5312
        %v5316 = vmul.f32 %v3525, %v5312
        %v5317 = vmul.f32 %v3528, %v5312
        %v5318 = vmul.f32 %v3533, %v5312
        %v5319 = vmul.f32 %v3536, %v5312
        %v5320 = vmul.f32 %v3541, %v5312
        %v5321 = vmul.f32 %v3544, %v5312
        %v5322 = vmul.f32 %v3549, %v5312
        %v5323 = vmul.f32 %v3552, %v5312
        %v5324 = vmul.f32 %v3557, %v5312
        %v5325 = vmul.f32 %v3560, %v5312
        %v5326 = vmul.f32 %v3565, %v5312
        %v5327 = vmul.f32 %v3568, %v5312
        %v5328 = vmul.f32 %v3573, %v5312
        %v5329 = vmul.f32 %v3576, %v5312
        %v5330 = vmul.f32 %v3581, %v5312
        %v5331 = vmul.f32 %v3584, %v5312
        %v5332 = vmul.f32 %v3589, %v5312
        %v5333 = vmul.f32 %v3592, %v5312
        %v5334 = vmul.f32 %v3597, %v5312
        %v5335 = vmul.f32 %v3600, %v5312
        %v5336 = vmul.f32 %v3605, %v5312
        %v5337 = vmul.f32 %v3608, %v5312
        %v5338 = vmul.f32 %v3613, %v5312
        %v5339 = vmul.f32 %v3616, %v5312
        %v5340 = vmul.f32 %v3621, %v5312
        %v5341 = vmul.f32 %v3624, %v5312
        %v5342 = vmul.f32 %v3629, %v5312
        %v5343 = vmul.f32 %v3632, %v5312
        %v5344 = vmul.f32 %v3637, %v5312
        %v5345 = vmul.f32 %v3640, %v5312
        %v5346 = vmul.f32 %v3645, %v5312
        %v5347 = vmul.f32 %v3648, %v5312
        %v5348 = vmul.f32 %v3653, %v5312
        %v5349 = vmul.f32 %v3656, %v5312
        %v5350 = vmul.f32 %v3661, %v5312
        %v5351 = vmul.f32 %v3664, %v5312
        %v5352 = vmul.f32 %v3669, %v5312
        %v5353 = vmul.f32 %v3672, %v5312
        %v5354 = vmul.f32 %v3677, %v5312
        %v5355 = vmul.f32 %v3680, %v5312
        %v5356 = vmul.f32 %v3685, %v5312
        %v5357 = vmul.f32 %v3688, %v5312
        %v5358 = vmul.f32 %v3693, %v5312
        %v5359 = vmul.f32 %v3696, %v5312
        %v5360 = vmul.f32 %v3701, %v5312
        %v5361 = vmul.f32 %v3704, %v5312
        %v5362 = vmul.f32 %v3709, %v5312
        %v5363 = vmul.f32 %v3712, %v5312
        %v5364 = vmul.f32 %v3717, %v5312
        %v5365 = vmul.f32 %v3720, %v5312
        %v5366 = vmul.f32 %v3725, %v5312
        %v5367 = vmul.f32 %v3728, %v5312
        %v5368 = vmul.f32 %v3733, %v5312
        %v5369 = vmul.f32 %v3736, %v5312
        %v5370 = vmul.f32 %v3741, %v5312
        %v5371 = vmul.f32 %v3744, %v5312
        %v5372 = vmul.f32 %v3749, %v5312
        %v5373 = vmul.f32 %v3752, %v5312
        %v5374 = vmul.f32 %v3757, %v5312
        %v5375 = vmul.f32 %v3760, %v5312
        %v5376 = vmul.f32 %v3765, %v5312
        %v5377 = vmul.f32 %v3768, %v5312
        %v5378 = vmul.f32 %v3773, %v5312
        %v5379 = vmul.f32 %v3776, %v5312
        %v5380 = vmul.f32 %v3781, %v5312
        %v5381 = vmul.f32 %v3784, %v5312
        %v5382 = vmul.f32 %v3789, %v5312
        %v5383 = vmul.f32 %v3792, %v5312
        %v5384 = vmul.f32 %v3797, %v5312
        %v5385 = vmul.f32 %v3800, %v5312
        %v5386 = vmul.f32 %v3805, %v5312
        %v5387 = vmul.f32 %v3808, %v5312
        %v5388 = vmul.f32 %v3813, %v5312
        %v5389 = vmul.f32 %v3816, %v5312
        %v5390 = vmul.f32 %v3821, %v5312
        %v5391 = vmul.f32 %v3824, %v5312
        %v5392 = vmul.f32 %v3829, %v5312
        %v5393 = vmul.f32 %v3832, %v5312
        %v5394 = vmul.f32 %v3837, %v5312
        %v5395 = vmul.f32 %v3840, %v5312
        %v5396 = vmul.f32 %v3845, %v5312
        %v5397 = vmul.f32 %v3848, %v5312
        %v5398 = vmul.f32 %v3853, %v5312
        %v5399 = vmul.f32 %v3856, %v5312
        %v5400 = vmul.f32 %v3861, %v5312
        %v5401 = vmul.f32 %v3864, %v5312
        %v5402 = vmul.f32 %v3869, %v5312
        %v5403 = vmul.f32 %v3872, %v5312
        %v5404 = vmul.f32 %v3877, %v5312
        %v5405 = vmul.f32 %v3880, %v5312
        %v5406 = vmul.f32 %v3885, %v5312
        %v5407 = vmul.f32 %v3888, %v5312
        %v5408 = vmul.f32 %v3893, %v5312
        %v5409 = vmul.f32 %v3896, %v5312
        %v5410 = vmul.f32 %v3901, %v5312
        %v5411 = vmul.f32 %v3904, %v5312
        %v5412 = vmul.f32 %v3909, %v5312
        %v5413 = vmul.f32 %v3912, %v5312
        %v5414 = vmul.f32 %v3917, %v5312
        %v5415 = vmul.f32 %v3920, %v5312
        %v5416 = vmul.f32 %v3925, %v5312
        %v5417 = vmul.f32 %v3928, %v5312
        %v5418 = vmul.f32 %v3933, %v5312
        %v5419 = vmul.f32 %v3936, %v5312
        %v5420 = vmul.f32 %v3941, %v5312
        %v5421 = vmul.f32 %v3944, %v5312
        %v5422 = vmul.f32 %v3949, %v5312
        %v5423 = vmul.f32 %v3952, %v5312
        %v5424 = vmul.f32 %v3957, %v5312
        %v5425 = vmul.f32 %v3960, %v5312
        %v5426 = vmul.f32 %v3965, %v5312
        %v5427 = vmul.f32 %v3968, %v5312
        %v5428 = vmul.f32 %v3973, %v5312
        %v5429 = vmul.f32 %v3976, %v5312
        %v5430 = vmul.f32 %v3981, %v5312
        %v5431 = vmul.f32 %v3984, %v5312
        %v5432 = vmul.f32 %v3989, %v5312
        %v5433 = vmul.f32 %v3992, %v5312
        %v5434 = vmul.f32 %v3997, %v5312
        %v5435 = vmul.f32 %v4000, %v5312
        %v5436 = vmul.f32 %v4005, %v5312
        %v5437 = vmul.f32 %v4008, %v5312
        %v5438 = vmul.f32 %v4013, %v5312
        %v5439 = vmul.f32 %v4016, %v5312
        %v5440 = vmul.f32 %v4021, %v5312
        %v5441 = vmul.f32 %v4024, %v5312
        %v5442 = vmul.f32 %v4029, %v5312
        %v5443 = vmul.f32 %v4032, %v5312
        %v5444 = vmul.f32 %v4037, %v5312
        %v5445 = vmul.f32 %v4040, %v5312
        %v5446 = vmul.f32 %v4045, %v5312
        %v5447 = vmul.f32 %v4048, %v5312
        %v5448 = vmul.f32 %v4053, %v5312
        %v5449 = vmul.f32 %v4056, %v5312
        %v5450 = vmul.f32 %v4061, %v5312
        %v5451 = vmul.f32 %v4064, %v5312
        %v5452 = vmul.f32 %v4069, %v5312
        %v5453 = vmul.f32 %v4072, %v5312
        %v5454 = vmul.f32 %v4077, %v5312
        %v5455 = vmul.f32 %v4080, %v5312
        %v5456 = vmul.f32 %v4085, %v5312
        %v5457 = vmul.f32 %v4088, %v5312
        %v5458 = vmul.f32 %v4093, %v5312
        %v5459 = vmul.f32 %v4096, %v5312
        %v5460 = vmul.f32 %v4101, %v5312
        %v5461 = vmul.f32 %v4104, %v5312
        %v5462 = vmul.f32 %v4109, %v5312
        %v5463 = vmul.f32 %v4112, %v5312
        %v5464 = vmul.f32 %v4117, %v5312
        %v5465 = vmul.f32 %v4120, %v5312
        %v5466 = vmul.f32 %v4125, %v5312
        %v5467 = vmul.f32 %v4128, %v5312
        %v5468 = vmul.f32 %v4133, %v5312
        %v5469 = vmul.f32 %v4136, %v5312
        %v5470 = vmul.f32 %v4141, %v5312
        %v5471 = vmul.f32 %v4144, %v5312
        %v5472 = vmul.f32 %v4149, %v5312
        %v5473 = vmul.f32 %v4152, %v5312
        %v5474 = vmul.f32 %v4157, %v5312
        %v5475 = vmul.f32 %v4160, %v5312
        %v5476 = vmul.f32 %v4165, %v5312
        %v5477 = vmul.f32 %v4168, %v5312
        %v5478 = vmul.f32 %v4173, %v5312
        %v5479 = vmul.f32 %v4176, %v5312
        %v5480 = vmul.f32 %v4181, %v5312
        %v5481 = vmul.f32 %v4184, %v5312
        %v5482 = vmul.f32 %v4189, %v5312
        %v5483 = vmul.f32 %v4192, %v5312
        %v5484 = vmul.f32 %v4197, %v5312
        %v5485 = vmul.f32 %v4200, %v5312
        %v5486 = vmul.f32 %v4205, %v5312
        %v5487 = vmul.f32 %v4208, %v5312
        %v5488 = vmul.f32 %v4213, %v5312
        %v5489 = vmul.f32 %v4216, %v5312
        %v5490 = vmul.f32 %v4221, %v5312
        %v5491 = vmul.f32 %v4224, %v5312
        %v5492 = vmul.f32 %v4229, %v5312
        %v5493 = vmul.f32 %v4232, %v5312
        %v5494 = vmul.f32 %v4237, %v5312
        %v5495 = vmul.f32 %v4240, %v5312
        %v5496 = vmul.f32 %v4245, %v5312
        %v5497 = vmul.f32 %v4248, %v5312
        %v5498 = vmul.f32 %v4253, %v5312
        %v5499 = vmul.f32 %v4256, %v5312
        %v5500 = vmul.f32 %v4261, %v5312
        %v5501 = vmul.f32 %v4264, %v5312
        %v5502 = vmul.f32 %v4269, %v5312
        %v5503 = vmul.f32 %v4272, %v5312
        %v5504 = vmul.f32 %v4277, %v5312
        %v5505 = vmul.f32 %v4280, %v5312
        %v5506 = vmul.f32 %v4285, %v5312
        %v5507 = vmul.f32 %v4288, %v5312
        %v5508 = vmul.f32 %v4293, %v5312
        %v5509 = vmul.f32 %v4296, %v5312
        %v5510 = vmul.f32 %v4301, %v5312
        %v5511 = vmul.f32 %v4304, %v5312
        %v5512 = vmul.f32 %v4309, %v5312
        %v5513 = vmul.f32 %v4312, %v5312
        %v5514 = vmul.f32 %v4317, %v5312
        %v5515 = vmul.f32 %v4320, %v5312
        %v5516 = vmul.f32 %v4325, %v5312
        %v5517 = vmul.f32 %v4328, %v5312
        %v5518 = vmul.f32 %v4333, %v5312
        %v5519 = vmul.f32 %v4336, %v5312
        %v5520 = vmul.f32 %v4341, %v5312
        %v5521 = vmul.f32 %v4344, %v5312
        %v5522 = vmul.f32 %v4349, %v5312
        %v5523 = vmul.f32 %v4352, %v5312
        %v5524 = vmul.f32 %v4357, %v5312
        %v5525 = vmul.f32 %v4360, %v5312
        %v5526 = vmul.f32 %v4365, %v5312
        %v5527 = vmul.f32 %v4368, %v5312
        %v5528 = vmul.f32 %v4373, %v5312
        %v5529 = vmul.f32 %v4376, %v5312
        %v5530 = vmul.f32 %v4381, %v5312
        %v5531 = vmul.f32 %v4384, %v5312
        %v5532 = vmul.f32 %v4389, %v5312
        %v5533 = vmul.f32 %v4392, %v5312
        %v5534 = vmul.f32 %v4397, %v5312
        %v5535 = vmul.f32 %v4400, %v5312
        %v5536 = vmul.f32 %v4405, %v5312
        %v5537 = vmul.f32 %v4408, %v5312
        %v5538 = vmul.f32 %v4413, %v5312
        %v5539 = vmul.f32 %v4416, %v5312
        %v5540 = vmul.f32 %v4421, %v5312
        %v5541 = vmul.f32 %v4424, %v5312
        %v5542 = vmul.f32 %v4429, %v5312
        %v5543 = vmul.f32 %v4432, %v5312
        %v5544 = vmul.f32 %v4437, %v5312
        %v5545 = vmul.f32 %v4440, %v5312
        %v5546 = vmul.f32 %v4445, %v5312
        %v5547 = vmul.f32 %v4448, %v5312
        %v5548 = vmul.f32 %v4453, %v5312
        %v5549 = vmul.f32 %v4456, %v5312
        %v5550 = vmul.f32 %v4461, %v5312
        %v5551 = vmul.f32 %v4464, %v5312
        %v5552 = vmul.f32 %v4469, %v5312
        %v5553 = vmul.f32 %v4472, %v5312
        %v5554 = vmul.f32 %v4477, %v5312
        %v5555 = vmul.f32 %v4480, %v5312
        %v5556 = vmul.f32 %v4485, %v5312
        %v5557 = vmul.f32 %v4488, %v5312
        %v5558 = vmul.f32 %v4493, %v5312
        %v5559 = vmul.f32 %v4496, %v5312
        %v5560 = vmul.f32 %v4501, %v5312
        %v5561 = vmul.f32 %v4504, %v5312
        %v5562 = vmul.f32 %v4509, %v5312
        %v5563 = vmul.f32 %v4512, %v5312
        %v5564 = vmul.f32 %v4517, %v5312
        %v5565 = vmul.f32 %v4520, %v5312
        %v5566 = vmul.f32 %v4525, %v5312
        %v5567 = vmul.f32 %v4528, %v5312
        %v5568 = vmul.f32 %v4533, %v5312
        %v5569 = vmul.f32 %v4536, %v5312
        %v5570 = vmul.f32 %v4541, %v5312
        %v5571 = vmul.f32 %v4544, %v5312
        %v5572 = vmul.f32 %v4549, %v5312
        %v5573 = vmul.f32 %v4552, %v5312
        %v5574 = vmul.f32 %v4557, %v5312
        %v5575 = vmul.f32 %v4560, %v5312
        %v5576 = vmul.f32 %v4565, %v5312
        %v5577 = vmul.f32 %v4568, %v5312
        %v5578 = vmul.f32 %v4573, %v5312
        %v5579 = vmul.f32 %v4576, %v5312
        %v5580 = vmul.f32 %v4581, %v5312
        %v5581 = vmul.f32 %v4584, %v5312
        %v5582 = vmul.f32 %v4589, %v5312
        %v5583 = vmul.f32 %v4592, %v5312
        %v5584 = vmul.f32 %v4597, %v5312
        %v5585 = vmul.f32 %v4600, %v5312
        %v5586 = vmul.f32 %v4605, %v5312
        %v5587 = vmul.f32 %v4608, %v5312
        %v5588 = vmul.f32 %v4613, %v5312
        %v5589 = vmul.f32 %v4616, %v5312
        %v5590 = vmul.f32 %v4621, %v5312
        %v5591 = vmul.f32 %v4624, %v5312
        %v5592 = vmul.f32 %v4629, %v5312
        %v5593 = vmul.f32 %v4632, %v5312
        %v5594 = vmul.f32 %v4637, %v5312
        %v5595 = vmul.f32 %v4640, %v5312
        %v5596 = vmul.f32 %v4645, %v5312
        %v5597 = vmul.f32 %v4648, %v5312
        %v5598 = vmul.f32 %v4653, %v5312
        %v5599 = vmul.f32 %v4656, %v5312
        %v5600 = vmul.f32 %v4661, %v5312
        %v5601 = vmul.f32 %v4664, %v5312
        %v5602 = vmul.f32 %v4669, %v5312
        %v5603 = vmul.f32 %v4672, %v5312
        %v5604 = vmul.f32 %v4677, %v5312
        %v5605 = vmul.f32 %v4680, %v5312
        %v5606 = vmul.f32 %v4685, %v5312
        %v5607 = vmul.f32 %v4688, %v5312
        %v5608 = vmul.f32 %v4693, %v5312
        %v5609 = vmul.f32 %v4696, %v5312
        %v5610 = vmul.f32 %v4701, %v5312
        %v5611 = vmul.f32 %v4704, %v5312
        %v5612 = vmul.f32 %v4709, %v5312
        %v5613 = vmul.f32 %v4712, %v5312
        %v5614 = vmul.f32 %v4717, %v5312
        %v5615 = vmul.f32 %v4720, %v5312
        %v5616 = vmul.f32 %v4725, %v5312
        %v5617 = vmul.f32 %v4728, %v5312
        %v5618 = vmul.f32 %v4733, %v5312
        %v5619 = vmul.f32 %v4736, %v5312
        %v5620 = vmul.f32 %v4741, %v5312
        %v5621 = vmul.f32 %v4744, %v5312
        %v5622 = vmul.f32 %v4749, %v5312
        %v5623 = vmul.f32 %v4752, %v5312
        %v5624 = vmul.f32 %v4757, %v5312
        %v5625 = vmul.f32 %v4760, %v5312
        %v5626 = vmul.f32 %v4765, %v5312
        %v5627 = vmul.f32 %v4768, %v5312
        %v5628 = vmul.f32 %v4773, %v5312
        %v5629 = vmul.f32 %v4776, %v5312
        %v5630 = vmul.f32 %v4781, %v5312
        %v5631 = vmul.f32 %v4784, %v5312
        %v5632 = vmul.f32 %v4789, %v5312
        %v5633 = vmul.f32 %v4792, %v5312
        %v5634 = vmul.f32 %v4797, %v5312
        %v5635 = vmul.f32 %v4800, %v5312
        %v5636 = vmul.f32 %v4805, %v5312
        %v5637 = vmul.f32 %v4808, %v5312
        %v5638 = vmul.f32 %v4813, %v5312
        %v5639 = vmul.f32 %v4816, %v5312
        %v5640 = vmul.f32 %v4821, %v5312
        %v5641 = vmul.f32 %v4824, %v5312
        %v5642 = vmul.f32 %v4829, %v5312
        %v5643 = vmul.f32 %v4832, %v5312
        %v5644 = vmul.f32 %v4837, %v5312
        %v5645 = vmul.f32 %v4840, %v5312
        %v5646 = vmul.f32 %v4845, %v5312
        %v5647 = vmul.f32 %v4848, %v5312
        %v5648 = vmul.f32 %v4853, %v5312
        %v5649 = vmul.f32 %v4856, %v5312
        %v5650 = vmul.f32 %v4861, %v5312
        %v5651 = vmul.f32 %v4864, %v5312
        %v5652 = vmul.f32 %v4869, %v5312
        %v5653 = vmul.f32 %v4872, %v5312
        %v5654 = vmul.f32 %v4877, %v5312
        %v5655 = vmul.f32 %v4880, %v5312
        %v5656 = vmul.f32 %v4885, %v5312
        %v5657 = vmul.f32 %v4888, %v5312
        %v5658 = vmul.f32 %v4893, %v5312
        %v5659 = vmul.f32 %v4896, %v5312
        %v5660 = vmul.f32 %v4901, %v5312
        %v5661 = vmul.f32 %v4904, %v5312
        %v5662 = vmul.f32 %v4909, %v5312
        %v5663 = vmul.f32 %v4912, %v5312
        %v5664 = vmul.f32 %v4917, %v5312
        %v5665 = vmul.f32 %v4920, %v5312
        %v5666 = vmul.f32 %v4925, %v5312
        %v5667 = vmul.f32 %v4928, %v5312
        %v5668 = vmul.f32 %v4933, %v5312
        %v5669 = vmul.f32 %v4936, %v5312
        %v5670 = vmul.f32 %v4941, %v5312
        %v5671 = vmul.f32 %v4944, %v5312
        %v5672 = vmul.f32 %v4949, %v5312
        %v5673 = vmul.f32 %v4952, %v5312
        %v5674 = vmul.f32 %v4957, %v5312
        %v5675 = vmul.f32 %v4960, %v5312
        %v5676 = vmul.f32 %v4965, %v5312
        %v5677 = vmul.f32 %v4968, %v5312
        %v5678 = vmul.f32 %v4973, %v5312
        %v5679 = vmul.f32 %v4976, %v5312
        %v5680 = vmul.f32 %v4981, %v5312
        %v5681 = vmul.f32 %v4984, %v5312
        %v5682 = vmul.f32 %v4989, %v5312
        %v5683 = vmul.f32 %v4992, %v5312
        %v5684 = vmul.f32 %v4997, %v5312
        %v5685 = vmul.f32 %v5000, %v5312
        %v5686 = vmul.f32 %v5005, %v5312
        %v5687 = vmul.f32 %v5008, %v5312
        %v5688 = vmul.f32 %v5013, %v5312
        %v5689 = vmul.f32 %v5016, %v5312
        %v5690 = vmul.f32 %v5021, %v5312
        %v5691 = vmul.f32 %v5024, %v5312
        %v5692 = vmul.f32 %v5029, %v5312
        %v5693 = vmul.f32 %v5032, %v5312
        %v5694 = vmul.f32 %v5037, %v5312
        %v5695 = vmul.f32 %v5040, %v5312
        %v5696 = vmul.f32 %v5045, %v5312
        %v5697 = vmul.f32 %v5048, %v5312
        %v5698 = vmul.f32 %v5053, %v5312
        %v5699 = vmul.f32 %v5056, %v5312
        %v5700 = vmul.f32 %v5061, %v5312
        %v5701 = vmul.f32 %v5064, %v5312
        %v5702 = vmul.f32 %v5069, %v5312
        %v5703 = vmul.f32 %v5072, %v5312
        %v5704 = vmul.f32 %v5077, %v5312
        %v5705 = vmul.f32 %v5080, %v5312
        %v5706 = vmul.f32 %v5085, %v5312
        %v5707 = vmul.f32 %v5088, %v5312
        %v5708 = vmul.f32 %v5093, %v5312
        %v5709 = vmul.f32 %v5096, %v5312
        %v5710 = vmul.f32 %v5101, %v5312
        %v5711 = vmul.f32 %v5104, %v5312
        %v5712 = vmul.f32 %v5109, %v5312
        %v5713 = vmul.f32 %v5112, %v5312
        %v5714 = vmul.f32 %v5117, %v5312
        %v5715 = vmul.f32 %v5120, %v5312
        %v5716 = vmul.f32 %v5125, %v5312
        %v5717 = vmul.f32 %v5128, %v5312
        %v5718 = vmul.f32 %v5133, %v5312
        %v5719 = vmul.f32 %v5136, %v5312
        %v5720 = vmul.f32 %v5141, %v5312
        %v5721 = vmul.f32 %v5144, %v5312
        %v5722 = vmul.f32 %v5149, %v5312
        %v5723 = vmul.f32 %v5152, %v5312
        %v5724 = vmul.f32 %v5157, %v5312
        %v5725 = vmul.f32 %v5160, %v5312
        %v5726 = vmul.f32 %v5165, %v5312
        %v5727 = vmul.f32 %v5168, %v5312
        %v5728 = vmul.f32 %v5173, %v5312
        %v5729 = vmul.f32 %v5176, %v5312
        %v5730 = vmul.f32 %v5181, %v5312
        %v5731 = vmul.f32 %v5184, %v5312
        %v5732 = vmul.f32 %v5189, %v5312
        %v5733 = vmul.f32 %v5192, %v5312
        %v5734 = vmul.f32 %v5197, %v5312
        %v5735 = vmul.f32 %v5200, %v5312
        %v5736 = vmul.f32 %v5205, %v5312
        %v5737 = vmul.f32 %v5208, %v5312
        %v5738 = vmul.f32 %v5213, %v5312
        %v5739 = vmul.f32 %v5216, %v5312
        %v5740 = vmul.f32 %v5221, %v5312
        %v5741 = vmul.f32 %v5224, %v5312
        %v5742 = vmul.f32 %v5229, %v5312
        %v5743 = vmul.f32 %v5232, %v5312
        %v5744 = vmul.f32 %v5237, %v5312
        %v5745 = vmul.f32 %v5240, %v5312
        %v5746 = vmul.f32 %v5245, %v5312
        %v5747 = vmul.f32 %v5248, %v5312
        %v5748 = vmul.f32 %v5253, %v5312
        %v5749 = vmul.f32 %v5256, %v5312
        %v5750 = vmul.f32 %v5261, %v5312
        %v5751 = vmul.f32 %v5264, %v5312
        %v5752 = vmul.f32 %v5269, %v5312
        %v5753 = vmul.f32 %v5272, %v5312
        %v5754 = vmul.f32 %v5277, %v5312
        %v5755 = vmul.f32 %v5280, %v5312
        %v5756 = vmul.f32 %v5285, %v5312
        %v5757 = vmul.f32 %v5288, %v5312
        %v5758 = vmul.f32 %v5293, %v5312
        %v5759 = vmul.f32 %v5296, %v5312
        %v5760 = vmul.f32 %v5301, %v5312
        %v5761 = vmul.f32 %v5304, %v5312
        %v5762 = vld [vmem:[%s259] sm:$0x1]
        %v5764 = vlaneseq
        %v5765 = vshrl.u32 %v5764, 7
        %v5766 = vsub.s32 0, %v5765
        %v5767 = vrot.slane %v5762, %v5766
        %v5769 = vadd.f32 %v5314, %v5767
        %v5770 = vadd.f32 %v5315, %v5767
        %v5771 = vadd.f32 %v5316, %v5767
        %v5772 = vadd.f32 %v5317, %v5767
        %v5773 = vadd.f32 %v5318, %v5767
        %v5774 = vadd.f32 %v5319, %v5767
        %v5775 = vadd.f32 %v5320, %v5767
        %v5776 = vadd.f32 %v5321, %v5767
        %v5777 = vadd.f32 %v5322, %v5767
        %v5778 = vadd.f32 %v5323, %v5767
        %v5779 = vadd.f32 %v5324, %v5767
        %v5780 = vadd.f32 %v5325, %v5767
        %v5781 = vadd.f32 %v5326, %v5767
        %v5782 = vadd.f32 %v5327, %v5767
        %v5783 = vadd.f32 %v5328, %v5767
        %v5784 = vadd.f32 %v5329, %v5767
        %v5785 = vadd.f32 %v5330, %v5767
        %v5786 = vadd.f32 %v5331, %v5767
        %v5787 = vadd.f32 %v5332, %v5767
        %v5788 = vadd.f32 %v5333, %v5767
        %v5789 = vadd.f32 %v5334, %v5767
        %v5790 = vadd.f32 %v5335, %v5767
        %v5791 = vadd.f32 %v5336, %v5767
        %v5792 = vadd.f32 %v5337, %v5767
        %v5793 = vadd.f32 %v5338, %v5767
        %v5794 = vadd.f32 %v5339, %v5767
        %v5795 = vadd.f32 %v5340, %v5767
        %v5796 = vadd.f32 %v5341, %v5767
        %v5797 = vadd.f32 %v5342, %v5767
        %v5798 = vadd.f32 %v5343, %v5767
        %v5799 = vadd.f32 %v5344, %v5767
        %v5800 = vadd.f32 %v5345, %v5767
        %v5801 = vadd.f32 %v5346, %v5767
        %v5802 = vadd.f32 %v5347, %v5767
        %v5803 = vadd.f32 %v5348, %v5767
        %v5804 = vadd.f32 %v5349, %v5767
        %v5805 = vadd.f32 %v5350, %v5767
        %v5806 = vadd.f32 %v5351, %v5767
        %v5807 = vadd.f32 %v5352, %v5767
        %v5808 = vadd.f32 %v5353, %v5767
        %v5809 = vadd.f32 %v5354, %v5767
        %v5810 = vadd.f32 %v5355, %v5767
        %v5811 = vadd.f32 %v5356, %v5767
        %v5812 = vadd.f32 %v5357, %v5767
        %v5813 = vadd.f32 %v5358, %v5767
        %v5814 = vadd.f32 %v5359, %v5767
        %v5815 = vadd.f32 %v5360, %v5767
        %v5816 = vadd.f32 %v5361, %v5767
        %v5817 = vadd.f32 %v5362, %v5767
        %v5818 = vadd.f32 %v5363, %v5767
        %v5819 = vadd.f32 %v5364, %v5767
        %v5820 = vadd.f32 %v5365, %v5767
        %v5821 = vadd.f32 %v5366, %v5767
        %v5822 = vadd.f32 %v5367, %v5767
        %v5823 = vadd.f32 %v5368, %v5767
        %v5824 = vadd.f32 %v5369, %v5767
        %v5825 = vadd.f32 %v5370, %v5767
        %v5826 = vadd.f32 %v5371, %v5767
        %v5827 = vadd.f32 %v5372, %v5767
        %v5828 = vadd.f32 %v5373, %v5767
        %v5829 = vadd.f32 %v5374, %v5767
        %v5830 = vadd.f32 %v5375, %v5767
        %v5831 = vadd.f32 %v5376, %v5767
        %v5832 = vadd.f32 %v5377, %v5767
        %v5833 = vadd.f32 %v5378, %v5767
        %v5834 = vadd.f32 %v5379, %v5767
        %v5835 = vadd.f32 %v5380, %v5767
        %v5836 = vadd.f32 %v5381, %v5767
        %v5837 = vadd.f32 %v5382, %v5767
        %v5838 = vadd.f32 %v5383, %v5767
        %v5839 = vadd.f32 %v5384, %v5767
        %v5840 = vadd.f32 %v5385, %v5767
        %v5841 = vadd.f32 %v5386, %v5767
        %v5842 = vadd.f32 %v5387, %v5767
        %v5843 = vadd.f32 %v5388, %v5767
        %v5844 = vadd.f32 %v5389, %v5767
        %v5845 = vadd.f32 %v5390, %v5767
        %v5846 = vadd.f32 %v5391, %v5767
        %v5847 = vadd.f32 %v5392, %v5767
        %v5848 = vadd.f32 %v5393, %v5767
        %v5849 = vadd.f32 %v5394, %v5767
        %v5850 = vadd.f32 %v5395, %v5767
        %v5851 = vadd.f32 %v5396, %v5767
        %v5852 = vadd.f32 %v5397, %v5767
        %v5853 = vadd.f32 %v5398, %v5767
        %v5854 = vadd.f32 %v5399, %v5767
        %v5855 = vadd.f32 %v5400, %v5767
        %v5856 = vadd.f32 %v5401, %v5767
        %v5857 = vadd.f32 %v5402, %v5767
        %v5858 = vadd.f32 %v5403, %v5767
        %v5859 = vadd.f32 %v5404, %v5767
        %v5860 = vadd.f32 %v5405, %v5767
        %v5861 = vadd.f32 %v5406, %v5767
        %v5862 = vadd.f32 %v5407, %v5767
        %v5863 = vadd.f32 %v5408, %v5767
        %v5864 = vadd.f32 %v5409, %v5767
        %v5865 = vadd.f32 %v5410, %v5767
        %v5866 = vadd.f32 %v5411, %v5767
        %v5867 = vadd.f32 %v5412, %v5767
        %v5868 = vadd.f32 %v5413, %v5767
        %v5869 = vadd.f32 %v5414, %v5767
        %v5870 = vadd.f32 %v5415, %v5767
        %v5871 = vadd.f32 %v5416, %v5767
        %v5872 = vadd.f32 %v5417, %v5767
        %v5873 = vadd.f32 %v5418, %v5767
        %v5874 = vadd.f32 %v5419, %v5767
        %v5875 = vadd.f32 %v5420, %v5767
        %v5876 = vadd.f32 %v5421, %v5767
        %v5877 = vadd.f32 %v5422, %v5767
        %v5878 = vadd.f32 %v5423, %v5767
        %v5879 = vadd.f32 %v5424, %v5767
        %v5880 = vadd.f32 %v5425, %v5767
        %v5881 = vadd.f32 %v5426, %v5767
        %v5882 = vadd.f32 %v5427, %v5767
        %v5883 = vadd.f32 %v5428, %v5767
        %v5884 = vadd.f32 %v5429, %v5767
        %v5885 = vadd.f32 %v5430, %v5767
        %v5886 = vadd.f32 %v5431, %v5767
        %v5887 = vadd.f32 %v5432, %v5767
        %v5888 = vadd.f32 %v5433, %v5767
        %v5889 = vadd.f32 %v5434, %v5767
        %v5890 = vadd.f32 %v5435, %v5767
        %v5891 = vadd.f32 %v5436, %v5767
        %v5892 = vadd.f32 %v5437, %v5767
        %v5893 = vadd.f32 %v5438, %v5767
        %v5894 = vadd.f32 %v5439, %v5767
        %v5895 = vadd.f32 %v5440, %v5767
        %v5896 = vadd.f32 %v5441, %v5767
        %v5897 = vadd.f32 %v5442, %v5767
        %v5898 = vadd.f32 %v5443, %v5767
        %v5899 = vadd.f32 %v5444, %v5767
        %v5900 = vadd.f32 %v5445, %v5767
        %v5901 = vadd.f32 %v5446, %v5767
        %v5902 = vadd.f32 %v5447, %v5767
        %v5903 = vadd.f32 %v5448, %v5767
        %v5904 = vadd.f32 %v5449, %v5767
        %v5905 = vadd.f32 %v5450, %v5767
        %v5906 = vadd.f32 %v5451, %v5767
        %v5907 = vadd.f32 %v5452, %v5767
        %v5908 = vadd.f32 %v5453, %v5767
        %v5909 = vadd.f32 %v5454, %v5767
        %v5910 = vadd.f32 %v5455, %v5767
        %v5911 = vadd.f32 %v5456, %v5767
        %v5912 = vadd.f32 %v5457, %v5767
        %v5913 = vadd.f32 %v5458, %v5767
        %v5914 = vadd.f32 %v5459, %v5767
        %v5915 = vadd.f32 %v5460, %v5767
        %v5916 = vadd.f32 %v5461, %v5767
        %v5917 = vadd.f32 %v5462, %v5767
        %v5918 = vadd.f32 %v5463, %v5767
        %v5919 = vadd.f32 %v5464, %v5767
        %v5920 = vadd.f32 %v5465, %v5767
        %v5921 = vadd.f32 %v5466, %v5767
        %v5922 = vadd.f32 %v5467, %v5767
        %v5923 = vadd.f32 %v5468, %v5767
        %v5924 = vadd.f32 %v5469, %v5767
        %v5925 = vadd.f32 %v5470, %v5767
        %v5926 = vadd.f32 %v5471, %v5767
        %v5927 = vadd.f32 %v5472, %v5767
        %v5928 = vadd.f32 %v5473, %v5767
        %v5929 = vadd.f32 %v5474, %v5767
        %v5930 = vadd.f32 %v5475, %v5767
        %v5931 = vadd.f32 %v5476, %v5767
        %v5932 = vadd.f32 %v5477, %v5767
        %v5933 = vadd.f32 %v5478, %v5767
        %v5934 = vadd.f32 %v5479, %v5767
        %v5935 = vadd.f32 %v5480, %v5767
        %v5936 = vadd.f32 %v5481, %v5767
        %v5937 = vadd.f32 %v5482, %v5767
        %v5938 = vadd.f32 %v5483, %v5767
        %v5939 = vadd.f32 %v5484, %v5767
        %v5940 = vadd.f32 %v5485, %v5767
        %v5941 = vadd.f32 %v5486, %v5767
        %v5942 = vadd.f32 %v5487, %v5767
        %v5943 = vadd.f32 %v5488, %v5767
        %v5944 = vadd.f32 %v5489, %v5767
        %v5945 = vadd.f32 %v5490, %v5767
        %v5946 = vadd.f32 %v5491, %v5767
        %v5947 = vadd.f32 %v5492, %v5767
        %v5948 = vadd.f32 %v5493, %v5767
        %v5949 = vadd.f32 %v5494, %v5767
        %v5950 = vadd.f32 %v5495, %v5767
        %v5951 = vadd.f32 %v5496, %v5767
        %v5952 = vadd.f32 %v5497, %v5767
        %v5953 = vadd.f32 %v5498, %v5767
        %v5954 = vadd.f32 %v5499, %v5767
        %v5955 = vadd.f32 %v5500, %v5767
        %v5956 = vadd.f32 %v5501, %v5767
        %v5957 = vadd.f32 %v5502, %v5767
        %v5958 = vadd.f32 %v5503, %v5767
        %v5959 = vadd.f32 %v5504, %v5767
        %v5960 = vadd.f32 %v5505, %v5767
        %v5961 = vadd.f32 %v5506, %v5767
        %v5962 = vadd.f32 %v5507, %v5767
        %v5963 = vadd.f32 %v5508, %v5767
        %v5964 = vadd.f32 %v5509, %v5767
        %v5965 = vadd.f32 %v5510, %v5767
        %v5966 = vadd.f32 %v5511, %v5767
        %v5967 = vadd.f32 %v5512, %v5767
        %v5968 = vadd.f32 %v5513, %v5767
        %v5969 = vadd.f32 %v5514, %v5767
        %v5970 = vadd.f32 %v5515, %v5767
        %v5971 = vadd.f32 %v5516, %v5767
        %v5972 = vadd.f32 %v5517, %v5767
        %v5973 = vadd.f32 %v5518, %v5767
        %v5974 = vadd.f32 %v5519, %v5767
        %v5975 = vadd.f32 %v5520, %v5767
        %v5976 = vadd.f32 %v5521, %v5767
        %v5977 = vadd.f32 %v5522, %v5767
        %v5978 = vadd.f32 %v5523, %v5767
        %v5979 = vadd.f32 %v5524, %v5767
        %v5980 = vadd.f32 %v5525, %v5767
        %v5981 = vadd.f32 %v5526, %v5767
        %v5982 = vadd.f32 %v5527, %v5767
        %v5983 = vadd.f32 %v5528, %v5767
        %v5984 = vadd.f32 %v5529, %v5767
        %v5985 = vadd.f32 %v5530, %v5767
        %v5986 = vadd.f32 %v5531, %v5767
        %v5987 = vadd.f32 %v5532, %v5767
        %v5988 = vadd.f32 %v5533, %v5767
        %v5989 = vadd.f32 %v5534, %v5767
        %v5990 = vadd.f32 %v5535, %v5767
        %v5991 = vadd.f32 %v5536, %v5767
        %v5992 = vadd.f32 %v5537, %v5767
        %v5993 = vadd.f32 %v5538, %v5767
        %v5994 = vadd.f32 %v5539, %v5767
        %v5995 = vadd.f32 %v5540, %v5767
        %v5996 = vadd.f32 %v5541, %v5767
        %v5997 = vadd.f32 %v5542, %v5767
        %v5998 = vadd.f32 %v5543, %v5767
        %v5999 = vadd.f32 %v5544, %v5767
        %v6000 = vadd.f32 %v5545, %v5767
        %v6001 = vadd.f32 %v5546, %v5767
        %v6002 = vadd.f32 %v5547, %v5767
        %v6003 = vadd.f32 %v5548, %v5767
        %v6004 = vadd.f32 %v5549, %v5767
        %v6005 = vadd.f32 %v5550, %v5767
        %v6006 = vadd.f32 %v5551, %v5767
        %v6007 = vadd.f32 %v5552, %v5767
        %v6008 = vadd.f32 %v5553, %v5767
        %v6009 = vadd.f32 %v5554, %v5767
        %v6010 = vadd.f32 %v5555, %v5767
        %v6011 = vadd.f32 %v5556, %v5767
        %v6012 = vadd.f32 %v5557, %v5767
        %v6013 = vadd.f32 %v5558, %v5767
        %v6014 = vadd.f32 %v5559, %v5767
        %v6015 = vadd.f32 %v5560, %v5767
        %v6016 = vadd.f32 %v5561, %v5767
        %v6017 = vadd.f32 %v5562, %v5767
        %v6018 = vadd.f32 %v5563, %v5767
        %v6019 = vadd.f32 %v5564, %v5767
        %v6020 = vadd.f32 %v5565, %v5767
        %v6021 = vadd.f32 %v5566, %v5767
        %v6022 = vadd.f32 %v5567, %v5767
        %v6023 = vadd.f32 %v5568, %v5767
        %v6024 = vadd.f32 %v5569, %v5767
        %v6025 = vadd.f32 %v5570, %v5767
        %v6026 = vadd.f32 %v5571, %v5767
        %v6027 = vadd.f32 %v5572, %v5767
        %v6028 = vadd.f32 %v5573, %v5767
        %v6029 = vadd.f32 %v5574, %v5767
        %v6030 = vadd.f32 %v5575, %v5767
        %v6031 = vadd.f32 %v5576, %v5767
        %v6032 = vadd.f32 %v5577, %v5767
        %v6033 = vadd.f32 %v5578, %v5767
        %v6034 = vadd.f32 %v5579, %v5767
        %v6035 = vadd.f32 %v5580, %v5767
        %v6036 = vadd.f32 %v5581, %v5767
        %v6037 = vadd.f32 %v5582, %v5767
        %v6038 = vadd.f32 %v5583, %v5767
        %v6039 = vadd.f32 %v5584, %v5767
        %v6040 = vadd.f32 %v5585, %v5767
        %v6041 = vadd.f32 %v5586, %v5767
        %v6042 = vadd.f32 %v5587, %v5767
        %v6043 = vadd.f32 %v5588, %v5767
        %v6044 = vadd.f32 %v5589, %v5767
        %v6045 = vadd.f32 %v5590, %v5767
        %v6046 = vadd.f32 %v5591, %v5767
        %v6047 = vadd.f32 %v5592, %v5767
        %v6048 = vadd.f32 %v5593, %v5767
        %v6049 = vadd.f32 %v5594, %v5767
        %v6050 = vadd.f32 %v5595, %v5767
        %v6051 = vadd.f32 %v5596, %v5767
        %v6052 = vadd.f32 %v5597, %v5767
        %v6053 = vadd.f32 %v5598, %v5767
        %v6054 = vadd.f32 %v5599, %v5767
        %v6055 = vadd.f32 %v5600, %v5767
        %v6056 = vadd.f32 %v5601, %v5767
        %v6057 = vadd.f32 %v5602, %v5767
        %v6058 = vadd.f32 %v5603, %v5767
        %v6059 = vadd.f32 %v5604, %v5767
        %v6060 = vadd.f32 %v5605, %v5767
        %v6061 = vadd.f32 %v5606, %v5767
        %v6062 = vadd.f32 %v5607, %v5767
        %v6063 = vadd.f32 %v5608, %v5767
        %v6064 = vadd.f32 %v5609, %v5767
        %v6065 = vadd.f32 %v5610, %v5767
        %v6066 = vadd.f32 %v5611, %v5767
        %v6067 = vadd.f32 %v5612, %v5767
        %v6068 = vadd.f32 %v5613, %v5767
        %v6069 = vadd.f32 %v5614, %v5767
        %v6070 = vadd.f32 %v5615, %v5767
        %v6071 = vadd.f32 %v5616, %v5767
        %v6072 = vadd.f32 %v5617, %v5767
        %v6073 = vadd.f32 %v5618, %v5767
        %v6074 = vadd.f32 %v5619, %v5767
        %v6075 = vadd.f32 %v5620, %v5767
        %v6076 = vadd.f32 %v5621, %v5767
        %v6077 = vadd.f32 %v5622, %v5767
        %v6078 = vadd.f32 %v5623, %v5767
        %v6079 = vadd.f32 %v5624, %v5767
        %v6080 = vadd.f32 %v5625, %v5767
        %v6081 = vadd.f32 %v5626, %v5767
        %v6082 = vadd.f32 %v5627, %v5767
        %v6083 = vadd.f32 %v5628, %v5767
        %v6084 = vadd.f32 %v5629, %v5767
        %v6085 = vadd.f32 %v5630, %v5767
        %v6086 = vadd.f32 %v5631, %v5767
        %v6087 = vadd.f32 %v5632, %v5767
        %v6088 = vadd.f32 %v5633, %v5767
        %v6089 = vadd.f32 %v5634, %v5767
        %v6090 = vadd.f32 %v5635, %v5767
        %v6091 = vadd.f32 %v5636, %v5767
        %v6092 = vadd.f32 %v5637, %v5767
        %v6093 = vadd.f32 %v5638, %v5767
        %v6094 = vadd.f32 %v5639, %v5767
        %v6095 = vadd.f32 %v5640, %v5767
        %v6096 = vadd.f32 %v5641, %v5767
        %v6097 = vadd.f32 %v5642, %v5767
        %v6098 = vadd.f32 %v5643, %v5767
        %v6099 = vadd.f32 %v5644, %v5767
        %v6100 = vadd.f32 %v5645, %v5767
        %v6101 = vadd.f32 %v5646, %v5767
        %v6102 = vadd.f32 %v5647, %v5767
        %v6103 = vadd.f32 %v5648, %v5767
        %v6104 = vadd.f32 %v5649, %v5767
        %v6105 = vadd.f32 %v5650, %v5767
        %v6106 = vadd.f32 %v5651, %v5767
        %v6107 = vadd.f32 %v5652, %v5767
        %v6108 = vadd.f32 %v5653, %v5767
        %v6109 = vadd.f32 %v5654, %v5767
        %v6110 = vadd.f32 %v5655, %v5767
        %v6111 = vadd.f32 %v5656, %v5767
        %v6112 = vadd.f32 %v5657, %v5767
        %v6113 = vadd.f32 %v5658, %v5767
        %v6114 = vadd.f32 %v5659, %v5767
        %v6115 = vadd.f32 %v5660, %v5767
        %v6116 = vadd.f32 %v5661, %v5767
        %v6117 = vadd.f32 %v5662, %v5767
        %v6118 = vadd.f32 %v5663, %v5767
        %v6119 = vadd.f32 %v5664, %v5767
        %v6120 = vadd.f32 %v5665, %v5767
        %v6121 = vadd.f32 %v5666, %v5767
        %v6122 = vadd.f32 %v5667, %v5767
        %v6123 = vadd.f32 %v5668, %v5767
        %v6124 = vadd.f32 %v5669, %v5767
        %v6125 = vadd.f32 %v5670, %v5767
        %v6126 = vadd.f32 %v5671, %v5767
        %v6127 = vadd.f32 %v5672, %v5767
        %v6128 = vadd.f32 %v5673, %v5767
        %v6129 = vadd.f32 %v5674, %v5767
        %v6130 = vadd.f32 %v5675, %v5767
        %v6131 = vadd.f32 %v5676, %v5767
        %v6132 = vadd.f32 %v5677, %v5767
        %v6133 = vadd.f32 %v5678, %v5767
        %v6134 = vadd.f32 %v5679, %v5767
        %v6135 = vadd.f32 %v5680, %v5767
        %v6136 = vadd.f32 %v5681, %v5767
        %v6137 = vadd.f32 %v5682, %v5767
        %v6138 = vadd.f32 %v5683, %v5767
        %v6139 = vadd.f32 %v5684, %v5767
        %v6140 = vadd.f32 %v5685, %v5767
        %v6141 = vadd.f32 %v5686, %v5767
        %v6142 = vadd.f32 %v5687, %v5767
        %v6143 = vadd.f32 %v5688, %v5767
        %v6144 = vadd.f32 %v5689, %v5767
        %v6145 = vadd.f32 %v5690, %v5767
        %v6146 = vadd.f32 %v5691, %v5767
        %v6147 = vadd.f32 %v5692, %v5767
        %v6148 = vadd.f32 %v5693, %v5767
        %v6149 = vadd.f32 %v5694, %v5767
        %v6150 = vadd.f32 %v5695, %v5767
        %v6151 = vadd.f32 %v5696, %v5767
        %v6152 = vadd.f32 %v5697, %v5767
        %v6153 = vadd.f32 %v5698, %v5767
        %v6154 = vadd.f32 %v5699, %v5767
        %v6155 = vadd.f32 %v5700, %v5767
        %v6156 = vadd.f32 %v5701, %v5767
        %v6157 = vadd.f32 %v5702, %v5767
        %v6158 = vadd.f32 %v5703, %v5767
        %v6159 = vadd.f32 %v5704, %v5767
        %v6160 = vadd.f32 %v5705, %v5767
        %v6161 = vadd.f32 %v5706, %v5767
        %v6162 = vadd.f32 %v5707, %v5767
        %v6163 = vadd.f32 %v5708, %v5767
        %v6164 = vadd.f32 %v5709, %v5767
        %v6165 = vadd.f32 %v5710, %v5767
        %v6166 = vadd.f32 %v5711, %v5767
        %v6167 = vadd.f32 %v5712, %v5767
        %v6168 = vadd.f32 %v5713, %v5767
        %v6169 = vadd.f32 %v5714, %v5767
        %v6170 = vadd.f32 %v5715, %v5767
        %v6171 = vadd.f32 %v5716, %v5767
        %v6172 = vadd.f32 %v5717, %v5767
        %v6173 = vadd.f32 %v5718, %v5767
        %v6174 = vadd.f32 %v5719, %v5767
        %v6175 = vadd.f32 %v5720, %v5767
        %v6176 = vadd.f32 %v5721, %v5767
        %v6177 = vadd.f32 %v5722, %v5767
        %v6178 = vadd.f32 %v5723, %v5767
        %v6179 = vadd.f32 %v5724, %v5767
        %v6180 = vadd.f32 %v5725, %v5767
        %v6181 = vadd.f32 %v5726, %v5767
        %v6182 = vadd.f32 %v5727, %v5767
        %v6183 = vadd.f32 %v5728, %v5767
        %v6184 = vadd.f32 %v5729, %v5767
        %v6185 = vadd.f32 %v5730, %v5767
        %v6186 = vadd.f32 %v5731, %v5767
        %v6187 = vadd.f32 %v5732, %v5767
        %v6188 = vadd.f32 %v5733, %v5767
        %v6189 = vadd.f32 %v5734, %v5767
        %v6190 = vadd.f32 %v5735, %v5767
        %v6191 = vadd.f32 %v5736, %v5767
        %v6192 = vadd.f32 %v5737, %v5767
        %v6193 = vadd.f32 %v5738, %v5767
        %v6194 = vadd.f32 %v5739, %v5767
        %v6195 = vadd.f32 %v5740, %v5767
        %v6196 = vadd.f32 %v5741, %v5767
        %v6197 = vadd.f32 %v5742, %v5767
        %v6198 = vadd.f32 %v5743, %v5767
        %v6199 = vadd.f32 %v5744, %v5767
        %v6200 = vadd.f32 %v5745, %v5767
        %v6201 = vadd.f32 %v5746, %v5767
        %v6202 = vadd.f32 %v5747, %v5767
        %v6203 = vadd.f32 %v5748, %v5767
        %v6204 = vadd.f32 %v5749, %v5767
        %v6205 = vadd.f32 %v5750, %v5767
        %v6206 = vadd.f32 %v5751, %v5767
        %v6207 = vadd.f32 %v5752, %v5767
        %v6208 = vadd.f32 %v5753, %v5767
        %v6209 = vadd.f32 %v5754, %v5767
        %v6210 = vadd.f32 %v5755, %v5767
        %v6211 = vadd.f32 %v5756, %v5767
        %v6212 = vadd.f32 %v5757, %v5767
        %v6213 = vadd.f32 %v5758, %v5767
        %v6214 = vadd.f32 %v5759, %v5767
        %v6215 = vadd.f32 %v5760, %v5767
        %v6216 = vadd.f32 %v5761, %v5767
        %v6217 = vmax.f32 %v5769, 0.0
        %v6218 = vmax.f32 %v5770, 0.0
        %v6219 = vmax.f32 %v5771, 0.0
        %v6220 = vmax.f32 %v5772, 0.0
        %v6221 = vmax.f32 %v5773, 0.0
        %v6222 = vmax.f32 %v5774, 0.0
        %v6223 = vmax.f32 %v5775, 0.0
        %v6224 = vmax.f32 %v5776, 0.0
        %v6225 = vmax.f32 %v5777, 0.0
        %v6226 = vmax.f32 %v5778, 0.0
        %v6227 = vmax.f32 %v5779, 0.0
        %v6228 = vmax.f32 %v5780, 0.0
        %v6229 = vmax.f32 %v5781, 0.0
        %v6230 = vmax.f32 %v5782, 0.0
        %v6231 = vmax.f32 %v5783, 0.0
        %v6232 = vmax.f32 %v5784, 0.0
        %v6233 = vmax.f32 %v5785, 0.0
        %v6234 = vmax.f32 %v5786, 0.0
        %v6235 = vmax.f32 %v5787, 0.0
        %v6236 = vmax.f32 %v5788, 0.0
        %v6237 = vmax.f32 %v5789, 0.0
        %v6238 = vmax.f32 %v5790, 0.0
        %v6239 = vmax.f32 %v5791, 0.0
        %v6240 = vmax.f32 %v5792, 0.0
        %v6241 = vmax.f32 %v5793, 0.0
        %v6242 = vmax.f32 %v5794, 0.0
        %v6243 = vmax.f32 %v5795, 0.0
        %v6244 = vmax.f32 %v5796, 0.0
        %v6245 = vmax.f32 %v5797, 0.0
        %v6246 = vmax.f32 %v5798, 0.0
        %v6247 = vmax.f32 %v5799, 0.0
        %v6248 = vmax.f32 %v5800, 0.0
        %v6249 = vmax.f32 %v5801, 0.0
        %v6250 = vmax.f32 %v5802, 0.0
        %v6251 = vmax.f32 %v5803, 0.0
        %v6252 = vmax.f32 %v5804, 0.0
        %v6253 = vmax.f32 %v5805, 0.0
        %v6254 = vmax.f32 %v5806, 0.0
        %v6255 = vmax.f32 %v5807, 0.0
        %v6256 = vmax.f32 %v5808, 0.0
        %v6257 = vmax.f32 %v5809, 0.0
        %v6258 = vmax.f32 %v5810, 0.0
        %v6259 = vmax.f32 %v5811, 0.0
        %v6260 = vmax.f32 %v5812, 0.0
        %v6261 = vmax.f32 %v5813, 0.0
        %v6262 = vmax.f32 %v5814, 0.0
        %v6263 = vmax.f32 %v5815, 0.0
        %v6264 = vmax.f32 %v5816, 0.0
        %v6265 = vmax.f32 %v5817, 0.0
        %v6266 = vmax.f32 %v5818, 0.0
        %v6267 = vmax.f32 %v5819, 0.0
        %v6268 = vmax.f32 %v5820, 0.0
        %v6269 = vmax.f32 %v5821, 0.0
        %v6270 = vmax.f32 %v5822, 0.0
        %v6271 = vmax.f32 %v5823, 0.0
        %v6272 = vmax.f32 %v5824, 0.0
        %v6273 = vmax.f32 %v5825, 0.0
        %v6274 = vmax.f32 %v5826, 0.0
        %v6275 = vmax.f32 %v5827, 0.0
        %v6276 = vmax.f32 %v5828, 0.0
        %v6277 = vmax.f32 %v5829, 0.0
        %v6278 = vmax.f32 %v5830, 0.0
        %v6279 = vmax.f32 %v5831, 0.0
        %v6280 = vmax.f32 %v5832, 0.0
        %v6281 = vmax.f32 %v5833, 0.0
        %v6282 = vmax.f32 %v5834, 0.0
        %v6283 = vmax.f32 %v5835, 0.0
        %v6284 = vmax.f32 %v5836, 0.0
        %v6285 = vmax.f32 %v5837, 0.0
        %v6286 = vmax.f32 %v5838, 0.0
        %v6287 = vmax.f32 %v5839, 0.0
        %v6288 = vmax.f32 %v5840, 0.0
        %v6289 = vmax.f32 %v5841, 0.0
        %v6290 = vmax.f32 %v5842, 0.0
        %v6291 = vmax.f32 %v5843, 0.0
        %v6292 = vmax.f32 %v5844, 0.0
        %v6293 = vmax.f32 %v5845, 0.0
        %v6294 = vmax.f32 %v5846, 0.0
        %v6295 = vmax.f32 %v5847, 0.0
        %v6296 = vmax.f32 %v5848, 0.0
        %v6297 = vmax.f32 %v5849, 0.0
        %v6298 = vmax.f32 %v5850, 0.0
        %v6299 = vmax.f32 %v5851, 0.0
        %v6300 = vmax.f32 %v5852, 0.0
        %v6301 = vmax.f32 %v5853, 0.0
        %v6302 = vmax.f32 %v5854, 0.0
        %v6303 = vmax.f32 %v5855, 0.0
        %v6304 = vmax.f32 %v5856, 0.0
        %v6305 = vmax.f32 %v5857, 0.0
        %v6306 = vmax.f32 %v5858, 0.0
        %v6307 = vmax.f32 %v5859, 0.0
        %v6308 = vmax.f32 %v5860, 0.0
        %v6309 = vmax.f32 %v5861, 0.0
        %v6310 = vmax.f32 %v5862, 0.0
        %v6311 = vmax.f32 %v5863, 0.0
        %v6312 = vmax.f32 %v5864, 0.0
        %v6313 = vmax.f32 %v5865, 0.0
        %v6314 = vmax.f32 %v5866, 0.0
        %v6315 = vmax.f32 %v5867, 0.0
        %v6316 = vmax.f32 %v5868, 0.0
        %v6317 = vmax.f32 %v5869, 0.0
        %v6318 = vmax.f32 %v5870, 0.0
        %v6319 = vmax.f32 %v5871, 0.0
        %v6320 = vmax.f32 %v5872, 0.0
        %v6321 = vmax.f32 %v5873, 0.0
        %v6322 = vmax.f32 %v5874, 0.0
        %v6323 = vmax.f32 %v5875, 0.0
        %v6324 = vmax.f32 %v5876, 0.0
        %v6325 = vmax.f32 %v5877, 0.0
        %v6326 = vmax.f32 %v5878, 0.0
        %v6327 = vmax.f32 %v5879, 0.0
        %v6328 = vmax.f32 %v5880, 0.0
        %v6329 = vmax.f32 %v5881, 0.0
        %v6330 = vmax.f32 %v5882, 0.0
        %v6331 = vmax.f32 %v5883, 0.0
        %v6332 = vmax.f32 %v5884, 0.0
        %v6333 = vmax.f32 %v5885, 0.0
        %v6334 = vmax.f32 %v5886, 0.0
        %v6335 = vmax.f32 %v5887, 0.0
        %v6336 = vmax.f32 %v5888, 0.0
        %v6337 = vmax.f32 %v5889, 0.0
        %v6338 = vmax.f32 %v5890, 0.0
        %v6339 = vmax.f32 %v5891, 0.0
        %v6340 = vmax.f32 %v5892, 0.0
        %v6341 = vmax.f32 %v5893, 0.0
        %v6342 = vmax.f32 %v5894, 0.0
        %v6343 = vmax.f32 %v5895, 0.0
        %v6344 = vmax.f32 %v5896, 0.0
        %v6345 = vmax.f32 %v5897, 0.0
        %v6346 = vmax.f32 %v5898, 0.0
        %v6347 = vmax.f32 %v5899, 0.0
        %v6348 = vmax.f32 %v5900, 0.0
        %v6349 = vmax.f32 %v5901, 0.0
        %v6350 = vmax.f32 %v5902, 0.0
        %v6351 = vmax.f32 %v5903, 0.0
        %v6352 = vmax.f32 %v5904, 0.0
        %v6353 = vmax.f32 %v5905, 0.0
        %v6354 = vmax.f32 %v5906, 0.0
        %v6355 = vmax.f32 %v5907, 0.0
        %v6356 = vmax.f32 %v5908, 0.0
        %v6357 = vmax.f32 %v5909, 0.0
        %v6358 = vmax.f32 %v5910, 0.0
        %v6359 = vmax.f32 %v5911, 0.0
        %v6360 = vmax.f32 %v5912, 0.0
        %v6361 = vmax.f32 %v5913, 0.0
        %v6362 = vmax.f32 %v5914, 0.0
        %v6363 = vmax.f32 %v5915, 0.0
        %v6364 = vmax.f32 %v5916, 0.0
        %v6365 = vmax.f32 %v5917, 0.0
        %v6366 = vmax.f32 %v5918, 0.0
        %v6367 = vmax.f32 %v5919, 0.0
        %v6368 = vmax.f32 %v5920, 0.0
        %v6369 = vmax.f32 %v5921, 0.0
        %v6370 = vmax.f32 %v5922, 0.0
        %v6371 = vmax.f32 %v5923, 0.0
        %v6372 = vmax.f32 %v5924, 0.0
        %v6373 = vmax.f32 %v5925, 0.0
        %v6374 = vmax.f32 %v5926, 0.0
        %v6375 = vmax.f32 %v5927, 0.0
        %v6376 = vmax.f32 %v5928, 0.0
        %v6377 = vmax.f32 %v5929, 0.0
        %v6378 = vmax.f32 %v5930, 0.0
        %v6379 = vmax.f32 %v5931, 0.0
        %v6380 = vmax.f32 %v5932, 0.0
        %v6381 = vmax.f32 %v5933, 0.0
        %v6382 = vmax.f32 %v5934, 0.0
        %v6383 = vmax.f32 %v5935, 0.0
        %v6384 = vmax.f32 %v5936, 0.0
        %v6385 = vmax.f32 %v5937, 0.0
        %v6386 = vmax.f32 %v5938, 0.0
        %v6387 = vmax.f32 %v5939, 0.0
        %v6388 = vmax.f32 %v5940, 0.0
        %v6389 = vmax.f32 %v5941, 0.0
        %v6390 = vmax.f32 %v5942, 0.0
        %v6391 = vmax.f32 %v5943, 0.0
        %v6392 = vmax.f32 %v5944, 0.0
        %v6393 = vmax.f32 %v5945, 0.0
        %v6394 = vmax.f32 %v5946, 0.0
        %v6395 = vmax.f32 %v5947, 0.0
        %v6396 = vmax.f32 %v5948, 0.0
        %v6397 = vmax.f32 %v5949, 0.0
        %v6398 = vmax.f32 %v5950, 0.0
        %v6399 = vmax.f32 %v5951, 0.0
        %v6400 = vmax.f32 %v5952, 0.0
        %v6401 = vmax.f32 %v5953, 0.0
        %v6402 = vmax.f32 %v5954, 0.0
        %v6403 = vmax.f32 %v5955, 0.0
        %v6404 = vmax.f32 %v5956, 0.0
        %v6405 = vmax.f32 %v5957, 0.0
        %v6406 = vmax.f32 %v5958, 0.0
        %v6407 = vmax.f32 %v5959, 0.0
        %v6408 = vmax.f32 %v5960, 0.0
        %v6409 = vmax.f32 %v5961, 0.0
        %v6410 = vmax.f32 %v5962, 0.0
        %v6411 = vmax.f32 %v5963, 0.0
        %v6412 = vmax.f32 %v5964, 0.0
        %v6413 = vmax.f32 %v5965, 0.0
        %v6414 = vmax.f32 %v5966, 0.0
        %v6415 = vmax.f32 %v5967, 0.0
        %v6416 = vmax.f32 %v5968, 0.0
        %v6417 = vmax.f32 %v5969, 0.0
        %v6418 = vmax.f32 %v5970, 0.0
        %v6419 = vmax.f32 %v5971, 0.0
        %v6420 = vmax.f32 %v5972, 0.0
        %v6421 = vmax.f32 %v5973, 0.0
        %v6422 = vmax.f32 %v5974, 0.0
        %v6423 = vmax.f32 %v5975, 0.0
        %v6424 = vmax.f32 %v5976, 0.0
        %v6425 = vmax.f32 %v5977, 0.0
        %v6426 = vmax.f32 %v5978, 0.0
        %v6427 = vmax.f32 %v5979, 0.0
        %v6428 = vmax.f32 %v5980, 0.0
        %v6429 = vmax.f32 %v5981, 0.0
        %v6430 = vmax.f32 %v5982, 0.0
        %v6431 = vmax.f32 %v5983, 0.0
        %v6432 = vmax.f32 %v5984, 0.0
        %v6433 = vmax.f32 %v5985, 0.0
        %v6434 = vmax.f32 %v5986, 0.0
        %v6435 = vmax.f32 %v5987, 0.0
        %v6436 = vmax.f32 %v5988, 0.0
        %v6437 = vmax.f32 %v5989, 0.0
        %v6438 = vmax.f32 %v5990, 0.0
        %v6439 = vmax.f32 %v5991, 0.0
        %v6440 = vmax.f32 %v5992, 0.0
        %v6441 = vmax.f32 %v5993, 0.0
        %v6442 = vmax.f32 %v5994, 0.0
        %v6443 = vmax.f32 %v5995, 0.0
        %v6444 = vmax.f32 %v5996, 0.0
        %v6445 = vmax.f32 %v5997, 0.0
        %v6446 = vmax.f32 %v5998, 0.0
        %v6447 = vmax.f32 %v5999, 0.0
        %v6448 = vmax.f32 %v6000, 0.0
        %v6449 = vmax.f32 %v6001, 0.0
        %v6450 = vmax.f32 %v6002, 0.0
        %v6451 = vmax.f32 %v6003, 0.0
        %v6452 = vmax.f32 %v6004, 0.0
        %v6453 = vmax.f32 %v6005, 0.0
        %v6454 = vmax.f32 %v6006, 0.0
        %v6455 = vmax.f32 %v6007, 0.0
        %v6456 = vmax.f32 %v6008, 0.0
        %v6457 = vmax.f32 %v6009, 0.0
        %v6458 = vmax.f32 %v6010, 0.0
        %v6459 = vmax.f32 %v6011, 0.0
        %v6460 = vmax.f32 %v6012, 0.0
        %v6461 = vmax.f32 %v6013, 0.0
        %v6462 = vmax.f32 %v6014, 0.0
        %v6463 = vmax.f32 %v6015, 0.0
        %v6464 = vmax.f32 %v6016, 0.0
        %v6465 = vmax.f32 %v6017, 0.0
        %v6466 = vmax.f32 %v6018, 0.0
        %v6467 = vmax.f32 %v6019, 0.0
        %v6468 = vmax.f32 %v6020, 0.0
        %v6469 = vmax.f32 %v6021, 0.0
        %v6470 = vmax.f32 %v6022, 0.0
        %v6471 = vmax.f32 %v6023, 0.0
        %v6472 = vmax.f32 %v6024, 0.0
        %v6473 = vmax.f32 %v6025, 0.0
        %v6474 = vmax.f32 %v6026, 0.0
        %v6475 = vmax.f32 %v6027, 0.0
        %v6476 = vmax.f32 %v6028, 0.0
        %v6477 = vmax.f32 %v6029, 0.0
        %v6478 = vmax.f32 %v6030, 0.0
        %v6479 = vmax.f32 %v6031, 0.0
        %v6480 = vmax.f32 %v6032, 0.0
        %v6481 = vmax.f32 %v6033, 0.0
        %v6482 = vmax.f32 %v6034, 0.0
        %v6483 = vmax.f32 %v6035, 0.0
        %v6484 = vmax.f32 %v6036, 0.0
        %v6485 = vmax.f32 %v6037, 0.0
        %v6486 = vmax.f32 %v6038, 0.0
        %v6487 = vmax.f32 %v6039, 0.0
        %v6488 = vmax.f32 %v6040, 0.0
        %v6489 = vmax.f32 %v6041, 0.0
        %v6490 = vmax.f32 %v6042, 0.0
        %v6491 = vmax.f32 %v6043, 0.0
        %v6492 = vmax.f32 %v6044, 0.0
        %v6493 = vmax.f32 %v6045, 0.0
        %v6494 = vmax.f32 %v6046, 0.0
        %v6495 = vmax.f32 %v6047, 0.0
        %v6496 = vmax.f32 %v6048, 0.0
        %v6497 = vmax.f32 %v6049, 0.0
        %v6498 = vmax.f32 %v6050, 0.0
        %v6499 = vmax.f32 %v6051, 0.0
        %v6500 = vmax.f32 %v6052, 0.0
        %v6501 = vmax.f32 %v6053, 0.0
        %v6502 = vmax.f32 %v6054, 0.0
        %v6503 = vmax.f32 %v6055, 0.0
        %v6504 = vmax.f32 %v6056, 0.0
        %v6505 = vmax.f32 %v6057, 0.0
        %v6506 = vmax.f32 %v6058, 0.0
        %v6507 = vmax.f32 %v6059, 0.0
        %v6508 = vmax.f32 %v6060, 0.0
        %v6509 = vmax.f32 %v6061, 0.0
        %v6510 = vmax.f32 %v6062, 0.0
        %v6511 = vmax.f32 %v6063, 0.0
        %v6512 = vmax.f32 %v6064, 0.0
        %v6513 = vmax.f32 %v6065, 0.0
        %v6514 = vmax.f32 %v6066, 0.0
        %v6515 = vmax.f32 %v6067, 0.0
        %v6516 = vmax.f32 %v6068, 0.0
        %v6517 = vmax.f32 %v6069, 0.0
        %v6518 = vmax.f32 %v6070, 0.0
        %v6519 = vmax.f32 %v6071, 0.0
        %v6520 = vmax.f32 %v6072, 0.0
        %v6521 = vmax.f32 %v6073, 0.0
        %v6522 = vmax.f32 %v6074, 0.0
        %v6523 = vmax.f32 %v6075, 0.0
        %v6524 = vmax.f32 %v6076, 0.0
        %v6525 = vmax.f32 %v6077, 0.0
        %v6526 = vmax.f32 %v6078, 0.0
        %v6527 = vmax.f32 %v6079, 0.0
        %v6528 = vmax.f32 %v6080, 0.0
        %v6529 = vmax.f32 %v6081, 0.0
        %v6530 = vmax.f32 %v6082, 0.0
        %v6531 = vmax.f32 %v6083, 0.0
        %v6532 = vmax.f32 %v6084, 0.0
        %v6533 = vmax.f32 %v6085, 0.0
        %v6534 = vmax.f32 %v6086, 0.0
        %v6535 = vmax.f32 %v6087, 0.0
        %v6536 = vmax.f32 %v6088, 0.0
        %v6537 = vmax.f32 %v6089, 0.0
        %v6538 = vmax.f32 %v6090, 0.0
        %v6539 = vmax.f32 %v6091, 0.0
        %v6540 = vmax.f32 %v6092, 0.0
        %v6541 = vmax.f32 %v6093, 0.0
        %v6542 = vmax.f32 %v6094, 0.0
        %v6543 = vmax.f32 %v6095, 0.0
        %v6544 = vmax.f32 %v6096, 0.0
        %v6545 = vmax.f32 %v6097, 0.0
        %v6546 = vmax.f32 %v6098, 0.0
        %v6547 = vmax.f32 %v6099, 0.0
        %v6548 = vmax.f32 %v6100, 0.0
        %v6549 = vmax.f32 %v6101, 0.0
        %v6550 = vmax.f32 %v6102, 0.0
        %v6551 = vmax.f32 %v6103, 0.0
        %v6552 = vmax.f32 %v6104, 0.0
        %v6553 = vmax.f32 %v6105, 0.0
        %v6554 = vmax.f32 %v6106, 0.0
        %v6555 = vmax.f32 %v6107, 0.0
        %v6556 = vmax.f32 %v6108, 0.0
        %v6557 = vmax.f32 %v6109, 0.0
        %v6558 = vmax.f32 %v6110, 0.0
        %v6559 = vmax.f32 %v6111, 0.0
        %v6560 = vmax.f32 %v6112, 0.0
        %v6561 = vmax.f32 %v6113, 0.0
        %v6562 = vmax.f32 %v6114, 0.0
        %v6563 = vmax.f32 %v6115, 0.0
        %v6564 = vmax.f32 %v6116, 0.0
        %v6565 = vmax.f32 %v6117, 0.0
        %v6566 = vmax.f32 %v6118, 0.0
        %v6567 = vmax.f32 %v6119, 0.0
        %v6568 = vmax.f32 %v6120, 0.0
        %v6569 = vmax.f32 %v6121, 0.0
        %v6570 = vmax.f32 %v6122, 0.0
        %v6571 = vmax.f32 %v6123, 0.0
        %v6572 = vmax.f32 %v6124, 0.0
        %v6573 = vmax.f32 %v6125, 0.0
        %v6574 = vmax.f32 %v6126, 0.0
        %v6575 = vmax.f32 %v6127, 0.0
        %v6576 = vmax.f32 %v6128, 0.0
        %v6577 = vmax.f32 %v6129, 0.0
        %v6578 = vmax.f32 %v6130, 0.0
        %v6579 = vmax.f32 %v6131, 0.0
        %v6580 = vmax.f32 %v6132, 0.0
        %v6581 = vmax.f32 %v6133, 0.0
        %v6582 = vmax.f32 %v6134, 0.0
        %v6583 = vmax.f32 %v6135, 0.0
        %v6584 = vmax.f32 %v6136, 0.0
        %v6585 = vmax.f32 %v6137, 0.0
        %v6586 = vmax.f32 %v6138, 0.0
        %v6587 = vmax.f32 %v6139, 0.0
        %v6588 = vmax.f32 %v6140, 0.0
        %v6589 = vmax.f32 %v6141, 0.0
        %v6590 = vmax.f32 %v6142, 0.0
        %v6591 = vmax.f32 %v6143, 0.0
        %v6592 = vmax.f32 %v6144, 0.0
        %v6593 = vmax.f32 %v6145, 0.0
        %v6594 = vmax.f32 %v6146, 0.0
        %v6595 = vmax.f32 %v6147, 0.0
        %v6596 = vmax.f32 %v6148, 0.0
        %v6597 = vmax.f32 %v6149, 0.0
        %v6598 = vmax.f32 %v6150, 0.0
        %v6599 = vmax.f32 %v6151, 0.0
        %v6600 = vmax.f32 %v6152, 0.0
        %v6601 = vmax.f32 %v6153, 0.0
        %v6602 = vmax.f32 %v6154, 0.0
        %v6603 = vmax.f32 %v6155, 0.0
        %v6604 = vmax.f32 %v6156, 0.0
        %v6605 = vmax.f32 %v6157, 0.0
        %v6606 = vmax.f32 %v6158, 0.0
        %v6607 = vmax.f32 %v6159, 0.0
        %v6608 = vmax.f32 %v6160, 0.0
        %v6609 = vmax.f32 %v6161, 0.0
        %v6610 = vmax.f32 %v6162, 0.0
        %v6611 = vmax.f32 %v6163, 0.0
        %v6612 = vmax.f32 %v6164, 0.0
        %v6613 = vmax.f32 %v6165, 0.0
        %v6614 = vmax.f32 %v6166, 0.0
        %v6615 = vmax.f32 %v6167, 0.0
        %v6616 = vmax.f32 %v6168, 0.0
        %v6617 = vmax.f32 %v6169, 0.0
        %v6618 = vmax.f32 %v6170, 0.0
        %v6619 = vmax.f32 %v6171, 0.0
        %v6620 = vmax.f32 %v6172, 0.0
        %v6621 = vmax.f32 %v6173, 0.0
        %v6622 = vmax.f32 %v6174, 0.0
        %v6623 = vmax.f32 %v6175, 0.0
        %v6624 = vmax.f32 %v6176, 0.0
        %v6625 = vmax.f32 %v6177, 0.0
        %v6626 = vmax.f32 %v6178, 0.0
        %v6627 = vmax.f32 %v6179, 0.0
        %v6628 = vmax.f32 %v6180, 0.0
        %v6629 = vmax.f32 %v6181, 0.0
        %v6630 = vmax.f32 %v6182, 0.0
        %v6631 = vmax.f32 %v6183, 0.0
        %v6632 = vmax.f32 %v6184, 0.0
        %v6633 = vmax.f32 %v6185, 0.0
        %v6634 = vmax.f32 %v6186, 0.0
        %v6635 = vmax.f32 %v6187, 0.0
        %v6636 = vmax.f32 %v6188, 0.0
        %v6637 = vmax.f32 %v6189, 0.0
        %v6638 = vmax.f32 %v6190, 0.0
        %v6639 = vmax.f32 %v6191, 0.0
        %v6640 = vmax.f32 %v6192, 0.0
        %v6641 = vmax.f32 %v6193, 0.0
        %v6642 = vmax.f32 %v6194, 0.0
        %v6643 = vmax.f32 %v6195, 0.0
        %v6644 = vmax.f32 %v6196, 0.0
        %v6645 = vmax.f32 %v6197, 0.0
        %v6646 = vmax.f32 %v6198, 0.0
        %v6647 = vmax.f32 %v6199, 0.0
        %v6648 = vmax.f32 %v6200, 0.0
        %v6649 = vmax.f32 %v6201, 0.0
        %v6650 = vmax.f32 %v6202, 0.0
        %v6651 = vmax.f32 %v6203, 0.0
        %v6652 = vmax.f32 %v6204, 0.0
        %v6653 = vmax.f32 %v6205, 0.0
        %v6654 = vmax.f32 %v6206, 0.0
        %v6655 = vmax.f32 %v6207, 0.0
        %v6656 = vmax.f32 %v6208, 0.0
        %v6657 = vmax.f32 %v6209, 0.0
        %v6658 = vmax.f32 %v6210, 0.0
        %v6659 = vmax.f32 %v6211, 0.0
        %v6660 = vmax.f32 %v6212, 0.0
        %v6661 = vmax.f32 %v6213, 0.0
        %v6662 = vmax.f32 %v6214, 0.0
        %v6663 = vmax.f32 %v6215, 0.0
        %v6664 = vmax.f32 %v6216, 0.0
        %v6665 = vpack.c.bf16 %v6218, %v6217
        %v6666 = vpack.c.bf16 %v6220, %v6219
        %v6667 = vpack.c.bf16 %v6222, %v6221
        %v6668 = vpack.c.bf16 %v6224, %v6223
        %v6669 = vpack.c.bf16 %v6226, %v6225
        %v6670 = vpack.c.bf16 %v6228, %v6227
        %v6671 = vpack.c.bf16 %v6230, %v6229
        %v6672 = vpack.c.bf16 %v6232, %v6231
        %v6673 = vpack.c.bf16 %v6234, %v6233
        %v6674 = vpack.c.bf16 %v6236, %v6235
        %v6675 = vpack.c.bf16 %v6238, %v6237
        %v6676 = vpack.c.bf16 %v6240, %v6239
        %v6677 = vpack.c.bf16 %v6242, %v6241
        %v6678 = vpack.c.bf16 %v6244, %v6243
        %v6679 = vpack.c.bf16 %v6246, %v6245
        %v6680 = vpack.c.bf16 %v6248, %v6247
        %v6681 = vpack.c.bf16 %v6250, %v6249
        %v6682 = vpack.c.bf16 %v6252, %v6251
        %v6683 = vpack.c.bf16 %v6254, %v6253
        %v6684 = vpack.c.bf16 %v6256, %v6255
        %v6685 = vpack.c.bf16 %v6258, %v6257
        %v6686 = vpack.c.bf16 %v6260, %v6259
        %v6687 = vpack.c.bf16 %v6262, %v6261
        %v6688 = vpack.c.bf16 %v6264, %v6263
        %v6689 = vpack.c.bf16 %v6266, %v6265
        %v6690 = vpack.c.bf16 %v6268, %v6267
        %v6691 = vpack.c.bf16 %v6270, %v6269
        %v6692 = vpack.c.bf16 %v6272, %v6271
        %v6693 = vpack.c.bf16 %v6274, %v6273
        %v6694 = vpack.c.bf16 %v6276, %v6275
        %v6695 = vpack.c.bf16 %v6278, %v6277
        %v6696 = vpack.c.bf16 %v6280, %v6279
        %v6697 = vpack.c.bf16 %v6282, %v6281
        %v6698 = vpack.c.bf16 %v6284, %v6283
        %v6699 = vpack.c.bf16 %v6286, %v6285
        %v6700 = vpack.c.bf16 %v6288, %v6287
        %v6701 = vpack.c.bf16 %v6290, %v6289
        %v6702 = vpack.c.bf16 %v6292, %v6291
        %v6703 = vpack.c.bf16 %v6294, %v6293
        %v6704 = vpack.c.bf16 %v6296, %v6295
        %v6705 = vpack.c.bf16 %v6298, %v6297
        %v6706 = vpack.c.bf16 %v6300, %v6299
        %v6707 = vpack.c.bf16 %v6302, %v6301
        %v6708 = vpack.c.bf16 %v6304, %v6303
        %v6709 = vpack.c.bf16 %v6306, %v6305
        %v6710 = vpack.c.bf16 %v6308, %v6307
        %v6711 = vpack.c.bf16 %v6310, %v6309
        %v6712 = vpack.c.bf16 %v6312, %v6311
        %v6713 = vpack.c.bf16 %v6314, %v6313
        %v6714 = vpack.c.bf16 %v6316, %v6315
        %v6715 = vpack.c.bf16 %v6318, %v6317
        %v6716 = vpack.c.bf16 %v6320, %v6319
        %v6717 = vpack.c.bf16 %v6322, %v6321
        %v6718 = vpack.c.bf16 %v6324, %v6323
        %v6719 = vpack.c.bf16 %v6326, %v6325
        %v6720 = vpack.c.bf16 %v6328, %v6327
        %v6721 = vpack.c.bf16 %v6330, %v6329
        %v6722 = vpack.c.bf16 %v6332, %v6331
        %v6723 = vpack.c.bf16 %v6334, %v6333
        %v6724 = vpack.c.bf16 %v6336, %v6335
        %v6725 = vpack.c.bf16 %v6338, %v6337
        %v6726 = vpack.c.bf16 %v6340, %v6339
        %v6727 = vpack.c.bf16 %v6342, %v6341
        %v6728 = vpack.c.bf16 %v6344, %v6343
        %v6729 = vpack.c.bf16 %v6346, %v6345
        %v6730 = vpack.c.bf16 %v6348, %v6347
        %v6731 = vpack.c.bf16 %v6350, %v6349
        %v6732 = vpack.c.bf16 %v6352, %v6351
        %v6733 = vpack.c.bf16 %v6354, %v6353
        %v6734 = vpack.c.bf16 %v6356, %v6355
        %v6735 = vpack.c.bf16 %v6358, %v6357
        %v6736 = vpack.c.bf16 %v6360, %v6359
        %v6737 = vpack.c.bf16 %v6362, %v6361
        %v6738 = vpack.c.bf16 %v6364, %v6363
        %v6739 = vpack.c.bf16 %v6366, %v6365
        %v6740 = vpack.c.bf16 %v6368, %v6367
        %v6741 = vpack.c.bf16 %v6370, %v6369
        %v6742 = vpack.c.bf16 %v6372, %v6371
        %v6743 = vpack.c.bf16 %v6374, %v6373
        %v6744 = vpack.c.bf16 %v6376, %v6375
        %v6745 = vpack.c.bf16 %v6378, %v6377
        %v6746 = vpack.c.bf16 %v6380, %v6379
        %v6747 = vpack.c.bf16 %v6382, %v6381
        %v6748 = vpack.c.bf16 %v6384, %v6383
        %v6749 = vpack.c.bf16 %v6386, %v6385
        %v6750 = vpack.c.bf16 %v6388, %v6387
        %v6751 = vpack.c.bf16 %v6390, %v6389
        %v6752 = vpack.c.bf16 %v6392, %v6391
        %v6753 = vpack.c.bf16 %v6394, %v6393
        %v6754 = vpack.c.bf16 %v6396, %v6395
        %v6755 = vpack.c.bf16 %v6398, %v6397
        %v6756 = vpack.c.bf16 %v6400, %v6399
        %v6757 = vpack.c.bf16 %v6402, %v6401
        %v6758 = vpack.c.bf16 %v6404, %v6403
        %v6759 = vpack.c.bf16 %v6406, %v6405
        %v6760 = vpack.c.bf16 %v6408, %v6407
        %v6761 = vpack.c.bf16 %v6410, %v6409
        %v6762 = vpack.c.bf16 %v6412, %v6411
        %v6763 = vpack.c.bf16 %v6414, %v6413
        %v6764 = vpack.c.bf16 %v6416, %v6415
        %v6765 = vpack.c.bf16 %v6418, %v6417
        %v6766 = vpack.c.bf16 %v6420, %v6419
        %v6767 = vpack.c.bf16 %v6422, %v6421
        %v6768 = vpack.c.bf16 %v6424, %v6423
        %v6769 = vpack.c.bf16 %v6426, %v6425
        %v6770 = vpack.c.bf16 %v6428, %v6427
        %v6771 = vpack.c.bf16 %v6430, %v6429
        %v6772 = vpack.c.bf16 %v6432, %v6431
        %v6773 = vpack.c.bf16 %v6434, %v6433
        %v6774 = vpack.c.bf16 %v6436, %v6435
        %v6775 = vpack.c.bf16 %v6438, %v6437
        %v6776 = vpack.c.bf16 %v6440, %v6439
        %v6777 = vpack.c.bf16 %v6442, %v6441
        %v6778 = vpack.c.bf16 %v6444, %v6443
        %v6779 = vpack.c.bf16 %v6446, %v6445
        %v6780 = vpack.c.bf16 %v6448, %v6447
        %v6781 = vpack.c.bf16 %v6450, %v6449
        %v6782 = vpack.c.bf16 %v6452, %v6451
        %v6783 = vpack.c.bf16 %v6454, %v6453
        %v6784 = vpack.c.bf16 %v6456, %v6455
        %v6785 = vpack.c.bf16 %v6458, %v6457
        %v6786 = vpack.c.bf16 %v6460, %v6459
        %v6787 = vpack.c.bf16 %v6462, %v6461
        %v6788 = vpack.c.bf16 %v6464, %v6463
        %v6789 = vpack.c.bf16 %v6466, %v6465
        %v6790 = vpack.c.bf16 %v6468, %v6467
        %v6791 = vpack.c.bf16 %v6470, %v6469
        %v6792 = vpack.c.bf16 %v6472, %v6471
        %v6793 = vpack.c.bf16 %v6474, %v6473
        %v6794 = vpack.c.bf16 %v6476, %v6475
        %v6795 = vpack.c.bf16 %v6478, %v6477
        %v6796 = vpack.c.bf16 %v6480, %v6479
        %v6797 = vpack.c.bf16 %v6482, %v6481
        %v6798 = vpack.c.bf16 %v6484, %v6483
        %v6799 = vpack.c.bf16 %v6486, %v6485
        %v6800 = vpack.c.bf16 %v6488, %v6487
        %v6801 = vpack.c.bf16 %v6490, %v6489
        %v6802 = vpack.c.bf16 %v6492, %v6491
        %v6803 = vpack.c.bf16 %v6494, %v6493
        %v6804 = vpack.c.bf16 %v6496, %v6495
        %v6805 = vpack.c.bf16 %v6498, %v6497
        %v6806 = vpack.c.bf16 %v6500, %v6499
        %v6807 = vpack.c.bf16 %v6502, %v6501
        %v6808 = vpack.c.bf16 %v6504, %v6503
        %v6809 = vpack.c.bf16 %v6506, %v6505
        %v6810 = vpack.c.bf16 %v6508, %v6507
        %v6811 = vpack.c.bf16 %v6510, %v6509
        %v6812 = vpack.c.bf16 %v6512, %v6511
        %v6813 = vpack.c.bf16 %v6514, %v6513
        %v6814 = vpack.c.bf16 %v6516, %v6515
        %v6815 = vpack.c.bf16 %v6518, %v6517
        %v6816 = vpack.c.bf16 %v6520, %v6519
        %v6817 = vpack.c.bf16 %v6522, %v6521
        %v6818 = vpack.c.bf16 %v6524, %v6523
        %v6819 = vpack.c.bf16 %v6526, %v6525
        %v6820 = vpack.c.bf16 %v6528, %v6527
        %v6821 = vpack.c.bf16 %v6530, %v6529
        %v6822 = vpack.c.bf16 %v6532, %v6531
        %v6823 = vpack.c.bf16 %v6534, %v6533
        %v6824 = vpack.c.bf16 %v6536, %v6535
        %v6825 = vpack.c.bf16 %v6538, %v6537
        %v6826 = vpack.c.bf16 %v6540, %v6539
        %v6827 = vpack.c.bf16 %v6542, %v6541
        %v6828 = vpack.c.bf16 %v6544, %v6543
        %v6829 = vpack.c.bf16 %v6546, %v6545
        %v6830 = vpack.c.bf16 %v6548, %v6547
        %v6831 = vpack.c.bf16 %v6550, %v6549
        %v6832 = vpack.c.bf16 %v6552, %v6551
        %v6833 = vpack.c.bf16 %v6554, %v6553
        %v6834 = vpack.c.bf16 %v6556, %v6555
        %v6835 = vpack.c.bf16 %v6558, %v6557
        %v6836 = vpack.c.bf16 %v6560, %v6559
        %v6837 = vpack.c.bf16 %v6562, %v6561
        %v6838 = vpack.c.bf16 %v6564, %v6563
        %v6839 = vpack.c.bf16 %v6566, %v6565
        %v6840 = vpack.c.bf16 %v6568, %v6567
        %v6841 = vpack.c.bf16 %v6570, %v6569
        %v6842 = vpack.c.bf16 %v6572, %v6571
        %v6843 = vpack.c.bf16 %v6574, %v6573
        %v6844 = vpack.c.bf16 %v6576, %v6575
        %v6845 = vpack.c.bf16 %v6578, %v6577
        %v6846 = vpack.c.bf16 %v6580, %v6579
        %v6847 = vpack.c.bf16 %v6582, %v6581
        %v6848 = vpack.c.bf16 %v6584, %v6583
        %v6849 = vpack.c.bf16 %v6586, %v6585
        %v6850 = vpack.c.bf16 %v6588, %v6587
        %v6851 = vpack.c.bf16 %v6590, %v6589
        %v6852 = vpack.c.bf16 %v6592, %v6591
        %v6853 = vpack.c.bf16 %v6594, %v6593
        %v6854 = vpack.c.bf16 %v6596, %v6595
        %v6855 = vpack.c.bf16 %v6598, %v6597
        %v6856 = vpack.c.bf16 %v6600, %v6599
        %v6857 = vpack.c.bf16 %v6602, %v6601
        %v6858 = vpack.c.bf16 %v6604, %v6603
        %v6859 = vpack.c.bf16 %v6606, %v6605
        %v6860 = vpack.c.bf16 %v6608, %v6607
        %v6861 = vpack.c.bf16 %v6610, %v6609
        %v6862 = vpack.c.bf16 %v6612, %v6611
        %v6863 = vpack.c.bf16 %v6614, %v6613
        %v6864 = vpack.c.bf16 %v6616, %v6615
        %v6865 = vpack.c.bf16 %v6618, %v6617
        %v6866 = vpack.c.bf16 %v6620, %v6619
        %v6867 = vpack.c.bf16 %v6622, %v6621
        %v6868 = vpack.c.bf16 %v6624, %v6623
        %v6869 = vpack.c.bf16 %v6626, %v6625
        %v6870 = vpack.c.bf16 %v6628, %v6627
        %v6871 = vpack.c.bf16 %v6630, %v6629
        %v6872 = vpack.c.bf16 %v6632, %v6631
        %v6873 = vpack.c.bf16 %v6634, %v6633
        %v6874 = vpack.c.bf16 %v6636, %v6635
        %v6875 = vpack.c.bf16 %v6638, %v6637
        %v6876 = vpack.c.bf16 %v6640, %v6639
        %v6877 = vpack.c.bf16 %v6642, %v6641
        %v6878 = vpack.c.bf16 %v6644, %v6643
        %v6879 = vpack.c.bf16 %v6646, %v6645
        %v6880 = vpack.c.bf16 %v6648, %v6647
        %v6881 = vpack.c.bf16 %v6650, %v6649
        %v6882 = vpack.c.bf16 %v6652, %v6651
        %v6883 = vpack.c.bf16 %v6654, %v6653
        %v6884 = vpack.c.bf16 %v6656, %v6655
        %v6885 = vpack.c.bf16 %v6658, %v6657
        %v6886 = vpack.c.bf16 %v6660, %v6659
        %v6887 = vpack.c.bf16 %v6662, %v6661
        %v6888 = vpack.c.bf16 %v6664, %v6663
        %v7113 = vunpack.c.l.b16 %v6665
        %v7114 = vunpack.c.h.b16 %v6665
        %v7115 = vunpack.c.l.b16 %v6666
        %v7116 = vunpack.c.h.b16 %v6666
        %v7117 = vunpack.c.l.b16 %v6667
        %v7118 = vunpack.c.h.b16 %v6667
        %v7119 = vunpack.c.l.b16 %v6668
        %v7120 = vunpack.c.h.b16 %v6668
        %v7121 = vunpack.c.l.b16 %v6669
        %v7122 = vunpack.c.h.b16 %v6669
        %v7123 = vunpack.c.l.b16 %v6670
        %v7124 = vunpack.c.h.b16 %v6670
        %v7125 = vunpack.c.l.b16 %v6671
        %v7126 = vunpack.c.h.b16 %v6671
        %v7127 = vunpack.c.l.b16 %v6672
        %v7128 = vunpack.c.h.b16 %v6672
        %v7129 = vunpack.c.l.b16 %v6673
        %v7130 = vunpack.c.h.b16 %v6673
        %v7131 = vunpack.c.l.b16 %v6674
        %v7132 = vunpack.c.h.b16 %v6674
        %v7133 = vunpack.c.l.b16 %v6675
        %v7134 = vunpack.c.h.b16 %v6675
        %v7135 = vunpack.c.l.b16 %v6676
        %v7136 = vunpack.c.h.b16 %v6676
        %v7137 = vunpack.c.l.b16 %v6677
        %v7138 = vunpack.c.h.b16 %v6677
        %v7139 = vunpack.c.l.b16 %v6678
        %v7140 = vunpack.c.h.b16 %v6678
        %v7141 = vunpack.c.l.b16 %v6679
        %v7142 = vunpack.c.h.b16 %v6679
        %v7143 = vunpack.c.l.b16 %v6680
        %v7144 = vunpack.c.h.b16 %v6680
        %v7145 = vunpack.c.l.b16 %v6681
        %v7146 = vunpack.c.h.b16 %v6681
        %v7147 = vunpack.c.l.b16 %v6682
        %v7148 = vunpack.c.h.b16 %v6682
        %v7149 = vunpack.c.l.b16 %v6683
        %v7150 = vunpack.c.h.b16 %v6683
        %v7151 = vunpack.c.l.b16 %v6684
        %v7152 = vunpack.c.h.b16 %v6684
        %v7153 = vunpack.c.l.b16 %v6685
        %v7154 = vunpack.c.h.b16 %v6685
        %v7155 = vunpack.c.l.b16 %v6686
        %v7156 = vunpack.c.h.b16 %v6686
        %v7157 = vunpack.c.l.b16 %v6687
        %v7158 = vunpack.c.h.b16 %v6687
        %v7159 = vunpack.c.l.b16 %v6688
        %v7160 = vunpack.c.h.b16 %v6688
        %v7161 = vunpack.c.l.b16 %v6689
        %v7162 = vunpack.c.h.b16 %v6689
        %v7163 = vunpack.c.l.b16 %v6690
        %v7164 = vunpack.c.h.b16 %v6690
        %v7165 = vunpack.c.l.b16 %v6691
        %v7166 = vunpack.c.h.b16 %v6691
        %v7167 = vunpack.c.l.b16 %v6692
        %v7168 = vunpack.c.h.b16 %v6692
        %v7169 = vunpack.c.l.b16 %v6693
        %v7170 = vunpack.c.h.b16 %v6693
        %v7171 = vunpack.c.l.b16 %v6694
        %v7172 = vunpack.c.h.b16 %v6694
        %v7173 = vunpack.c.l.b16 %v6695
        %v7174 = vunpack.c.h.b16 %v6695
        %v7175 = vunpack.c.l.b16 %v6696
        %v7176 = vunpack.c.h.b16 %v6696
        %v7177 = vunpack.c.l.b16 %v6697
        %v7178 = vunpack.c.h.b16 %v6697
        %v7179 = vunpack.c.l.b16 %v6698
        %v7180 = vunpack.c.h.b16 %v6698
        %v7181 = vunpack.c.l.b16 %v6699
        %v7182 = vunpack.c.h.b16 %v6699
        %v7183 = vunpack.c.l.b16 %v6700
        %v7184 = vunpack.c.h.b16 %v6700
        %v7185 = vunpack.c.l.b16 %v6701
        %v7186 = vunpack.c.h.b16 %v6701
        %v7187 = vunpack.c.l.b16 %v6702
        %v7188 = vunpack.c.h.b16 %v6702
        %v7189 = vunpack.c.l.b16 %v6703
        %v7190 = vunpack.c.h.b16 %v6703
        %v7191 = vunpack.c.l.b16 %v6704
        %v7192 = vunpack.c.h.b16 %v6704
        %v7193 = vunpack.c.l.b16 %v6705
        %v7194 = vunpack.c.h.b16 %v6705
        %v7195 = vunpack.c.l.b16 %v6706
        %v7196 = vunpack.c.h.b16 %v6706
        %v7197 = vunpack.c.l.b16 %v6707
        %v7198 = vunpack.c.h.b16 %v6707
        %v7199 = vunpack.c.l.b16 %v6708
        %v7200 = vunpack.c.h.b16 %v6708
        %v7201 = vunpack.c.l.b16 %v6709
        %v7202 = vunpack.c.h.b16 %v6709
        %v7203 = vunpack.c.l.b16 %v6710
        %v7204 = vunpack.c.h.b16 %v6710
        %v7205 = vunpack.c.l.b16 %v6711
        %v7206 = vunpack.c.h.b16 %v6711
        %v7207 = vunpack.c.l.b16 %v6712
        %v7208 = vunpack.c.h.b16 %v6712
        %v7209 = vunpack.c.l.b16 %v6713
        %v7210 = vunpack.c.h.b16 %v6713
        %v7211 = vunpack.c.l.b16 %v6714
        %v7212 = vunpack.c.h.b16 %v6714
        %v7213 = vunpack.c.l.b16 %v6715
        %v7214 = vunpack.c.h.b16 %v6715
        %v7215 = vunpack.c.l.b16 %v6716
        %v7216 = vunpack.c.h.b16 %v6716
        %v7217 = vunpack.c.l.b16 %v6717
        %v7218 = vunpack.c.h.b16 %v6717
        %v7219 = vunpack.c.l.b16 %v6718
        %v7220 = vunpack.c.h.b16 %v6718
        %v7221 = vunpack.c.l.b16 %v6719
        %v7222 = vunpack.c.h.b16 %v6719
        %v7223 = vunpack.c.l.b16 %v6720
        %v7224 = vunpack.c.h.b16 %v6720
        %v7225 = vunpack.c.l.b16 %v6721
        %v7226 = vunpack.c.h.b16 %v6721
        %v7227 = vunpack.c.l.b16 %v6722
        %v7228 = vunpack.c.h.b16 %v6722
        %v7229 = vunpack.c.l.b16 %v6723
        %v7230 = vunpack.c.h.b16 %v6723
        %v7231 = vunpack.c.l.b16 %v6724
        %v7232 = vunpack.c.h.b16 %v6724
        %v7233 = vunpack.c.l.b16 %v6725
        %v7234 = vunpack.c.h.b16 %v6725
        %v7235 = vunpack.c.l.b16 %v6726
        %v7236 = vunpack.c.h.b16 %v6726
        %v7237 = vunpack.c.l.b16 %v6727
        %v7238 = vunpack.c.h.b16 %v6727
        %v7239 = vunpack.c.l.b16 %v6728
        %v7240 = vunpack.c.h.b16 %v6728
        %v7241 = vunpack.c.l.b16 %v6729
        %v7242 = vunpack.c.h.b16 %v6729
        %v7243 = vunpack.c.l.b16 %v6730
        %v7244 = vunpack.c.h.b16 %v6730
        %v7245 = vunpack.c.l.b16 %v6731
        %v7246 = vunpack.c.h.b16 %v6731
        %v7247 = vunpack.c.l.b16 %v6732
        %v7248 = vunpack.c.h.b16 %v6732
        %v7249 = vunpack.c.l.b16 %v6733
        %v7250 = vunpack.c.h.b16 %v6733
        %v7251 = vunpack.c.l.b16 %v6734
        %v7252 = vunpack.c.h.b16 %v6734
        %v7253 = vunpack.c.l.b16 %v6735
        %v7254 = vunpack.c.h.b16 %v6735
        %v7255 = vunpack.c.l.b16 %v6736
        %v7256 = vunpack.c.h.b16 %v6736
        %v7257 = vunpack.c.l.b16 %v6737
        %v7258 = vunpack.c.h.b16 %v6737
        %v7259 = vunpack.c.l.b16 %v6738
        %v7260 = vunpack.c.h.b16 %v6738
        %v7261 = vunpack.c.l.b16 %v6739
        %v7262 = vunpack.c.h.b16 %v6739
        %v7263 = vunpack.c.l.b16 %v6740
        %v7264 = vunpack.c.h.b16 %v6740
        %v7265 = vunpack.c.l.b16 %v6741
        %v7266 = vunpack.c.h.b16 %v6741
        %v7267 = vunpack.c.l.b16 %v6742
        %v7268 = vunpack.c.h.b16 %v6742
        %v7269 = vunpack.c.l.b16 %v6743
        %v7270 = vunpack.c.h.b16 %v6743
        %v7271 = vunpack.c.l.b16 %v6744
        %v7272 = vunpack.c.h.b16 %v6744
        %v7273 = vunpack.c.l.b16 %v6745
        %v7274 = vunpack.c.h.b16 %v6745
        %v7275 = vunpack.c.l.b16 %v6746
        %v7276 = vunpack.c.h.b16 %v6746
        %v7277 = vunpack.c.l.b16 %v6747
        %v7278 = vunpack.c.h.b16 %v6747
        %v7279 = vunpack.c.l.b16 %v6748
        %v7280 = vunpack.c.h.b16 %v6748
        %v7281 = vunpack.c.l.b16 %v6749
        %v7282 = vunpack.c.h.b16 %v6749
        %v7283 = vunpack.c.l.b16 %v6750
        %v7284 = vunpack.c.h.b16 %v6750
        %v7285 = vunpack.c.l.b16 %v6751
        %v7286 = vunpack.c.h.b16 %v6751
        %v7287 = vunpack.c.l.b16 %v6752
        %v7288 = vunpack.c.h.b16 %v6752
        %v7289 = vunpack.c.l.b16 %v6753
        %v7290 = vunpack.c.h.b16 %v6753
        %v7291 = vunpack.c.l.b16 %v6754
        %v7292 = vunpack.c.h.b16 %v6754
        %v7293 = vunpack.c.l.b16 %v6755
        %v7294 = vunpack.c.h.b16 %v6755
        %v7295 = vunpack.c.l.b16 %v6756
        %v7296 = vunpack.c.h.b16 %v6756
        %v7297 = vunpack.c.l.b16 %v6757
        %v7298 = vunpack.c.h.b16 %v6757
        %v7299 = vunpack.c.l.b16 %v6758
        %v7300 = vunpack.c.h.b16 %v6758
        %v7301 = vunpack.c.l.b16 %v6759
        %v7302 = vunpack.c.h.b16 %v6759
        %v7303 = vunpack.c.l.b16 %v6760
        %v7304 = vunpack.c.h.b16 %v6760
        %v7305 = vunpack.c.l.b16 %v6761
        %v7306 = vunpack.c.h.b16 %v6761
        %v7307 = vunpack.c.l.b16 %v6762
        %v7308 = vunpack.c.h.b16 %v6762
        %v7309 = vunpack.c.l.b16 %v6763
        %v7310 = vunpack.c.h.b16 %v6763
        %v7311 = vunpack.c.l.b16 %v6764
        %v7312 = vunpack.c.h.b16 %v6764
        %v7313 = vunpack.c.l.b16 %v6765
        %v7314 = vunpack.c.h.b16 %v6765
        %v7315 = vunpack.c.l.b16 %v6766
        %v7316 = vunpack.c.h.b16 %v6766
        %v7317 = vunpack.c.l.b16 %v6767
        %v7318 = vunpack.c.h.b16 %v6767
        %v7319 = vunpack.c.l.b16 %v6768
        %v7320 = vunpack.c.h.b16 %v6768
        %v7321 = vunpack.c.l.b16 %v6769
        %v7322 = vunpack.c.h.b16 %v6769
        %v7323 = vunpack.c.l.b16 %v6770
        %v7324 = vunpack.c.h.b16 %v6770
        %v7325 = vunpack.c.l.b16 %v6771
        %v7326 = vunpack.c.h.b16 %v6771
        %v7327 = vunpack.c.l.b16 %v6772
        %v7328 = vunpack.c.h.b16 %v6772
        %v7329 = vunpack.c.l.b16 %v6773
        %v7330 = vunpack.c.h.b16 %v6773
        %v7331 = vunpack.c.l.b16 %v6774
        %v7332 = vunpack.c.h.b16 %v6774
        %v7333 = vunpack.c.l.b16 %v6775
        %v7334 = vunpack.c.h.b16 %v6775
        %v7335 = vunpack.c.l.b16 %v6776
        %v7336 = vunpack.c.h.b16 %v6776
        %v7337 = vunpack.c.l.b16 %v6777
        %v7338 = vunpack.c.h.b16 %v6777
        %v7339 = vunpack.c.l.b16 %v6778
        %v7340 = vunpack.c.h.b16 %v6778
        %v7341 = vunpack.c.l.b16 %v6779
        %v7342 = vunpack.c.h.b16 %v6779
        %v7343 = vunpack.c.l.b16 %v6780
        %v7344 = vunpack.c.h.b16 %v6780
        %v7345 = vunpack.c.l.b16 %v6781
        %v7346 = vunpack.c.h.b16 %v6781
        %v7347 = vunpack.c.l.b16 %v6782
        %v7348 = vunpack.c.h.b16 %v6782
        %v7349 = vunpack.c.l.b16 %v6783
        %v7350 = vunpack.c.h.b16 %v6783
        %v7351 = vunpack.c.l.b16 %v6784
        %v7352 = vunpack.c.h.b16 %v6784
        %v7353 = vunpack.c.l.b16 %v6785
        %v7354 = vunpack.c.h.b16 %v6785
        %v7355 = vunpack.c.l.b16 %v6786
        %v7356 = vunpack.c.h.b16 %v6786
        %v7357 = vunpack.c.l.b16 %v6787
        %v7358 = vunpack.c.h.b16 %v6787
        %v7359 = vunpack.c.l.b16 %v6788
        %v7360 = vunpack.c.h.b16 %v6788
        %v7361 = vunpack.c.l.b16 %v6789
        %v7362 = vunpack.c.h.b16 %v6789
        %v7363 = vunpack.c.l.b16 %v6790
        %v7364 = vunpack.c.h.b16 %v6790
        %v7365 = vunpack.c.l.b16 %v6791
        %v7366 = vunpack.c.h.b16 %v6791
        %v7367 = vunpack.c.l.b16 %v6792
        %v7368 = vunpack.c.h.b16 %v6792
        %v7369 = vunpack.c.l.b16 %v6793
        %v7370 = vunpack.c.h.b16 %v6793
        %v7371 = vunpack.c.l.b16 %v6794
        %v7372 = vunpack.c.h.b16 %v6794
        %v7373 = vunpack.c.l.b16 %v6795
        %v7374 = vunpack.c.h.b16 %v6795
        %v7375 = vunpack.c.l.b16 %v6796
        %v7376 = vunpack.c.h.b16 %v6796
        %v7377 = vunpack.c.l.b16 %v6797
        %v7378 = vunpack.c.h.b16 %v6797
        %v7379 = vunpack.c.l.b16 %v6798
        %v7380 = vunpack.c.h.b16 %v6798
        %v7381 = vunpack.c.l.b16 %v6799
        %v7382 = vunpack.c.h.b16 %v6799
        %v7383 = vunpack.c.l.b16 %v6800
        %v7384 = vunpack.c.h.b16 %v6800
        %v7385 = vunpack.c.l.b16 %v6801
        %v7386 = vunpack.c.h.b16 %v6801
        %v7387 = vunpack.c.l.b16 %v6802
        %v7388 = vunpack.c.h.b16 %v6802
        %v7389 = vunpack.c.l.b16 %v6803
        %v7390 = vunpack.c.h.b16 %v6803
        %v7391 = vunpack.c.l.b16 %v6804
        %v7392 = vunpack.c.h.b16 %v6804
        %v7393 = vunpack.c.l.b16 %v6805
        %v7394 = vunpack.c.h.b16 %v6805
        %v7395 = vunpack.c.l.b16 %v6806
        %v7396 = vunpack.c.h.b16 %v6806
        %v7397 = vunpack.c.l.b16 %v6807
        %v7398 = vunpack.c.h.b16 %v6807
        %v7399 = vunpack.c.l.b16 %v6808
        %v7400 = vunpack.c.h.b16 %v6808
        %v7401 = vunpack.c.l.b16 %v6809
        %v7402 = vunpack.c.h.b16 %v6809
        %v7403 = vunpack.c.l.b16 %v6810
        %v7404 = vunpack.c.h.b16 %v6810
        %v7405 = vunpack.c.l.b16 %v6811
        %v7406 = vunpack.c.h.b16 %v6811
        %v7407 = vunpack.c.l.b16 %v6812
        %v7408 = vunpack.c.h.b16 %v6812
        %v7409 = vunpack.c.l.b16 %v6813
        %v7410 = vunpack.c.h.b16 %v6813
        %v7411 = vunpack.c.l.b16 %v6814
        %v7412 = vunpack.c.h.b16 %v6814
        %v7413 = vunpack.c.l.b16 %v6815
        %v7414 = vunpack.c.h.b16 %v6815
        %v7415 = vunpack.c.l.b16 %v6816
        %v7416 = vunpack.c.h.b16 %v6816
        %v7417 = vunpack.c.l.b16 %v6817
        %v7418 = vunpack.c.h.b16 %v6817
        %v7419 = vunpack.c.l.b16 %v6818
        %v7420 = vunpack.c.h.b16 %v6818
        %v7421 = vunpack.c.l.b16 %v6819
        %v7422 = vunpack.c.h.b16 %v6819
        %v7423 = vunpack.c.l.b16 %v6820
        %v7424 = vunpack.c.h.b16 %v6820
        %v7425 = vunpack.c.l.b16 %v6821
        %v7426 = vunpack.c.h.b16 %v6821
        %v7427 = vunpack.c.l.b16 %v6822
        %v7428 = vunpack.c.h.b16 %v6822
        %v7429 = vunpack.c.l.b16 %v6823
        %v7430 = vunpack.c.h.b16 %v6823
        %v7431 = vunpack.c.l.b16 %v6824
        %v7432 = vunpack.c.h.b16 %v6824
        %v7433 = vunpack.c.l.b16 %v6825
        %v7434 = vunpack.c.h.b16 %v6825
        %v7435 = vunpack.c.l.b16 %v6826
        %v7436 = vunpack.c.h.b16 %v6826
        %v7437 = vunpack.c.l.b16 %v6827
        %v7438 = vunpack.c.h.b16 %v6827
        %v7439 = vunpack.c.l.b16 %v6828
        %v7440 = vunpack.c.h.b16 %v6828
        %v7441 = vunpack.c.l.b16 %v6829
        %v7442 = vunpack.c.h.b16 %v6829
        %v7443 = vunpack.c.l.b16 %v6830
        %v7444 = vunpack.c.h.b16 %v6830
        %v7445 = vunpack.c.l.b16 %v6831
        %v7446 = vunpack.c.h.b16 %v6831
        %v7447 = vunpack.c.l.b16 %v6832
        %v7448 = vunpack.c.h.b16 %v6832
        %v7449 = vunpack.c.l.b16 %v6833
        %v7450 = vunpack.c.h.b16 %v6833
        %v7451 = vunpack.c.l.b16 %v6834
        %v7452 = vunpack.c.h.b16 %v6834
        %v7453 = vunpack.c.l.b16 %v6835
        %v7454 = vunpack.c.h.b16 %v6835
        %v7455 = vunpack.c.l.b16 %v6836
        %v7456 = vunpack.c.h.b16 %v6836
        %v7457 = vunpack.c.l.b16 %v6837
        %v7458 = vunpack.c.h.b16 %v6837
        %v7459 = vunpack.c.l.b16 %v6838
        %v7460 = vunpack.c.h.b16 %v6838
        %v7461 = vunpack.c.l.b16 %v6839
        %v7462 = vunpack.c.h.b16 %v6839
        %v7463 = vunpack.c.l.b16 %v6840
        %v7464 = vunpack.c.h.b16 %v6840
        %v7465 = vunpack.c.l.b16 %v6841
        %v7466 = vunpack.c.h.b16 %v6841
        %v7467 = vunpack.c.l.b16 %v6842
        %v7468 = vunpack.c.h.b16 %v6842
        %v7469 = vunpack.c.l.b16 %v6843
        %v7470 = vunpack.c.h.b16 %v6843
        %v7471 = vunpack.c.l.b16 %v6844
        %v7472 = vunpack.c.h.b16 %v6844
        %v7473 = vunpack.c.l.b16 %v6845
        %v7474 = vunpack.c.h.b16 %v6845
        %v7475 = vunpack.c.l.b16 %v6846
        %v7476 = vunpack.c.h.b16 %v6846
        %v7477 = vunpack.c.l.b16 %v6847
        %v7478 = vunpack.c.h.b16 %v6847
        %v7479 = vunpack.c.l.b16 %v6848
        %v7480 = vunpack.c.h.b16 %v6848
        %v7481 = vunpack.c.l.b16 %v6849
        %v7482 = vunpack.c.h.b16 %v6849
        %v7483 = vunpack.c.l.b16 %v6850
        %v7484 = vunpack.c.h.b16 %v6850
        %v7485 = vunpack.c.l.b16 %v6851
        %v7486 = vunpack.c.h.b16 %v6851
        %v7487 = vunpack.c.l.b16 %v6852
        %v7488 = vunpack.c.h.b16 %v6852
        %v7489 = vunpack.c.l.b16 %v6853
        %v7490 = vunpack.c.h.b16 %v6853
        %v7491 = vunpack.c.l.b16 %v6854
        %v7492 = vunpack.c.h.b16 %v6854
        %v7493 = vunpack.c.l.b16 %v6855
        %v7494 = vunpack.c.h.b16 %v6855
        %v7495 = vunpack.c.l.b16 %v6856
        %v7496 = vunpack.c.h.b16 %v6856
        %v7497 = vunpack.c.l.b16 %v6857
        %v7498 = vunpack.c.h.b16 %v6857
        %v7499 = vunpack.c.l.b16 %v6858
        %v7500 = vunpack.c.h.b16 %v6858
        %v7501 = vunpack.c.l.b16 %v6859
        %v7502 = vunpack.c.h.b16 %v6859
        %v7503 = vunpack.c.l.b16 %v6860
        %v7504 = vunpack.c.h.b16 %v6860
        %v7505 = vunpack.c.l.b16 %v6861
        %v7506 = vunpack.c.h.b16 %v6861
        %v7507 = vunpack.c.l.b16 %v6862
        %v7508 = vunpack.c.h.b16 %v6862
        %v7509 = vunpack.c.l.b16 %v6863
        %v7510 = vunpack.c.h.b16 %v6863
        %v7511 = vunpack.c.l.b16 %v6864
        %v7512 = vunpack.c.h.b16 %v6864
        %v7513 = vunpack.c.l.b16 %v6865
        %v7514 = vunpack.c.h.b16 %v6865
        %v7515 = vunpack.c.l.b16 %v6866
        %v7516 = vunpack.c.h.b16 %v6866
        %v7517 = vunpack.c.l.b16 %v6867
        %v7518 = vunpack.c.h.b16 %v6867
        %v7519 = vunpack.c.l.b16 %v6868
        %v7520 = vunpack.c.h.b16 %v6868
        %v7521 = vunpack.c.l.b16 %v6869
        %v7522 = vunpack.c.h.b16 %v6869
        %v7523 = vunpack.c.l.b16 %v6870
        %v7524 = vunpack.c.h.b16 %v6870
        %v7525 = vunpack.c.l.b16 %v6871
        %v7526 = vunpack.c.h.b16 %v6871
        %v7527 = vunpack.c.l.b16 %v6872
        %v7528 = vunpack.c.h.b16 %v6872
        %v7529 = vunpack.c.l.b16 %v6873
        %v7530 = vunpack.c.h.b16 %v6873
        %v7531 = vunpack.c.l.b16 %v6874
        %v7532 = vunpack.c.h.b16 %v6874
        %v7533 = vunpack.c.l.b16 %v6875
        %v7534 = vunpack.c.h.b16 %v6875
        %v7535 = vunpack.c.l.b16 %v6876
        %v7536 = vunpack.c.h.b16 %v6876
        %v7537 = vunpack.c.l.b16 %v6877
        %v7538 = vunpack.c.h.b16 %v6877
        %v7539 = vunpack.c.l.b16 %v6878
        %v7540 = vunpack.c.h.b16 %v6878
        %v7541 = vunpack.c.l.b16 %v6879
        %v7542 = vunpack.c.h.b16 %v6879
        %v7543 = vunpack.c.l.b16 %v6880
        %v7544 = vunpack.c.h.b16 %v6880
        %v7545 = vunpack.c.l.b16 %v6881
        %v7546 = vunpack.c.h.b16 %v6881
        %v7547 = vunpack.c.l.b16 %v6882
        %v7548 = vunpack.c.h.b16 %v6882
        %v7549 = vunpack.c.l.b16 %v6883
        %v7550 = vunpack.c.h.b16 %v6883
        %v7551 = vunpack.c.l.b16 %v6884
        %v7552 = vunpack.c.h.b16 %v6884
        %v7553 = vunpack.c.l.b16 %v6885
        %v7554 = vunpack.c.h.b16 %v6885
        %v7555 = vunpack.c.l.b16 %v6886
        %v7556 = vunpack.c.h.b16 %v6886
        %v7557 = vunpack.c.l.b16 %v6887
        %v7558 = vunpack.c.h.b16 %v6887
        %v7559 = vunpack.c.l.b16 %v6888
        %v7560 = vunpack.c.h.b16 %v6888
        %v7561 = vpack.c.b16 %v7113, %v7113
        %v7562 = vpack.c.b16 %v7114, %v7114
        %v7563 = vpack.c.b16 %v7115, %v7115
        %v7564 = vpack.c.b16 %v7116, %v7116
        %v7565 = vpack.c.b16 %v7117, %v7117
        %v7566 = vpack.c.b16 %v7118, %v7118
        %v7567 = vpack.c.b16 %v7119, %v7119
        %v7568 = vpack.c.b16 %v7120, %v7120
        %v7569 = vpack.c.b16 %v7121, %v7121
        %v7570 = vpack.c.b16 %v7122, %v7122
        %v7571 = vpack.c.b16 %v7123, %v7123
        %v7572 = vpack.c.b16 %v7124, %v7124
        %v7573 = vpack.c.b16 %v7125, %v7125
        %v7574 = vpack.c.b16 %v7126, %v7126
        %v7575 = vpack.c.b16 %v7127, %v7127
        %v7576 = vpack.c.b16 %v7128, %v7128
        %v7577 = vpack.c.b16 %v7129, %v7129
        %v7578 = vpack.c.b16 %v7130, %v7130
        %v7579 = vpack.c.b16 %v7131, %v7131
        %v7580 = vpack.c.b16 %v7132, %v7132
        %v7581 = vpack.c.b16 %v7133, %v7133
        %v7582 = vpack.c.b16 %v7134, %v7134
        %v7583 = vpack.c.b16 %v7135, %v7135
        %v7584 = vpack.c.b16 %v7136, %v7136
        %v7585 = vpack.c.b16 %v7137, %v7137
        %v7586 = vpack.c.b16 %v7138, %v7138
        %v7587 = vpack.c.b16 %v7139, %v7139
        %v7588 = vpack.c.b16 %v7140, %v7140
        %v7589 = vpack.c.b16 %v7141, %v7141
        %v7590 = vpack.c.b16 %v7142, %v7142
        %v7591 = vpack.c.b16 %v7143, %v7143
        %v7592 = vpack.c.b16 %v7144, %v7144
        %v7593 = vpack.c.b16 %v7145, %v7145
        %v7594 = vpack.c.b16 %v7146, %v7146
        %v7595 = vpack.c.b16 %v7147, %v7147
        %v7596 = vpack.c.b16 %v7148, %v7148
        %v7597 = vpack.c.b16 %v7149, %v7149
        %v7598 = vpack.c.b16 %v7150, %v7150
        %v7599 = vpack.c.b16 %v7151, %v7151
        %v7600 = vpack.c.b16 %v7152, %v7152
        %v7601 = vpack.c.b16 %v7153, %v7153
        %v7602 = vpack.c.b16 %v7154, %v7154
        %v7603 = vpack.c.b16 %v7155, %v7155
        %v7604 = vpack.c.b16 %v7156, %v7156
        %v7605 = vpack.c.b16 %v7157, %v7157
        %v7606 = vpack.c.b16 %v7158, %v7158
        %v7607 = vpack.c.b16 %v7159, %v7159
        %v7608 = vpack.c.b16 %v7160, %v7160
        %v7609 = vpack.c.b16 %v7161, %v7161
        %v7610 = vpack.c.b16 %v7162, %v7162
        %v7611 = vpack.c.b16 %v7163, %v7163
        %v7612 = vpack.c.b16 %v7164, %v7164
        %v7613 = vpack.c.b16 %v7165, %v7165
        %v7614 = vpack.c.b16 %v7166, %v7166
        %v7615 = vpack.c.b16 %v7167, %v7167
        %v7616 = vpack.c.b16 %v7168, %v7168
        %v7617 = vpack.c.b16 %v7169, %v7169
        %v7618 = vpack.c.b16 %v7170, %v7170
        %v7619 = vpack.c.b16 %v7171, %v7171
        %v7620 = vpack.c.b16 %v7172, %v7172
        %v7621 = vpack.c.b16 %v7173, %v7173
        %v7622 = vpack.c.b16 %v7174, %v7174
        %v7623 = vpack.c.b16 %v7175, %v7175
        %v7624 = vpack.c.b16 %v7176, %v7176
        %v7625 = vpack.c.b16 %v7177, %v7177
        %v7626 = vpack.c.b16 %v7178, %v7178
        %v7627 = vpack.c.b16 %v7179, %v7179
        %v7628 = vpack.c.b16 %v7180, %v7180
        %v7629 = vpack.c.b16 %v7181, %v7181
        %v7630 = vpack.c.b16 %v7182, %v7182
        %v7631 = vpack.c.b16 %v7183, %v7183
        %v7632 = vpack.c.b16 %v7184, %v7184
        %v7633 = vpack.c.b16 %v7185, %v7185
        %v7634 = vpack.c.b16 %v7186, %v7186
        %v7635 = vpack.c.b16 %v7187, %v7187
        %v7636 = vpack.c.b16 %v7188, %v7188
        %v7637 = vpack.c.b16 %v7189, %v7189
        %v7638 = vpack.c.b16 %v7190, %v7190
        %v7639 = vpack.c.b16 %v7191, %v7191
        %v7640 = vpack.c.b16 %v7192, %v7192
        %v7641 = vpack.c.b16 %v7193, %v7193
        %v7642 = vpack.c.b16 %v7194, %v7194
        %v7643 = vpack.c.b16 %v7195, %v7195
        %v7644 = vpack.c.b16 %v7196, %v7196
        %v7645 = vpack.c.b16 %v7197, %v7197
        %v7646 = vpack.c.b16 %v7198, %v7198
        %v7647 = vpack.c.b16 %v7199, %v7199
        %v7648 = vpack.c.b16 %v7200, %v7200
        %v7649 = vpack.c.b16 %v7201, %v7201
        %v7650 = vpack.c.b16 %v7202, %v7202
        %v7651 = vpack.c.b16 %v7203, %v7203
        %v7652 = vpack.c.b16 %v7204, %v7204
        %v7653 = vpack.c.b16 %v7205, %v7205
        %v7654 = vpack.c.b16 %v7206, %v7206
        %v7655 = vpack.c.b16 %v7207, %v7207
        %v7656 = vpack.c.b16 %v7208, %v7208
        %v7657 = vpack.c.b16 %v7209, %v7209
        %v7658 = vpack.c.b16 %v7210, %v7210
        %v7659 = vpack.c.b16 %v7211, %v7211
        %v7660 = vpack.c.b16 %v7212, %v7212
        %v7661 = vpack.c.b16 %v7213, %v7213
        %v7662 = vpack.c.b16 %v7214, %v7214
        %v7663 = vpack.c.b16 %v7215, %v7215
        %v7664 = vpack.c.b16 %v7216, %v7216
        %v7665 = vpack.c.b16 %v7217, %v7217
        %v7666 = vpack.c.b16 %v7218, %v7218
        %v7667 = vpack.c.b16 %v7219, %v7219
        %v7668 = vpack.c.b16 %v7220, %v7220
        %v7669 = vpack.c.b16 %v7221, %v7221
        %v7670 = vpack.c.b16 %v7222, %v7222
        %v7671 = vpack.c.b16 %v7223, %v7223
        %v7672 = vpack.c.b16 %v7224, %v7224
        %v7673 = vpack.c.b16 %v7225, %v7225
        %v7674 = vpack.c.b16 %v7226, %v7226
        %v7675 = vpack.c.b16 %v7227, %v7227
        %v7676 = vpack.c.b16 %v7228, %v7228
        %v7677 = vpack.c.b16 %v7229, %v7229
        %v7678 = vpack.c.b16 %v7230, %v7230
        %v7679 = vpack.c.b16 %v7231, %v7231
        %v7680 = vpack.c.b16 %v7232, %v7232
        %v7681 = vpack.c.b16 %v7233, %v7233
        %v7682 = vpack.c.b16 %v7234, %v7234
        %v7683 = vpack.c.b16 %v7235, %v7235
        %v7684 = vpack.c.b16 %v7236, %v7236
        %v7685 = vpack.c.b16 %v7237, %v7237
        %v7686 = vpack.c.b16 %v7238, %v7238
        %v7687 = vpack.c.b16 %v7239, %v7239
        %v7688 = vpack.c.b16 %v7240, %v7240
        %v7689 = vpack.c.b16 %v7241, %v7241
        %v7690 = vpack.c.b16 %v7242, %v7242
        %v7691 = vpack.c.b16 %v7243, %v7243
        %v7692 = vpack.c.b16 %v7244, %v7244
        %v7693 = vpack.c.b16 %v7245, %v7245
        %v7694 = vpack.c.b16 %v7246, %v7246
        %v7695 = vpack.c.b16 %v7247, %v7247
        %v7696 = vpack.c.b16 %v7248, %v7248
        %v7697 = vpack.c.b16 %v7249, %v7249
        %v7698 = vpack.c.b16 %v7250, %v7250
        %v7699 = vpack.c.b16 %v7251, %v7251
        %v7700 = vpack.c.b16 %v7252, %v7252
        %v7701 = vpack.c.b16 %v7253, %v7253
        %v7702 = vpack.c.b16 %v7254, %v7254
        %v7703 = vpack.c.b16 %v7255, %v7255
        %v7704 = vpack.c.b16 %v7256, %v7256
        %v7705 = vpack.c.b16 %v7257, %v7257
        %v7706 = vpack.c.b16 %v7258, %v7258
        %v7707 = vpack.c.b16 %v7259, %v7259
        %v7708 = vpack.c.b16 %v7260, %v7260
        %v7709 = vpack.c.b16 %v7261, %v7261
        %v7710 = vpack.c.b16 %v7262, %v7262
        %v7711 = vpack.c.b16 %v7263, %v7263
        %v7712 = vpack.c.b16 %v7264, %v7264
        %v7713 = vpack.c.b16 %v7265, %v7265
        %v7714 = vpack.c.b16 %v7266, %v7266
        %v7715 = vpack.c.b16 %v7267, %v7267
        %v7716 = vpack.c.b16 %v7268, %v7268
        %v7717 = vpack.c.b16 %v7269, %v7269
        %v7718 = vpack.c.b16 %v7270, %v7270
        %v7719 = vpack.c.b16 %v7271, %v7271
        %v7720 = vpack.c.b16 %v7272, %v7272
        %v7721 = vpack.c.b16 %v7273, %v7273
        %v7722 = vpack.c.b16 %v7274, %v7274
        %v7723 = vpack.c.b16 %v7275, %v7275
        %v7724 = vpack.c.b16 %v7276, %v7276
        %v7725 = vpack.c.b16 %v7277, %v7277
        %v7726 = vpack.c.b16 %v7278, %v7278
        %v7727 = vpack.c.b16 %v7279, %v7279
        %v7728 = vpack.c.b16 %v7280, %v7280
        %v7729 = vpack.c.b16 %v7281, %v7281
        %v7730 = vpack.c.b16 %v7282, %v7282
        %v7731 = vpack.c.b16 %v7283, %v7283
        %v7732 = vpack.c.b16 %v7284, %v7284
        %v7733 = vpack.c.b16 %v7285, %v7285
        %v7734 = vpack.c.b16 %v7286, %v7286
        %v7735 = vpack.c.b16 %v7287, %v7287
        %v7736 = vpack.c.b16 %v7288, %v7288
        %v7737 = vpack.c.b16 %v7289, %v7289
        %v7738 = vpack.c.b16 %v7290, %v7290
        %v7739 = vpack.c.b16 %v7291, %v7291
        %v7740 = vpack.c.b16 %v7292, %v7292
        %v7741 = vpack.c.b16 %v7293, %v7293
        %v7742 = vpack.c.b16 %v7294, %v7294
        %v7743 = vpack.c.b16 %v7295, %v7295
        %v7744 = vpack.c.b16 %v7296, %v7296
        %v7745 = vpack.c.b16 %v7297, %v7297
        %v7746 = vpack.c.b16 %v7298, %v7298
        %v7747 = vpack.c.b16 %v7299, %v7299
        %v7748 = vpack.c.b16 %v7300, %v7300
        %v7749 = vpack.c.b16 %v7301, %v7301
        %v7750 = vpack.c.b16 %v7302, %v7302
        %v7751 = vpack.c.b16 %v7303, %v7303
        %v7752 = vpack.c.b16 %v7304, %v7304
        %v7753 = vpack.c.b16 %v7305, %v7305
        %v7754 = vpack.c.b16 %v7306, %v7306
        %v7755 = vpack.c.b16 %v7307, %v7307
        %v7756 = vpack.c.b16 %v7308, %v7308
        %v7757 = vpack.c.b16 %v7309, %v7309
        %v7758 = vpack.c.b16 %v7310, %v7310
        %v7759 = vpack.c.b16 %v7311, %v7311
        %v7760 = vpack.c.b16 %v7312, %v7312
        %v7761 = vpack.c.b16 %v7313, %v7313
        %v7762 = vpack.c.b16 %v7314, %v7314
        %v7763 = vpack.c.b16 %v7315, %v7315
        %v7764 = vpack.c.b16 %v7316, %v7316
        %v7765 = vpack.c.b16 %v7317, %v7317
        %v7766 = vpack.c.b16 %v7318, %v7318
        %v7767 = vpack.c.b16 %v7319, %v7319
        %v7768 = vpack.c.b16 %v7320, %v7320
        %v7769 = vpack.c.b16 %v7321, %v7321
        %v7770 = vpack.c.b16 %v7322, %v7322
        %v7771 = vpack.c.b16 %v7323, %v7323
        %v7772 = vpack.c.b16 %v7324, %v7324
        %v7773 = vpack.c.b16 %v7325, %v7325
        %v7774 = vpack.c.b16 %v7326, %v7326
        %v7775 = vpack.c.b16 %v7327, %v7327
        %v7776 = vpack.c.b16 %v7328, %v7328
        %v7777 = vpack.c.b16 %v7329, %v7329
        %v7778 = vpack.c.b16 %v7330, %v7330
        %v7779 = vpack.c.b16 %v7331, %v7331
        %v7780 = vpack.c.b16 %v7332, %v7332
        %v7781 = vpack.c.b16 %v7333, %v7333
        %v7782 = vpack.c.b16 %v7334, %v7334
        %v7783 = vpack.c.b16 %v7335, %v7335
        %v7784 = vpack.c.b16 %v7336, %v7336
        %v7785 = vpack.c.b16 %v7337, %v7337
        %v7786 = vpack.c.b16 %v7338, %v7338
        %v7787 = vpack.c.b16 %v7339, %v7339
        %v7788 = vpack.c.b16 %v7340, %v7340
        %v7789 = vpack.c.b16 %v7341, %v7341
        %v7790 = vpack.c.b16 %v7342, %v7342
        %v7791 = vpack.c.b16 %v7343, %v7343
        %v7792 = vpack.c.b16 %v7344, %v7344
        %v7793 = vpack.c.b16 %v7345, %v7345
        %v7794 = vpack.c.b16 %v7346, %v7346
        %v7795 = vpack.c.b16 %v7347, %v7347
        %v7796 = vpack.c.b16 %v7348, %v7348
        %v7797 = vpack.c.b16 %v7349, %v7349
        %v7798 = vpack.c.b16 %v7350, %v7350
        %v7799 = vpack.c.b16 %v7351, %v7351
        %v7800 = vpack.c.b16 %v7352, %v7352
        %v7801 = vpack.c.b16 %v7353, %v7353
        %v7802 = vpack.c.b16 %v7354, %v7354
        %v7803 = vpack.c.b16 %v7355, %v7355
        %v7804 = vpack.c.b16 %v7356, %v7356
        %v7805 = vpack.c.b16 %v7357, %v7357
        %v7806 = vpack.c.b16 %v7358, %v7358
        %v7807 = vpack.c.b16 %v7359, %v7359
        %v7808 = vpack.c.b16 %v7360, %v7360
        %v7809 = vpack.c.b16 %v7361, %v7361
        %v7810 = vpack.c.b16 %v7362, %v7362
        %v7811 = vpack.c.b16 %v7363, %v7363
        %v7812 = vpack.c.b16 %v7364, %v7364
        %v7813 = vpack.c.b16 %v7365, %v7365
        %v7814 = vpack.c.b16 %v7366, %v7366
        %v7815 = vpack.c.b16 %v7367, %v7367
        %v7816 = vpack.c.b16 %v7368, %v7368
        %v7817 = vpack.c.b16 %v7369, %v7369
        %v7818 = vpack.c.b16 %v7370, %v7370
        %v7819 = vpack.c.b16 %v7371, %v7371
        %v7820 = vpack.c.b16 %v7372, %v7372
        %v7821 = vpack.c.b16 %v7373, %v7373
        %v7822 = vpack.c.b16 %v7374, %v7374
        %v7823 = vpack.c.b16 %v7375, %v7375
        %v7824 = vpack.c.b16 %v7376, %v7376
        %v7825 = vpack.c.b16 %v7377, %v7377
        %v7826 = vpack.c.b16 %v7378, %v7378
        %v7827 = vpack.c.b16 %v7379, %v7379
        %v7828 = vpack.c.b16 %v7380, %v7380
        %v7829 = vpack.c.b16 %v7381, %v7381
        %v7830 = vpack.c.b16 %v7382, %v7382
        %v7831 = vpack.c.b16 %v7383, %v7383
        %v7832 = vpack.c.b16 %v7384, %v7384
        %v7833 = vpack.c.b16 %v7385, %v7385
        %v7834 = vpack.c.b16 %v7386, %v7386
        %v7835 = vpack.c.b16 %v7387, %v7387
        %v7836 = vpack.c.b16 %v7388, %v7388
        %v7837 = vpack.c.b16 %v7389, %v7389
        %v7838 = vpack.c.b16 %v7390, %v7390
        %v7839 = vpack.c.b16 %v7391, %v7391
        %v7840 = vpack.c.b16 %v7392, %v7392
        %v7841 = vpack.c.b16 %v7393, %v7393
        %v7842 = vpack.c.b16 %v7394, %v7394
        %v7843 = vpack.c.b16 %v7395, %v7395
        %v7844 = vpack.c.b16 %v7396, %v7396
        %v7845 = vpack.c.b16 %v7397, %v7397
        %v7846 = vpack.c.b16 %v7398, %v7398
        %v7847 = vpack.c.b16 %v7399, %v7399
        %v7848 = vpack.c.b16 %v7400, %v7400
        %v7849 = vpack.c.b16 %v7401, %v7401
        %v7850 = vpack.c.b16 %v7402, %v7402
        %v7851 = vpack.c.b16 %v7403, %v7403
        %v7852 = vpack.c.b16 %v7404, %v7404
        %v7853 = vpack.c.b16 %v7405, %v7405
        %v7854 = vpack.c.b16 %v7406, %v7406
        %v7855 = vpack.c.b16 %v7407, %v7407
        %v7856 = vpack.c.b16 %v7408, %v7408
        %v7857 = vpack.c.b16 %v7409, %v7409
        %v7858 = vpack.c.b16 %v7410, %v7410
        %v7859 = vpack.c.b16 %v7411, %v7411
        %v7860 = vpack.c.b16 %v7412, %v7412
        %v7861 = vpack.c.b16 %v7413, %v7413
        %v7862 = vpack.c.b16 %v7414, %v7414
        %v7863 = vpack.c.b16 %v7415, %v7415
        %v7864 = vpack.c.b16 %v7416, %v7416
        %v7865 = vpack.c.b16 %v7417, %v7417
        %v7866 = vpack.c.b16 %v7418, %v7418
        %v7867 = vpack.c.b16 %v7419, %v7419
        %v7868 = vpack.c.b16 %v7420, %v7420
        %v7869 = vpack.c.b16 %v7421, %v7421
        %v7870 = vpack.c.b16 %v7422, %v7422
        %v7871 = vpack.c.b16 %v7423, %v7423
        %v7872 = vpack.c.b16 %v7424, %v7424
        %v7873 = vpack.c.b16 %v7425, %v7425
        %v7874 = vpack.c.b16 %v7426, %v7426
        %v7875 = vpack.c.b16 %v7427, %v7427
        %v7876 = vpack.c.b16 %v7428, %v7428
        %v7877 = vpack.c.b16 %v7429, %v7429
        %v7878 = vpack.c.b16 %v7430, %v7430
        %v7879 = vpack.c.b16 %v7431, %v7431
        %v7880 = vpack.c.b16 %v7432, %v7432
        %v7881 = vpack.c.b16 %v7433, %v7433
        %v7882 = vpack.c.b16 %v7434, %v7434
        %v7883 = vpack.c.b16 %v7435, %v7435
        %v7884 = vpack.c.b16 %v7436, %v7436
        %v7885 = vpack.c.b16 %v7437, %v7437
        %v7886 = vpack.c.b16 %v7438, %v7438
        %v7887 = vpack.c.b16 %v7439, %v7439
        %v7888 = vpack.c.b16 %v7440, %v7440
        %v7889 = vpack.c.b16 %v7441, %v7441
        %v7890 = vpack.c.b16 %v7442, %v7442
        %v7891 = vpack.c.b16 %v7443, %v7443
        %v7892 = vpack.c.b16 %v7444, %v7444
        %v7893 = vpack.c.b16 %v7445, %v7445
        %v7894 = vpack.c.b16 %v7446, %v7446
        %v7895 = vpack.c.b16 %v7447, %v7447
        %v7896 = vpack.c.b16 %v7448, %v7448
        %v7897 = vpack.c.b16 %v7449, %v7449
        %v7898 = vpack.c.b16 %v7450, %v7450
        %v7899 = vpack.c.b16 %v7451, %v7451
        %v7900 = vpack.c.b16 %v7452, %v7452
        %v7901 = vpack.c.b16 %v7453, %v7453
        %v7902 = vpack.c.b16 %v7454, %v7454
        %v7903 = vpack.c.b16 %v7455, %v7455
        %v7904 = vpack.c.b16 %v7456, %v7456
        %v7905 = vpack.c.b16 %v7457, %v7457
        %v7906 = vpack.c.b16 %v7458, %v7458
        %v7907 = vpack.c.b16 %v7459, %v7459
        %v7908 = vpack.c.b16 %v7460, %v7460
        %v7909 = vpack.c.b16 %v7461, %v7461
        %v7910 = vpack.c.b16 %v7462, %v7462
        %v7911 = vpack.c.b16 %v7463, %v7463
        %v7912 = vpack.c.b16 %v7464, %v7464
        %v7913 = vpack.c.b16 %v7465, %v7465
        %v7914 = vpack.c.b16 %v7466, %v7466
        %v7915 = vpack.c.b16 %v7467, %v7467
        %v7916 = vpack.c.b16 %v7468, %v7468
        %v7917 = vpack.c.b16 %v7469, %v7469
        %v7918 = vpack.c.b16 %v7470, %v7470
        %v7919 = vpack.c.b16 %v7471, %v7471
        %v7920 = vpack.c.b16 %v7472, %v7472
        %v7921 = vpack.c.b16 %v7473, %v7473
        %v7922 = vpack.c.b16 %v7474, %v7474
        %v7923 = vpack.c.b16 %v7475, %v7475
        %v7924 = vpack.c.b16 %v7476, %v7476
        %v7925 = vpack.c.b16 %v7477, %v7477
        %v7926 = vpack.c.b16 %v7478, %v7478
        %v7927 = vpack.c.b16 %v7479, %v7479
        %v7928 = vpack.c.b16 %v7480, %v7480
        %v7929 = vpack.c.b16 %v7481, %v7481
        %v7930 = vpack.c.b16 %v7482, %v7482
        %v7931 = vpack.c.b16 %v7483, %v7483
        %v7932 = vpack.c.b16 %v7484, %v7484
        %v7933 = vpack.c.b16 %v7485, %v7485
        %v7934 = vpack.c.b16 %v7486, %v7486
        %v7935 = vpack.c.b16 %v7487, %v7487
        %v7936 = vpack.c.b16 %v7488, %v7488
        %v7937 = vpack.c.b16 %v7489, %v7489
        %v7938 = vpack.c.b16 %v7490, %v7490
        %v7939 = vpack.c.b16 %v7491, %v7491
        %v7940 = vpack.c.b16 %v7492, %v7492
        %v7941 = vpack.c.b16 %v7493, %v7493
        %v7942 = vpack.c.b16 %v7494, %v7494
        %v7943 = vpack.c.b16 %v7495, %v7495
        %v7944 = vpack.c.b16 %v7496, %v7496
        %v7945 = vpack.c.b16 %v7497, %v7497
        %v7946 = vpack.c.b16 %v7498, %v7498
        %v7947 = vpack.c.b16 %v7499, %v7499
        %v7948 = vpack.c.b16 %v7500, %v7500
        %v7949 = vpack.c.b16 %v7501, %v7501
        %v7950 = vpack.c.b16 %v7502, %v7502
        %v7951 = vpack.c.b16 %v7503, %v7503
        %v7952 = vpack.c.b16 %v7504, %v7504
        %v7953 = vpack.c.b16 %v7505, %v7505
        %v7954 = vpack.c.b16 %v7506, %v7506
        %v7955 = vpack.c.b16 %v7507, %v7507
        %v7956 = vpack.c.b16 %v7508, %v7508
        %v7957 = vpack.c.b16 %v7509, %v7509
        %v7958 = vpack.c.b16 %v7510, %v7510
        %v7959 = vpack.c.b16 %v7511, %v7511
        %v7960 = vpack.c.b16 %v7512, %v7512
        %v7961 = vpack.c.b16 %v7513, %v7513
        %v7962 = vpack.c.b16 %v7514, %v7514
        %v7963 = vpack.c.b16 %v7515, %v7515
        %v7964 = vpack.c.b16 %v7516, %v7516
        %v7965 = vpack.c.b16 %v7517, %v7517
        %v7966 = vpack.c.b16 %v7518, %v7518
        %v7967 = vpack.c.b16 %v7519, %v7519
        %v7968 = vpack.c.b16 %v7520, %v7520
        %v7969 = vpack.c.b16 %v7521, %v7521
        %v7970 = vpack.c.b16 %v7522, %v7522
        %v7971 = vpack.c.b16 %v7523, %v7523
        %v7972 = vpack.c.b16 %v7524, %v7524
        %v7973 = vpack.c.b16 %v7525, %v7525
        %v7974 = vpack.c.b16 %v7526, %v7526
        %v7975 = vpack.c.b16 %v7527, %v7527
        %v7976 = vpack.c.b16 %v7528, %v7528
        %v7977 = vpack.c.b16 %v7529, %v7529
        %v7978 = vpack.c.b16 %v7530, %v7530
        %v7979 = vpack.c.b16 %v7531, %v7531
        %v7980 = vpack.c.b16 %v7532, %v7532
        %v7981 = vpack.c.b16 %v7533, %v7533
        %v7982 = vpack.c.b16 %v7534, %v7534
        %v7983 = vpack.c.b16 %v7535, %v7535
        %v7984 = vpack.c.b16 %v7536, %v7536
        %v7985 = vpack.c.b16 %v7537, %v7537
        %v7986 = vpack.c.b16 %v7538, %v7538
        %v7987 = vpack.c.b16 %v7539, %v7539
        %v7988 = vpack.c.b16 %v7540, %v7540
        %v7989 = vpack.c.b16 %v7541, %v7541
        %v7990 = vpack.c.b16 %v7542, %v7542
        %v7991 = vpack.c.b16 %v7543, %v7543
        %v7992 = vpack.c.b16 %v7544, %v7544
        %v7993 = vpack.c.b16 %v7545, %v7545
        %v7994 = vpack.c.b16 %v7546, %v7546
        %v7995 = vpack.c.b16 %v7547, %v7547
        %v7996 = vpack.c.b16 %v7548, %v7548
        %v7997 = vpack.c.b16 %v7549, %v7549
        %v7998 = vpack.c.b16 %v7550, %v7550
        %v7999 = vpack.c.b16 %v7551, %v7551
        %v8000 = vpack.c.b16 %v7552, %v7552
        %v8001 = vpack.c.b16 %v7553, %v7553
        %v8002 = vpack.c.b16 %v7554, %v7554
        %v8003 = vpack.c.b16 %v7555, %v7555
        %v8004 = vpack.c.b16 %v7556, %v7556
        %v8005 = vpack.c.b16 %v7557, %v7557
        %v8006 = vpack.c.b16 %v7558, %v7558
        %v8007 = vpack.c.b16 %v7559, %v7559
        %v8008 = vpack.c.b16 %v7560, %v7560
        %vm8457 = vcmask 519168
        %8458 = vst.msk [vmem:[%s242] sm:$0xf] %vm8457, %v7561
        %8459 = vst.msk [vmem:[%s242 + $0x4] sm:$0xf] %vm8457, %v7562
        %8460 = vst.msk [vmem:[%s242 + $0x8] sm:$0xf] %vm8457, %v7563
        %8461 = vst.msk [vmem:[%s242 + $0xc] sm:$0xf] %vm8457, %v7564
        %8462 = vst.msk [vmem:[%s242 + $0x10] sm:$0xf] %vm8457, %v7565
        %8463 = vst.msk [vmem:[%s242 + $0x14] sm:$0xf] %vm8457, %v7566
        %8464 = vst.msk [vmem:[%s242 + $0x18] sm:$0xf] %vm8457, %v7567
        %8465 = vst.msk [vmem:[%s242 + $0x1c] sm:$0xf] %vm8457, %v7568
        %8466 = vst.msk [vmem:[%s242 + $0x20] sm:$0xf] %vm8457, %v7569
        %8467 = vst.msk [vmem:[%s242 + $0x24] sm:$0xf] %vm8457, %v7570
        %8468 = vst.msk [vmem:[%s242 + $0x28] sm:$0xf] %vm8457, %v7571
        %8469 = vst.msk [vmem:[%s242 + $0x2c] sm:$0xf] %vm8457, %v7572
        %8470 = vst.msk [vmem:[%s242 + $0x30] sm:$0xf] %vm8457, %v7573
        %8471 = vst.msk [vmem:[%s242 + $0x34] sm:$0xf] %vm8457, %v7574
        %8472 = vst.msk [vmem:[%s242 + $0x38] sm:$0xf] %vm8457, %v7575
        %8473 = vst.msk [vmem:[%s242 + $0x3c] sm:$0xf] %vm8457, %v7576
        %8474 = vst.msk [vmem:[%s242 + $0x40] sm:$0xf] %vm8457, %v7577
        %8475 = vst.msk [vmem:[%s242 + $0x44] sm:$0xf] %vm8457, %v7578
        %8476 = vst.msk [vmem:[%s242 + $0x48] sm:$0xf] %vm8457, %v7579
        %8477 = vst.msk [vmem:[%s242 + $0x4c] sm:$0xf] %vm8457, %v7580
        %8478 = vst.msk [vmem:[%s242 + $0x50] sm:$0xf] %vm8457, %v7581
        %8479 = vst.msk [vmem:[%s242 + $0x54] sm:$0xf] %vm8457, %v7582
        %8480 = vst.msk [vmem:[%s242 + $0x58] sm:$0xf] %vm8457, %v7583
        %8481 = vst.msk [vmem:[%s242 + $0x5c] sm:$0xf] %vm8457, %v7584
        %8482 = vst.msk [vmem:[%s242 + $0x60] sm:$0xf] %vm8457, %v7585
        %8483 = vst.msk [vmem:[%s242 + $0x64] sm:$0xf] %vm8457, %v7586
        %8484 = vst.msk [vmem:[%s242 + $0x68] sm:$0xf] %vm8457, %v7587
        %8485 = vst.msk [vmem:[%s242 + $0x6c] sm:$0xf] %vm8457, %v7588
        %8486 = vst.msk [vmem:[%s242 + $0x70] sm:$0xf] %vm8457, %v7589
        %8487 = vst.msk [vmem:[%s242 + $0x74] sm:$0xf] %vm8457, %v7590
        %8488 = vst.msk [vmem:[%s242 + $0x78] sm:$0xf] %vm8457, %v7591
        %8489 = vst.msk [vmem:[%s242 + $0x7c] sm:$0xf] %vm8457, %v7592
        %8490 = vst.msk [vmem:[%s242 + $0x80] sm:$0xf] %vm8457, %v7593
        %8491 = vst.msk [vmem:[%s242 + $0x84] sm:$0xf] %vm8457, %v7594
        %8492 = vst.msk [vmem:[%s242 + $0x88] sm:$0xf] %vm8457, %v7595
        %8493 = vst.msk [vmem:[%s242 + $0x8c] sm:$0xf] %vm8457, %v7596
        %8494 = vst.msk [vmem:[%s242 + $0x90] sm:$0xf] %vm8457, %v7597
        %8495 = vst.msk [vmem:[%s242 + $0x94] sm:$0xf] %vm8457, %v7598
        %8496 = vst.msk [vmem:[%s242 + $0x98] sm:$0xf] %vm8457, %v7599
        %8497 = vst.msk [vmem:[%s242 + $0x9c] sm:$0xf] %vm8457, %v7600
        %8498 = vst.msk [vmem:[%s242 + $0xa0] sm:$0xf] %vm8457, %v7601
        %8499 = vst.msk [vmem:[%s242 + $0xa4] sm:$0xf] %vm8457, %v7602
        %8500 = vst.msk [vmem:[%s242 + $0xa8] sm:$0xf] %vm8457, %v7603
        %8501 = vst.msk [vmem:[%s242 + $0xac] sm:$0xf] %vm8457, %v7604
        %8502 = vst.msk [vmem:[%s242 + $0xb0] sm:$0xf] %vm8457, %v7605
        %8503 = vst.msk [vmem:[%s242 + $0xb4] sm:$0xf] %vm8457, %v7606
        %8504 = vst.msk [vmem:[%s242 + $0xb8] sm:$0xf] %vm8457, %v7607
        %8505 = vst.msk [vmem:[%s242 + $0xbc] sm:$0xf] %vm8457, %v7608
        %8506 = vst.msk [vmem:[%s242 + $0xc0] sm:$0xf] %vm8457, %v7609
        %8507 = vst.msk [vmem:[%s242 + $0xc4] sm:$0xf] %vm8457, %v7610
        %8508 = vst.msk [vmem:[%s242 + $0xc8] sm:$0xf] %vm8457, %v7611
        %8509 = vst.msk [vmem:[%s242 + $0xcc] sm:$0xf] %vm8457, %v7612
        %8510 = vst.msk [vmem:[%s242 + $0xd0] sm:$0xf] %vm8457, %v7613
        %8511 = vst.msk [vmem:[%s242 + $0xd4] sm:$0xf] %vm8457, %v7614
        %8512 = vst.msk [vmem:[%s242 + $0xd8] sm:$0xf] %vm8457, %v7615
        %8513 = vst.msk [vmem:[%s242 + $0xdc] sm:$0xf] %vm8457, %v7616
        %8514 = vst.msk [vmem:[%s242 + $0xe0] sm:$0xf] %vm8457, %v7617
        %8515 = vst.msk [vmem:[%s242 + $0xe4] sm:$0xf] %vm8457, %v7618
        %8516 = vst.msk [vmem:[%s242 + $0xe8] sm:$0xf] %vm8457, %v7619
        %8517 = vst.msk [vmem:[%s242 + $0xec] sm:$0xf] %vm8457, %v7620
        %8518 = vst.msk [vmem:[%s242 + $0xf0] sm:$0xf] %vm8457, %v7621
        %8519 = vst.msk [vmem:[%s242 + $0xf4] sm:$0xf] %vm8457, %v7622
        %8520 = vst.msk [vmem:[%s242 + $0xf8] sm:$0xf] %vm8457, %v7623
        %8521 = vst.msk [vmem:[%s242 + $0xfc] sm:$0xf] %vm8457, %v7624
        %8522 = vst.msk [vmem:[%s242 + $0x100] sm:$0xf] %vm8457, %v7625
        %8523 = vst.msk [vmem:[%s242 + $0x104] sm:$0xf] %vm8457, %v7626
        %8524 = vst.msk [vmem:[%s242 + $0x108] sm:$0xf] %vm8457, %v7627
        %8525 = vst.msk [vmem:[%s242 + $0x10c] sm:$0xf] %vm8457, %v7628
        %8526 = vst.msk [vmem:[%s242 + $0x110] sm:$0xf] %vm8457, %v7629
        %8527 = vst.msk [vmem:[%s242 + $0x114] sm:$0xf] %vm8457, %v7630
        %8528 = vst.msk [vmem:[%s242 + $0x118] sm:$0xf] %vm8457, %v7631
        %8529 = vst.msk [vmem:[%s242 + $0x11c] sm:$0xf] %vm8457, %v7632
        %8530 = vst.msk [vmem:[%s242 + $0x120] sm:$0xf] %vm8457, %v7633
        %8531 = vst.msk [vmem:[%s242 + $0x124] sm:$0xf] %vm8457, %v7634
        %8532 = vst.msk [vmem:[%s242 + $0x128] sm:$0xf] %vm8457, %v7635
        %8533 = vst.msk [vmem:[%s242 + $0x12c] sm:$0xf] %vm8457, %v7636
        %8534 = vst.msk [vmem:[%s242 + $0x130] sm:$0xf] %vm8457, %v7637
        %8535 = vst.msk [vmem:[%s242 + $0x134] sm:$0xf] %vm8457, %v7638
        %8536 = vst.msk [vmem:[%s242 + $0x138] sm:$0xf] %vm8457, %v7639
        %8537 = vst.msk [vmem:[%s242 + $0x13c] sm:$0xf] %vm8457, %v7640
        %8538 = vst.msk [vmem:[%s242 + $0x140] sm:$0xf] %vm8457, %v7641
        %8539 = vst.msk [vmem:[%s242 + $0x144] sm:$0xf] %vm8457, %v7642
        %8540 = vst.msk [vmem:[%s242 + $0x148] sm:$0xf] %vm8457, %v7643
        %8541 = vst.msk [vmem:[%s242 + $0x14c] sm:$0xf] %vm8457, %v7644
        %8542 = vst.msk [vmem:[%s242 + $0x150] sm:$0xf] %vm8457, %v7645
        %8543 = vst.msk [vmem:[%s242 + $0x154] sm:$0xf] %vm8457, %v7646
        %8544 = vst.msk [vmem:[%s242 + $0x158] sm:$0xf] %vm8457, %v7647
        %8545 = vst.msk [vmem:[%s242 + $0x15c] sm:$0xf] %vm8457, %v7648
        %8546 = vst.msk [vmem:[%s242 + $0x160] sm:$0xf] %vm8457, %v7649
        %8547 = vst.msk [vmem:[%s242 + $0x164] sm:$0xf] %vm8457, %v7650
        %8548 = vst.msk [vmem:[%s242 + $0x168] sm:$0xf] %vm8457, %v7651
        %8549 = vst.msk [vmem:[%s242 + $0x16c] sm:$0xf] %vm8457, %v7652
        %8550 = vst.msk [vmem:[%s242 + $0x170] sm:$0xf] %vm8457, %v7653
        %8551 = vst.msk [vmem:[%s242 + $0x174] sm:$0xf] %vm8457, %v7654
        %8552 = vst.msk [vmem:[%s242 + $0x178] sm:$0xf] %vm8457, %v7655
        %8553 = vst.msk [vmem:[%s242 + $0x17c] sm:$0xf] %vm8457, %v7656
        %8554 = vst.msk [vmem:[%s242 + $0x180] sm:$0xf] %vm8457, %v7657
        %8555 = vst.msk [vmem:[%s242 + $0x184] sm:$0xf] %vm8457, %v7658
        %8556 = vst.msk [vmem:[%s242 + $0x188] sm:$0xf] %vm8457, %v7659
        %8557 = vst.msk [vmem:[%s242 + $0x18c] sm:$0xf] %vm8457, %v7660
        %8558 = vst.msk [vmem:[%s242 + $0x190] sm:$0xf] %vm8457, %v7661
        %8559 = vst.msk [vmem:[%s242 + $0x194] sm:$0xf] %vm8457, %v7662
        %8560 = vst.msk [vmem:[%s242 + $0x198] sm:$0xf] %vm8457, %v7663
        %8561 = vst.msk [vmem:[%s242 + $0x19c] sm:$0xf] %vm8457, %v7664
        %8562 = vst.msk [vmem:[%s242 + $0x1a0] sm:$0xf] %vm8457, %v7665
        %8563 = vst.msk [vmem:[%s242 + $0x1a4] sm:$0xf] %vm8457, %v7666
        %8564 = vst.msk [vmem:[%s242 + $0x1a8] sm:$0xf] %vm8457, %v7667
        %8565 = vst.msk [vmem:[%s242 + $0x1ac] sm:$0xf] %vm8457, %v7668
        %8566 = vst.msk [vmem:[%s242 + $0x1b0] sm:$0xf] %vm8457, %v7669
        %8567 = vst.msk [vmem:[%s242 + $0x1b4] sm:$0xf] %vm8457, %v7670
        %8568 = vst.msk [vmem:[%s242 + $0x1b8] sm:$0xf] %vm8457, %v7671
        %8569 = vst.msk [vmem:[%s242 + $0x1bc] sm:$0xf] %vm8457, %v7672
        %8570 = vst.msk [vmem:[%s242 + $0x1c0] sm:$0xf] %vm8457, %v7673
        %8571 = vst.msk [vmem:[%s242 + $0x1c4] sm:$0xf] %vm8457, %v7674
        %8572 = vst.msk [vmem:[%s242 + $0x1c8] sm:$0xf] %vm8457, %v7675
        %8573 = vst.msk [vmem:[%s242 + $0x1cc] sm:$0xf] %vm8457, %v7676
        %8574 = vst.msk [vmem:[%s242 + $0x1d0] sm:$0xf] %vm8457, %v7677
        %8575 = vst.msk [vmem:[%s242 + $0x1d4] sm:$0xf] %vm8457, %v7678
        %8576 = vst.msk [vmem:[%s242 + $0x1d8] sm:$0xf] %vm8457, %v7679
        %8577 = vst.msk [vmem:[%s242 + $0x1dc] sm:$0xf] %vm8457, %v7680
        %8578 = vst.msk [vmem:[%s242 + $0x1e0] sm:$0xf] %vm8457, %v7681
        %8579 = vst.msk [vmem:[%s242 + $0x1e4] sm:$0xf] %vm8457, %v7682
        %8580 = vst.msk [vmem:[%s242 + $0x1e8] sm:$0xf] %vm8457, %v7683
        %8581 = vst.msk [vmem:[%s242 + $0x1ec] sm:$0xf] %vm8457, %v7684
        %8582 = vst.msk [vmem:[%s242 + $0x1f0] sm:$0xf] %vm8457, %v7685
        %8583 = vst.msk [vmem:[%s242 + $0x1f4] sm:$0xf] %vm8457, %v7686
        %8584 = vst.msk [vmem:[%s242 + $0x1f8] sm:$0xf] %vm8457, %v7687
        %8585 = vst.msk [vmem:[%s242 + $0x1fc] sm:$0xf] %vm8457, %v7688
        %8586 = vst.msk [vmem:[%s242 + $0x200] sm:$0xf] %vm8457, %v7689
        %8587 = vst.msk [vmem:[%s242 + $0x204] sm:$0xf] %vm8457, %v7690
        %8588 = vst.msk [vmem:[%s242 + $0x208] sm:$0xf] %vm8457, %v7691
        %8589 = vst.msk [vmem:[%s242 + $0x20c] sm:$0xf] %vm8457, %v7692
        %8590 = vst.msk [vmem:[%s242 + $0x210] sm:$0xf] %vm8457, %v7693
        %8591 = vst.msk [vmem:[%s242 + $0x214] sm:$0xf] %vm8457, %v7694
        %8592 = vst.msk [vmem:[%s242 + $0x218] sm:$0xf] %vm8457, %v7695
        %8593 = vst.msk [vmem:[%s242 + $0x21c] sm:$0xf] %vm8457, %v7696
        %8594 = vst.msk [vmem:[%s242 + $0x220] sm:$0xf] %vm8457, %v7697
        %8595 = vst.msk [vmem:[%s242 + $0x224] sm:$0xf] %vm8457, %v7698
        %8596 = vst.msk [vmem:[%s242 + $0x228] sm:$0xf] %vm8457, %v7699
        %8597 = vst.msk [vmem:[%s242 + $0x22c] sm:$0xf] %vm8457, %v7700
        %8598 = vst.msk [vmem:[%s242 + $0x230] sm:$0xf] %vm8457, %v7701
        %8599 = vst.msk [vmem:[%s242 + $0x234] sm:$0xf] %vm8457, %v7702
        %8600 = vst.msk [vmem:[%s242 + $0x238] sm:$0xf] %vm8457, %v7703
        %8601 = vst.msk [vmem:[%s242 + $0x23c] sm:$0xf] %vm8457, %v7704
        %8602 = vst.msk [vmem:[%s242 + $0x240] sm:$0xf] %vm8457, %v7705
        %8603 = vst.msk [vmem:[%s242 + $0x244] sm:$0xf] %vm8457, %v7706
        %8604 = vst.msk [vmem:[%s242 + $0x248] sm:$0xf] %vm8457, %v7707
        %8605 = vst.msk [vmem:[%s242 + $0x24c] sm:$0xf] %vm8457, %v7708
        %8606 = vst.msk [vmem:[%s242 + $0x250] sm:$0xf] %vm8457, %v7709
        %8607 = vst.msk [vmem:[%s242 + $0x254] sm:$0xf] %vm8457, %v7710
        %8608 = vst.msk [vmem:[%s242 + $0x258] sm:$0xf] %vm8457, %v7711
        %8609 = vst.msk [vmem:[%s242 + $0x25c] sm:$0xf] %vm8457, %v7712
        %8610 = vst.msk [vmem:[%s242 + $0x260] sm:$0xf] %vm8457, %v7713
        %8611 = vst.msk [vmem:[%s242 + $0x264] sm:$0xf] %vm8457, %v7714
        %8612 = vst.msk [vmem:[%s242 + $0x268] sm:$0xf] %vm8457, %v7715
        %8613 = vst.msk [vmem:[%s242 + $0x26c] sm:$0xf] %vm8457, %v7716
        %8614 = vst.msk [vmem:[%s242 + $0x270] sm:$0xf] %vm8457, %v7717
        %8615 = vst.msk [vmem:[%s242 + $0x274] sm:$0xf] %vm8457, %v7718
        %8616 = vst.msk [vmem:[%s242 + $0x278] sm:$0xf] %vm8457, %v7719
        %8617 = vst.msk [vmem:[%s242 + $0x27c] sm:$0xf] %vm8457, %v7720
        %8618 = vst.msk [vmem:[%s242 + $0x280] sm:$0xf] %vm8457, %v7721
        %8619 = vst.msk [vmem:[%s242 + $0x284] sm:$0xf] %vm8457, %v7722
        %8620 = vst.msk [vmem:[%s242 + $0x288] sm:$0xf] %vm8457, %v7723
        %8621 = vst.msk [vmem:[%s242 + $0x28c] sm:$0xf] %vm8457, %v7724
        %8622 = vst.msk [vmem:[%s242 + $0x290] sm:$0xf] %vm8457, %v7725
        %8623 = vst.msk [vmem:[%s242 + $0x294] sm:$0xf] %vm8457, %v7726
        %8624 = vst.msk [vmem:[%s242 + $0x298] sm:$0xf] %vm8457, %v7727
        %8625 = vst.msk [vmem:[%s242 + $0x29c] sm:$0xf] %vm8457, %v7728
        %8626 = vst.msk [vmem:[%s242 + $0x2a0] sm:$0xf] %vm8457, %v7729
        %8627 = vst.msk [vmem:[%s242 + $0x2a4] sm:$0xf] %vm8457, %v7730
        %8628 = vst.msk [vmem:[%s242 + $0x2a8] sm:$0xf] %vm8457, %v7731
        %8629 = vst.msk [vmem:[%s242 + $0x2ac] sm:$0xf] %vm8457, %v7732
        %8630 = vst.msk [vmem:[%s242 + $0x2b0] sm:$0xf] %vm8457, %v7733
        %8631 = vst.msk [vmem:[%s242 + $0x2b4] sm:$0xf] %vm8457, %v7734
        %8632 = vst.msk [vmem:[%s242 + $0x2b8] sm:$0xf] %vm8457, %v7735
        %8633 = vst.msk [vmem:[%s242 + $0x2bc] sm:$0xf] %vm8457, %v7736
        %8634 = vst.msk [vmem:[%s242 + $0x2c0] sm:$0xf] %vm8457, %v7737
        %8635 = vst.msk [vmem:[%s242 + $0x2c4] sm:$0xf] %vm8457, %v7738
        %8636 = vst.msk [vmem:[%s242 + $0x2c8] sm:$0xf] %vm8457, %v7739
        %8637 = vst.msk [vmem:[%s242 + $0x2cc] sm:$0xf] %vm8457, %v7740
        %8638 = vst.msk [vmem:[%s242 + $0x2d0] sm:$0xf] %vm8457, %v7741
        %8639 = vst.msk [vmem:[%s242 + $0x2d4] sm:$0xf] %vm8457, %v7742
        %8640 = vst.msk [vmem:[%s242 + $0x2d8] sm:$0xf] %vm8457, %v7743
        %8641 = vst.msk [vmem:[%s242 + $0x2dc] sm:$0xf] %vm8457, %v7744
        %8642 = vst.msk [vmem:[%s242 + $0x2e0] sm:$0xf] %vm8457, %v7745
        %8643 = vst.msk [vmem:[%s242 + $0x2e4] sm:$0xf] %vm8457, %v7746
        %8644 = vst.msk [vmem:[%s242 + $0x2e8] sm:$0xf] %vm8457, %v7747
        %8645 = vst.msk [vmem:[%s242 + $0x2ec] sm:$0xf] %vm8457, %v7748
        %8646 = vst.msk [vmem:[%s242 + $0x2f0] sm:$0xf] %vm8457, %v7749
        %8647 = vst.msk [vmem:[%s242 + $0x2f4] sm:$0xf] %vm8457, %v7750
        %8648 = vst.msk [vmem:[%s242 + $0x2f8] sm:$0xf] %vm8457, %v7751
        %8649 = vst.msk [vmem:[%s242 + $0x2fc] sm:$0xf] %vm8457, %v7752
        %8650 = vst.msk [vmem:[%s242 + $0x300] sm:$0xf] %vm8457, %v7753
        %8651 = vst.msk [vmem:[%s242 + $0x304] sm:$0xf] %vm8457, %v7754
        %8652 = vst.msk [vmem:[%s242 + $0x308] sm:$0xf] %vm8457, %v7755
        %8653 = vst.msk [vmem:[%s242 + $0x30c] sm:$0xf] %vm8457, %v7756
        %8654 = vst.msk [vmem:[%s242 + $0x310] sm:$0xf] %vm8457, %v7757
        %8655 = vst.msk [vmem:[%s242 + $0x314] sm:$0xf] %vm8457, %v7758
        %8656 = vst.msk [vmem:[%s242 + $0x318] sm:$0xf] %vm8457, %v7759
        %8657 = vst.msk [vmem:[%s242 + $0x31c] sm:$0xf] %vm8457, %v7760
        %8658 = vst.msk [vmem:[%s242 + $0x320] sm:$0xf] %vm8457, %v7761
        %8659 = vst.msk [vmem:[%s242 + $0x324] sm:$0xf] %vm8457, %v7762
        %8660 = vst.msk [vmem:[%s242 + $0x328] sm:$0xf] %vm8457, %v7763
        %8661 = vst.msk [vmem:[%s242 + $0x32c] sm:$0xf] %vm8457, %v7764
        %8662 = vst.msk [vmem:[%s242 + $0x330] sm:$0xf] %vm8457, %v7765
        %8663 = vst.msk [vmem:[%s242 + $0x334] sm:$0xf] %vm8457, %v7766
        %8664 = vst.msk [vmem:[%s242 + $0x338] sm:$0xf] %vm8457, %v7767
        %8665 = vst.msk [vmem:[%s242 + $0x33c] sm:$0xf] %vm8457, %v7768
        %8666 = vst.msk [vmem:[%s242 + $0x340] sm:$0xf] %vm8457, %v7769
        %8667 = vst.msk [vmem:[%s242 + $0x344] sm:$0xf] %vm8457, %v7770
        %8668 = vst.msk [vmem:[%s242 + $0x348] sm:$0xf] %vm8457, %v7771
        %8669 = vst.msk [vmem:[%s242 + $0x34c] sm:$0xf] %vm8457, %v7772
        %8670 = vst.msk [vmem:[%s242 + $0x350] sm:$0xf] %vm8457, %v7773
        %8671 = vst.msk [vmem:[%s242 + $0x354] sm:$0xf] %vm8457, %v7774
        %8672 = vst.msk [vmem:[%s242 + $0x358] sm:$0xf] %vm8457, %v7775
        %8673 = vst.msk [vmem:[%s242 + $0x35c] sm:$0xf] %vm8457, %v7776
        %8674 = vst.msk [vmem:[%s242 + $0x360] sm:$0xf] %vm8457, %v7777
        %8675 = vst.msk [vmem:[%s242 + $0x364] sm:$0xf] %vm8457, %v7778
        %8676 = vst.msk [vmem:[%s242 + $0x368] sm:$0xf] %vm8457, %v7779
        %8677 = vst.msk [vmem:[%s242 + $0x36c] sm:$0xf] %vm8457, %v7780
        %8678 = vst.msk [vmem:[%s242 + $0x370] sm:$0xf] %vm8457, %v7781
        %8679 = vst.msk [vmem:[%s242 + $0x374] sm:$0xf] %vm8457, %v7782
        %8680 = vst.msk [vmem:[%s242 + $0x378] sm:$0xf] %vm8457, %v7783
        %8681 = vst.msk [vmem:[%s242 + $0x37c] sm:$0xf] %vm8457, %v7784
        %8682 = vst.msk [vmem:[%s242 + $0x380] sm:$0xf] %vm8457, %v7785
        %8683 = vst.msk [vmem:[%s242 + $0x384] sm:$0xf] %vm8457, %v7786
        %8684 = vst.msk [vmem:[%s242 + $0x388] sm:$0xf] %vm8457, %v7787
        %8685 = vst.msk [vmem:[%s242 + $0x38c] sm:$0xf] %vm8457, %v7788
        %8686 = vst.msk [vmem:[%s242 + $0x390] sm:$0xf] %vm8457, %v7789
        %8687 = vst.msk [vmem:[%s242 + $0x394] sm:$0xf] %vm8457, %v7790
        %8688 = vst.msk [vmem:[%s242 + $0x398] sm:$0xf] %vm8457, %v7791
        %8689 = vst.msk [vmem:[%s242 + $0x39c] sm:$0xf] %vm8457, %v7792
        %8690 = vst.msk [vmem:[%s242 + $0x3a0] sm:$0xf] %vm8457, %v7793
        %8691 = vst.msk [vmem:[%s242 + $0x3a4] sm:$0xf] %vm8457, %v7794
        %8692 = vst.msk [vmem:[%s242 + $0x3a8] sm:$0xf] %vm8457, %v7795
        %8693 = vst.msk [vmem:[%s242 + $0x3ac] sm:$0xf] %vm8457, %v7796
        %8694 = vst.msk [vmem:[%s242 + $0x3b0] sm:$0xf] %vm8457, %v7797
        %8695 = vst.msk [vmem:[%s242 + $0x3b4] sm:$0xf] %vm8457, %v7798
        %8696 = vst.msk [vmem:[%s242 + $0x3b8] sm:$0xf] %vm8457, %v7799
        %8697 = vst.msk [vmem:[%s242 + $0x3bc] sm:$0xf] %vm8457, %v7800
        %8698 = vst.msk [vmem:[%s242 + $0x3c0] sm:$0xf] %vm8457, %v7801
        %8699 = vst.msk [vmem:[%s242 + $0x3c4] sm:$0xf] %vm8457, %v7802
        %8700 = vst.msk [vmem:[%s242 + $0x3c8] sm:$0xf] %vm8457, %v7803
        %8701 = vst.msk [vmem:[%s242 + $0x3cc] sm:$0xf] %vm8457, %v7804
        %8702 = vst.msk [vmem:[%s242 + $0x3d0] sm:$0xf] %vm8457, %v7805
        %8703 = vst.msk [vmem:[%s242 + $0x3d4] sm:$0xf] %vm8457, %v7806
        %8704 = vst.msk [vmem:[%s242 + $0x3d8] sm:$0xf] %vm8457, %v7807
        %8705 = vst.msk [vmem:[%s242 + $0x3dc] sm:$0xf] %vm8457, %v7808
        %8706 = vst.msk [vmem:[%s242 + $0x3e0] sm:$0xf] %vm8457, %v7809
        %8707 = vst.msk [vmem:[%s242 + $0x3e4] sm:$0xf] %vm8457, %v7810
        %8708 = vst.msk [vmem:[%s242 + $0x3e8] sm:$0xf] %vm8457, %v7811
        %8709 = vst.msk [vmem:[%s242 + $0x3ec] sm:$0xf] %vm8457, %v7812
        %8710 = vst.msk [vmem:[%s242 + $0x3f0] sm:$0xf] %vm8457, %v7813
        %8711 = vst.msk [vmem:[%s242 + $0x3f4] sm:$0xf] %vm8457, %v7814
        %8712 = vst.msk [vmem:[%s242 + $0x3f8] sm:$0xf] %vm8457, %v7815
        %8713 = vst.msk [vmem:[%s242 + $0x3fc] sm:$0xf] %vm8457, %v7816
        %8714 = vst.msk [vmem:[%s242 + $0x400] sm:$0xf] %vm8457, %v7817
        %8715 = vst.msk [vmem:[%s242 + $0x404] sm:$0xf] %vm8457, %v7818
        %8716 = vst.msk [vmem:[%s242 + $0x408] sm:$0xf] %vm8457, %v7819
        %8717 = vst.msk [vmem:[%s242 + $0x40c] sm:$0xf] %vm8457, %v7820
        %8718 = vst.msk [vmem:[%s242 + $0x410] sm:$0xf] %vm8457, %v7821
        %8719 = vst.msk [vmem:[%s242 + $0x414] sm:$0xf] %vm8457, %v7822
        %8720 = vst.msk [vmem:[%s242 + $0x418] sm:$0xf] %vm8457, %v7823
        %8721 = vst.msk [vmem:[%s242 + $0x41c] sm:$0xf] %vm8457, %v7824
        %8722 = vst.msk [vmem:[%s242 + $0x420] sm:$0xf] %vm8457, %v7825
        %8723 = vst.msk [vmem:[%s242 + $0x424] sm:$0xf] %vm8457, %v7826
        %8724 = vst.msk [vmem:[%s242 + $0x428] sm:$0xf] %vm8457, %v7827
        %8725 = vst.msk [vmem:[%s242 + $0x42c] sm:$0xf] %vm8457, %v7828
        %8726 = vst.msk [vmem:[%s242 + $0x430] sm:$0xf] %vm8457, %v7829
        %8727 = vst.msk [vmem:[%s242 + $0x434] sm:$0xf] %vm8457, %v7830
        %8728 = vst.msk [vmem:[%s242 + $0x438] sm:$0xf] %vm8457, %v7831
        %8729 = vst.msk [vmem:[%s242 + $0x43c] sm:$0xf] %vm8457, %v7832
        %8730 = vst.msk [vmem:[%s242 + $0x440] sm:$0xf] %vm8457, %v7833
        %8731 = vst.msk [vmem:[%s242 + $0x444] sm:$0xf] %vm8457, %v7834
        %8732 = vst.msk [vmem:[%s242 + $0x448] sm:$0xf] %vm8457, %v7835
        %8733 = vst.msk [vmem:[%s242 + $0x44c] sm:$0xf] %vm8457, %v7836
        %8734 = vst.msk [vmem:[%s242 + $0x450] sm:$0xf] %vm8457, %v7837
        %8735 = vst.msk [vmem:[%s242 + $0x454] sm:$0xf] %vm8457, %v7838
        %8736 = vst.msk [vmem:[%s242 + $0x458] sm:$0xf] %vm8457, %v7839
        %8737 = vst.msk [vmem:[%s242 + $0x45c] sm:$0xf] %vm8457, %v7840
        %8738 = vst.msk [vmem:[%s242 + $0x460] sm:$0xf] %vm8457, %v7841
        %8739 = vst.msk [vmem:[%s242 + $0x464] sm:$0xf] %vm8457, %v7842
        %8740 = vst.msk [vmem:[%s242 + $0x468] sm:$0xf] %vm8457, %v7843
        %8741 = vst.msk [vmem:[%s242 + $0x46c] sm:$0xf] %vm8457, %v7844
        %8742 = vst.msk [vmem:[%s242 + $0x470] sm:$0xf] %vm8457, %v7845
        %8743 = vst.msk [vmem:[%s242 + $0x474] sm:$0xf] %vm8457, %v7846
        %8744 = vst.msk [vmem:[%s242 + $0x478] sm:$0xf] %vm8457, %v7847
        %8745 = vst.msk [vmem:[%s242 + $0x47c] sm:$0xf] %vm8457, %v7848
        %8746 = vst.msk [vmem:[%s242 + $0x480] sm:$0xf] %vm8457, %v7849
        %8747 = vst.msk [vmem:[%s242 + $0x484] sm:$0xf] %vm8457, %v7850
        %8748 = vst.msk [vmem:[%s242 + $0x488] sm:$0xf] %vm8457, %v7851
        %8749 = vst.msk [vmem:[%s242 + $0x48c] sm:$0xf] %vm8457, %v7852
        %8750 = vst.msk [vmem:[%s242 + $0x490] sm:$0xf] %vm8457, %v7853
        %8751 = vst.msk [vmem:[%s242 + $0x494] sm:$0xf] %vm8457, %v7854
        %8752 = vst.msk [vmem:[%s242 + $0x498] sm:$0xf] %vm8457, %v7855
        %8753 = vst.msk [vmem:[%s242 + $0x49c] sm:$0xf] %vm8457, %v7856
        %8754 = vst.msk [vmem:[%s242 + $0x4a0] sm:$0xf] %vm8457, %v7857
        %8755 = vst.msk [vmem:[%s242 + $0x4a4] sm:$0xf] %vm8457, %v7858
        %8756 = vst.msk [vmem:[%s242 + $0x4a8] sm:$0xf] %vm8457, %v7859
        %8757 = vst.msk [vmem:[%s242 + $0x4ac] sm:$0xf] %vm8457, %v7860
        %8758 = vst.msk [vmem:[%s242 + $0x4b0] sm:$0xf] %vm8457, %v7861
        %8759 = vst.msk [vmem:[%s242 + $0x4b4] sm:$0xf] %vm8457, %v7862
        %8760 = vst.msk [vmem:[%s242 + $0x4b8] sm:$0xf] %vm8457, %v7863
        %8761 = vst.msk [vmem:[%s242 + $0x4bc] sm:$0xf] %vm8457, %v7864
        %8762 = vst.msk [vmem:[%s242 + $0x4c0] sm:$0xf] %vm8457, %v7865
        %8763 = vst.msk [vmem:[%s242 + $0x4c4] sm:$0xf] %vm8457, %v7866
        %8764 = vst.msk [vmem:[%s242 + $0x4c8] sm:$0xf] %vm8457, %v7867
        %8765 = vst.msk [vmem:[%s242 + $0x4cc] sm:$0xf] %vm8457, %v7868
        %8766 = vst.msk [vmem:[%s242 + $0x4d0] sm:$0xf] %vm8457, %v7869
        %8767 = vst.msk [vmem:[%s242 + $0x4d4] sm:$0xf] %vm8457, %v7870
        %8768 = vst.msk [vmem:[%s242 + $0x4d8] sm:$0xf] %vm8457, %v7871
        %8769 = vst.msk [vmem:[%s242 + $0x4dc] sm:$0xf] %vm8457, %v7872
        %8770 = vst.msk [vmem:[%s242 + $0x4e0] sm:$0xf] %vm8457, %v7873
        %8771 = vst.msk [vmem:[%s242 + $0x4e4] sm:$0xf] %vm8457, %v7874
        %8772 = vst.msk [vmem:[%s242 + $0x4e8] sm:$0xf] %vm8457, %v7875
        %8773 = vst.msk [vmem:[%s242 + $0x4ec] sm:$0xf] %vm8457, %v7876
        %8774 = vst.msk [vmem:[%s242 + $0x4f0] sm:$0xf] %vm8457, %v7877
        %8775 = vst.msk [vmem:[%s242 + $0x4f4] sm:$0xf] %vm8457, %v7878
        %8776 = vst.msk [vmem:[%s242 + $0x4f8] sm:$0xf] %vm8457, %v7879
        %8777 = vst.msk [vmem:[%s242 + $0x4fc] sm:$0xf] %vm8457, %v7880
        %8778 = vst.msk [vmem:[%s242 + $0x500] sm:$0xf] %vm8457, %v7881
        %8779 = vst.msk [vmem:[%s242 + $0x504] sm:$0xf] %vm8457, %v7882
        %8780 = vst.msk [vmem:[%s242 + $0x508] sm:$0xf] %vm8457, %v7883
        %8781 = vst.msk [vmem:[%s242 + $0x50c] sm:$0xf] %vm8457, %v7884
        %8782 = vst.msk [vmem:[%s242 + $0x510] sm:$0xf] %vm8457, %v7885
        %8783 = vst.msk [vmem:[%s242 + $0x514] sm:$0xf] %vm8457, %v7886
        %8784 = vst.msk [vmem:[%s242 + $0x518] sm:$0xf] %vm8457, %v7887
        %8785 = vst.msk [vmem:[%s242 + $0x51c] sm:$0xf] %vm8457, %v7888
        %8786 = vst.msk [vmem:[%s242 + $0x520] sm:$0xf] %vm8457, %v7889
        %8787 = vst.msk [vmem:[%s242 + $0x524] sm:$0xf] %vm8457, %v7890
        %8788 = vst.msk [vmem:[%s242 + $0x528] sm:$0xf] %vm8457, %v7891
        %8789 = vst.msk [vmem:[%s242 + $0x52c] sm:$0xf] %vm8457, %v7892
        %8790 = vst.msk [vmem:[%s242 + $0x530] sm:$0xf] %vm8457, %v7893
        %8791 = vst.msk [vmem:[%s242 + $0x534] sm:$0xf] %vm8457, %v7894
        %8792 = vst.msk [vmem:[%s242 + $0x538] sm:$0xf] %vm8457, %v7895
        %8793 = vst.msk [vmem:[%s242 + $0x53c] sm:$0xf] %vm8457, %v7896
        %8794 = vst.msk [vmem:[%s242 + $0x540] sm:$0xf] %vm8457, %v7897
        %8795 = vst.msk [vmem:[%s242 + $0x544] sm:$0xf] %vm8457, %v7898
        %8796 = vst.msk [vmem:[%s242 + $0x548] sm:$0xf] %vm8457, %v7899
        %8797 = vst.msk [vmem:[%s242 + $0x54c] sm:$0xf] %vm8457, %v7900
        %8798 = vst.msk [vmem:[%s242 + $0x550] sm:$0xf] %vm8457, %v7901
        %8799 = vst.msk [vmem:[%s242 + $0x554] sm:$0xf] %vm8457, %v7902
        %8800 = vst.msk [vmem:[%s242 + $0x558] sm:$0xf] %vm8457, %v7903
        %8801 = vst.msk [vmem:[%s242 + $0x55c] sm:$0xf] %vm8457, %v7904
        %8802 = vst.msk [vmem:[%s242 + $0x560] sm:$0xf] %vm8457, %v7905
        %8803 = vst.msk [vmem:[%s242 + $0x564] sm:$0xf] %vm8457, %v7906
        %8804 = vst.msk [vmem:[%s242 + $0x568] sm:$0xf] %vm8457, %v7907
        %8805 = vst.msk [vmem:[%s242 + $0x56c] sm:$0xf] %vm8457, %v7908
        %8806 = vst.msk [vmem:[%s242 + $0x570] sm:$0xf] %vm8457, %v7909
        %8807 = vst.msk [vmem:[%s242 + $0x574] sm:$0xf] %vm8457, %v7910
        %8808 = vst.msk [vmem:[%s242 + $0x578] sm:$0xf] %vm8457, %v7911
        %8809 = vst.msk [vmem:[%s242 + $0x57c] sm:$0xf] %vm8457, %v7912
        %8810 = vst.msk [vmem:[%s242 + $0x580] sm:$0xf] %vm8457, %v7913
        %8811 = vst.msk [vmem:[%s242 + $0x584] sm:$0xf] %vm8457, %v7914
        %8812 = vst.msk [vmem:[%s242 + $0x588] sm:$0xf] %vm8457, %v7915
        %8813 = vst.msk [vmem:[%s242 + $0x58c] sm:$0xf] %vm8457, %v7916
        %8814 = vst.msk [vmem:[%s242 + $0x590] sm:$0xf] %vm8457, %v7917
        %8815 = vst.msk [vmem:[%s242 + $0x594] sm:$0xf] %vm8457, %v7918
        %8816 = vst.msk [vmem:[%s242 + $0x598] sm:$0xf] %vm8457, %v7919
        %8817 = vst.msk [vmem:[%s242 + $0x59c] sm:$0xf] %vm8457, %v7920
        %8818 = vst.msk [vmem:[%s242 + $0x5a0] sm:$0xf] %vm8457, %v7921
        %8819 = vst.msk [vmem:[%s242 + $0x5a4] sm:$0xf] %vm8457, %v7922
        %8820 = vst.msk [vmem:[%s242 + $0x5a8] sm:$0xf] %vm8457, %v7923
        %8821 = vst.msk [vmem:[%s242 + $0x5ac] sm:$0xf] %vm8457, %v7924
        %8822 = vst.msk [vmem:[%s242 + $0x5b0] sm:$0xf] %vm8457, %v7925
        %8823 = vst.msk [vmem:[%s242 + $0x5b4] sm:$0xf] %vm8457, %v7926
        %8824 = vst.msk [vmem:[%s242 + $0x5b8] sm:$0xf] %vm8457, %v7927
        %8825 = vst.msk [vmem:[%s242 + $0x5bc] sm:$0xf] %vm8457, %v7928
        %8826 = vst.msk [vmem:[%s242 + $0x5c0] sm:$0xf] %vm8457, %v7929
        %8827 = vst.msk [vmem:[%s242 + $0x5c4] sm:$0xf] %vm8457, %v7930
        %8828 = vst.msk [vmem:[%s242 + $0x5c8] sm:$0xf] %vm8457, %v7931
        %8829 = vst.msk [vmem:[%s242 + $0x5cc] sm:$0xf] %vm8457, %v7932
        %8830 = vst.msk [vmem:[%s242 + $0x5d0] sm:$0xf] %vm8457, %v7933
        %8831 = vst.msk [vmem:[%s242 + $0x5d4] sm:$0xf] %vm8457, %v7934
        %8832 = vst.msk [vmem:[%s242 + $0x5d8] sm:$0xf] %vm8457, %v7935
        %8833 = vst.msk [vmem:[%s242 + $0x5dc] sm:$0xf] %vm8457, %v7936
        %8834 = vst.msk [vmem:[%s242 + $0x5e0] sm:$0xf] %vm8457, %v7937
        %8835 = vst.msk [vmem:[%s242 + $0x5e4] sm:$0xf] %vm8457, %v7938
        %8836 = vst.msk [vmem:[%s242 + $0x5e8] sm:$0xf] %vm8457, %v7939
        %8837 = vst.msk [vmem:[%s242 + $0x5ec] sm:$0xf] %vm8457, %v7940
        %8838 = vst.msk [vmem:[%s242 + $0x5f0] sm:$0xf] %vm8457, %v7941
        %8839 = vst.msk [vmem:[%s242 + $0x5f4] sm:$0xf] %vm8457, %v7942
        %8840 = vst.msk [vmem:[%s242 + $0x5f8] sm:$0xf] %vm8457, %v7943
        %8841 = vst.msk [vmem:[%s242 + $0x5fc] sm:$0xf] %vm8457, %v7944
        %8842 = vst.msk [vmem:[%s242 + $0x600] sm:$0xf] %vm8457, %v7945
        %8843 = vst.msk [vmem:[%s242 + $0x604] sm:$0xf] %vm8457, %v7946
        %8844 = vst.msk [vmem:[%s242 + $0x608] sm:$0xf] %vm8457, %v7947
        %8845 = vst.msk [vmem:[%s242 + $0x60c] sm:$0xf] %vm8457, %v7948
        %8846 = vst.msk [vmem:[%s242 + $0x610] sm:$0xf] %vm8457, %v7949
        %8847 = vst.msk [vmem:[%s242 + $0x614] sm:$0xf] %vm8457, %v7950
        %8848 = vst.msk [vmem:[%s242 + $0x618] sm:$0xf] %vm8457, %v7951
        %8849 = vst.msk [vmem:[%s242 + $0x61c] sm:$0xf] %vm8457, %v7952
        %8850 = vst.msk [vmem:[%s242 + $0x620] sm:$0xf] %vm8457, %v7953
        %8851 = vst.msk [vmem:[%s242 + $0x624] sm:$0xf] %vm8457, %v7954
        %8852 = vst.msk [vmem:[%s242 + $0x628] sm:$0xf] %vm8457, %v7955
        %8853 = vst.msk [vmem:[%s242 + $0x62c] sm:$0xf] %vm8457, %v7956
        %8854 = vst.msk [vmem:[%s242 + $0x630] sm:$0xf] %vm8457, %v7957
        %8855 = vst.msk [vmem:[%s242 + $0x634] sm:$0xf] %vm8457, %v7958
        %8856 = vst.msk [vmem:[%s242 + $0x638] sm:$0xf] %vm8457, %v7959
        %8857 = vst.msk [vmem:[%s242 + $0x63c] sm:$0xf] %vm8457, %v7960
        %8858 = vst.msk [vmem:[%s242 + $0x640] sm:$0xf] %vm8457, %v7961
        %8859 = vst.msk [vmem:[%s242 + $0x644] sm:$0xf] %vm8457, %v7962
        %8860 = vst.msk [vmem:[%s242 + $0x648] sm:$0xf] %vm8457, %v7963
        %8861 = vst.msk [vmem:[%s242 + $0x64c] sm:$0xf] %vm8457, %v7964
        %8862 = vst.msk [vmem:[%s242 + $0x650] sm:$0xf] %vm8457, %v7965
        %8863 = vst.msk [vmem:[%s242 + $0x654] sm:$0xf] %vm8457, %v7966
        %8864 = vst.msk [vmem:[%s242 + $0x658] sm:$0xf] %vm8457, %v7967
        %8865 = vst.msk [vmem:[%s242 + $0x65c] sm:$0xf] %vm8457, %v7968
        %8866 = vst.msk [vmem:[%s242 + $0x660] sm:$0xf] %vm8457, %v7969
        %8867 = vst.msk [vmem:[%s242 + $0x664] sm:$0xf] %vm8457, %v7970
        %8868 = vst.msk [vmem:[%s242 + $0x668] sm:$0xf] %vm8457, %v7971
        %8869 = vst.msk [vmem:[%s242 + $0x66c] sm:$0xf] %vm8457, %v7972
        %8870 = vst.msk [vmem:[%s242 + $0x670] sm:$0xf] %vm8457, %v7973
        %8871 = vst.msk [vmem:[%s242 + $0x674] sm:$0xf] %vm8457, %v7974
        %8872 = vst.msk [vmem:[%s242 + $0x678] sm:$0xf] %vm8457, %v7975
        %8873 = vst.msk [vmem:[%s242 + $0x67c] sm:$0xf] %vm8457, %v7976
        %8874 = vst.msk [vmem:[%s242 + $0x680] sm:$0xf] %vm8457, %v7977
        %8875 = vst.msk [vmem:[%s242 + $0x684] sm:$0xf] %vm8457, %v7978
        %8876 = vst.msk [vmem:[%s242 + $0x688] sm:$0xf] %vm8457, %v7979
        %8877 = vst.msk [vmem:[%s242 + $0x68c] sm:$0xf] %vm8457, %v7980
        %8878 = vst.msk [vmem:[%s242 + $0x690] sm:$0xf] %vm8457, %v7981
        %8879 = vst.msk [vmem:[%s242 + $0x694] sm:$0xf] %vm8457, %v7982
        %8880 = vst.msk [vmem:[%s242 + $0x698] sm:$0xf] %vm8457, %v7983
        %8881 = vst.msk [vmem:[%s242 + $0x69c] sm:$0xf] %vm8457, %v7984
        %8882 = vst.msk [vmem:[%s242 + $0x6a0] sm:$0xf] %vm8457, %v7985
        %8883 = vst.msk [vmem:[%s242 + $0x6a4] sm:$0xf] %vm8457, %v7986
        %8884 = vst.msk [vmem:[%s242 + $0x6a8] sm:$0xf] %vm8457, %v7987
        %8885 = vst.msk [vmem:[%s242 + $0x6ac] sm:$0xf] %vm8457, %v7988
        %8886 = vst.msk [vmem:[%s242 + $0x6b0] sm:$0xf] %vm8457, %v7989
        %8887 = vst.msk [vmem:[%s242 + $0x6b4] sm:$0xf] %vm8457, %v7990
        %8888 = vst.msk [vmem:[%s242 + $0x6b8] sm:$0xf] %vm8457, %v7991
        %8889 = vst.msk [vmem:[%s242 + $0x6bc] sm:$0xf] %vm8457, %v7992
        %8890 = vst.msk [vmem:[%s242 + $0x6c0] sm:$0xf] %vm8457, %v7993
        %8891 = vst.msk [vmem:[%s242 + $0x6c4] sm:$0xf] %vm8457, %v7994
        %8892 = vst.msk [vmem:[%s242 + $0x6c8] sm:$0xf] %vm8457, %v7995
        %8893 = vst.msk [vmem:[%s242 + $0x6cc] sm:$0xf] %vm8457, %v7996
        %8894 = vst.msk [vmem:[%s242 + $0x6d0] sm:$0xf] %vm8457, %v7997
        %8895 = vst.msk [vmem:[%s242 + $0x6d4] sm:$0xf] %vm8457, %v7998
        %8896 = vst.msk [vmem:[%s242 + $0x6d8] sm:$0xf] %vm8457, %v7999
        %8897 = vst.msk [vmem:[%s242 + $0x6dc] sm:$0xf] %vm8457, %v8000
        %8898 = vst.msk [vmem:[%s242 + $0x6e0] sm:$0xf] %vm8457, %v8001
        %8899 = vst.msk [vmem:[%s242 + $0x6e4] sm:$0xf] %vm8457, %v8002
        %8900 = vst.msk [vmem:[%s242 + $0x6e8] sm:$0xf] %vm8457, %v8003
        %8901 = vst.msk [vmem:[%s242 + $0x6ec] sm:$0xf] %vm8457, %v8004
        %8902 = vst.msk [vmem:[%s242 + $0x6f0] sm:$0xf] %vm8457, %v8005
        %8903 = vst.msk [vmem:[%s242 + $0x6f4] sm:$0xf] %vm8457, %v8006
        %8904 = vst.msk [vmem:[%s242 + $0x6f8] sm:$0xf] %vm8457, %v8007
        %8905 = vst.msk [vmem:[%s242 + $0x6fc] sm:$0xf] %vm8457, %v8008
        %s8906 = sand.u32 %s144, 1
        %s8907 = scalar_lea.sflag [#allocation3], %s8906
        %s8908 = sand.u32 %s144, 1
        %s8909 = smul.addr %s8908, 1792
        %s8910 = scalar_lea.vmem [#allocation2], %s8909
        // Predicated region
        $region37: #{matmul_bn_act.1} parent=35 // pred_check
          %p8911 = pneg %p154
        $region38: #{matmul_bn_act.1} parent=35 // pred_check_branch
          %8913 = sbr.rel (%p8911) target = $region40
        $region39: #{matmul_bn_act.1} parent=35 // pred_region
          %s8914 = smul.u32 448, %s22
          %s8916 = ssub.s32 28672, 28672
          %8917 = vsyncadd %s8907, %s8916
          %s8918 = sadd.s32 %s23, %s8914
          %s8919 = smul.addr %s8918, 64
          %s8920 = scalar_lea.hbm %s4, %s8919
          %s8921 = sshll.u32 %s8910, 4
          %s8922 = int_to_ptr.vmem [resolvable:$true] %s8921
          %8927 = dma.vmem_to_hbm [thread:$0]  %s8922, 28672, %s8920, %s8907, 64, 64, 4
        $region40: #{matmul_bn_act.1} parent=35 // pred_fallthru
          _
      $region36: #{matmul_bn_act.1} parent=5 // pred_fallthru
        _
      %p8928 = scmp.le.s32.totalorder 2, %s13
      // Predicated region
      $region41: #{matmul_bn_act.1} parent=5 // pred_check
        %p8929 = pneg %p8928
      $region42: #{matmul_bn_act.1} parent=5 // pred_check_branch
        %8931 = sbr.rel (%p8929) target = $region44
      $region43: #{matmul_bn_act.1} parent=5 // pred_region
        %s8932 = ssub.s32 %s13, 2
        // Predicated region
        $region45: #{matmul_bn_act.1} parent=43 // pred_check
          %p8933 = pneg %p160
        $region46: #{matmul_bn_act.1} parent=43 // pred_check_branch
          %8935 = sbr.rel (%p8933) target = $region48
        $region47: #{matmul_bn_act.1} parent=43 // pred_region
          %s8936 = sand.u32 %s145, 1
          %s8937 = scalar_lea.sflag [#allocation3], %s8936
          %s8938 = sand.u32 %s145, 1
          %s8939 = smul.addr %s8938, 1792
          %s8940 = scalar_lea.vmem [#allocation2], %s8939
          %8941 = dma.done %s8937, 28672
        $region48: #{matmul_bn_act.1} parent=43 // pred_fallthru
          _
      $region44: #{matmul_bn_act.1} parent=5 // pred_fallthru
        _
    $region6: #{matmul_bn_act.1} parent=1 // loop_footer
      %s17 = sadd.s32 1, %s13
    $region7: #{matmul_bn_act.1} parent=1 // loop_footer_branch
      %12 = sbr.rel target = $region3
    $region8: #{matmul_bn_act.1} parent=1 // loop_exit
      _
    %8942 = vsyncpa [#allocation3], 1
    %s8943 = scalar_lea.sflag [#allocation3], 1
    %8944 = vsyncpa %s8943, 1

</llo_original>
